<compile_context>
chip_gen: v7x
topology: tpu7x:2x2x1
jax: 0.10.0
libtpu: 0.0.40
codegen_flags: <defaults>
</compile_context>

<pallas_src>
import math

import numpy as np
import jax
import jax.numpy as jnp
from jax.experimental import pallas as pl
from jax.experimental.pallas import tpu as pltpu

STATE_SIZE = 32
ACTION_SIZE = 4
ATOMS = 51
HID = 128                 # per-head hidden width
PA = 128                  # per-action padded atom width (lane-aligned)
V_MIN, V_MAX = -10.0, 10.0
BATCH = 256
LN_EPS = 1e-5             # PyTorch nn.LayerNorm default
NEG_PAD = -1e9            # padded-logit bias -> exp() == 0


def _layer_norm(h, gamma, beta):
    """Fused one-pass LayerNorm: var = E[x^2] - E[x]^2 (f32)."""
    n = h.shape[-1]
    inv_n = 1.0 / n
    mu = jnp.sum(h, axis=-1, keepdims=True) * inv_n
    ms = jnp.sum(h * h, axis=-1, keepdims=True) * inv_n
    var = ms - mu * mu
    return (h - mu) * jax.lax.rsqrt(var + LN_EPS) * gamma + beta


def dqn_kernel(x_ref,
               w1_ref, b1_ref, g1_ref, be1_ref,
               w2_ref, b2_ref, g2_ref, be2_ref,
               wh1_ref, bh1_ref,
               whd_ref, bhd_ref,
               red_ref,
               q_ref):
    bf16, f32 = jnp.bfloat16, jnp.float32

    x = x_ref[...].astype(bf16)

    # --- feature trunk: NoisyLinear(S,512) -> LayerNorm -> ReLU -> (Dropout=id) ---
    h = jnp.dot(x, w1_ref[...], preferred_element_type=f32) + b1_ref[...]
    h = jnp.maximum(_layer_norm(h, g1_ref[...], be1_ref[...]), 0.0)

    # --- NoisyLinear(512,256) -> LayerNorm -> ReLU -> (Dropout=id) ---
    h = jnp.dot(h.astype(bf16), w2_ref[...], preferred_element_type=f32) + b2_ref[...]
    h = jnp.maximum(_layer_norm(h, g2_ref[...], be2_ref[...]), 0.0)

    # --- fused head hidden layer: [advantage 256->128 | value 256->128] as one 256->256 ---
    hid = jnp.dot(h.astype(bf16), wh1_ref[...], preferred_element_type=f32) + bh1_ref[...]
    hid = jnp.maximum(hid, 0.0).astype(bf16)          # (TB, 256)

    # --- fused head outputs: one K=256 block-diagonal matmul -> (TB, 5*128) ---
    # columns: [adv action0 | action1 | action2 | action3 | value], each padded to 128 lanes.
    out = jnp.dot(hid, whd_ref[...], preferred_element_type=f32) + bhd_ref[...]
    adv = out[:, :ACTION_SIZE * PA]                   # (TB, 512) aligned view; padded cols = 0
    val = out[:, ACTION_SIZE * PA:]                   # (TB, 128) aligned view; padded cols = -1e9

    # dueling combine in (TB, A*128) layout; all slices are 128-lane aligned (free views)
    adv_sum = adv[:, 0:PA]
    for a in range(1, ACTION_SIZE):
        adv_sum = adv_sum + adv[:, a * PA:(a + 1) * PA]
    base = val - adv_sum * (1.0 / ACTION_SIZE)        # shared across actions; padded cols ~ -1e9
    # lane-aligned broadcast of the shared term (cheap lane-group copies, no masked ops)
    logits = adv + jnp.concatenate([base] * ACTION_SIZE, axis=-1)   # (TB, A*128)

    # stable softmax over all actions at once (global per-row max; padded cols exp -> 0)
    m = jnp.max(logits, axis=-1, keepdims=True)
    e = jnp.exp(logits - m)

    # block-diagonal [support | ones] reduction on the MXU: columns 0..A-1 = numerators,
    # columns 128..128+A-1 = denominators; everything stays lane-dense.
    red = jnp.dot(e, red_ref[...], preferred_element_type=f32)      # (TB, 256)
    num = red[:, :PA]
    den = jnp.maximum(red[:, PA:], 1e-30)             # keep unused lanes finite
    q_ref[...] = num * pl.reciprocal(den, approx=True)  # (TB, 128); lanes >= ACTION_SIZE are junk


def make_params(key, w_dtype=jnp.bfloat16):
    """Returns (kernel_params, raw_params).  Matches NoisyLinear.reset_parameters() (eval path)."""
    def lin(k, fan_in, fan_out):
        kw, kb = jax.random.split(k)
        bound = 1.0 / math.sqrt(fan_in)
        w = jax.random.uniform(kw, (fan_in, fan_out), jnp.float32, -bound, bound)
        b = jax.random.uniform(kb, (fan_out,), jnp.float32, -bound, bound)
        return w, b

    ks = jax.random.split(key, 6)
    w1, b1 = lin(ks[0], STATE_SIZE, 512)
    w2, b2 = lin(ks[1], 512, 256)
    wa1, ba1 = lin(ks[2], 256, HID)
    wv1, bv1 = lin(ks[3], 256, HID)
    wa2, ba2 = lin(ks[4], HID, ACTION_SIZE * ATOMS)
    wv2, bv2 = lin(ks[5], HID, ATOMS)

    g1, be1 = jnp.ones((1, 512), jnp.float32), jnp.zeros((1, 512), jnp.float32)
    g2, be2 = jnp.ones((1, 256), jnp.float32), jnp.zeros((1, 256), jnp.float32)
    support = jnp.linspace(V_MIN, V_MAX, ATOMS).astype(jnp.float32)

    # fuse the two 256->128 head hidden layers into one 256->256 matmul
    wh1 = jnp.concatenate([wa1, wv1], axis=1)                 # (256, 256)
    bh1 = jnp.concatenate([ba1, bv1]).reshape(1, 2 * HID)

    # fused, lane-padded head-output weights: (256, (A+1)*128) block-diagonal
    whd = np.zeros((2 * HID, (ACTION_SIZE + 1) * PA), np.float32)
    bhd = np.zeros((1, (ACTION_SIZE + 1) * PA), np.float32)
    wa2_np, ba2_np = np.asarray(wa2), np.asarray(ba2)
    for a in range(ACTION_SIZE):
        whd[:HID, a * PA:a * PA + ATOMS] = wa2_np[:, a * ATOMS:(a + 1) * ATOMS]
        bhd[0, a * PA:a * PA + ATOMS] = ba2_np[a * ATOMS:(a + 1) * ATOMS]
    whd[HID:, ACTION_SIZE * PA:ACTION_SIZE * PA + ATOMS] = np.asarray(wv2)
    bhd[0, ACTION_SIZE * PA:ACTION_SIZE * PA + ATOMS] = np.asarray(bv2)
    # padded *value* bias columns get -1e9 so the combined logits' padded lanes exp() to 0
    bhd[0, ACTION_SIZE * PA + ATOMS:] = NEG_PAD

    # constant block-diagonal [support | ones] reduction matrix (512, 256)
    red = np.zeros((ACTION_SIZE * PA, 2 * PA), np.float32)
    sup_np = np.asarray(support)
    for a in range(ACTION_SIZE):
        red[a * PA:a * PA + ATOMS, a] = sup_np
        red[a * PA:a * PA + ATOMS, PA + a] = 1.0

    cast = lambda w: jnp.asarray(w, w_dtype)
    kernel_params = (cast(w1), b1.reshape(1, -1), g1, be1,
                     cast(w2), b2.reshape(1, -1), g2, be2,
                     cast(wh1), bh1,
                     cast(whd), jnp.asarray(bhd),
                     jnp.asarray(red))
    raw_params = (w1, b1, g1, be1, w2, b2, g2, be2,
                  wa1, ba1, wv1, bv1, wa2, ba2, wv2, bv2, support)
    return kernel_params, raw_params


def _num_tensorcores() -> int:
    """Heuristic TC count per device: 2 on megacore / v7x generations, else 1."""
    try:
        kind = jax.devices()[0].device_kind.lower()
    except Exception:
        return 1
    return 2 if ("v7" in kind or "v4" in kind or "v5p" in kind) else 1


def distributional_dqn_forward(x, kernel_params, *, tile_batch=None):
    B, S = x.shape
    if tile_batch is None:
        n_tc = _num_tensorcores()
        tb = -(-B // n_tc)                  # one tile per TensorCore
        tile_batch = min(512, max(8, -(-tb // 8) * 8))
    TB = tile_batch
    pad = (-B) % TB
    if pad:
        x = jnp.concatenate([x, jnp.zeros((pad, S), x.dtype)], axis=0)
    Bp = B + pad
    grid = (Bp // TB,)

    x_spec = pl.BlockSpec((TB, S), lambda i: (i, 0))
    # Weights / biases / reduction matrix: full block, constant index_map -> resident.
    param_specs = [pl.BlockSpec(p.shape, lambda i: (0, 0)) for p in kernel_params]
    # Lane-dense output block (TB, 128); wrapper slices the first ACTION_SIZE columns.
    out_spec = pl.BlockSpec((TB, PA), lambda i: (i, 0))

    q = pl.pallas_call(
        dqn_kernel,
        out_shape=jax.ShapeDtypeStruct((Bp, PA), jnp.float32),
        grid=grid,
        in_specs=[x_spec] + param_specs,
        out_specs=out_spec,
        compiler_params=pltpu.CompilerParams(
            dimension_semantics=("parallel",)),     # shards batch tiles across TCs on v7x
    )(x, *kernel_params)
    return q[:B, :ACTION_SIZE]


def reference_forward(x, raw_params):
    """Pure-JAX reference in the module's natural structure (bf16 weights, f32 accumulate)."""
    (w1, b1, g1, be1, w2, b2, g2, be2,
     wa1, ba1, wv1, bv1, wa2, ba2, wv2, bv2, support) = raw_params
    bf16, f32 = jnp.bfloat16, jnp.float32
    h = jnp.dot(x.astype(bf16), w1.astype(bf16), preferred_element_type=f32) + b1
    h = jnp.maximum(_layer_norm(h, g1, be1), 0.0)
    h = jnp.dot(h.astype(bf16), w2.astype(bf16), preferred_element_type=f32) + b2
    h = jnp.maximum(_layer_norm(h, g2, be2), 0.0)
    a = jnp.maximum(jnp.dot(h.astype(bf16), wa1.astype(bf16),
                            preferred_element_type=f32) + ba1, 0.0).astype(bf16)
    v = jnp.maximum(jnp.dot(h.astype(bf16), wv1.astype(bf16),
                            preferred_element_type=f32) + bv1, 0.0).astype(bf16)
    adv = (jnp.dot(a, wa2.astype(bf16), preferred_element_type=f32)
           + ba2).reshape(-1, ACTION_SIZE, ATOMS)
    val = (jnp.dot(v, wv2.astype(bf16), preferred_element_type=f32)
           + bv2).reshape(-1, 1, ATOMS)
    dist = jax.nn.softmax(val + adv - adv.mean(axis=1, keepdims=True), axis=-1)
    return jnp.sum(dist * support[None, None, :], axis=-1)


if __name__ == "__main__":
    key = jax.random.PRNGKey(0)
    k_params, k_x = jax.random.split(key)
    kernel_params, raw_params = make_params(k_params)
    x = jax.random.normal(k_x, (BATCH, STATE_SIZE), jnp.float32)

    q = jax.block_until_ready(distributional_dqn_forward(x, kernel_params))

    q_ref = reference_forward(x, raw_params)
    assert q.shape == (BATCH, ACTION_SIZE), q.shape
    err = float(jnp.max(jnp.abs(q - q_ref)))
    assert jnp.allclose(q, q_ref, atol=5e-3, rtol=5e-3), (err, q[:2], q_ref[:2])

    print("KERNEL_OK")
</pallas_src>

<mosaic_0001>
module attributes {stable_mosaic.version = 11 : i64} {
  func.func @dqn_kernel(%arg0: i32, %arg1: memref<256x32xf32, #tpu.memory_space<vmem>>, %arg2: memref<32x512xbf16, #tpu.memory_space<vmem>>, %arg3: memref<1x512xf32, #tpu.memory_space<vmem>>, %arg4: memref<1x512xf32, #tpu.memory_space<vmem>>, %arg5: memref<1x512xf32, #tpu.memory_space<vmem>>, %arg6: memref<512x256xbf16, #tpu.memory_space<vmem>>, %arg7: memref<1x256xf32, #tpu.memory_space<vmem>>, %arg8: memref<1x256xf32, #tpu.memory_space<vmem>>, %arg9: memref<1x256xf32, #tpu.memory_space<vmem>>, %arg10: memref<256x256xbf16, #tpu.memory_space<vmem>>, %arg11: memref<1x256xf32, #tpu.memory_space<vmem>>, %arg12: memref<256x640xbf16, #tpu.memory_space<vmem>>, %arg13: memref<1x640xf32, #tpu.memory_space<vmem>>, %arg14: memref<512x256xf32, #tpu.memory_space<vmem>>, %arg15: memref<256x128xf32, #tpu.memory_space<vmem>>) attributes {dimension_semantics = [#tpu.dimension_semantics<parallel>], iteration_bounds = array<i64: 1>, scalar_prefetch = 0 : i64, scratch_operands = 0 : i64, tpu.core_type = #tpu.core_type<tc>, window_params = [{transform_indices = @transform_0, window_bounds = array<i64: 256, 32>}, {pipeline_mode = #tpu.pipeline_mode<synchronous>, transform_indices = @transform_1, window_bounds = array<i64: 32, 512>}, {pipeline_mode = #tpu.pipeline_mode<synchronous>, transform_indices = @transform_2, window_bounds = array<i64: 1, 512>}, {pipeline_mode = #tpu.pipeline_mode<synchronous>, transform_indices = @transform_3, window_bounds = array<i64: 1, 512>}, {pipeline_mode = #tpu.pipeline_mode<synchronous>, transform_indices = @transform_4, window_bounds = array<i64: 1, 512>}, {pipeline_mode = #tpu.pipeline_mode<synchronous>, transform_indices = @transform_5, window_bounds = array<i64: 512, 256>}, {pipeline_mode = #tpu.pipeline_mode<synchronous>, transform_indices = @transform_6, window_bounds = array<i64: 1, 256>}, {pipeline_mode = #tpu.pipeline_mode<synchronous>, transform_indices = @transform_7, window_bounds = array<i64: 1, 256>}, {pipeline_mode = #tpu.pipeline_mode<synchronous>, transform_indices = @transform_8, window_bounds = array<i64: 1, 256>}, {pipeline_mode = #tpu.pipeline_mode<synchronous>, transform_indices = @transform_9, window_bounds = array<i64: 256, 256>}, {pipeline_mode = #tpu.pipeline_mode<synchronous>, transform_indices = @transform_10, window_bounds = array<i64: 1, 256>}, {pipeline_mode = #tpu.pipeline_mode<synchronous>, transform_indices = @transform_11, window_bounds = array<i64: 256, 640>}, {pipeline_mode = #tpu.pipeline_mode<synchronous>, transform_indices = @transform_12, window_bounds = array<i64: 1, 640>}, {pipeline_mode = #tpu.pipeline_mode<synchronous>, transform_indices = @transform_13, window_bounds = array<i64: 512, 256>}, {transform_indices = @transform_14, window_bounds = array<i64: 256, 128>}]} {
    %c0 = arith.constant 0 : index
    %c0_0 = arith.constant 0 : index
    %0 = vector.load %arg1[%c0, %c0_0] : memref<256x32xf32, #tpu.memory_space<vmem>>, vector<256x32xf32>
    %1 = arith.truncf %0 : vector<256x32xf32> to vector<256x32xbf16>
    %c0_1 = arith.constant 0 : index
    %c0_2 = arith.constant 0 : index
    %2 = vector.load %arg2[%c0_1, %c0_2] : memref<32x512xbf16, #tpu.memory_space<vmem>>, vector<32x512xbf16>
    %cst = arith.constant dense<0.000000e+00> : vector<256x512xf32>
    %3 = tpu.matmul %1, %2, %cst {dimension_numbers = #tpu.dot_dimension_numbers<[1], [0], [0], [1], [0, 0, 1, 1], [], []>} : vector<256x32xbf16>, vector<32x512xbf16>, vector<256x512xf32> -> vector<256x512xf32>
    %c0_3 = arith.constant 0 : index
    %c0_4 = arith.constant 0 : index
    %4 = vector.load %arg3[%c0_3, %c0_4] : memref<1x512xf32, #tpu.memory_space<vmem>>, vector<1x512xf32>
    %5 = vector.broadcast %4 : vector<1x512xf32> to vector<256x512xf32>
    %6 = arith.addf %3, %5 : vector<256x512xf32>
    %c0_5 = arith.constant 0 : index
    %c0_6 = arith.constant 0 : index
    %7 = vector.load %arg4[%c0_5, %c0_6] : memref<1x512xf32, #tpu.memory_space<vmem>>, vector<1x512xf32>
    %c0_7 = arith.constant 0 : index
    %c0_8 = arith.constant 0 : index
    %8 = vector.load %arg5[%c0_7, %c0_8] : memref<1x512xf32, #tpu.memory_space<vmem>>, vector<1x512xf32>
    %cst_9 = arith.constant dense<0.000000e+00> : vector<256xf32>
    %9 = vector.multi_reduction <add>, %6, %cst_9 [1] : vector<256x512xf32> to vector<256xf32>
    %10 = vector.shape_cast %9 : vector<256xf32> to vector<256x1xf32>
    %cst_10 = arith.constant 0.001953125 : f32
    %11 = vector.broadcast %cst_10 : f32 to vector<256x1xf32>
    %12 = arith.mulf %10, %11 : vector<256x1xf32>
    %13 = arith.mulf %6, %6 : vector<256x512xf32>
    %cst_11 = arith.constant dense<0.000000e+00> : vector<256xf32>
    %14 = vector.multi_reduction <add>, %13, %cst_11 [1] : vector<256x512xf32> to vector<256xf32>
    %15 = vector.shape_cast %14 : vector<256xf32> to vector<256x1xf32>
    %cst_12 = arith.constant 0.001953125 : f32
    %16 = vector.broadcast %cst_12 : f32 to vector<256x1xf32>
    %17 = arith.mulf %15, %16 : vector<256x1xf32>
    %18 = arith.mulf %12, %12 : vector<256x1xf32>
    %19 = arith.subf %17, %18 : vector<256x1xf32>
    %20 = vector.broadcast %12 : vector<256x1xf32> to vector<256x512xf32>
    %21 = arith.subf %6, %20 : vector<256x512xf32>
    %cst_13 = arith.constant 9.99999974E-6 : f32
    %22 = vector.broadcast %cst_13 : f32 to vector<256x1xf32>
    %23 = arith.addf %19, %22 : vector<256x1xf32>
    %24 = math.rsqrt %23 : vector<256x1xf32>
    %25 = vector.broadcast %24 : vector<256x1xf32> to vector<256x512xf32>
    %26 = arith.mulf %21, %25 : vector<256x512xf32>
    %27 = vector.broadcast %7 : vector<1x512xf32> to vector<256x512xf32>
    %28 = arith.mulf %26, %27 : vector<256x512xf32>
    %29 = vector.broadcast %8 : vector<1x512xf32> to vector<256x512xf32>
    %30 = arith.addf %28, %29 : vector<256x512xf32>
    %cst_14 = arith.constant 0.000000e+00 : f32
    %31 = vector.broadcast %cst_14 : f32 to vector<256x512xf32>
    %32 = arith.maximumf %30, %31 : vector<256x512xf32>
    %33 = arith.truncf %32 : vector<256x512xf32> to vector<256x512xbf16>
    %c0_15 = arith.constant 0 : index
    %c0_16 = arith.constant 0 : index
    %34 = vector.load %arg6[%c0_15, %c0_16] : memref<512x256xbf16, #tpu.memory_space<vmem>>, vector<512x256xbf16>
    %cst_17 = arith.constant dense<0.000000e+00> : vector<256x256xf32>
    %35 = tpu.matmul %33, %34, %cst_17 {dimension_numbers = #tpu.dot_dimension_numbers<[1], [0], [0], [1], [0, 0, 1, 1], [], []>} : vector<256x512xbf16>, vector<512x256xbf16>, vector<256x256xf32> -> vector<256x256xf32>
    %c0_18 = arith.constant 0 : index
    %c0_19 = arith.constant 0 : index
    %36 = vector.load %arg7[%c0_18, %c0_19] : memref<1x256xf32, #tpu.memory_space<vmem>>, vector<1x256xf32>
    %37 = vector.broadcast %36 : vector<1x256xf32> to vector<256x256xf32>
    %38 = arith.addf %35, %37 : vector<256x256xf32>
    %c0_20 = arith.constant 0 : index
    %c0_21 = arith.constant 0 : index
    %39 = vector.load %arg8[%c0_20, %c0_21] : memref<1x256xf32, #tpu.memory_space<vmem>>, vector<1x256xf32>
    %c0_22 = arith.constant 0 : index
    %c0_23 = arith.constant 0 : index
    %40 = vector.load %arg9[%c0_22, %c0_23] : memref<1x256xf32, #tpu.memory_space<vmem>>, vector<1x256xf32>
    %cst_24 = arith.constant dense<0.000000e+00> : vector<256xf32>
    %41 = vector.multi_reduction <add>, %38, %cst_24 [1] : vector<256x256xf32> to vector<256xf32>
    %42 = vector.shape_cast %41 : vector<256xf32> to vector<256x1xf32>
    %cst_25 = arith.constant 3.906250e-03 : f32
    %43 = vector.broadcast %cst_25 : f32 to vector<256x1xf32>
    %44 = arith.mulf %42, %43 : vector<256x1xf32>
    %45 = arith.mulf %38, %38 : vector<256x256xf32>
    %cst_26 = arith.constant dense<0.000000e+00> : vector<256xf32>
    %46 = vector.multi_reduction <add>, %45, %cst_26 [1] : vector<256x256xf32> to vector<256xf32>
    %47 = vector.shape_cast %46 : vector<256xf32> to vector<256x1xf32>
    %cst_27 = arith.constant 3.906250e-03 : f32
    %48 = vector.broadcast %cst_27 : f32 to vector<256x1xf32>
    %49 = arith.mulf %47, %48 : vector<256x1xf32>
    %50 = arith.mulf %44, %44 : vector<256x1xf32>
    %51 = arith.subf %49, %50 : vector<256x1xf32>
    %52 = vector.broadcast %44 : vector<256x1xf32> to vector<256x256xf32>
    %53 = arith.subf %38, %52 : vector<256x256xf32>
    %cst_28 = arith.constant 9.99999974E-6 : f32
    %54 = vector.broadcast %cst_28 : f32 to vector<256x1xf32>
    %55 = arith.addf %51, %54 : vector<256x1xf32>
    %56 = math.rsqrt %55 : vector<256x1xf32>
    %57 = vector.broadcast %56 : vector<256x1xf32> to vector<256x256xf32>
    %58 = arith.mulf %53, %57 : vector<256x256xf32>
    %59 = vector.broadcast %39 : vector<1x256xf32> to vector<256x256xf32>
    %60 = arith.mulf %58, %59 : vector<256x256xf32>
    %61 = vector.broadcast %40 : vector<1x256xf32> to vector<256x256xf32>
    %62 = arith.addf %60, %61 : vector<256x256xf32>
    %cst_29 = arith.constant 0.000000e+00 : f32
    %63 = vector.broadcast %cst_29 : f32 to vector<256x256xf32>
    %64 = arith.maximumf %62, %63 : vector<256x256xf32>
    %65 = arith.truncf %64 : vector<256x256xf32> to vector<256x256xbf16>
    %c0_30 = arith.constant 0 : index
    %c0_31 = arith.constant 0 : index
    %66 = vector.load %arg10[%c0_30, %c0_31] : memref<256x256xbf16, #tpu.memory_space<vmem>>, vector<256x256xbf16>
    %cst_32 = arith.constant dense<0.000000e+00> : vector<256x256xf32>
    %67 = tpu.matmul %65, %66, %cst_32 {dimension_numbers = #tpu.dot_dimension_numbers<[1], [0], [0], [1], [0, 0, 1, 1], [], []>} : vector<256x256xbf16>, vector<256x256xbf16>, vector<256x256xf32> -> vector<256x256xf32>
    %c0_33 = arith.constant 0 : index
    %c0_34 = arith.constant 0 : index
    %68 = vector.load %arg11[%c0_33, %c0_34] : memref<1x256xf32, #tpu.memory_space<vmem>>, vector<1x256xf32>
    %69 = vector.broadcast %68 : vector<1x256xf32> to vector<256x256xf32>
    %70 = arith.addf %67, %69 : vector<256x256xf32>
    %cst_35 = arith.constant 0.000000e+00 : f32
    %71 = vector.broadcast %cst_35 : f32 to vector<256x256xf32>
    %72 = arith.maximumf %70, %71 : vector<256x256xf32>
    %73 = arith.truncf %72 : vector<256x256xf32> to vector<256x256xbf16>
    %c0_36 = arith.constant 0 : index
    %c0_37 = arith.constant 0 : index
    %74 = vector.load %arg12[%c0_36, %c0_37] : memref<256x640xbf16, #tpu.memory_space<vmem>>, vector<256x640xbf16>
    %cst_38 = arith.constant dense<0.000000e+00> : vector<256x640xf32>
    %75 = tpu.matmul %73, %74, %cst_38 {dimension_numbers = #tpu.dot_dimension_numbers<[1], [0], [0], [1], [0, 0, 1, 1], [], []>} : vector<256x256xbf16>, vector<256x640xbf16>, vector<256x640xf32> -> vector<256x640xf32>
    %c0_39 = arith.constant 0 : index
    %c0_40 = arith.constant 0 : index
    %76 = vector.load %arg13[%c0_39, %c0_40] : memref<1x640xf32, #tpu.memory_space<vmem>>, vector<1x640xf32>
    %77 = vector.broadcast %76 : vector<1x640xf32> to vector<256x640xf32>
    %78 = arith.addf %75, %77 : vector<256x640xf32>
    %79 = vector.extract_strided_slice %78 {offsets = [0, 0], sizes = [256, 512], strides = [1, 1]} : vector<256x640xf32> to vector<256x512xf32>
    %80 = vector.extract_strided_slice %78 {offsets = [0, 512], sizes = [256, 128], strides = [1, 1]} : vector<256x640xf32> to vector<256x128xf32>
    %81 = vector.extract_strided_slice %79 {offsets = [0, 0], sizes = [256, 128], strides = [1, 1]} : vector<256x512xf32> to vector<256x128xf32>
    %82 = vector.extract_strided_slice %79 {offsets = [0, 128], sizes = [256, 128], strides = [1, 1]} : vector<256x512xf32> to vector<256x128xf32>
    %83 = arith.addf %81, %82 : vector<256x128xf32>
    %84 = vector.extract_strided_slice %79 {offsets = [0, 256], sizes = [256, 128], strides = [1, 1]} : vector<256x512xf32> to vector<256x128xf32>
    %85 = arith.addf %83, %84 : vector<256x128xf32>
    %86 = vector.extract_strided_slice %79 {offsets = [0, 384], sizes = [256, 128], strides = [1, 1]} : vector<256x512xf32> to vector<256x128xf32>
    %87 = arith.addf %85, %86 : vector<256x128xf32>
    %cst_41 = arith.constant 2.500000e-01 : f32
    %88 = vector.broadcast %cst_41 : f32 to vector<256x128xf32>
    %89 = arith.mulf %87, %88 : vector<256x128xf32>
    %90 = arith.subf %80, %89 : vector<256x128xf32>
    %91 = tpu.concatenate %90, %90, %90, %90 in 1 : vector<256x128xf32>, vector<256x128xf32>, vector<256x128xf32>, vector<256x128xf32> -> vector<256x512xf32>
    %92 = arith.addf %79, %91 : vector<256x512xf32>
    %cst_42 = arith.constant dense<0xFF800000> : vector<256xf32>
    %93 = vector.multi_reduction <maximumf>, %92, %cst_42 [1] : vector<256x512xf32> to vector<256xf32>
    %94 = vector.shape_cast %93 : vector<256xf32> to vector<256x1xf32>
    %95 = vector.broadcast %94 : vector<256x1xf32> to vector<256x512xf32>
    %96 = arith.subf %92, %95 : vector<256x512xf32>
    %97 = math.exp %96 : vector<256x512xf32>
    %c0_43 = arith.constant 0 : index
    %c0_44 = arith.constant 0 : index
    %98 = vector.load %arg14[%c0_43, %c0_44] : memref<512x256xf32, #tpu.memory_space<vmem>>, vector<512x256xf32>
    %cst_45 = arith.constant dense<0.000000e+00> : vector<256x256xf32>
    %99 = tpu.matmul %97, %98, %cst_45 {dimension_numbers = #tpu.dot_dimension_numbers<[1], [0], [0], [1], [0, 0, 1, 1], [], []>} : vector<256x512xf32>, vector<512x256xf32>, vector<256x256xf32> -> vector<256x256xf32>
    %100 = vector.extract_strided_slice %99 {offsets = [0, 0], sizes = [256, 128], strides = [1, 1]} : vector<256x256xf32> to vector<256x128xf32>
    %101 = vector.extract_strided_slice %99 {offsets = [0, 128], sizes = [256, 128], strides = [1, 1]} : vector<256x256xf32> to vector<256x128xf32>
    %cst_46 = arith.constant 1.000000e-30 : f32
    %102 = vector.broadcast %cst_46 : f32 to vector<256x128xf32>
    %103 = arith.maximumf %101, %102 : vector<256x128xf32>
    %104 = tpu.reciprocal %103 {approx = true} : vector<256x128xf32> -> vector<256x128xf32>
    %105 = arith.mulf %100, %104 : vector<256x128xf32>
    %c0_47 = arith.constant 0 : index
    %c0_48 = arith.constant 0 : index
    %106 = vector.load %arg15[%c0_47, %c0_48] : memref<256x128xf32, #tpu.memory_space<vmem>>, vector<256x128xf32>
    tpu.vector_store %arg15[%c0_47, %c0_48], %105 {strides = array<i32>} : memref<256x128xf32, #tpu.memory_space<vmem>>, vector<256x128xf32>,
    return
  }
  func.func @transform_0(%arg0: i32) -> (i32, i32) {
    %c0_i32 = arith.constant 0 : i32
    %c0_i32_0 = arith.constant 0 : i32
    return %arg0, %c0_i32 : i32, i32
  }
  func.func @transform_1(%arg0: i32) -> (i32, i32) {
    %c0_i32 = arith.constant 0 : i32
    %c0_i32_0 = arith.constant 0 : i32
    %c0_i32_1 = arith.constant 0 : i32
    return %c0_i32, %c0_i32_0 : i32, i32
  }
  func.func @transform_2(%arg0: i32) -> (i32, i32) {
    %c0_i32 = arith.constant 0 : i32
    %c0_i32_0 = arith.constant 0 : i32
    %c0_i32_1 = arith.constant 0 : i32
    return %c0_i32, %c0_i32_0 : i32, i32
  }
  func.func @transform_3(%arg0: i32) -> (i32, i32) {
    %c0_i32 = arith.constant 0 : i32
    %c0_i32_0 = arith.constant 0 : i32
    %c0_i32_1 = arith.constant 0 : i32
    return %c0_i32, %c0_i32_0 : i32, i32
  }
  func.func @transform_4(%arg0: i32) -> (i32, i32) {
    %c0_i32 = arith.constant 0 : i32
    %c0_i32_0 = arith.constant 0 : i32
    %c0_i32_1 = arith.constant 0 : i32
    return %c0_i32, %c0_i32_0 : i32, i32
  }
  func.func @transform_5(%arg0: i32) -> (i32, i32) {
    %c0_i32 = arith.constant 0 : i32
    %c0_i32_0 = arith.constant 0 : i32
    %c0_i32_1 = arith.constant 0 : i32
    return %c0_i32, %c0_i32_0 : i32, i32
  }
  func.func @transform_6(%arg0: i32) -> (i32, i32) {
    %c0_i32 = arith.constant 0 : i32
    %c0_i32_0 = arith.constant 0 : i32
    %c0_i32_1 = arith.constant 0 : i32
    return %c0_i32, %c0_i32_0 : i32, i32
  }
  func.func @transform_7(%arg0: i32) -> (i32, i32) {
    %c0_i32 = arith.constant 0 : i32
    %c0_i32_0 = arith.constant 0 : i32
    %c0_i32_1 = arith.constant 0 : i32
    return %c0_i32, %c0_i32_0 : i32, i32
  }
  func.func @transform_8(%arg0: i32) -> (i32, i32) {
    %c0_i32 = arith.constant 0 : i32
    %c0_i32_0 = arith.constant 0 : i32
    %c0_i32_1 = arith.constant 0 : i32
    return %c0_i32, %c0_i32_0 : i32, i32
  }
  func.func @transform_9(%arg0: i32) -> (i32, i32) {
    %c0_i32 = arith.constant 0 : i32
    %c0_i32_0 = arith.constant 0 : i32
    %c0_i32_1 = arith.constant 0 : i32
    return %c0_i32, %c0_i32_0 : i32, i32
  }
  func.func @transform_10(%arg0: i32) -> (i32, i32) {
    %c0_i32 = arith.constant 0 : i32
    %c0_i32_0 = arith.constant 0 : i32
    %c0_i32_1 = arith.constant 0 : i32
    return %c0_i32, %c0_i32_0 : i32, i32
  }
  func.func @transform_11(%arg0: i32) -> (i32, i32) {
    %c0_i32 = arith.constant 0 : i32
    %c0_i32_0 = arith.constant 0 : i32
    %c0_i32_1 = arith.constant 0 : i32
    return %c0_i32, %c0_i32_0 : i32, i32
  }
  func.func @transform_12(%arg0: i32) -> (i32, i32) {
    %c0_i32 = arith.constant 0 : i32
    %c0_i32_0 = arith.constant 0 : i32
    %c0_i32_1 = arith.constant 0 : i32
    return %c0_i32, %c0_i32_0 : i32, i32
  }
  func.func @transform_13(%arg0: i32) -> (i32, i32) {
    %c0_i32 = arith.constant 0 : i32
    %c0_i32_0 = arith.constant 0 : i32
    %c0_i32_1 = arith.constant 0 : i32
    return %c0_i32, %c0_i32_0 : i32, i32
  }
  func.func @transform_14(%arg0: i32) -> (i32, i32) {
    %c0_i32 = arith.constant 0 : i32
    %c0_i32_0 = arith.constant 0 : i32
    return %arg0, %c0_i32 : i32, i32
  }
}

</mosaic_0001>

<llo_original>
// kernel: tpu_custom_call.1
$region0: #{tpu_custom_call.1}
  #allocation0 [shape = 'u32[]', space=smem, size = 0x4, offset = 0x4, fixed_abs, tag = 'smem constant byte address 0x4 - core index']
  #allocation1 [shape = 'u32[144,128]{1,0:T(1,128)}', space=vmem, size = 0x12000, scoped, tag = 'internal scratch']
  %s0 = inlined_call_operand.vmem [shape: f32[256,32], index: 0, kind: input, shape index: {}]
  %s1 = inlined_call_operand.vmem [shape: bf16[32,512], index: 1, kind: input, shape index: {}]
  %s2 = inlined_call_operand.vmem [shape: f32[1,512], index: 2, kind: input, shape index: {}]
  %s3 = inlined_call_operand.vmem [shape: f32[1,512], index: 3, kind: input, shape index: {}]
  %s4 = inlined_call_operand.vmem [shape: f32[1,512], index: 4, kind: input, shape index: {}]
  %s5 = inlined_call_operand.hbm [shape: bf16[512,256], index: 5, kind: input, shape index: {}]
  %s6 = inlined_call_operand.vmem [shape: f32[1,256], index: 6, kind: input, shape index: {}]
  %s7 = inlined_call_operand.vmem [shape: f32[1,256], index: 7, kind: input, shape index: {}]
  %s8 = inlined_call_operand.vmem [shape: f32[1,256], index: 8, kind: input, shape index: {}]
  %s9 = inlined_call_operand.vmem [shape: bf16[256,256], index: 9, kind: input, shape index: {}]
  %s10 = inlined_call_operand.vmem [shape: f32[1,256], index: 10, kind: input, shape index: {}]
  %s11 = inlined_call_operand.hbm [shape: bf16[256,640], index: 11, kind: input, shape index: {}]
  %s12 = inlined_call_operand.vmem [shape: f32[1,640], index: 12, kind: input, shape index: {}]
  %s13 = inlined_call_operand.hbm [shape: f32[512,256], index: 13, kind: input, shape index: {}]
  %s14 = inlined_call_operand.hbm [shape: f32[256,128], index: 14, kind: output, shape index: {}]
  %s15 = sld [smem:[#allocation0]]
  $region78: #{tpu_custom_call.1} parent=0
    _
  %s17 = ssub.s32 1, %s15
  %s18 = scalar_select 0, %s17, %s15
  $region1: #{tpu_custom_call.1} parent=0
    #allocation2 [shape = 'u8[262144]{0}', space=vmem, size = 0x40000, scoped, tag = 'input window, operand 5, single buffered']
    #allocation3 [shape = 's32[1]{0}', space=sflag, size = 0x4, scoped, tag = 'scoped memory for tpu_custom_call.1']
    #allocation4 [shape = 's32[1]{0}', space=sflag, size = 0x4, scoped, tag = 'scoped memory for tpu_custom_call.1']
    #allocation5 [shape = 'u8[327680]{0}', space=vmem, size = 0x50000, scoped, tag = 'input window, operand 11, single buffered']
    #allocation6 [shape = 's32[1]{0}', space=sflag, size = 0x4, scoped, tag = 'scoped memory for tpu_custom_call.1']
    #allocation7 [shape = 'u8[524288]{0}', space=vmem, size = 0x80000, scoped, tag = 'input window, operand 13, single buffered']
    #allocation8 [shape = 'u8[131072]{0}', space=vmem, size = 0x20000, scoped, tag = 'output window, operand 0, single buffered']
    %19 = vsyncpa [#allocation3], 0
    %20 = vsyncpa [#allocation6], 0
    %21 = vsyncpa [#allocation4], 0
    // Predicated region
    $region2: #{tpu_custom_call.1} parent=1 // pred_check
      _
    $region3: #{tpu_custom_call.1} parent=1 // pred_check_branch
      %23 = sbr.rel (0) target = $region5
    $region4: #{tpu_custom_call.1} parent=1 // pred_region
      _
    $region5: #{tpu_custom_call.1} parent=1 // pred_fallthru
      _
    // Predicated region
    $region6: #{tpu_custom_call.1} parent=1 // pred_check
      _
    $region7: #{tpu_custom_call.1} parent=1 // pred_check_branch
      %25 = sbr.rel (0) target = $region9
    $region8: #{tpu_custom_call.1} parent=1 // pred_region
      _
    $region9: #{tpu_custom_call.1} parent=1 // pred_fallthru
      _
    // Predicated region
    $region10: #{tpu_custom_call.1} parent=1 // pred_check
      _
    $region11: #{tpu_custom_call.1} parent=1 // pred_check_branch
      %27 = sbr.rel (0) target = $region13
    $region12: #{tpu_custom_call.1} parent=1 // pred_region
      _
    $region13: #{tpu_custom_call.1} parent=1 // pred_fallthru
      _
    // Predicated region
    $region14: #{tpu_custom_call.1} parent=1 // pred_check
      _
    $region15: #{tpu_custom_call.1} parent=1 // pred_check_branch
      %29 = sbr.rel (0) target = $region17
    $region16: #{tpu_custom_call.1} parent=1 // pred_region
      _
    $region17: #{tpu_custom_call.1} parent=1 // pred_fallthru
      _
    // Predicated region
    $region18: #{tpu_custom_call.1} parent=1 // pred_check
      _
    $region19: #{tpu_custom_call.1} parent=1 // pred_check_branch
      %31 = sbr.rel (0) target = $region21
    $region20: #{tpu_custom_call.1} parent=1 // pred_region
      _
    $region21: #{tpu_custom_call.1} parent=1 // pred_fallthru
      _
    // Predicated region
    $region22: #{tpu_custom_call.1} parent=1 // pred_check
      _
    $region23: #{tpu_custom_call.1} parent=1 // pred_check_branch
      %33 = sbr.rel (0) target = $region25
    $region24: #{tpu_custom_call.1} parent=1 // pred_region
      %s35 = ssub.s32 8192, 8192
      %36 = vsyncadd [#allocation3], %s35
      %s37 = sshll.u32 [#allocation2], 4
      %s38 = int_to_ptr.vmem [resolvable:$true] %s37
      %43 = dma.hbm_to_vmem [thread:$0]  %s5, 8192, %s38, [#allocation3], 128, 128, 8
    $region25: #{tpu_custom_call.1} parent=1 // pred_fallthru
      _
    // Predicated region
    $region26: #{tpu_custom_call.1} parent=1 // pred_check
      _
    $region27: #{tpu_custom_call.1} parent=1 // pred_check_branch
      %45 = sbr.rel (0) target = $region29
    $region28: #{tpu_custom_call.1} parent=1 // pred_region
      _
    $region29: #{tpu_custom_call.1} parent=1 // pred_fallthru
      _
    // Predicated region
    $region30: #{tpu_custom_call.1} parent=1 // pred_check
      _
    $region31: #{tpu_custom_call.1} parent=1 // pred_check_branch
      %47 = sbr.rel (0) target = $region33
    $region32: #{tpu_custom_call.1} parent=1 // pred_region
      _
    $region33: #{tpu_custom_call.1} parent=1 // pred_fallthru
      _
    // Predicated region
    $region34: #{tpu_custom_call.1} parent=1 // pred_check
      _
    $region35: #{tpu_custom_call.1} parent=1 // pred_check_branch
      %49 = sbr.rel (0) target = $region37
    $region36: #{tpu_custom_call.1} parent=1 // pred_region
      _
    $region37: #{tpu_custom_call.1} parent=1 // pred_fallthru
      _
    // Predicated region
    $region38: #{tpu_custom_call.1} parent=1 // pred_check
      _
    $region39: #{tpu_custom_call.1} parent=1 // pred_check_branch
      %51 = sbr.rel (0) target = $region41
    $region40: #{tpu_custom_call.1} parent=1 // pred_region
      _
    $region41: #{tpu_custom_call.1} parent=1 // pred_fallthru
      _
    // Predicated region
    $region42: #{tpu_custom_call.1} parent=1 // pred_check
      _
    $region43: #{tpu_custom_call.1} parent=1 // pred_check_branch
      %53 = sbr.rel (0) target = $region45
    $region44: #{tpu_custom_call.1} parent=1 // pred_region
      _
    $region45: #{tpu_custom_call.1} parent=1 // pred_fallthru
      _
    // Predicated region
    $region46: #{tpu_custom_call.1} parent=1 // pred_check
      _
    $region47: #{tpu_custom_call.1} parent=1 // pred_check_branch
      %55 = sbr.rel (0) target = $region49
    $region48: #{tpu_custom_call.1} parent=1 // pred_region
      %s57 = ssub.s32 10240, 10240
      %58 = vsyncadd [#allocation6], %s57
      %s59 = sshll.u32 [#allocation5], 4
      %s60 = int_to_ptr.vmem [resolvable:$true] %s59
      %65 = dma.hbm_to_vmem [thread:$0]  %s11, 10240, %s60, [#allocation6], 320, 320, 20
    $region49: #{tpu_custom_call.1} parent=1 // pred_fallthru
      _
    // Predicated region
    $region50: #{tpu_custom_call.1} parent=1 // pred_check
      _
    $region51: #{tpu_custom_call.1} parent=1 // pred_check_branch
      %67 = sbr.rel (0) target = $region53
    $region52: #{tpu_custom_call.1} parent=1 // pred_region
      _
    $region53: #{tpu_custom_call.1} parent=1 // pred_fallthru
      _
    // Predicated region
    $region54: #{tpu_custom_call.1} parent=1 // pred_check
      _
    $region55: #{tpu_custom_call.1} parent=1 // pred_check_branch
      %69 = sbr.rel (0) target = $region57
    $region56: #{tpu_custom_call.1} parent=1 // pred_region
      %s71 = ssub.s32 16384, 16384
      %72 = vsyncadd [#allocation6], %s71
      %s73 = sshll.u32 [#allocation7], 4
      %s74 = int_to_ptr.vmem [resolvable:$true] %s73
      %79 = dma.hbm_to_vmem [thread:$0]  %s13, 16384, %s74, [#allocation6], 256, 256, 16
    $region57: #{tpu_custom_call.1} parent=1 // pred_fallthru
      _
    // Predicated region
    $region58: #{tpu_custom_call.1} parent=1 // pred_check
      _
    $region59: #{tpu_custom_call.1} parent=1 // pred_check_branch
      %81 = sbr.rel (0) target = $region61
    $region60: #{tpu_custom_call.1} parent=1 // pred_region
      %82 = dma.done [#allocation3], 8192
    $region61: #{tpu_custom_call.1} parent=1 // pred_fallthru
      _
    // Predicated region
    $region62: #{tpu_custom_call.1} parent=1 // pred_check
      _
    $region63: #{tpu_custom_call.1} parent=1 // pred_check_branch
      %84 = sbr.rel (0) target = $region65
    $region64: #{tpu_custom_call.1} parent=1 // pred_region
      %85 = dma.done [#allocation6], 10240
    $region65: #{tpu_custom_call.1} parent=1 // pred_fallthru
      _
    // Predicated region
    $region66: #{tpu_custom_call.1} parent=1 // pred_check
      _
    $region67: #{tpu_custom_call.1} parent=1 // pred_check_branch
      %87 = sbr.rel (0) target = $region69
    $region68: #{tpu_custom_call.1} parent=1 // pred_region
      %88 = dma.done [#allocation6], 16384
    $region69: #{tpu_custom_call.1} parent=1 // pred_fallthru
      _
    %v90 = vld [vmem:[%s0] sm:$0xff]
    %v91 = vld [vmem:[%s0 + $0x8] sm:$0xff]
    %v92 = vld [vmem:[%s0 + $0x10] sm:$0xff]
    %v93 = vld [vmem:[%s0 + $0x18] sm:$0xff]
    %v94 = vld [vmem:[%s0 + $0x20] sm:$0xff]
    %v95 = vld [vmem:[%s0 + $0x28] sm:$0xff]
    %v96 = vld [vmem:[%s0 + $0x30] sm:$0xff]
    %v97 = vld [vmem:[%s0 + $0x38] sm:$0xff]
    %v98 = vld [vmem:[%s0 + $0x40] sm:$0xff]
    %v99 = vld [vmem:[%s0 + $0x48] sm:$0xff]
    %v100 = vld [vmem:[%s0 + $0x50] sm:$0xff]
    %v101 = vld [vmem:[%s0 + $0x58] sm:$0xff]
    %v102 = vld [vmem:[%s0 + $0x60] sm:$0xff]
    %v103 = vld [vmem:[%s0 + $0x68] sm:$0xff]
    %v104 = vld [vmem:[%s0 + $0x70] sm:$0xff]
    %v105 = vld [vmem:[%s0 + $0x78] sm:$0xff]
    %v106 = vld [vmem:[%s0 + $0x80] sm:$0xff]
    %v107 = vld [vmem:[%s0 + $0x88] sm:$0xff]
    %v108 = vld [vmem:[%s0 + $0x90] sm:$0xff]
    %v109 = vld [vmem:[%s0 + $0x98] sm:$0xff]
    %v110 = vld [vmem:[%s0 + $0xa0] sm:$0xff]
    %v111 = vld [vmem:[%s0 + $0xa8] sm:$0xff]
    %v112 = vld [vmem:[%s0 + $0xb0] sm:$0xff]
    %v113 = vld [vmem:[%s0 + $0xb8] sm:$0xff]
    %v114 = vld [vmem:[%s0 + $0xc0] sm:$0xff]
    %v115 = vld [vmem:[%s0 + $0xc8] sm:$0xff]
    %v116 = vld [vmem:[%s0 + $0xd0] sm:$0xff]
    %v117 = vld [vmem:[%s0 + $0xd8] sm:$0xff]
    %v118 = vld [vmem:[%s0 + $0xe0] sm:$0xff]
    %v119 = vld [vmem:[%s0 + $0xe8] sm:$0xff]
    %v120 = vld [vmem:[%s0 + $0xf0] sm:$0xff]
    %v121 = vld [vmem:[%s0 + $0xf8] sm:$0xff]
    %v122 = vpack.c.bf16 %v91, %v90
    %v123 = vpack.c.bf16 %v93, %v92
    %v124 = vpack.c.bf16 %v95, %v94
    %v125 = vpack.c.bf16 %v97, %v96
    %v126 = vpack.c.bf16 %v99, %v98
    %v127 = vpack.c.bf16 %v101, %v100
    %v128 = vpack.c.bf16 %v103, %v102
    %v129 = vpack.c.bf16 %v105, %v104
    %v130 = vpack.c.bf16 %v107, %v106
    %v131 = vpack.c.bf16 %v109, %v108
    %v132 = vpack.c.bf16 %v111, %v110
    %v133 = vpack.c.bf16 %v113, %v112
    %v134 = vpack.c.bf16 %v115, %v114
    %v135 = vpack.c.bf16 %v117, %v116
    %v136 = vpack.c.bf16 %v119, %v118
    %v137 = vpack.c.bf16 %v121, %v120
    %v138 = vld [vmem:[%s1] sm:$0xff]
    %v139 = vld [vmem:[%s1 + $0x8] sm:$0xff]
    %v140 = vld [vmem:[%s1 + $0x10] sm:$0xff]
    %v141 = vld [vmem:[%s1 + $0x18] sm:$0xff]
    %v142 = vld [vmem:[%s1 + $0x20] sm:$0xff]
    %v143 = vld [vmem:[%s1 + $0x28] sm:$0xff]
    %v144 = vld [vmem:[%s1 + $0x30] sm:$0xff]
    %v145 = vld [vmem:[%s1 + $0x38] sm:$0xff]
    %v146 = vld [vmem:[%s2] sm:$0xf]
    %v148 = vlaneseq
    %v149 = vshrl.u32 %v148, 7
    %v150 = vsub.s32 0, %v149
    %v151 = vrot.slane %v146, %v150
    %v152 = vlaneseq
    %v153 = vshrl.u32 %v152, 7
    %v154 = vsub.s32 1, %v153
    %v155 = vrot.slane %v146, %v154
    %v156 = vlaneseq
    %v157 = vshrl.u32 %v156, 7
    %v158 = vsub.s32 2, %v157
    %v159 = vrot.slane %v146, %v158
    %v160 = vlaneseq
    %v161 = vshrl.u32 %v160, 7
    %v162 = vsub.s32 3, %v161
    %v163 = vrot.slane %v146, %v162
    %v176 = vunpack.c.l.b16 %v138
    %v177 = vunpack.c.h.b16 %v138
    %v178 = vunpack.c.l.b16 %v139
    %v179 = vunpack.c.h.b16 %v139
    %v180 = vunpack.c.l.b16 %v140
    %v181 = vunpack.c.h.b16 %v140
    %v182 = vunpack.c.l.b16 %v141
    %v183 = vunpack.c.h.b16 %v141
    %v184 = vunpack.c.l.b16 %v142
    %v185 = vunpack.c.h.b16 %v142
    %v186 = vunpack.c.l.b16 %v143
    %v187 = vunpack.c.h.b16 %v143
    %v188 = vunpack.c.l.b16 %v144
    %v189 = vunpack.c.h.b16 %v144
    %v190 = vunpack.c.l.b16 %v145
    %v191 = vunpack.c.h.b16 %v145
    %v192 = vpack.c.b16 %v180, %v176
    %v193 = vpack.c.b16 %v181, %v177
    %v194 = vpack.c.b16 %v182, %v178
    %v195 = vpack.c.b16 %v183, %v179
    %v196 = vpack.c.b16 %v188, %v184
    %v197 = vpack.c.b16 %v189, %v185
    %v198 = vpack.c.b16 %v190, %v186
    %v199 = vpack.c.b16 %v191, %v187
    %vm208 = vcmask 261120
    %v210 = vsel %vm208, %v122, 0
    %v213 = vsel %vm208, %v123, 0
    %v216 = vsel %vm208, %v124, 0
    %v219 = vsel %vm208, %v125, 0
    %v222 = vsel %vm208, %v126, 0
    %v225 = vsel %vm208, %v127, 0
    %v228 = vsel %vm208, %v128, 0
    %v231 = vsel %vm208, %v129, 0
    %v234 = vsel %vm208, %v130, 0
    %v237 = vsel %vm208, %v131, 0
    %v240 = vsel %vm208, %v132, 0
    %v243 = vsel %vm208, %v133, 0
    %v246 = vsel %vm208, %v134, 0
    %v249 = vsel %vm208, %v135, 0
    %v252 = vsel %vm208, %v136, 0
    %v255 = vsel %vm208, %v137, 0
    %257 = vmatprep.subr.bf16.mxu0 %v193
    %258 = vmatpush1.bf16.msra.mxu0 %v192
    %259 = vmatprep.subr.bf16.mxu0 %v197
    %260 = vmatpush1.bf16.msra.mxu0 %v196
    %261 = vmatprep.subr.bf16.mxu0 0
    %262 = vmatpush1.bf16.msra.mxu0 0
    %263 = vmatprep.subr.bf16.mxu0 0
    %264 = vmatpush1.bf16.msra.mxu0 0
    %265 = vmatprep.subr.bf16.mxu0 0
    %266 = vmatpush1.bf16.msra.mxu0 0
    %267 = vmatprep.subr.bf16.mxu0 0
    %268 = vmatpush1.bf16.msra.mxu0 0
    %269 = vmatprep.subr.bf16.mxu0 0
    %270 = vmatpush1.bf16.msra.mxu0 0
    %271 = vmatprep.subr.bf16.mxu0 0
    %272 = vmatpush1.bf16.msra.mxu0 0
    %273 = vmatprep.subr.bf16.mxu0 0
    %274 = vmatpush1.bf16.msra.mxu0 0
    %275 = vmatprep.subr.bf16.mxu0 0
    %276 = vmatpush1.bf16.msra.mxu0 0
    %277 = vmatprep.subr.bf16.mxu0 0
    %278 = vmatpush1.bf16.msra.mxu0 0
    %279 = vmatprep.subr.bf16.mxu0 0
    %280 = vmatpush1.bf16.msra.mxu0 0
    %281 = vmatprep.subr.bf16.mxu0 0
    %282 = vmatpush1.bf16.msra.mxu0 0
    %283 = vmatprep.subr.bf16.mxu0 0
    %284 = vmatpush1.bf16.msra.mxu0 0
    %285 = vmatprep.subr.bf16.mxu0 0
    %286 = vmatpush1.bf16.msra.mxu0 0
    %287 = vmatprep.subr.bf16.mxu0 0
    %288 = vmatpush1.bf16.msra.mxu0 0
    %289 = vmatprep.mubr.bf16.mxu0 0
    %290 = vmatmul.mubr.bf16.gmra.mrb[0].mxu0 %v210
    %v291 = vpop.f32.mrb[0].mxu0
    %v292 = vadd.f32 %v151, %v291
    %v293 = vpop.f32.mrb[0].mxu0
    %v294 = vadd.f32 %v155, %v293
    %v295 = vpop.f32.mrb[0].mxu0
    %v296 = vadd.f32 %v151, %v295
    %v297 = vpop.f32.mrb[0].mxu0
    %v298 = vadd.f32 %v155, %v297
    %299 = vmatprep.mubr.bf16.mxu0 0
    %300 = vmatmul.mubr.bf16.gmra.mrb[0].mxu0 %v213
    %v301 = vpop.f32.mrb[0].mxu0
    %v302 = vadd.f32 %v151, %v301
    %v303 = vpop.f32.mrb[0].mxu0
    %v304 = vadd.f32 %v155, %v303
    %v305 = vpop.f32.mrb[0].mxu0
    %v306 = vadd.f32 %v151, %v305
    %v307 = vpop.f32.mrb[0].mxu0
    %v308 = vadd.f32 %v155, %v307
    %309 = vmatprep.mubr.bf16.mxu0 0
    %310 = vmatmul.mubr.bf16.gmra.mrb[0].mxu0 %v216
    %v311 = vpop.f32.mrb[0].mxu0
    %v312 = vadd.f32 %v151, %v311
    %v313 = vpop.f32.mrb[0].mxu0
    %v314 = vadd.f32 %v155, %v313
    %v315 = vpop.f32.mrb[0].mxu0
    %v316 = vadd.f32 %v151, %v315
    %v317 = vpop.f32.mrb[0].mxu0
    %v318 = vadd.f32 %v155, %v317
    %319 = vmatprep.mubr.bf16.mxu0 0
    %320 = vmatmul.mubr.bf16.gmra.mrb[0].mxu0 %v219
    %v321 = vpop.f32.mrb[0].mxu0
    %v322 = vadd.f32 %v151, %v321
    %v323 = vpop.f32.mrb[0].mxu0
    %v324 = vadd.f32 %v155, %v323
    %v325 = vpop.f32.mrb[0].mxu0
    %v326 = vadd.f32 %v151, %v325
    %v327 = vpop.f32.mrb[0].mxu0
    %v328 = vadd.f32 %v155, %v327
    %329 = vmatprep.mubr.bf16.mxu0 0
    %330 = vmatmul.mubr.bf16.gmra.mrb[0].mxu0 %v222
    %v331 = vpop.f32.mrb[0].mxu0
    %v332 = vadd.f32 %v151, %v331
    %v333 = vpop.f32.mrb[0].mxu0
    %v334 = vadd.f32 %v155, %v333
    %v335 = vpop.f32.mrb[0].mxu0
    %v336 = vadd.f32 %v151, %v335
    %v337 = vpop.f32.mrb[0].mxu0
    %v338 = vadd.f32 %v155, %v337
    %339 = vmatprep.mubr.bf16.mxu0 0
    %340 = vmatmul.mubr.bf16.gmra.mrb[0].mxu0 %v225
    %v341 = vpop.f32.mrb[0].mxu0
    %v342 = vadd.f32 %v151, %v341
    %v343 = vpop.f32.mrb[0].mxu0
    %v344 = vadd.f32 %v155, %v343
    %v345 = vpop.f32.mrb[0].mxu0
    %v346 = vadd.f32 %v151, %v345
    %v347 = vpop.f32.mrb[0].mxu0
    %v348 = vadd.f32 %v155, %v347
    %349 = vmatprep.mubr.bf16.mxu0 0
    %350 = vmatmul.mubr.bf16.gmra.mrb[0].mxu0 %v228
    %v351 = vpop.f32.mrb[0].mxu0
    %v352 = vadd.f32 %v151, %v351
    %v353 = vpop.f32.mrb[0].mxu0
    %v354 = vadd.f32 %v155, %v353
    %v355 = vpop.f32.mrb[0].mxu0
    %v356 = vadd.f32 %v151, %v355
    %v357 = vpop.f32.mrb[0].mxu0
    %v358 = vadd.f32 %v155, %v357
    %359 = vmatprep.mubr.bf16.mxu0 0
    %360 = vmatmul.mubr.bf16.gmra.mrb[0].mxu0 %v231
    %v361 = vpop.f32.mrb[0].mxu0
    %v362 = vadd.f32 %v151, %v361
    %v363 = vpop.f32.mrb[0].mxu0
    %v364 = vadd.f32 %v155, %v363
    %v365 = vpop.f32.mrb[0].mxu0
    %v366 = vadd.f32 %v151, %v365
    %v367 = vpop.f32.mrb[0].mxu0
    %v368 = vadd.f32 %v155, %v367
    %369 = vmatprep.mubr.bf16.mxu0 0
    %370 = vmatmul.mubr.bf16.gmra.mrb[0].mxu0 %v234
    %v371 = vpop.f32.mrb[0].mxu0
    %v372 = vadd.f32 %v151, %v371
    %v373 = vpop.f32.mrb[0].mxu0
    %v374 = vadd.f32 %v155, %v373
    %v375 = vpop.f32.mrb[0].mxu0
    %v376 = vadd.f32 %v151, %v375
    %v377 = vpop.f32.mrb[0].mxu0
    %v378 = vadd.f32 %v155, %v377
    %379 = vmatprep.mubr.bf16.mxu0 0
    %380 = vmatmul.mubr.bf16.gmra.mrb[0].mxu0 %v237
    %v381 = vpop.f32.mrb[0].mxu0
    %v382 = vadd.f32 %v151, %v381
    %v383 = vpop.f32.mrb[0].mxu0
    %v384 = vadd.f32 %v155, %v383
    %v385 = vpop.f32.mrb[0].mxu0
    %v386 = vadd.f32 %v151, %v385
    %v387 = vpop.f32.mrb[0].mxu0
    %v388 = vadd.f32 %v155, %v387
    %389 = vmatprep.mubr.bf16.mxu0 0
    %390 = vmatmul.mubr.bf16.gmra.mrb[0].mxu0 %v240
    %v391 = vpop.f32.mrb[0].mxu0
    %v392 = vadd.f32 %v151, %v391
    %v393 = vpop.f32.mrb[0].mxu0
    %v394 = vadd.f32 %v155, %v393
    %v395 = vpop.f32.mrb[0].mxu0
    %v396 = vadd.f32 %v151, %v395
    %v397 = vpop.f32.mrb[0].mxu0
    %v398 = vadd.f32 %v155, %v397
    %399 = vmatprep.mubr.bf16.mxu0 0
    %400 = vmatmul.mubr.bf16.gmra.mrb[0].mxu0 %v243
    %v401 = vpop.f32.mrb[0].mxu0
    %v402 = vadd.f32 %v151, %v401
    %v403 = vpop.f32.mrb[0].mxu0
    %v404 = vadd.f32 %v155, %v403
    %v405 = vpop.f32.mrb[0].mxu0
    %v406 = vadd.f32 %v151, %v405
    %v407 = vpop.f32.mrb[0].mxu0
    %v408 = vadd.f32 %v155, %v407
    %409 = vmatprep.mubr.bf16.mxu0 0
    %410 = vmatmul.mubr.bf16.gmra.mrb[0].mxu0 %v246
    %v411 = vpop.f32.mrb[0].mxu0
    %v412 = vadd.f32 %v151, %v411
    %v413 = vpop.f32.mrb[0].mxu0
    %v414 = vadd.f32 %v155, %v413
    %v415 = vpop.f32.mrb[0].mxu0
    %v416 = vadd.f32 %v151, %v415
    %v417 = vpop.f32.mrb[0].mxu0
    %v418 = vadd.f32 %v155, %v417
    %419 = vmatprep.mubr.bf16.mxu0 0
    %420 = vmatmul.mubr.bf16.gmra.mrb[0].mxu0 %v249
    %v421 = vpop.f32.mrb[0].mxu0
    %v422 = vadd.f32 %v151, %v421
    %v423 = vpop.f32.mrb[0].mxu0
    %v424 = vadd.f32 %v155, %v423
    %v425 = vpop.f32.mrb[0].mxu0
    %v426 = vadd.f32 %v151, %v425
    %v427 = vpop.f32.mrb[0].mxu0
    %v428 = vadd.f32 %v155, %v427
    %429 = vmatprep.mubr.bf16.mxu0 0
    %430 = vmatmul.mubr.bf16.gmra.mrb[0].mxu0 %v252
    %v431 = vpop.f32.mrb[0].mxu0
    %v432 = vadd.f32 %v151, %v431
    %v433 = vpop.f32.mrb[0].mxu0
    %v434 = vadd.f32 %v155, %v433
    %v435 = vpop.f32.mrb[0].mxu0
    %v436 = vadd.f32 %v151, %v435
    %v437 = vpop.f32.mrb[0].mxu0
    %v438 = vadd.f32 %v155, %v437
    %439 = vmatprep.mubr.bf16.mxu0 0
    %440 = vmatmul.mubr.bf16.gmra.mrb[0].mxu0 %v255
    %v441 = vpop.f32.mrb[0].mxu0
    %v442 = vadd.f32 %v151, %v441
    %v443 = vpop.f32.mrb[0].mxu0
    %v444 = vadd.f32 %v155, %v443
    %v445 = vpop.f32.mrb[0].mxu0
    %v446 = vadd.f32 %v151, %v445
    %v447 = vpop.f32.mrb[0].mxu0
    %v448 = vadd.f32 %v155, %v447
    %449 = vdwg.mxu0
    %450 = vmatprep.subr.bf16.mxu0 %v195
    %451 = vmatpush1.bf16.msra.mxu0 %v194
    %452 = vmatprep.subr.bf16.mxu0 %v199
    %453 = vmatpush1.bf16.msra.mxu0 %v198
    %454 = vmatprep.subr.bf16.mxu0 0
    %455 = vmatpush1.bf16.msra.mxu0 0
    %456 = vmatprep.subr.bf16.mxu0 0
    %457 = vmatpush1.bf16.msra.mxu0 0
    %458 = vmatprep.subr.bf16.mxu0 0
    %459 = vmatpush1.bf16.msra.mxu0 0
    %460 = vmatprep.subr.bf16.mxu0 0
    %461 = vmatpush1.bf16.msra.mxu0 0
    %462 = vmatprep.subr.bf16.mxu0 0
    %463 = vmatpush1.bf16.msra.mxu0 0
    %464 = vmatprep.subr.bf16.mxu0 0
    %465 = vmatpush1.bf16.msra.mxu0 0
    %466 = vmatprep.subr.bf16.mxu0 0
    %467 = vmatpush1.bf16.msra.mxu0 0
    %468 = vmatprep.subr.bf16.mxu0 0
    %469 = vmatpush1.bf16.msra.mxu0 0
    %470 = vmatprep.subr.bf16.mxu0 0
    %471 = vmatpush1.bf16.msra.mxu0 0
    %472 = vmatprep.subr.bf16.mxu0 0
    %473 = vmatpush1.bf16.msra.mxu0 0
    %474 = vmatprep.subr.bf16.mxu0 0
    %475 = vmatpush1.bf16.msra.mxu0 0
    %476 = vmatprep.subr.bf16.mxu0 0
    %477 = vmatpush1.bf16.msra.mxu0 0
    %478 = vmatprep.subr.bf16.mxu0 0
    %479 = vmatpush1.bf16.msra.mxu0 0
    %480 = vmatprep.subr.bf16.mxu0 0
    %481 = vmatpush1.bf16.msra.mxu0 0
    %482 = vmatprep.mubr.bf16.mxu0 0
    %483 = vmatmul.mubr.bf16.gmra.mrb[0].mxu0 %v210
    %v484 = vpop.f32.mrb[0].mxu0
    %v485 = vadd.f32 %v159, %v484
    %v486 = vpop.f32.mrb[0].mxu0
    %v487 = vadd.f32 %v163, %v486
    %v488 = vpop.f32.mrb[0].mxu0
    %v489 = vadd.f32 %v159, %v488
    %v490 = vpop.f32.mrb[0].mxu0
    %v491 = vadd.f32 %v163, %v490
    %492 = vmatprep.mubr.bf16.mxu0 0
    %493 = vmatmul.mubr.bf16.gmra.mrb[0].mxu0 %v213
    %v494 = vpop.f32.mrb[0].mxu0
    %v495 = vadd.f32 %v159, %v494
    %v496 = vpop.f32.mrb[0].mxu0
    %v497 = vadd.f32 %v163, %v496
    %v498 = vpop.f32.mrb[0].mxu0
    %v499 = vadd.f32 %v159, %v498
    %v500 = vpop.f32.mrb[0].mxu0
    %v501 = vadd.f32 %v163, %v500
    %502 = vmatprep.mubr.bf16.mxu0 0
    %503 = vmatmul.mubr.bf16.gmra.mrb[0].mxu0 %v216
    %v504 = vpop.f32.mrb[0].mxu0
    %v505 = vadd.f32 %v159, %v504
    %v506 = vpop.f32.mrb[0].mxu0
    %v507 = vadd.f32 %v163, %v506
    %v508 = vpop.f32.mrb[0].mxu0
    %v509 = vadd.f32 %v159, %v508
    %v510 = vpop.f32.mrb[0].mxu0
    %v511 = vadd.f32 %v163, %v510
    %512 = vmatprep.mubr.bf16.mxu0 0
    %513 = vmatmul.mubr.bf16.gmra.mrb[0].mxu0 %v219
    %v514 = vpop.f32.mrb[0].mxu0
    %v515 = vadd.f32 %v159, %v514
    %v516 = vpop.f32.mrb[0].mxu0
    %v517 = vadd.f32 %v163, %v516
    %v518 = vpop.f32.mrb[0].mxu0
    %v519 = vadd.f32 %v159, %v518
    %v520 = vpop.f32.mrb[0].mxu0
    %v521 = vadd.f32 %v163, %v520
    %522 = vmatprep.mubr.bf16.mxu0 0
    %523 = vmatmul.mubr.bf16.gmra.mrb[0].mxu0 %v222
    %v524 = vpop.f32.mrb[0].mxu0
    %v525 = vadd.f32 %v159, %v524
    %v526 = vpop.f32.mrb[0].mxu0
    %v527 = vadd.f32 %v163, %v526
    %v528 = vpop.f32.mrb[0].mxu0
    %v529 = vadd.f32 %v159, %v528
    %v530 = vpop.f32.mrb[0].mxu0
    %v531 = vadd.f32 %v163, %v530
    %532 = vmatprep.mubr.bf16.mxu0 0
    %533 = vmatmul.mubr.bf16.gmra.mrb[0].mxu0 %v225
    %v534 = vpop.f32.mrb[0].mxu0
    %v535 = vadd.f32 %v159, %v534
    %v536 = vpop.f32.mrb[0].mxu0
    %v537 = vadd.f32 %v163, %v536
    %v538 = vpop.f32.mrb[0].mxu0
    %v539 = vadd.f32 %v159, %v538
    %v540 = vpop.f32.mrb[0].mxu0
    %v541 = vadd.f32 %v163, %v540
    %542 = vmatprep.mubr.bf16.mxu0 0
    %543 = vmatmul.mubr.bf16.gmra.mrb[0].mxu0 %v228
    %v544 = vpop.f32.mrb[0].mxu0
    %v545 = vadd.f32 %v159, %v544
    %v546 = vpop.f32.mrb[0].mxu0
    %v547 = vadd.f32 %v163, %v546
    %v548 = vpop.f32.mrb[0].mxu0
    %v549 = vadd.f32 %v159, %v548
    %v550 = vpop.f32.mrb[0].mxu0
    %v551 = vadd.f32 %v163, %v550
    %552 = vmatprep.mubr.bf16.mxu0 0
    %553 = vmatmul.mubr.bf16.gmra.mrb[0].mxu0 %v231
    %v554 = vpop.f32.mrb[0].mxu0
    %v555 = vadd.f32 %v159, %v554
    %v556 = vpop.f32.mrb[0].mxu0
    %v557 = vadd.f32 %v163, %v556
    %v558 = vpop.f32.mrb[0].mxu0
    %v559 = vadd.f32 %v159, %v558
    %v560 = vpop.f32.mrb[0].mxu0
    %v561 = vadd.f32 %v163, %v560
    %562 = vmatprep.mubr.bf16.mxu0 0
    %563 = vmatmul.mubr.bf16.gmra.mrb[0].mxu0 %v234
    %v564 = vpop.f32.mrb[0].mxu0
    %v565 = vadd.f32 %v159, %v564
    %v566 = vpop.f32.mrb[0].mxu0
    %v567 = vadd.f32 %v163, %v566
    %v568 = vpop.f32.mrb[0].mxu0
    %v569 = vadd.f32 %v159, %v568
    %v570 = vpop.f32.mrb[0].mxu0
    %v571 = vadd.f32 %v163, %v570
    %572 = vmatprep.mubr.bf16.mxu0 0
    %573 = vmatmul.mubr.bf16.gmra.mrb[0].mxu0 %v237
    %v574 = vpop.f32.mrb[0].mxu0
    %v575 = vadd.f32 %v159, %v574
    %v576 = vpop.f32.mrb[0].mxu0
    %v577 = vadd.f32 %v163, %v576
    %v578 = vpop.f32.mrb[0].mxu0
    %v579 = vadd.f32 %v159, %v578
    %v580 = vpop.f32.mrb[0].mxu0
    %v581 = vadd.f32 %v163, %v580
    %582 = vmatprep.mubr.bf16.mxu0 0
    %583 = vmatmul.mubr.bf16.gmra.mrb[0].mxu0 %v240
    %v584 = vpop.f32.mrb[0].mxu0
    %v585 = vadd.f32 %v159, %v584
    %v586 = vpop.f32.mrb[0].mxu0
    %v587 = vadd.f32 %v163, %v586
    %v588 = vpop.f32.mrb[0].mxu0
    %v589 = vadd.f32 %v159, %v588
    %v590 = vpop.f32.mrb[0].mxu0
    %v591 = vadd.f32 %v163, %v590
    %592 = vmatprep.mubr.bf16.mxu0 0
    %593 = vmatmul.mubr.bf16.gmra.mrb[0].mxu0 %v243
    %v594 = vpop.f32.mrb[0].mxu0
    %v595 = vadd.f32 %v159, %v594
    %v596 = vpop.f32.mrb[0].mxu0
    %v597 = vadd.f32 %v163, %v596
    %v598 = vpop.f32.mrb[0].mxu0
    %v599 = vadd.f32 %v159, %v598
    %v600 = vpop.f32.mrb[0].mxu0
    %v601 = vadd.f32 %v163, %v600
    %602 = vmatprep.mubr.bf16.mxu0 0
    %603 = vmatmul.mubr.bf16.gmra.mrb[0].mxu0 %v246
    %v604 = vpop.f32.mrb[0].mxu0
    %v605 = vadd.f32 %v159, %v604
    %v606 = vpop.f32.mrb[0].mxu0
    %v607 = vadd.f32 %v163, %v606
    %v608 = vpop.f32.mrb[0].mxu0
    %v609 = vadd.f32 %v159, %v608
    %v610 = vpop.f32.mrb[0].mxu0
    %v611 = vadd.f32 %v163, %v610
    %612 = vmatprep.mubr.bf16.mxu0 0
    %613 = vmatmul.mubr.bf16.gmra.mrb[0].mxu0 %v249
    %v614 = vpop.f32.mrb[0].mxu0
    %v615 = vadd.f32 %v159, %v614
    %v616 = vpop.f32.mrb[0].mxu0
    %v617 = vadd.f32 %v163, %v616
    %v618 = vpop.f32.mrb[0].mxu0
    %v619 = vadd.f32 %v159, %v618
    %v620 = vpop.f32.mrb[0].mxu0
    %v621 = vadd.f32 %v163, %v620
    %622 = vmatprep.mubr.bf16.mxu0 0
    %623 = vmatmul.mubr.bf16.gmra.mrb[0].mxu0 %v252
    %v624 = vpop.f32.mrb[0].mxu0
    %v625 = vadd.f32 %v159, %v624
    %v626 = vpop.f32.mrb[0].mxu0
    %v627 = vadd.f32 %v163, %v626
    %v628 = vpop.f32.mrb[0].mxu0
    %v629 = vadd.f32 %v159, %v628
    %v630 = vpop.f32.mrb[0].mxu0
    %v631 = vadd.f32 %v163, %v630
    %632 = vmatprep.mubr.bf16.mxu0 0
    %633 = vmatmul.mubr.bf16.gmra.mrb[0].mxu0 %v255
    %v634 = vpop.f32.mrb[0].mxu0
    %v635 = vadd.f32 %v159, %v634
    %v636 = vpop.f32.mrb[0].mxu0
    %v637 = vadd.f32 %v163, %v636
    %v638 = vpop.f32.mrb[0].mxu0
    %v639 = vadd.f32 %v159, %v638
    %v640 = vpop.f32.mrb[0].mxu0
    %v641 = vadd.f32 %v163, %v640
    %642 = vdwg.mxu0
    %v643 = vld [vmem:[%s3] sm:$0xf]
    %v644 = vld [vmem:[%s4] sm:$0xf]
    %v645 = vadd.f32 %v292, %v294
    %v646 = vadd.f32 %v645, %v485
    %v647 = vadd.f32 %v646, %v487
    %648 = vadd.xlane.f32.xlu0 %v647
    %v649 = vpop.xlane.xlu0 %648
    %v650 = vadd.f32 %v296, %v298
    %v651 = vadd.f32 %v650, %v489
    %v652 = vadd.f32 %v651, %v491
    %653 = vadd.xlane.f32.xlu0 %v652
    %v654 = vpop.xlane.xlu0 %653
    %v655 = vadd.f32 %v302, %v304
    %v656 = vadd.f32 %v655, %v495
    %v657 = vadd.f32 %v656, %v497
    %658 = vadd.xlane.f32.xlu0 %v657
    %v659 = vpop.xlane.xlu0 %658
    %v660 = vadd.f32 %v306, %v308
    %v661 = vadd.f32 %v660, %v499
    %v662 = vadd.f32 %v661, %v501
    %663 = vadd.xlane.f32.xlu0 %v662
    %v664 = vpop.xlane.xlu0 %663
    %v665 = vadd.f32 %v312, %v314
    %v666 = vadd.f32 %v665, %v505
    %v667 = vadd.f32 %v666, %v507
    %668 = vadd.xlane.f32.xlu0 %v667
    %v669 = vpop.xlane.xlu0 %668
    %v670 = vadd.f32 %v316, %v318
    %v671 = vadd.f32 %v670, %v509
    %v672 = vadd.f32 %v671, %v511
    %673 = vadd.xlane.f32.xlu0 %v672
    %v674 = vpop.xlane.xlu0 %673
    %v675 = vadd.f32 %v322, %v324
    %v676 = vadd.f32 %v675, %v515
    %v677 = vadd.f32 %v676, %v517
    %678 = vadd.xlane.f32.xlu0 %v677
    %v679 = vpop.xlane.xlu0 %678
    %v680 = vadd.f32 %v326, %v328
    %v681 = vadd.f32 %v680, %v519
    %v682 = vadd.f32 %v681, %v521
    %683 = vadd.xlane.f32.xlu0 %v682
    %v684 = vpop.xlane.xlu0 %683
    %v685 = vadd.f32 %v332, %v334
    %v686 = vadd.f32 %v685, %v525
    %v687 = vadd.f32 %v686, %v527
    %688 = vadd.xlane.f32.xlu0 %v687
    %v689 = vpop.xlane.xlu0 %688
    %v690 = vadd.f32 %v336, %v338
    %v691 = vadd.f32 %v690, %v529
    %v692 = vadd.f32 %v691, %v531
    %693 = vadd.xlane.f32.xlu0 %v692
    %v694 = vpop.xlane.xlu0 %693
    %v695 = vadd.f32 %v342, %v344
    %v696 = vadd.f32 %v695, %v535
    %v697 = vadd.f32 %v696, %v537
    %698 = vadd.xlane.f32.xlu0 %v697
    %v699 = vpop.xlane.xlu0 %698
    %v700 = vadd.f32 %v346, %v348
    %v701 = vadd.f32 %v700, %v539
    %v702 = vadd.f32 %v701, %v541
    %703 = vadd.xlane.f32.xlu0 %v702
    %v704 = vpop.xlane.xlu0 %703
    %v705 = vadd.f32 %v352, %v354
    %v706 = vadd.f32 %v705, %v545
    %v707 = vadd.f32 %v706, %v547
    %708 = vadd.xlane.f32.xlu0 %v707
    %v709 = vpop.xlane.xlu0 %708
    %v710 = vadd.f32 %v356, %v358
    %v711 = vadd.f32 %v710, %v549
    %v712 = vadd.f32 %v711, %v551
    %713 = vadd.xlane.f32.xlu0 %v712
    %v714 = vpop.xlane.xlu0 %713
    %v715 = vadd.f32 %v362, %v364
    %v716 = vadd.f32 %v715, %v555
    %v717 = vadd.f32 %v716, %v557
    %718 = vadd.xlane.f32.xlu0 %v717
    %v719 = vpop.xlane.xlu0 %718
    %v720 = vadd.f32 %v366, %v368
    %v721 = vadd.f32 %v720, %v559
    %v722 = vadd.f32 %v721, %v561
    %723 = vadd.xlane.f32.xlu0 %v722
    %v724 = vpop.xlane.xlu0 %723
    %v725 = vadd.f32 %v372, %v374
    %v726 = vadd.f32 %v725, %v565
    %v727 = vadd.f32 %v726, %v567
    %728 = vadd.xlane.f32.xlu0 %v727
    %v729 = vpop.xlane.xlu0 %728
    %v730 = vadd.f32 %v376, %v378
    %v731 = vadd.f32 %v730, %v569
    %v732 = vadd.f32 %v731, %v571
    %733 = vadd.xlane.f32.xlu0 %v732
    %v734 = vpop.xlane.xlu0 %733
    %v735 = vadd.f32 %v382, %v384
    %v736 = vadd.f32 %v735, %v575
    %v737 = vadd.f32 %v736, %v577
    %738 = vadd.xlane.f32.xlu0 %v737
    %v739 = vpop.xlane.xlu0 %738
    %v740 = vadd.f32 %v386, %v388
    %v741 = vadd.f32 %v740, %v579
    %v742 = vadd.f32 %v741, %v581
    %743 = vadd.xlane.f32.xlu0 %v742
    %v744 = vpop.xlane.xlu0 %743
    %v745 = vadd.f32 %v392, %v394
    %v746 = vadd.f32 %v745, %v585
    %v747 = vadd.f32 %v746, %v587
    %748 = vadd.xlane.f32.xlu0 %v747
    %v749 = vpop.xlane.xlu0 %748
    %v750 = vadd.f32 %v396, %v398
    %v751 = vadd.f32 %v750, %v589
    %v752 = vadd.f32 %v751, %v591
    %753 = vadd.xlane.f32.xlu0 %v752
    %v754 = vpop.xlane.xlu0 %753
    %v755 = vadd.f32 %v402, %v404
    %v756 = vadd.f32 %v755, %v595
    %v757 = vadd.f32 %v756, %v597
    %758 = vadd.xlane.f32.xlu0 %v757
    %v759 = vpop.xlane.xlu0 %758
    %v760 = vadd.f32 %v406, %v408
    %v761 = vadd.f32 %v760, %v599
    %v762 = vadd.f32 %v761, %v601
    %763 = vadd.xlane.f32.xlu0 %v762
    %v764 = vpop.xlane.xlu0 %763
    %v765 = vadd.f32 %v412, %v414
    %v766 = vadd.f32 %v765, %v605
    %v767 = vadd.f32 %v766, %v607
    %768 = vadd.xlane.f32.xlu0 %v767
    %v769 = vpop.xlane.xlu0 %768
    %v770 = vadd.f32 %v416, %v418
    %v771 = vadd.f32 %v770, %v609
    %v772 = vadd.f32 %v771, %v611
    %773 = vadd.xlane.f32.xlu0 %v772
    %v774 = vpop.xlane.xlu0 %773
    %v775 = vadd.f32 %v422, %v424
    %v776 = vadd.f32 %v775, %v615
    %v777 = vadd.f32 %v776, %v617
    %778 = vadd.xlane.f32.xlu0 %v777
    %v779 = vpop.xlane.xlu0 %778
    %v780 = vadd.f32 %v426, %v428
    %v781 = vadd.f32 %v780, %v619
    %v782 = vadd.f32 %v781, %v621
    %783 = vadd.xlane.f32.xlu0 %v782
    %v784 = vpop.xlane.xlu0 %783
    %v785 = vadd.f32 %v432, %v434
    %v786 = vadd.f32 %v785, %v625
    %v787 = vadd.f32 %v786, %v627
    %788 = vadd.xlane.f32.xlu0 %v787
    %v789 = vpop.xlane.xlu0 %788
    %v790 = vadd.f32 %v436, %v438
    %v791 = vadd.f32 %v790, %v629
    %v792 = vadd.f32 %v791, %v631
    %793 = vadd.xlane.f32.xlu0 %v792
    %v794 = vpop.xlane.xlu0 %793
    %v795 = vadd.f32 %v442, %v444
    %v796 = vadd.f32 %v795, %v635
    %v797 = vadd.f32 %v796, %v637
    %798 = vadd.xlane.f32.xlu0 %v797
    %v799 = vpop.xlane.xlu0 %798
    %v800 = vadd.f32 %v446, %v448
    %v801 = vadd.f32 %v800, %v639
    %v802 = vadd.f32 %v801, %v641
    %803 = vadd.xlane.f32.xlu0 %v802
    %v804 = vpop.xlane.xlu0 %803
    %v805 = vmul.f32 %v649, 0.001953125
    %v806 = vmul.f32 %v654, 0.001953125
    %v807 = vmul.f32 %v659, 0.001953125
    %v808 = vmul.f32 %v664, 0.001953125
    %v809 = vmul.f32 %v669, 0.001953125
    %v810 = vmul.f32 %v674, 0.001953125
    %v811 = vmul.f32 %v679, 0.001953125
    %v812 = vmul.f32 %v684, 0.001953125
    %v813 = vmul.f32 %v689, 0.001953125
    %v814 = vmul.f32 %v694, 0.001953125
    %v815 = vmul.f32 %v699, 0.001953125
    %v816 = vmul.f32 %v704, 0.001953125
    %v817 = vmul.f32 %v709, 0.001953125
    %v818 = vmul.f32 %v714, 0.001953125
    %v819 = vmul.f32 %v719, 0.001953125
    %v820 = vmul.f32 %v724, 0.001953125
    %v821 = vmul.f32 %v729, 0.001953125
    %v822 = vmul.f32 %v734, 0.001953125
    %v823 = vmul.f32 %v739, 0.001953125
    %v824 = vmul.f32 %v744, 0.001953125
    %v825 = vmul.f32 %v749, 0.001953125
    %v826 = vmul.f32 %v754, 0.001953125
    %v827 = vmul.f32 %v759, 0.001953125
    %v828 = vmul.f32 %v764, 0.001953125
    %v829 = vmul.f32 %v769, 0.001953125
    %v830 = vmul.f32 %v774, 0.001953125
    %v831 = vmul.f32 %v779, 0.001953125
    %v832 = vmul.f32 %v784, 0.001953125
    %v833 = vmul.f32 %v789, 0.001953125
    %v834 = vmul.f32 %v794, 0.001953125
    %v835 = vmul.f32 %v799, 0.001953125
    %v836 = vmul.f32 %v804, 0.001953125
    %v837 = vmul.f32 %v292, %v292
    %v838 = vmul.f32 %v294, %v294
    %v839 = vmul.f32 %v485, %v485
    %v840 = vmul.f32 %v487, %v487
    %v841 = vmul.f32 %v296, %v296
    %v842 = vmul.f32 %v298, %v298
    %v843 = vmul.f32 %v489, %v489
    %v844 = vmul.f32 %v491, %v491
    %v845 = vmul.f32 %v302, %v302
    %v846 = vmul.f32 %v304, %v304
    %v847 = vmul.f32 %v495, %v495
    %v848 = vmul.f32 %v497, %v497
    %v849 = vmul.f32 %v306, %v306
    %v850 = vmul.f32 %v308, %v308
    %v851 = vmul.f32 %v499, %v499
    %v852 = vmul.f32 %v501, %v501
    %v853 = vmul.f32 %v312, %v312
    %v854 = vmul.f32 %v314, %v314
    %v855 = vmul.f32 %v505, %v505
    %v856 = vmul.f32 %v507, %v507
    %v857 = vmul.f32 %v316, %v316
    %v858 = vmul.f32 %v318, %v318
    %v859 = vmul.f32 %v509, %v509
    %v860 = vmul.f32 %v511, %v511
    %v861 = vmul.f32 %v322, %v322
    %v862 = vmul.f32 %v324, %v324
    %v863 = vmul.f32 %v515, %v515
    %v864 = vmul.f32 %v517, %v517
    %v865 = vmul.f32 %v326, %v326
    %v866 = vmul.f32 %v328, %v328
    %v867 = vmul.f32 %v519, %v519
    %v868 = vmul.f32 %v521, %v521
    %v869 = vmul.f32 %v332, %v332
    %v870 = vmul.f32 %v334, %v334
    %v871 = vmul.f32 %v525, %v525
    %v872 = vmul.f32 %v527, %v527
    %v873 = vmul.f32 %v336, %v336
    %v874 = vmul.f32 %v338, %v338
    %v875 = vmul.f32 %v529, %v529
    %v876 = vmul.f32 %v531, %v531
    %v877 = vmul.f32 %v342, %v342
    %v878 = vmul.f32 %v344, %v344
    %v879 = vmul.f32 %v535, %v535
    %v880 = vmul.f32 %v537, %v537
    %v881 = vmul.f32 %v346, %v346
    %v882 = vmul.f32 %v348, %v348
    %v883 = vmul.f32 %v539, %v539
    %v884 = vmul.f32 %v541, %v541
    %v885 = vmul.f32 %v352, %v352
    %v886 = vmul.f32 %v354, %v354
    %v887 = vmul.f32 %v545, %v545
    %v888 = vmul.f32 %v547, %v547
    %v889 = vmul.f32 %v356, %v356
    %v890 = vmul.f32 %v358, %v358
    %v891 = vmul.f32 %v549, %v549
    %v892 = vmul.f32 %v551, %v551
    %v893 = vmul.f32 %v362, %v362
    %v894 = vmul.f32 %v364, %v364
    %v895 = vmul.f32 %v555, %v555
    %v896 = vmul.f32 %v557, %v557
    %v897 = vmul.f32 %v366, %v366
    %v898 = vmul.f32 %v368, %v368
    %v899 = vmul.f32 %v559, %v559
    %v900 = vmul.f32 %v561, %v561
    %v901 = vmul.f32 %v372, %v372
    %v902 = vmul.f32 %v374, %v374
    %v903 = vmul.f32 %v565, %v565
    %v904 = vmul.f32 %v567, %v567
    %v905 = vmul.f32 %v376, %v376
    %v906 = vmul.f32 %v378, %v378
    %v907 = vmul.f32 %v569, %v569
    %v908 = vmul.f32 %v571, %v571
    %v909 = vmul.f32 %v382, %v382
    %v910 = vmul.f32 %v384, %v384
    %v911 = vmul.f32 %v575, %v575
    %v912 = vmul.f32 %v577, %v577
    %v913 = vmul.f32 %v386, %v386
    %v914 = vmul.f32 %v388, %v388
    %v915 = vmul.f32 %v579, %v579
    %v916 = vmul.f32 %v581, %v581
    %v917 = vmul.f32 %v392, %v392
    %v918 = vmul.f32 %v394, %v394
    %v919 = vmul.f32 %v585, %v585
    %v920 = vmul.f32 %v587, %v587
    %v921 = vmul.f32 %v396, %v396
    %v922 = vmul.f32 %v398, %v398
    %v923 = vmul.f32 %v589, %v589
    %v924 = vmul.f32 %v591, %v591
    %v925 = vmul.f32 %v402, %v402
    %v926 = vmul.f32 %v404, %v404
    %v927 = vmul.f32 %v595, %v595
    %v928 = vmul.f32 %v597, %v597
    %v929 = vmul.f32 %v406, %v406
    %v930 = vmul.f32 %v408, %v408
    %v931 = vmul.f32 %v599, %v599
    %v932 = vmul.f32 %v601, %v601
    %v933 = vmul.f32 %v412, %v412
    %v934 = vmul.f32 %v414, %v414
    %v935 = vmul.f32 %v605, %v605
    %v936 = vmul.f32 %v607, %v607
    %v937 = vmul.f32 %v416, %v416
    %v938 = vmul.f32 %v418, %v418
    %v939 = vmul.f32 %v609, %v609
    %v940 = vmul.f32 %v611, %v611
    %v941 = vmul.f32 %v422, %v422
    %v942 = vmul.f32 %v424, %v424
    %v943 = vmul.f32 %v615, %v615
    %v944 = vmul.f32 %v617, %v617
    %v945 = vmul.f32 %v426, %v426
    %v946 = vmul.f32 %v428, %v428
    %v947 = vmul.f32 %v619, %v619
    %v948 = vmul.f32 %v621, %v621
    %v949 = vmul.f32 %v432, %v432
    %v950 = vmul.f32 %v434, %v434
    %v951 = vmul.f32 %v625, %v625
    %v952 = vmul.f32 %v627, %v627
    %v953 = vmul.f32 %v436, %v436
    %v954 = vmul.f32 %v438, %v438
    %v955 = vmul.f32 %v629, %v629
    %v956 = vmul.f32 %v631, %v631
    %v957 = vmul.f32 %v442, %v442
    %v958 = vmul.f32 %v444, %v444
    %v959 = vmul.f32 %v635, %v635
    %v960 = vmul.f32 %v637, %v637
    %v961 = vmul.f32 %v446, %v446
    %v962 = vmul.f32 %v448, %v448
    %v963 = vmul.f32 %v639, %v639
    %v964 = vmul.f32 %v641, %v641
    %v965 = vadd.f32 %v837, %v838
    %v966 = vadd.f32 %v965, %v839
    %v967 = vadd.f32 %v966, %v840
    %968 = vadd.xlane.f32.xlu0 %v967
    %v969 = vpop.xlane.xlu0 %968
    %v970 = vadd.f32 %v841, %v842
    %v971 = vadd.f32 %v970, %v843
    %v972 = vadd.f32 %v971, %v844
    %973 = vadd.xlane.f32.xlu0 %v972
    %v974 = vpop.xlane.xlu0 %973
    %v975 = vadd.f32 %v845, %v846
    %v976 = vadd.f32 %v975, %v847
    %v977 = vadd.f32 %v976, %v848
    %978 = vadd.xlane.f32.xlu0 %v977
    %v979 = vpop.xlane.xlu0 %978
    %v980 = vadd.f32 %v849, %v850
    %v981 = vadd.f32 %v980, %v851
    %v982 = vadd.f32 %v981, %v852
    %983 = vadd.xlane.f32.xlu0 %v982
    %v984 = vpop.xlane.xlu0 %983
    %v985 = vadd.f32 %v853, %v854
    %v986 = vadd.f32 %v985, %v855
    %v987 = vadd.f32 %v986, %v856
    %988 = vadd.xlane.f32.xlu0 %v987
    %v989 = vpop.xlane.xlu0 %988
    %v990 = vadd.f32 %v857, %v858
    %v991 = vadd.f32 %v990, %v859
    %v992 = vadd.f32 %v991, %v860
    %993 = vadd.xlane.f32.xlu0 %v992
    %v994 = vpop.xlane.xlu0 %993
    %v995 = vadd.f32 %v861, %v862
    %v996 = vadd.f32 %v995, %v863
    %v997 = vadd.f32 %v996, %v864
    %998 = vadd.xlane.f32.xlu0 %v997
    %v999 = vpop.xlane.xlu0 %998
    %v1000 = vadd.f32 %v865, %v866
    %v1001 = vadd.f32 %v1000, %v867
    %v1002 = vadd.f32 %v1001, %v868
    %1003 = vadd.xlane.f32.xlu0 %v1002
    %v1004 = vpop.xlane.xlu0 %1003
    %v1005 = vadd.f32 %v869, %v870
    %v1006 = vadd.f32 %v1005, %v871
    %v1007 = vadd.f32 %v1006, %v872
    %1008 = vadd.xlane.f32.xlu0 %v1007
    %v1009 = vpop.xlane.xlu0 %1008
    %v1010 = vadd.f32 %v873, %v874
    %v1011 = vadd.f32 %v1010, %v875
    %v1012 = vadd.f32 %v1011, %v876
    %1013 = vadd.xlane.f32.xlu0 %v1012
    %v1014 = vpop.xlane.xlu0 %1013
    %v1015 = vadd.f32 %v877, %v878
    %v1016 = vadd.f32 %v1015, %v879
    %v1017 = vadd.f32 %v1016, %v880
    %1018 = vadd.xlane.f32.xlu0 %v1017
    %v1019 = vpop.xlane.xlu0 %1018
    %v1020 = vadd.f32 %v881, %v882
    %v1021 = vadd.f32 %v1020, %v883
    %v1022 = vadd.f32 %v1021, %v884
    %1023 = vadd.xlane.f32.xlu0 %v1022
    %v1024 = vpop.xlane.xlu0 %1023
    %v1025 = vadd.f32 %v885, %v886
    %v1026 = vadd.f32 %v1025, %v887
    %v1027 = vadd.f32 %v1026, %v888
    %1028 = vadd.xlane.f32.xlu0 %v1027
    %v1029 = vpop.xlane.xlu0 %1028
    %v1030 = vadd.f32 %v889, %v890
    %v1031 = vadd.f32 %v1030, %v891
    %v1032 = vadd.f32 %v1031, %v892
    %1033 = vadd.xlane.f32.xlu0 %v1032
    %v1034 = vpop.xlane.xlu0 %1033
    %v1035 = vadd.f32 %v893, %v894
    %v1036 = vadd.f32 %v1035, %v895
    %v1037 = vadd.f32 %v1036, %v896
    %1038 = vadd.xlane.f32.xlu0 %v1037
    %v1039 = vpop.xlane.xlu0 %1038
    %v1040 = vadd.f32 %v897, %v898
    %v1041 = vadd.f32 %v1040, %v899
    %v1042 = vadd.f32 %v1041, %v900
    %1043 = vadd.xlane.f32.xlu0 %v1042
    %v1044 = vpop.xlane.xlu0 %1043
    %v1045 = vadd.f32 %v901, %v902
    %v1046 = vadd.f32 %v1045, %v903
    %v1047 = vadd.f32 %v1046, %v904
    %1048 = vadd.xlane.f32.xlu0 %v1047
    %v1049 = vpop.xlane.xlu0 %1048
    %v1050 = vadd.f32 %v905, %v906
    %v1051 = vadd.f32 %v1050, %v907
    %v1052 = vadd.f32 %v1051, %v908
    %1053 = vadd.xlane.f32.xlu0 %v1052
    %v1054 = vpop.xlane.xlu0 %1053
    %v1055 = vadd.f32 %v909, %v910
    %v1056 = vadd.f32 %v1055, %v911
    %v1057 = vadd.f32 %v1056, %v912
    %1058 = vadd.xlane.f32.xlu0 %v1057
    %v1059 = vpop.xlane.xlu0 %1058
    %v1060 = vadd.f32 %v913, %v914
    %v1061 = vadd.f32 %v1060, %v915
    %v1062 = vadd.f32 %v1061, %v916
    %1063 = vadd.xlane.f32.xlu0 %v1062
    %v1064 = vpop.xlane.xlu0 %1063
    %v1065 = vadd.f32 %v917, %v918
    %v1066 = vadd.f32 %v1065, %v919
    %v1067 = vadd.f32 %v1066, %v920
    %1068 = vadd.xlane.f32.xlu0 %v1067
    %v1069 = vpop.xlane.xlu0 %1068
    %v1070 = vadd.f32 %v921, %v922
    %v1071 = vadd.f32 %v1070, %v923
    %v1072 = vadd.f32 %v1071, %v924
    %1073 = vadd.xlane.f32.xlu0 %v1072
    %v1074 = vpop.xlane.xlu0 %1073
    %v1075 = vadd.f32 %v925, %v926
    %v1076 = vadd.f32 %v1075, %v927
    %v1077 = vadd.f32 %v1076, %v928
    %1078 = vadd.xlane.f32.xlu0 %v1077
    %v1079 = vpop.xlane.xlu0 %1078
    %v1080 = vadd.f32 %v929, %v930
    %v1081 = vadd.f32 %v1080, %v931
    %v1082 = vadd.f32 %v1081, %v932
    %1083 = vadd.xlane.f32.xlu0 %v1082
    %v1084 = vpop.xlane.xlu0 %1083
    %v1085 = vadd.f32 %v933, %v934
    %v1086 = vadd.f32 %v1085, %v935
    %v1087 = vadd.f32 %v1086, %v936
    %1088 = vadd.xlane.f32.xlu0 %v1087
    %v1089 = vpop.xlane.xlu0 %1088
    %v1090 = vadd.f32 %v937, %v938
    %v1091 = vadd.f32 %v1090, %v939
    %v1092 = vadd.f32 %v1091, %v940
    %1093 = vadd.xlane.f32.xlu0 %v1092
    %v1094 = vpop.xlane.xlu0 %1093
    %v1095 = vadd.f32 %v941, %v942
    %v1096 = vadd.f32 %v1095, %v943
    %v1097 = vadd.f32 %v1096, %v944
    %1098 = vadd.xlane.f32.xlu0 %v1097
    %v1099 = vpop.xlane.xlu0 %1098
    %v1100 = vadd.f32 %v945, %v946
    %v1101 = vadd.f32 %v1100, %v947
    %v1102 = vadd.f32 %v1101, %v948
    %1103 = vadd.xlane.f32.xlu0 %v1102
    %v1104 = vpop.xlane.xlu0 %1103
    %v1105 = vadd.f32 %v949, %v950
    %v1106 = vadd.f32 %v1105, %v951
    %v1107 = vadd.f32 %v1106, %v952
    %1108 = vadd.xlane.f32.xlu0 %v1107
    %v1109 = vpop.xlane.xlu0 %1108
    %v1110 = vadd.f32 %v953, %v954
    %v1111 = vadd.f32 %v1110, %v955
    %v1112 = vadd.f32 %v1111, %v956
    %1113 = vadd.xlane.f32.xlu0 %v1112
    %v1114 = vpop.xlane.xlu0 %1113
    %v1115 = vadd.f32 %v957, %v958
    %v1116 = vadd.f32 %v1115, %v959
    %v1117 = vadd.f32 %v1116, %v960
    %1118 = vadd.xlane.f32.xlu0 %v1117
    %v1119 = vpop.xlane.xlu0 %1118
    %v1120 = vadd.f32 %v961, %v962
    %v1121 = vadd.f32 %v1120, %v963
    %v1122 = vadd.f32 %v1121, %v964
    %1123 = vadd.xlane.f32.xlu0 %v1122
    %v1124 = vpop.xlane.xlu0 %1123
    %v1125 = vmul.f32 %v969, 0.001953125
    %v1126 = vmul.f32 %v974, 0.001953125
    %v1127 = vmul.f32 %v979, 0.001953125
    %v1128 = vmul.f32 %v984, 0.001953125
    %v1129 = vmul.f32 %v989, 0.001953125
    %v1130 = vmul.f32 %v994, 0.001953125
    %v1131 = vmul.f32 %v999, 0.001953125
    %v1132 = vmul.f32 %v1004, 0.001953125
    %v1133 = vmul.f32 %v1009, 0.001953125
    %v1134 = vmul.f32 %v1014, 0.001953125
    %v1135 = vmul.f32 %v1019, 0.001953125
    %v1136 = vmul.f32 %v1024, 0.001953125
    %v1137 = vmul.f32 %v1029, 0.001953125
    %v1138 = vmul.f32 %v1034, 0.001953125
    %v1139 = vmul.f32 %v1039, 0.001953125
    %v1140 = vmul.f32 %v1044, 0.001953125
    %v1141 = vmul.f32 %v1049, 0.001953125
    %v1142 = vmul.f32 %v1054, 0.001953125
    %v1143 = vmul.f32 %v1059, 0.001953125
    %v1144 = vmul.f32 %v1064, 0.001953125
    %v1145 = vmul.f32 %v1069, 0.001953125
    %v1146 = vmul.f32 %v1074, 0.001953125
    %v1147 = vmul.f32 %v1079, 0.001953125
    %v1148 = vmul.f32 %v1084, 0.001953125
    %v1149 = vmul.f32 %v1089, 0.001953125
    %v1150 = vmul.f32 %v1094, 0.001953125
    %v1151 = vmul.f32 %v1099, 0.001953125
    %v1152 = vmul.f32 %v1104, 0.001953125
    %v1153 = vmul.f32 %v1109, 0.001953125
    %v1154 = vmul.f32 %v1114, 0.001953125
    %v1155 = vmul.f32 %v1119, 0.001953125
    %v1156 = vmul.f32 %v1124, 0.001953125
    %v1157 = vmul.f32 %v805, %v805
    %v1158 = vmul.f32 %v806, %v806
    %v1159 = vmul.f32 %v807, %v807
    %v1160 = vmul.f32 %v808, %v808
    %v1161 = vmul.f32 %v809, %v809
    %v1162 = vmul.f32 %v810, %v810
    %v1163 = vmul.f32 %v811, %v811
    %v1164 = vmul.f32 %v812, %v812
    %v1165 = vmul.f32 %v813, %v813
    %v1166 = vmul.f32 %v814, %v814
    %v1167 = vmul.f32 %v815, %v815
    %v1168 = vmul.f32 %v816, %v816
    %v1169 = vmul.f32 %v817, %v817
    %v1170 = vmul.f32 %v818, %v818
    %v1171 = vmul.f32 %v819, %v819
    %v1172 = vmul.f32 %v820, %v820
    %v1173 = vmul.f32 %v821, %v821
    %v1174 = vmul.f32 %v822, %v822
    %v1175 = vmul.f32 %v823, %v823
    %v1176 = vmul.f32 %v824, %v824
    %v1177 = vmul.f32 %v825, %v825
    %v1178 = vmul.f32 %v826, %v826
    %v1179 = vmul.f32 %v827, %v827
    %v1180 = vmul.f32 %v828, %v828
    %v1181 = vmul.f32 %v829, %v829
    %v1182 = vmul.f32 %v830, %v830
    %v1183 = vmul.f32 %v831, %v831
    %v1184 = vmul.f32 %v832, %v832
    %v1185 = vmul.f32 %v833, %v833
    %v1186 = vmul.f32 %v834, %v834
    %v1187 = vmul.f32 %v835, %v835
    %v1188 = vmul.f32 %v836, %v836
    %v1189 = vsub.f32 %v1125, %v1157
    %v1190 = vsub.f32 %v1126, %v1158
    %v1191 = vsub.f32 %v1127, %v1159
    %v1192 = vsub.f32 %v1128, %v1160
    %v1193 = vsub.f32 %v1129, %v1161
    %v1194 = vsub.f32 %v1130, %v1162
    %v1195 = vsub.f32 %v1131, %v1163
    %v1196 = vsub.f32 %v1132, %v1164
    %v1197 = vsub.f32 %v1133, %v1165
    %v1198 = vsub.f32 %v1134, %v1166
    %v1199 = vsub.f32 %v1135, %v1167
    %v1200 = vsub.f32 %v1136, %v1168
    %v1201 = vsub.f32 %v1137, %v1169
    %v1202 = vsub.f32 %v1138, %v1170
    %v1203 = vsub.f32 %v1139, %v1171
    %v1204 = vsub.f32 %v1140, %v1172
    %v1205 = vsub.f32 %v1141, %v1173
    %v1206 = vsub.f32 %v1142, %v1174
    %v1207 = vsub.f32 %v1143, %v1175
    %v1208 = vsub.f32 %v1144, %v1176
    %v1209 = vsub.f32 %v1145, %v1177
    %v1210 = vsub.f32 %v1146, %v1178
    %v1211 = vsub.f32 %v1147, %v1179
    %v1212 = vsub.f32 %v1148, %v1180
    %v1213 = vsub.f32 %v1149, %v1181
    %v1214 = vsub.f32 %v1150, %v1182
    %v1215 = vsub.f32 %v1151, %v1183
    %v1216 = vsub.f32 %v1152, %v1184
    %v1217 = vsub.f32 %v1153, %v1185
    %v1218 = vsub.f32 %v1154, %v1186
    %v1219 = vsub.f32 %v1155, %v1187
    %v1220 = vsub.f32 %v1156, %v1188
    %v1221 = vsub.f32 %v292, %v805
    %v1222 = vsub.f32 %v294, %v805
    %v1223 = vsub.f32 %v485, %v805
    %v1224 = vsub.f32 %v487, %v805
    %v1225 = vsub.f32 %v296, %v806
    %v1226 = vsub.f32 %v298, %v806
    %v1227 = vsub.f32 %v489, %v806
    %v1228 = vsub.f32 %v491, %v806
    %v1229 = vsub.f32 %v302, %v807
    %v1230 = vsub.f32 %v304, %v807
    %v1231 = vsub.f32 %v495, %v807
    %v1232 = vsub.f32 %v497, %v807
    %v1233 = vsub.f32 %v306, %v808
    %v1234 = vsub.f32 %v308, %v808
    %v1235 = vsub.f32 %v499, %v808
    %v1236 = vsub.f32 %v501, %v808
    %v1237 = vsub.f32 %v312, %v809
    %v1238 = vsub.f32 %v314, %v809
    %v1239 = vsub.f32 %v505, %v809
    %v1240 = vsub.f32 %v507, %v809
    %v1241 = vsub.f32 %v316, %v810
    %v1242 = vsub.f32 %v318, %v810
    %v1243 = vsub.f32 %v509, %v810
    %v1244 = vsub.f32 %v511, %v810
    %v1245 = vsub.f32 %v322, %v811
    %v1246 = vsub.f32 %v324, %v811
    %v1247 = vsub.f32 %v515, %v811
    %v1248 = vsub.f32 %v517, %v811
    %v1249 = vsub.f32 %v326, %v812
    %v1250 = vsub.f32 %v328, %v812
    %v1251 = vsub.f32 %v519, %v812
    %v1252 = vsub.f32 %v521, %v812
    %v1253 = vsub.f32 %v332, %v813
    %v1254 = vsub.f32 %v334, %v813
    %v1255 = vsub.f32 %v525, %v813
    %v1256 = vsub.f32 %v527, %v813
    %v1257 = vsub.f32 %v336, %v814
    %v1258 = vsub.f32 %v338, %v814
    %v1259 = vsub.f32 %v529, %v814
    %v1260 = vsub.f32 %v531, %v814
    %v1261 = vsub.f32 %v342, %v815
    %v1262 = vsub.f32 %v344, %v815
    %v1263 = vsub.f32 %v535, %v815
    %v1264 = vsub.f32 %v537, %v815
    %v1265 = vsub.f32 %v346, %v816
    %v1266 = vsub.f32 %v348, %v816
    %v1267 = vsub.f32 %v539, %v816
    %v1268 = vsub.f32 %v541, %v816
    %v1269 = vsub.f32 %v352, %v817
    %v1270 = vsub.f32 %v354, %v817
    %v1271 = vsub.f32 %v545, %v817
    %v1272 = vsub.f32 %v547, %v817
    %v1273 = vsub.f32 %v356, %v818
    %v1274 = vsub.f32 %v358, %v818
    %v1275 = vsub.f32 %v549, %v818
    %v1276 = vsub.f32 %v551, %v818
    %v1277 = vsub.f32 %v362, %v819
    %v1278 = vsub.f32 %v364, %v819
    %v1279 = vsub.f32 %v555, %v819
    %v1280 = vsub.f32 %v557, %v819
    %v1281 = vsub.f32 %v366, %v820
    %v1282 = vsub.f32 %v368, %v820
    %v1283 = vsub.f32 %v559, %v820
    %v1284 = vsub.f32 %v561, %v820
    %v1285 = vsub.f32 %v372, %v821
    %v1286 = vsub.f32 %v374, %v821
    %v1287 = vsub.f32 %v565, %v821
    %v1288 = vsub.f32 %v567, %v821
    %v1289 = vsub.f32 %v376, %v822
    %v1290 = vsub.f32 %v378, %v822
    %v1291 = vsub.f32 %v569, %v822
    %v1292 = vsub.f32 %v571, %v822
    %v1293 = vsub.f32 %v382, %v823
    %v1294 = vsub.f32 %v384, %v823
    %v1295 = vsub.f32 %v575, %v823
    %v1296 = vsub.f32 %v577, %v823
    %v1297 = vsub.f32 %v386, %v824
    %v1298 = vsub.f32 %v388, %v824
    %v1299 = vsub.f32 %v579, %v824
    %v1300 = vsub.f32 %v581, %v824
    %v1301 = vsub.f32 %v392, %v825
    %v1302 = vsub.f32 %v394, %v825
    %v1303 = vsub.f32 %v585, %v825
    %v1304 = vsub.f32 %v587, %v825
    %v1305 = vsub.f32 %v396, %v826
    %v1306 = vsub.f32 %v398, %v826
    %v1307 = vsub.f32 %v589, %v826
    %v1308 = vsub.f32 %v591, %v826
    %v1309 = vsub.f32 %v402, %v827
    %v1310 = vsub.f32 %v404, %v827
    %v1311 = vsub.f32 %v595, %v827
    %v1312 = vsub.f32 %v597, %v827
    %v1313 = vsub.f32 %v406, %v828
    %v1314 = vsub.f32 %v408, %v828
    %v1315 = vsub.f32 %v599, %v828
    %v1316 = vsub.f32 %v601, %v828
    %v1317 = vsub.f32 %v412, %v829
    %v1318 = vsub.f32 %v414, %v829
    %v1319 = vsub.f32 %v605, %v829
    %v1320 = vsub.f32 %v607, %v829
    %v1321 = vsub.f32 %v416, %v830
    %v1322 = vsub.f32 %v418, %v830
    %v1323 = vsub.f32 %v609, %v830
    %v1324 = vsub.f32 %v611, %v830
    %v1325 = vsub.f32 %v422, %v831
    %v1326 = vsub.f32 %v424, %v831
    %v1327 = vsub.f32 %v615, %v831
    %v1328 = vsub.f32 %v617, %v831
    %v1329 = vsub.f32 %v426, %v832
    %v1330 = vsub.f32 %v428, %v832
    %v1331 = vsub.f32 %v619, %v832
    %v1332 = vsub.f32 %v621, %v832
    %v1333 = vsub.f32 %v432, %v833
    %v1334 = vsub.f32 %v434, %v833
    %v1335 = vsub.f32 %v625, %v833
    %v1336 = vsub.f32 %v627, %v833
    %v1337 = vsub.f32 %v436, %v834
    %v1338 = vsub.f32 %v438, %v834
    %v1339 = vsub.f32 %v629, %v834
    %v1340 = vsub.f32 %v631, %v834
    %v1341 = vsub.f32 %v442, %v835
    %v1342 = vsub.f32 %v444, %v835
    %v1343 = vsub.f32 %v635, %v835
    %v1344 = vsub.f32 %v637, %v835
    %v1345 = vsub.f32 %v446, %v836
    %v1346 = vsub.f32 %v448, %v836
    %v1347 = vsub.f32 %v639, %v836
    %v1348 = vsub.f32 %v641, %v836
    %v1349 = vadd.f32 %v1189, 1e-05
    %v1350 = vadd.f32 %v1190, 1e-05
    %v1351 = vadd.f32 %v1191, 1e-05
    %v1352 = vadd.f32 %v1192, 1e-05
    %v1353 = vadd.f32 %v1193, 1e-05
    %v1354 = vadd.f32 %v1194, 1e-05
    %v1355 = vadd.f32 %v1195, 1e-05
    %v1356 = vadd.f32 %v1196, 1e-05
    %v1357 = vadd.f32 %v1197, 1e-05
    %v1358 = vadd.f32 %v1198, 1e-05
    %v1359 = vadd.f32 %v1199, 1e-05
    %v1360 = vadd.f32 %v1200, 1e-05
    %v1361 = vadd.f32 %v1201, 1e-05
    %v1362 = vadd.f32 %v1202, 1e-05
    %v1363 = vadd.f32 %v1203, 1e-05
    %v1364 = vadd.f32 %v1204, 1e-05
    %v1365 = vadd.f32 %v1205, 1e-05
    %v1366 = vadd.f32 %v1206, 1e-05
    %v1367 = vadd.f32 %v1207, 1e-05
    %v1368 = vadd.f32 %v1208, 1e-05
    %v1369 = vadd.f32 %v1209, 1e-05
    %v1370 = vadd.f32 %v1210, 1e-05
    %v1371 = vadd.f32 %v1211, 1e-05
    %v1372 = vadd.f32 %v1212, 1e-05
    %v1373 = vadd.f32 %v1213, 1e-05
    %v1374 = vadd.f32 %v1214, 1e-05
    %v1375 = vadd.f32 %v1215, 1e-05
    %v1376 = vadd.f32 %v1216, 1e-05
    %v1377 = vadd.f32 %v1217, 1e-05
    %v1378 = vadd.f32 %v1218, 1e-05
    %v1379 = vadd.f32 %v1219, 1e-05
    %v1380 = vadd.f32 %v1220, 1e-05
    %v1381 = vrsqrt.pop %v1349
    %v1382 = vrsqrt.pop %v1350
    %v1383 = vrsqrt.pop %v1351
    %v1384 = vrsqrt.pop %v1352
    %v1385 = vrsqrt.pop %v1353
    %v1386 = vrsqrt.pop %v1354
    %v1387 = vrsqrt.pop %v1355
    %v1388 = vrsqrt.pop %v1356
    %v1389 = vrsqrt.pop %v1357
    %v1390 = vrsqrt.pop %v1358
    %v1391 = vrsqrt.pop %v1359
    %v1392 = vrsqrt.pop %v1360
    %v1393 = vrsqrt.pop %v1361
    %v1394 = vrsqrt.pop %v1362
    %v1395 = vrsqrt.pop %v1363
    %v1396 = vrsqrt.pop %v1364
    %v1397 = vrsqrt.pop %v1365
    %v1398 = vrsqrt.pop %v1366
    %v1399 = vrsqrt.pop %v1367
    %v1400 = vrsqrt.pop %v1368
    %v1401 = vrsqrt.pop %v1369
    %v1402 = vrsqrt.pop %v1370
    %v1403 = vrsqrt.pop %v1371
    %v1404 = vrsqrt.pop %v1372
    %v1405 = vrsqrt.pop %v1373
    %v1406 = vrsqrt.pop %v1374
    %v1407 = vrsqrt.pop %v1375
    %v1408 = vrsqrt.pop %v1376
    %v1409 = vrsqrt.pop %v1377
    %v1410 = vrsqrt.pop %v1378
    %v1411 = vrsqrt.pop %v1379
    %v1412 = vrsqrt.pop %v1380
    %v1413 = vmul.f32 %v1221, %v1381
    %v1414 = vmul.f32 %v1222, %v1381
    %v1415 = vmul.f32 %v1223, %v1381
    %v1416 = vmul.f32 %v1224, %v1381
    %v1417 = vmul.f32 %v1225, %v1382
    %v1418 = vmul.f32 %v1226, %v1382
    %v1419 = vmul.f32 %v1227, %v1382
    %v1420 = vmul.f32 %v1228, %v1382
    %v1421 = vmul.f32 %v1229, %v1383
    %v1422 = vmul.f32 %v1230, %v1383
    %v1423 = vmul.f32 %v1231, %v1383
    %v1424 = vmul.f32 %v1232, %v1383
    %v1425 = vmul.f32 %v1233, %v1384
    %v1426 = vmul.f32 %v1234, %v1384
    %v1427 = vmul.f32 %v1235, %v1384
    %v1428 = vmul.f32 %v1236, %v1384
    %v1429 = vmul.f32 %v1237, %v1385
    %v1430 = vmul.f32 %v1238, %v1385
    %v1431 = vmul.f32 %v1239, %v1385
    %v1432 = vmul.f32 %v1240, %v1385
    %v1433 = vmul.f32 %v1241, %v1386
    %v1434 = vmul.f32 %v1242, %v1386
    %v1435 = vmul.f32 %v1243, %v1386
    %v1436 = vmul.f32 %v1244, %v1386
    %v1437 = vmul.f32 %v1245, %v1387
    %v1438 = vmul.f32 %v1246, %v1387
    %v1439 = vmul.f32 %v1247, %v1387
    %v1440 = vmul.f32 %v1248, %v1387
    %v1441 = vmul.f32 %v1249, %v1388
    %v1442 = vmul.f32 %v1250, %v1388
    %v1443 = vmul.f32 %v1251, %v1388
    %v1444 = vmul.f32 %v1252, %v1388
    %v1445 = vmul.f32 %v1253, %v1389
    %v1446 = vmul.f32 %v1254, %v1389
    %v1447 = vmul.f32 %v1255, %v1389
    %v1448 = vmul.f32 %v1256, %v1389
    %v1449 = vmul.f32 %v1257, %v1390
    %v1450 = vmul.f32 %v1258, %v1390
    %v1451 = vmul.f32 %v1259, %v1390
    %v1452 = vmul.f32 %v1260, %v1390
    %v1453 = vmul.f32 %v1261, %v1391
    %v1454 = vmul.f32 %v1262, %v1391
    %v1455 = vmul.f32 %v1263, %v1391
    %v1456 = vmul.f32 %v1264, %v1391
    %v1457 = vmul.f32 %v1265, %v1392
    %v1458 = vmul.f32 %v1266, %v1392
    %v1459 = vmul.f32 %v1267, %v1392
    %v1460 = vmul.f32 %v1268, %v1392
    %v1461 = vmul.f32 %v1269, %v1393
    %v1462 = vmul.f32 %v1270, %v1393
    %v1463 = vmul.f32 %v1271, %v1393
    %v1464 = vmul.f32 %v1272, %v1393
    %v1465 = vmul.f32 %v1273, %v1394
    %v1466 = vmul.f32 %v1274, %v1394
    %v1467 = vmul.f32 %v1275, %v1394
    %v1468 = vmul.f32 %v1276, %v1394
    %v1469 = vmul.f32 %v1277, %v1395
    %v1470 = vmul.f32 %v1278, %v1395
    %v1471 = vmul.f32 %v1279, %v1395
    %v1472 = vmul.f32 %v1280, %v1395
    %v1473 = vmul.f32 %v1281, %v1396
    %v1474 = vmul.f32 %v1282, %v1396
    %v1475 = vmul.f32 %v1283, %v1396
    %v1476 = vmul.f32 %v1284, %v1396
    %v1477 = vmul.f32 %v1285, %v1397
    %v1478 = vmul.f32 %v1286, %v1397
    %v1479 = vmul.f32 %v1287, %v1397
    %v1480 = vmul.f32 %v1288, %v1397
    %v1481 = vmul.f32 %v1289, %v1398
    %v1482 = vmul.f32 %v1290, %v1398
    %v1483 = vmul.f32 %v1291, %v1398
    %v1484 = vmul.f32 %v1292, %v1398
    %v1485 = vmul.f32 %v1293, %v1399
    %v1486 = vmul.f32 %v1294, %v1399
    %v1487 = vmul.f32 %v1295, %v1399
    %v1488 = vmul.f32 %v1296, %v1399
    %v1489 = vmul.f32 %v1297, %v1400
    %v1490 = vmul.f32 %v1298, %v1400
    %v1491 = vmul.f32 %v1299, %v1400
    %v1492 = vmul.f32 %v1300, %v1400
    %v1493 = vmul.f32 %v1301, %v1401
    %v1494 = vmul.f32 %v1302, %v1401
    %v1495 = vmul.f32 %v1303, %v1401
    %v1496 = vmul.f32 %v1304, %v1401
    %v1497 = vmul.f32 %v1305, %v1402
    %v1498 = vmul.f32 %v1306, %v1402
    %v1499 = vmul.f32 %v1307, %v1402
    %v1500 = vmul.f32 %v1308, %v1402
    %v1501 = vmul.f32 %v1309, %v1403
    %v1502 = vmul.f32 %v1310, %v1403
    %v1503 = vmul.f32 %v1311, %v1403
    %v1504 = vmul.f32 %v1312, %v1403
    %v1505 = vmul.f32 %v1313, %v1404
    %v1506 = vmul.f32 %v1314, %v1404
    %v1507 = vmul.f32 %v1315, %v1404
    %v1508 = vmul.f32 %v1316, %v1404
    %v1509 = vmul.f32 %v1317, %v1405
    %v1510 = vmul.f32 %v1318, %v1405
    %v1511 = vmul.f32 %v1319, %v1405
    %v1512 = vmul.f32 %v1320, %v1405
    %v1513 = vmul.f32 %v1321, %v1406
    %v1514 = vmul.f32 %v1322, %v1406
    %v1515 = vmul.f32 %v1323, %v1406
    %v1516 = vmul.f32 %v1324, %v1406
    %v1517 = vmul.f32 %v1325, %v1407
    %v1518 = vmul.f32 %v1326, %v1407
    %v1519 = vmul.f32 %v1327, %v1407
    %v1520 = vmul.f32 %v1328, %v1407
    %v1521 = vmul.f32 %v1329, %v1408
    %v1522 = vmul.f32 %v1330, %v1408
    %v1523 = vmul.f32 %v1331, %v1408
    %v1524 = vmul.f32 %v1332, %v1408
    %v1525 = vmul.f32 %v1333, %v1409
    %v1526 = vmul.f32 %v1334, %v1409
    %v1527 = vmul.f32 %v1335, %v1409
    %v1528 = vmul.f32 %v1336, %v1409
    %v1529 = vmul.f32 %v1337, %v1410
    %v1530 = vmul.f32 %v1338, %v1410
    %v1531 = vmul.f32 %v1339, %v1410
    %v1532 = vmul.f32 %v1340, %v1410
    %v1533 = vmul.f32 %v1341, %v1411
    %v1534 = vmul.f32 %v1342, %v1411
    %v1535 = vmul.f32 %v1343, %v1411
    %v1536 = vmul.f32 %v1344, %v1411
    %v1537 = vmul.f32 %v1345, %v1412
    %v1538 = vmul.f32 %v1346, %v1412
    %v1539 = vmul.f32 %v1347, %v1412
    %v1540 = vmul.f32 %v1348, %v1412
    %v1542 = vlaneseq
    %v1543 = vshrl.u32 %v1542, 7
    %v1544 = vsub.s32 0, %v1543
    %v1545 = vrot.slane %v643, %v1544
    %v1546 = vlaneseq
    %v1547 = vshrl.u32 %v1546, 7
    %v1548 = vsub.s32 1, %v1547
    %v1549 = vrot.slane %v643, %v1548
    %v1550 = vlaneseq
    %v1551 = vshrl.u32 %v1550, 7
    %v1552 = vsub.s32 2, %v1551
    %v1553 = vrot.slane %v643, %v1552
    %v1554 = vlaneseq
    %v1555 = vshrl.u32 %v1554, 7
    %v1556 = vsub.s32 3, %v1555
    %v1557 = vrot.slane %v643, %v1556
    %v1562 = vmul.f32 %v1413, %v1545
    %v1563 = vmul.f32 %v1414, %v1549
    %v1564 = vmul.f32 %v1415, %v1553
    %v1565 = vmul.f32 %v1416, %v1557
    %v1566 = vmul.f32 %v1417, %v1545
    %v1567 = vmul.f32 %v1418, %v1549
    %v1568 = vmul.f32 %v1419, %v1553
    %v1569 = vmul.f32 %v1420, %v1557
    %v1570 = vmul.f32 %v1421, %v1545
    %v1571 = vmul.f32 %v1422, %v1549
    %v1572 = vmul.f32 %v1423, %v1553
    %v1573 = vmul.f32 %v1424, %v1557
    %v1574 = vmul.f32 %v1425, %v1545
    %v1575 = vmul.f32 %v1426, %v1549
    %v1576 = vmul.f32 %v1427, %v1553
    %v1577 = vmul.f32 %v1428, %v1557
    %v1578 = vmul.f32 %v1429, %v1545
    %v1579 = vmul.f32 %v1430, %v1549
    %v1580 = vmul.f32 %v1431, %v1553
    %v1581 = vmul.f32 %v1432, %v1557
    %v1582 = vmul.f32 %v1433, %v1545
    %v1583 = vmul.f32 %v1434, %v1549
    %v1584 = vmul.f32 %v1435, %v1553
    %v1585 = vmul.f32 %v1436, %v1557
    %v1586 = vmul.f32 %v1437, %v1545
    %v1587 = vmul.f32 %v1438, %v1549
    %v1588 = vmul.f32 %v1439, %v1553
    %v1589 = vmul.f32 %v1440, %v1557
    %v1590 = vmul.f32 %v1441, %v1545
    %v1591 = vmul.f32 %v1442, %v1549
    %v1592 = vmul.f32 %v1443, %v1553
    %v1593 = vmul.f32 %v1444, %v1557
    %v1594 = vmul.f32 %v1445, %v1545
    %v1595 = vmul.f32 %v1446, %v1549
    %v1596 = vmul.f32 %v1447, %v1553
    %v1597 = vmul.f32 %v1448, %v1557
    %v1598 = vmul.f32 %v1449, %v1545
    %v1599 = vmul.f32 %v1450, %v1549
    %v1600 = vmul.f32 %v1451, %v1553
    %v1601 = vmul.f32 %v1452, %v1557
    %v1602 = vmul.f32 %v1453, %v1545
    %v1603 = vmul.f32 %v1454, %v1549
    %v1604 = vmul.f32 %v1455, %v1553
    %v1605 = vmul.f32 %v1456, %v1557
    %v1606 = vmul.f32 %v1457, %v1545
    %v1607 = vmul.f32 %v1458, %v1549
    %v1608 = vmul.f32 %v1459, %v1553
    %v1609 = vmul.f32 %v1460, %v1557
    %v1610 = vmul.f32 %v1461, %v1545
    %v1611 = vmul.f32 %v1462, %v1549
    %v1612 = vmul.f32 %v1463, %v1553
    %v1613 = vmul.f32 %v1464, %v1557
    %v1614 = vmul.f32 %v1465, %v1545
    %v1615 = vmul.f32 %v1466, %v1549
    %v1616 = vmul.f32 %v1467, %v1553
    %v1617 = vmul.f32 %v1468, %v1557
    %v1618 = vmul.f32 %v1469, %v1545
    %v1619 = vmul.f32 %v1470, %v1549
    %v1620 = vmul.f32 %v1471, %v1553
    %v1621 = vmul.f32 %v1472, %v1557
    %v1622 = vmul.f32 %v1473, %v1545
    %v1623 = vmul.f32 %v1474, %v1549
    %v1624 = vmul.f32 %v1475, %v1553
    %v1625 = vmul.f32 %v1476, %v1557
    %v1626 = vmul.f32 %v1477, %v1545
    %v1627 = vmul.f32 %v1478, %v1549
    %v1628 = vmul.f32 %v1479, %v1553
    %v1629 = vmul.f32 %v1480, %v1557
    %v1630 = vmul.f32 %v1481, %v1545
    %v1631 = vmul.f32 %v1482, %v1549
    %v1632 = vmul.f32 %v1483, %v1553
    %v1633 = vmul.f32 %v1484, %v1557
    %v1634 = vmul.f32 %v1485, %v1545
    %v1635 = vmul.f32 %v1486, %v1549
    %v1636 = vmul.f32 %v1487, %v1553
    %v1637 = vmul.f32 %v1488, %v1557
    %v1638 = vmul.f32 %v1489, %v1545
    %v1639 = vmul.f32 %v1490, %v1549
    %v1640 = vmul.f32 %v1491, %v1553
    %v1641 = vmul.f32 %v1492, %v1557
    %v1642 = vmul.f32 %v1493, %v1545
    %v1643 = vmul.f32 %v1494, %v1549
    %v1644 = vmul.f32 %v1495, %v1553
    %v1645 = vmul.f32 %v1496, %v1557
    %v1646 = vmul.f32 %v1497, %v1545
    %v1647 = vmul.f32 %v1498, %v1549
    %v1648 = vmul.f32 %v1499, %v1553
    %v1649 = vmul.f32 %v1500, %v1557
    %v1650 = vmul.f32 %v1501, %v1545
    %v1651 = vmul.f32 %v1502, %v1549
    %v1652 = vmul.f32 %v1503, %v1553
    %v1653 = vmul.f32 %v1504, %v1557
    %v1654 = vmul.f32 %v1505, %v1545
    %v1655 = vmul.f32 %v1506, %v1549
    %v1656 = vmul.f32 %v1507, %v1553
    %v1657 = vmul.f32 %v1508, %v1557
    %v1658 = vmul.f32 %v1509, %v1545
    %v1659 = vmul.f32 %v1510, %v1549
    %v1660 = vmul.f32 %v1511, %v1553
    %v1661 = vmul.f32 %v1512, %v1557
    %v1662 = vmul.f32 %v1513, %v1545
    %v1663 = vmul.f32 %v1514, %v1549
    %v1664 = vmul.f32 %v1515, %v1553
    %v1665 = vmul.f32 %v1516, %v1557
    %v1666 = vmul.f32 %v1517, %v1545
    %v1667 = vmul.f32 %v1518, %v1549
    %v1668 = vmul.f32 %v1519, %v1553
    %v1669 = vmul.f32 %v1520, %v1557
    %v1670 = vmul.f32 %v1521, %v1545
    %v1671 = vmul.f32 %v1522, %v1549
    %v1672 = vmul.f32 %v1523, %v1553
    %v1673 = vmul.f32 %v1524, %v1557
    %v1674 = vmul.f32 %v1525, %v1545
    %v1675 = vmul.f32 %v1526, %v1549
    %v1676 = vmul.f32 %v1527, %v1553
    %v1677 = vmul.f32 %v1528, %v1557
    %v1678 = vmul.f32 %v1529, %v1545
    %v1679 = vmul.f32 %v1530, %v1549
    %v1680 = vmul.f32 %v1531, %v1553
    %v1681 = vmul.f32 %v1532, %v1557
    %v1682 = vmul.f32 %v1533, %v1545
    %v1683 = vmul.f32 %v1534, %v1549
    %v1684 = vmul.f32 %v1535, %v1553
    %v1685 = vmul.f32 %v1536, %v1557
    %v1686 = vmul.f32 %v1537, %v1545
    %v1687 = vmul.f32 %v1538, %v1549
    %v1688 = vmul.f32 %v1539, %v1553
    %v1689 = vmul.f32 %v1540, %v1557
    %v1691 = vlaneseq
    %v1692 = vshrl.u32 %v1691, 7
    %v1693 = vsub.s32 0, %v1692
    %v1694 = vrot.slane %v644, %v1693
    %v1695 = vlaneseq
    %v1696 = vshrl.u32 %v1695, 7
    %v1697 = vsub.s32 1, %v1696
    %v1698 = vrot.slane %v644, %v1697
    %v1699 = vlaneseq
    %v1700 = vshrl.u32 %v1699, 7
    %v1701 = vsub.s32 2, %v1700
    %v1702 = vrot.slane %v644, %v1701
    %v1703 = vlaneseq
    %v1704 = vshrl.u32 %v1703, 7
    %v1705 = vsub.s32 3, %v1704
    %v1706 = vrot.slane %v644, %v1705
    %v1711 = vadd.f32 %v1562, %v1694
    %v1712 = vadd.f32 %v1563, %v1698
    %v1713 = vadd.f32 %v1564, %v1702
    %v1714 = vadd.f32 %v1565, %v1706
    %v1715 = vadd.f32 %v1566, %v1694
    %v1716 = vadd.f32 %v1567, %v1698
    %v1717 = vadd.f32 %v1568, %v1702
    %v1718 = vadd.f32 %v1569, %v1706
    %v1719 = vadd.f32 %v1570, %v1694
    %v1720 = vadd.f32 %v1571, %v1698
    %v1721 = vadd.f32 %v1572, %v1702
    %v1722 = vadd.f32 %v1573, %v1706
    %v1723 = vadd.f32 %v1574, %v1694
    %v1724 = vadd.f32 %v1575, %v1698
    %v1725 = vadd.f32 %v1576, %v1702
    %v1726 = vadd.f32 %v1577, %v1706
    %v1727 = vadd.f32 %v1578, %v1694
    %v1728 = vadd.f32 %v1579, %v1698
    %v1729 = vadd.f32 %v1580, %v1702
    %v1730 = vadd.f32 %v1581, %v1706
    %v1731 = vadd.f32 %v1582, %v1694
    %v1732 = vadd.f32 %v1583, %v1698
    %v1733 = vadd.f32 %v1584, %v1702
    %v1734 = vadd.f32 %v1585, %v1706
    %v1735 = vadd.f32 %v1586, %v1694
    %v1736 = vadd.f32 %v1587, %v1698
    %v1737 = vadd.f32 %v1588, %v1702
    %v1738 = vadd.f32 %v1589, %v1706
    %v1739 = vadd.f32 %v1590, %v1694
    %v1740 = vadd.f32 %v1591, %v1698
    %v1741 = vadd.f32 %v1592, %v1702
    %v1742 = vadd.f32 %v1593, %v1706
    %v1743 = vadd.f32 %v1594, %v1694
    %v1744 = vadd.f32 %v1595, %v1698
    %v1745 = vadd.f32 %v1596, %v1702
    %v1746 = vadd.f32 %v1597, %v1706
    %v1747 = vadd.f32 %v1598, %v1694
    %v1748 = vadd.f32 %v1599, %v1698
    %v1749 = vadd.f32 %v1600, %v1702
    %v1750 = vadd.f32 %v1601, %v1706
    %v1751 = vadd.f32 %v1602, %v1694
    %v1752 = vadd.f32 %v1603, %v1698
    %v1753 = vadd.f32 %v1604, %v1702
    %v1754 = vadd.f32 %v1605, %v1706
    %v1755 = vadd.f32 %v1606, %v1694
    %v1756 = vadd.f32 %v1607, %v1698
    %v1757 = vadd.f32 %v1608, %v1702
    %v1758 = vadd.f32 %v1609, %v1706
    %v1759 = vadd.f32 %v1610, %v1694
    %v1760 = vadd.f32 %v1611, %v1698
    %v1761 = vadd.f32 %v1612, %v1702
    %v1762 = vadd.f32 %v1613, %v1706
    %v1763 = vadd.f32 %v1614, %v1694
    %v1764 = vadd.f32 %v1615, %v1698
    %v1765 = vadd.f32 %v1616, %v1702
    %v1766 = vadd.f32 %v1617, %v1706
    %v1767 = vadd.f32 %v1618, %v1694
    %v1768 = vadd.f32 %v1619, %v1698
    %v1769 = vadd.f32 %v1620, %v1702
    %v1770 = vadd.f32 %v1621, %v1706
    %v1771 = vadd.f32 %v1622, %v1694
    %v1772 = vadd.f32 %v1623, %v1698
    %v1773 = vadd.f32 %v1624, %v1702
    %v1774 = vadd.f32 %v1625, %v1706
    %v1775 = vadd.f32 %v1626, %v1694
    %v1776 = vadd.f32 %v1627, %v1698
    %v1777 = vadd.f32 %v1628, %v1702
    %v1778 = vadd.f32 %v1629, %v1706
    %v1779 = vadd.f32 %v1630, %v1694
    %v1780 = vadd.f32 %v1631, %v1698
    %v1781 = vadd.f32 %v1632, %v1702
    %v1782 = vadd.f32 %v1633, %v1706
    %v1783 = vadd.f32 %v1634, %v1694
    %v1784 = vadd.f32 %v1635, %v1698
    %v1785 = vadd.f32 %v1636, %v1702
    %v1786 = vadd.f32 %v1637, %v1706
    %v1787 = vadd.f32 %v1638, %v1694
    %v1788 = vadd.f32 %v1639, %v1698
    %v1789 = vadd.f32 %v1640, %v1702
    %v1790 = vadd.f32 %v1641, %v1706
    %v1791 = vadd.f32 %v1642, %v1694
    %v1792 = vadd.f32 %v1643, %v1698
    %v1793 = vadd.f32 %v1644, %v1702
    %v1794 = vadd.f32 %v1645, %v1706
    %v1795 = vadd.f32 %v1646, %v1694
    %v1796 = vadd.f32 %v1647, %v1698
    %v1797 = vadd.f32 %v1648, %v1702
    %v1798 = vadd.f32 %v1649, %v1706
    %v1799 = vadd.f32 %v1650, %v1694
    %v1800 = vadd.f32 %v1651, %v1698
    %v1801 = vadd.f32 %v1652, %v1702
    %v1802 = vadd.f32 %v1653, %v1706
    %v1803 = vadd.f32 %v1654, %v1694
    %v1804 = vadd.f32 %v1655, %v1698
    %v1805 = vadd.f32 %v1656, %v1702
    %v1806 = vadd.f32 %v1657, %v1706
    %v1807 = vadd.f32 %v1658, %v1694
    %v1808 = vadd.f32 %v1659, %v1698
    %v1809 = vadd.f32 %v1660, %v1702
    %v1810 = vadd.f32 %v1661, %v1706
    %v1811 = vadd.f32 %v1662, %v1694
    %v1812 = vadd.f32 %v1663, %v1698
    %v1813 = vadd.f32 %v1664, %v1702
    %v1814 = vadd.f32 %v1665, %v1706
    %v1815 = vadd.f32 %v1666, %v1694
    %v1816 = vadd.f32 %v1667, %v1698
    %v1817 = vadd.f32 %v1668, %v1702
    %v1818 = vadd.f32 %v1669, %v1706
    %v1819 = vadd.f32 %v1670, %v1694
    %v1820 = vadd.f32 %v1671, %v1698
    %v1821 = vadd.f32 %v1672, %v1702
    %v1822 = vadd.f32 %v1673, %v1706
    %v1823 = vadd.f32 %v1674, %v1694
    %v1824 = vadd.f32 %v1675, %v1698
    %v1825 = vadd.f32 %v1676, %v1702
    %v1826 = vadd.f32 %v1677, %v1706
    %v1827 = vadd.f32 %v1678, %v1694
    %v1828 = vadd.f32 %v1679, %v1698
    %v1829 = vadd.f32 %v1680, %v1702
    %v1830 = vadd.f32 %v1681, %v1706
    %v1831 = vadd.f32 %v1682, %v1694
    %v1832 = vadd.f32 %v1683, %v1698
    %v1833 = vadd.f32 %v1684, %v1702
    %v1834 = vadd.f32 %v1685, %v1706
    %v1835 = vadd.f32 %v1686, %v1694
    %v1836 = vadd.f32 %v1687, %v1698
    %v1837 = vadd.f32 %v1688, %v1702
    %v1838 = vadd.f32 %v1689, %v1706
    %v1839 = vmax.f32 %v1711, 0.0
    %v1840 = vmax.f32 %v1712, 0.0
    %v1841 = vmax.f32 %v1713, 0.0
    %v1842 = vmax.f32 %v1714, 0.0
    %v1843 = vmax.f32 %v1715, 0.0
    %v1844 = vmax.f32 %v1716, 0.0
    %v1845 = vmax.f32 %v1717, 0.0
    %v1846 = vmax.f32 %v1718, 0.0
    %v1847 = vmax.f32 %v1719, 0.0
    %v1848 = vmax.f32 %v1720, 0.0
    %v1849 = vmax.f32 %v1721, 0.0
    %v1850 = vmax.f32 %v1722, 0.0
    %v1851 = vmax.f32 %v1723, 0.0
    %v1852 = vmax.f32 %v1724, 0.0
    %v1853 = vmax.f32 %v1725, 0.0
    %v1854 = vmax.f32 %v1726, 0.0
    %v1855 = vmax.f32 %v1727, 0.0
    %v1856 = vmax.f32 %v1728, 0.0
    %v1857 = vmax.f32 %v1729, 0.0
    %v1858 = vmax.f32 %v1730, 0.0
    %v1859 = vmax.f32 %v1731, 0.0
    %v1860 = vmax.f32 %v1732, 0.0
    %v1861 = vmax.f32 %v1733, 0.0
    %v1862 = vmax.f32 %v1734, 0.0
    %v1863 = vmax.f32 %v1735, 0.0
    %v1864 = vmax.f32 %v1736, 0.0
    %v1865 = vmax.f32 %v1737, 0.0
    %v1866 = vmax.f32 %v1738, 0.0
    %v1867 = vmax.f32 %v1739, 0.0
    %v1868 = vmax.f32 %v1740, 0.0
    %v1869 = vmax.f32 %v1741, 0.0
    %v1870 = vmax.f32 %v1742, 0.0
    %v1871 = vmax.f32 %v1743, 0.0
    %v1872 = vmax.f32 %v1744, 0.0
    %v1873 = vmax.f32 %v1745, 0.0
    %v1874 = vmax.f32 %v1746, 0.0
    %v1875 = vmax.f32 %v1747, 0.0
    %v1876 = vmax.f32 %v1748, 0.0
    %v1877 = vmax.f32 %v1749, 0.0
    %v1878 = vmax.f32 %v1750, 0.0
    %v1879 = vmax.f32 %v1751, 0.0
    %v1880 = vmax.f32 %v1752, 0.0
    %v1881 = vmax.f32 %v1753, 0.0
    %v1882 = vmax.f32 %v1754, 0.0
    %v1883 = vmax.f32 %v1755, 0.0
    %v1884 = vmax.f32 %v1756, 0.0
    %v1885 = vmax.f32 %v1757, 0.0
    %v1886 = vmax.f32 %v1758, 0.0
    %v1887 = vmax.f32 %v1759, 0.0
    %v1888 = vmax.f32 %v1760, 0.0
    %v1889 = vmax.f32 %v1761, 0.0
    %v1890 = vmax.f32 %v1762, 0.0
    %v1891 = vmax.f32 %v1763, 0.0
    %v1892 = vmax.f32 %v1764, 0.0
    %v1893 = vmax.f32 %v1765, 0.0
    %v1894 = vmax.f32 %v1766, 0.0
    %v1895 = vmax.f32 %v1767, 0.0
    %v1896 = vmax.f32 %v1768, 0.0
    %v1897 = vmax.f32 %v1769, 0.0
    %v1898 = vmax.f32 %v1770, 0.0
    %v1899 = vmax.f32 %v1771, 0.0
    %v1900 = vmax.f32 %v1772, 0.0
    %v1901 = vmax.f32 %v1773, 0.0
    %v1902 = vmax.f32 %v1774, 0.0
    %v1903 = vmax.f32 %v1775, 0.0
    %v1904 = vmax.f32 %v1776, 0.0
    %v1905 = vmax.f32 %v1777, 0.0
    %v1906 = vmax.f32 %v1778, 0.0
    %v1907 = vmax.f32 %v1779, 0.0
    %v1908 = vmax.f32 %v1780, 0.0
    %v1909 = vmax.f32 %v1781, 0.0
    %v1910 = vmax.f32 %v1782, 0.0
    %v1911 = vmax.f32 %v1783, 0.0
    %v1912 = vmax.f32 %v1784, 0.0
    %v1913 = vmax.f32 %v1785, 0.0
    %v1914 = vmax.f32 %v1786, 0.0
    %v1915 = vmax.f32 %v1787, 0.0
    %v1916 = vmax.f32 %v1788, 0.0
    %v1917 = vmax.f32 %v1789, 0.0
    %v1918 = vmax.f32 %v1790, 0.0
    %v1919 = vmax.f32 %v1791, 0.0
    %v1920 = vmax.f32 %v1792, 0.0
    %v1921 = vmax.f32 %v1793, 0.0
    %v1922 = vmax.f32 %v1794, 0.0
    %v1923 = vmax.f32 %v1795, 0.0
    %v1924 = vmax.f32 %v1796, 0.0
    %v1925 = vmax.f32 %v1797, 0.0
    %v1926 = vmax.f32 %v1798, 0.0
    %v1927 = vmax.f32 %v1799, 0.0
    %v1928 = vmax.f32 %v1800, 0.0
    %v1929 = vmax.f32 %v1801, 0.0
    %v1930 = vmax.f32 %v1802, 0.0
    %v1931 = vmax.f32 %v1803, 0.0
    %v1932 = vmax.f32 %v1804, 0.0
    %v1933 = vmax.f32 %v1805, 0.0
    %v1934 = vmax.f32 %v1806, 0.0
    %v1935 = vmax.f32 %v1807, 0.0
    %v1936 = vmax.f32 %v1808, 0.0
    %v1937 = vmax.f32 %v1809, 0.0
    %v1938 = vmax.f32 %v1810, 0.0
    %v1939 = vmax.f32 %v1811, 0.0
    %v1940 = vmax.f32 %v1812, 0.0
    %v1941 = vmax.f32 %v1813, 0.0
    %v1942 = vmax.f32 %v1814, 0.0
    %v1943 = vmax.f32 %v1815, 0.0
    %v1944 = vmax.f32 %v1816, 0.0
    %v1945 = vmax.f32 %v1817, 0.0
    %v1946 = vmax.f32 %v1818, 0.0
    %v1947 = vmax.f32 %v1819, 0.0
    %v1948 = vmax.f32 %v1820, 0.0
    %v1949 = vmax.f32 %v1821, 0.0
    %v1950 = vmax.f32 %v1822, 0.0
    %v1951 = vmax.f32 %v1823, 0.0
    %v1952 = vmax.f32 %v1824, 0.0
    %v1953 = vmax.f32 %v1825, 0.0
    %v1954 = vmax.f32 %v1826, 0.0
    %v1955 = vmax.f32 %v1827, 0.0
    %v1956 = vmax.f32 %v1828, 0.0
    %v1957 = vmax.f32 %v1829, 0.0
    %v1958 = vmax.f32 %v1830, 0.0
    %v1959 = vmax.f32 %v1831, 0.0
    %v1960 = vmax.f32 %v1832, 0.0
    %v1961 = vmax.f32 %v1833, 0.0
    %v1962 = vmax.f32 %v1834, 0.0
    %v1963 = vmax.f32 %v1835, 0.0
    %v1964 = vmax.f32 %v1836, 0.0
    %v1965 = vmax.f32 %v1837, 0.0
    %v1966 = vmax.f32 %v1838, 0.0
    %v1967 = vpack.c.bf16 %v1843, %v1839
    %v1968 = vpack.c.bf16 %v1844, %v1840
    %v1969 = vpack.c.bf16 %v1845, %v1841
    %v1970 = vpack.c.bf16 %v1846, %v1842
    %v1971 = vpack.c.bf16 %v1851, %v1847
    %v1972 = vpack.c.bf16 %v1852, %v1848
    %v1973 = vpack.c.bf16 %v1853, %v1849
    %v1974 = vpack.c.bf16 %v1854, %v1850
    %v1975 = vpack.c.bf16 %v1859, %v1855
    %v1976 = vpack.c.bf16 %v1860, %v1856
    %v1977 = vpack.c.bf16 %v1861, %v1857
    %v1978 = vpack.c.bf16 %v1862, %v1858
    %v1979 = vpack.c.bf16 %v1867, %v1863
    %v1980 = vpack.c.bf16 %v1868, %v1864
    %v1981 = vpack.c.bf16 %v1869, %v1865
    %v1982 = vpack.c.bf16 %v1870, %v1866
    %v1983 = vpack.c.bf16 %v1875, %v1871
    %v1984 = vpack.c.bf16 %v1876, %v1872
    %v1985 = vpack.c.bf16 %v1877, %v1873
    %v1986 = vpack.c.bf16 %v1878, %v1874
    %v1987 = vpack.c.bf16 %v1883, %v1879
    %v1988 = vpack.c.bf16 %v1884, %v1880
    %v1989 = vpack.c.bf16 %v1885, %v1881
    %v1990 = vpack.c.bf16 %v1886, %v1882
    %v1991 = vpack.c.bf16 %v1891, %v1887
    %v1992 = vpack.c.bf16 %v1892, %v1888
    %v1993 = vpack.c.bf16 %v1893, %v1889
    %v1994 = vpack.c.bf16 %v1894, %v1890
    %v1995 = vpack.c.bf16 %v1899, %v1895
    %v1996 = vpack.c.bf16 %v1900, %v1896
    %v1997 = vpack.c.bf16 %v1901, %v1897
    %v1998 = vpack.c.bf16 %v1902, %v1898
    %v1999 = vpack.c.bf16 %v1907, %v1903
    %v2000 = vpack.c.bf16 %v1908, %v1904
    %v2001 = vpack.c.bf16 %v1909, %v1905
    %v2002 = vpack.c.bf16 %v1910, %v1906
    %v2003 = vpack.c.bf16 %v1915, %v1911
    %v2004 = vpack.c.bf16 %v1916, %v1912
    %v2005 = vpack.c.bf16 %v1917, %v1913
    %v2006 = vpack.c.bf16 %v1918, %v1914
    %v2007 = vpack.c.bf16 %v1923, %v1919
    %v2008 = vpack.c.bf16 %v1924, %v1920
    %v2009 = vpack.c.bf16 %v1925, %v1921
    %v2010 = vpack.c.bf16 %v1926, %v1922
    %v2011 = vpack.c.bf16 %v1931, %v1927
    %v2012 = vpack.c.bf16 %v1932, %v1928
    %v2013 = vpack.c.bf16 %v1933, %v1929
    %v2014 = vpack.c.bf16 %v1934, %v1930
    %v2015 = vpack.c.bf16 %v1939, %v1935
    %v2016 = vpack.c.bf16 %v1940, %v1936
    %v2017 = vpack.c.bf16 %v1941, %v1937
    %v2018 = vpack.c.bf16 %v1942, %v1938
    %v2019 = vpack.c.bf16 %v1947, %v1943
    %v2020 = vpack.c.bf16 %v1948, %v1944
    %v2021 = vpack.c.bf16 %v1949, %v1945
    %v2022 = vpack.c.bf16 %v1950, %v1946
    %v2023 = vpack.c.bf16 %v1955, %v1951
    %v2024 = vpack.c.bf16 %v1956, %v1952
    %v2025 = vpack.c.bf16 %v1957, %v1953
    %v2026 = vpack.c.bf16 %v1958, %v1954
    %v2027 = vpack.c.bf16 %v1963, %v1959
    %v2028 = vpack.c.bf16 %v1964, %v1960
    %v2029 = vpack.c.bf16 %v1965, %v1961
    %v2030 = vpack.c.bf16 %v1966, %v1962
    %v2031 = vld [vmem:[#allocation2] sm:$0xff]
    %v2032 = vld [vmem:[#allocation2 + $0x8] sm:$0xff]
    %v2033 = vld [vmem:[#allocation2 + $0x10] sm:$0xff]
    %v2034 = vld [vmem:[#allocation2 + $0x18] sm:$0xff]
    %v2035 = vld [vmem:[#allocation2 + $0x20] sm:$0xff]
    %v2036 = vld [vmem:[#allocation2 + $0x28] sm:$0xff]
    %v2037 = vld [vmem:[#allocation2 + $0x30] sm:$0xff]
    %v2038 = vld [vmem:[#allocation2 + $0x38] sm:$0xff]
    %v2039 = vld [vmem:[#allocation2 + $0x40] sm:$0xff]
    %v2040 = vld [vmem:[#allocation2 + $0x48] sm:$0xff]
    %v2041 = vld [vmem:[#allocation2 + $0x50] sm:$0xff]
    %v2042 = vld [vmem:[#allocation2 + $0x58] sm:$0xff]
    %v2043 = vld [vmem:[#allocation2 + $0x60] sm:$0xff]
    %v2044 = vld [vmem:[#allocation2 + $0x68] sm:$0xff]
    %v2045 = vld [vmem:[#allocation2 + $0x70] sm:$0xff]
    %v2046 = vld [vmem:[#allocation2 + $0x78] sm:$0xff]
    %v2047 = vld [vmem:[#allocation2 + $0x80] sm:$0xff]
    %v2048 = vld [vmem:[#allocation2 + $0x88] sm:$0xff]
    %v2049 = vld [vmem:[#allocation2 + $0x90] sm:$0xff]
    %v2050 = vld [vmem:[#allocation2 + $0x98] sm:$0xff]
    %v2051 = vld [vmem:[#allocation2 + $0xa0] sm:$0xff]
    %v2052 = vld [vmem:[#allocation2 + $0xa8] sm:$0xff]
    %v2053 = vld [vmem:[#allocation2 + $0xb0] sm:$0xff]
    %v2054 = vld [vmem:[#allocation2 + $0xb8] sm:$0xff]
    %v2055 = vld [vmem:[#allocation2 + $0xc0] sm:$0xff]
    %v2056 = vld [vmem:[#allocation2 + $0xc8] sm:$0xff]
    %v2057 = vld [vmem:[#allocation2 + $0xd0] sm:$0xff]
    %v2058 = vld [vmem:[#allocation2 + $0xd8] sm:$0xff]
    %v2059 = vld [vmem:[#allocation2 + $0xe0] sm:$0xff]
    %v2060 = vld [vmem:[#allocation2 + $0xe8] sm:$0xff]
    %v2061 = vld [vmem:[#allocation2 + $0xf0] sm:$0xff]
    %v2062 = vld [vmem:[#allocation2 + $0xf8] sm:$0xff]
    %v2063 = vld [vmem:[#allocation2 + $0x100] sm:$0xff]
    %v2064 = vld [vmem:[#allocation2 + $0x108] sm:$0xff]
    %v2065 = vld [vmem:[#allocation2 + $0x110] sm:$0xff]
    %v2066 = vld [vmem:[#allocation2 + $0x118] sm:$0xff]
    %v2067 = vld [vmem:[#allocation2 + $0x120] sm:$0xff]
    %v2068 = vld [vmem:[#allocation2 + $0x128] sm:$0xff]
    %v2069 = vld [vmem:[#allocation2 + $0x130] sm:$0xff]
    %v2070 = vld [vmem:[#allocation2 + $0x138] sm:$0xff]
    %v2071 = vld [vmem:[#allocation2 + $0x140] sm:$0xff]
    %v2072 = vld [vmem:[#allocation2 + $0x148] sm:$0xff]
    %v2073 = vld [vmem:[#allocation2 + $0x150] sm:$0xff]
    %v2074 = vld [vmem:[#allocation2 + $0x158] sm:$0xff]
    %v2075 = vld [vmem:[#allocation2 + $0x160] sm:$0xff]
    %v2076 = vld [vmem:[#allocation2 + $0x168] sm:$0xff]
    %v2077 = vld [vmem:[#allocation2 + $0x170] sm:$0xff]
    %v2078 = vld [vmem:[#allocation2 + $0x178] sm:$0xff]
    %v2079 = vld [vmem:[#allocation2 + $0x180] sm:$0xff]
    %v2080 = vld [vmem:[#allocation2 + $0x188] sm:$0xff]
    %v2081 = vld [vmem:[#allocation2 + $0x190] sm:$0xff]
    %v2082 = vld [vmem:[#allocation2 + $0x198] sm:$0xff]
    %v2083 = vld [vmem:[#allocation2 + $0x1a0] sm:$0xff]
    %v2084 = vld [vmem:[#allocation2 + $0x1a8] sm:$0xff]
    %v2085 = vld [vmem:[#allocation2 + $0x1b0] sm:$0xff]
    %v2086 = vld [vmem:[#allocation2 + $0x1b8] sm:$0xff]
    %v2087 = vld [vmem:[#allocation2 + $0x1c0] sm:$0xff]
    %v2088 = vld [vmem:[#allocation2 + $0x1c8] sm:$0xff]
    %v2089 = vld [vmem:[#allocation2 + $0x1d0] sm:$0xff]
    %v2090 = vld [vmem:[#allocation2 + $0x1d8] sm:$0xff]
    %v2091 = vld [vmem:[#allocation2 + $0x1e0] sm:$0xff]
    %v2092 = vld [vmem:[#allocation2 + $0x1e8] sm:$0xff]
    %v2093 = vld [vmem:[#allocation2 + $0x1f0] sm:$0xff]
    %v2094 = vld [vmem:[#allocation2 + $0x1f8] sm:$0xff]
    %v2095 = vld [vmem:[%s6] sm:$0x3]
    %v2097 = vlaneseq
    %v2098 = vshrl.u32 %v2097, 7
    %v2099 = vsub.s32 0, %v2098
    %v2100 = vrot.slane %v2095, %v2099
    %v2101 = vlaneseq
    %v2102 = vshrl.u32 %v2101, 7
    %v2103 = vsub.s32 1, %v2102
    %v2104 = vrot.slane %v2095, %v2103
    %v2171 = vunpack.c.l.b16 %v2031
    %v2172 = vunpack.c.h.b16 %v2031
    %v2173 = vunpack.c.l.b16 %v2032
    %v2174 = vunpack.c.h.b16 %v2032
    %v2175 = vunpack.c.l.b16 %v2033
    %v2176 = vunpack.c.h.b16 %v2033
    %v2177 = vunpack.c.l.b16 %v2034
    %v2178 = vunpack.c.h.b16 %v2034
    %v2179 = vunpack.c.l.b16 %v2035
    %v2180 = vunpack.c.h.b16 %v2035
    %v2181 = vunpack.c.l.b16 %v2036
    %v2182 = vunpack.c.h.b16 %v2036
    %v2183 = vunpack.c.l.b16 %v2037
    %v2184 = vunpack.c.h.b16 %v2037
    %v2185 = vunpack.c.l.b16 %v2038
    %v2186 = vunpack.c.h.b16 %v2038
    %v2187 = vunpack.c.l.b16 %v2039
    %v2188 = vunpack.c.h.b16 %v2039
    %v2189 = vunpack.c.l.b16 %v2040
    %v2190 = vunpack.c.h.b16 %v2040
    %v2191 = vunpack.c.l.b16 %v2041
    %v2192 = vunpack.c.h.b16 %v2041
    %v2193 = vunpack.c.l.b16 %v2042
    %v2194 = vunpack.c.h.b16 %v2042
    %v2195 = vunpack.c.l.b16 %v2043
    %v2196 = vunpack.c.h.b16 %v2043
    %v2197 = vunpack.c.l.b16 %v2044
    %v2198 = vunpack.c.h.b16 %v2044
    %v2199 = vunpack.c.l.b16 %v2045
    %v2200 = vunpack.c.h.b16 %v2045
    %v2201 = vunpack.c.l.b16 %v2046
    %v2202 = vunpack.c.h.b16 %v2046
    %v2203 = vunpack.c.l.b16 %v2047
    %v2204 = vunpack.c.h.b16 %v2047
    %v2205 = vunpack.c.l.b16 %v2048
    %v2206 = vunpack.c.h.b16 %v2048
    %v2207 = vunpack.c.l.b16 %v2049
    %v2208 = vunpack.c.h.b16 %v2049
    %v2209 = vunpack.c.l.b16 %v2050
    %v2210 = vunpack.c.h.b16 %v2050
    %v2211 = vunpack.c.l.b16 %v2051
    %v2212 = vunpack.c.h.b16 %v2051
    %v2213 = vunpack.c.l.b16 %v2052
    %v2214 = vunpack.c.h.b16 %v2052
    %v2215 = vunpack.c.l.b16 %v2053
    %v2216 = vunpack.c.h.b16 %v2053
    %v2217 = vunpack.c.l.b16 %v2054
    %v2218 = vunpack.c.h.b16 %v2054
    %v2219 = vunpack.c.l.b16 %v2055
    %v2220 = vunpack.c.h.b16 %v2055
    %v2221 = vunpack.c.l.b16 %v2056
    %v2222 = vunpack.c.h.b16 %v2056
    %v2223 = vunpack.c.l.b16 %v2057
    %v2224 = vunpack.c.h.b16 %v2057
    %v2225 = vunpack.c.l.b16 %v2058
    %v2226 = vunpack.c.h.b16 %v2058
    %v2227 = vunpack.c.l.b16 %v2059
    %v2228 = vunpack.c.h.b16 %v2059
    %v2229 = vunpack.c.l.b16 %v2060
    %v2230 = vunpack.c.h.b16 %v2060
    %v2231 = vunpack.c.l.b16 %v2061
    %v2232 = vunpack.c.h.b16 %v2061
    %v2233 = vunpack.c.l.b16 %v2062
    %v2234 = vunpack.c.h.b16 %v2062
    %v2235 = vunpack.c.l.b16 %v2063
    %v2236 = vunpack.c.h.b16 %v2063
    %v2237 = vunpack.c.l.b16 %v2064
    %v2238 = vunpack.c.h.b16 %v2064
    %v2239 = vunpack.c.l.b16 %v2065
    %v2240 = vunpack.c.h.b16 %v2065
    %v2241 = vunpack.c.l.b16 %v2066
    %v2242 = vunpack.c.h.b16 %v2066
    %v2243 = vunpack.c.l.b16 %v2067
    %v2244 = vunpack.c.h.b16 %v2067
    %v2245 = vunpack.c.l.b16 %v2068
    %v2246 = vunpack.c.h.b16 %v2068
    %v2247 = vunpack.c.l.b16 %v2069
    %v2248 = vunpack.c.h.b16 %v2069
    %v2249 = vunpack.c.l.b16 %v2070
    %v2250 = vunpack.c.h.b16 %v2070
    %v2251 = vunpack.c.l.b16 %v2071
    %v2252 = vunpack.c.h.b16 %v2071
    %v2253 = vunpack.c.l.b16 %v2072
    %v2254 = vunpack.c.h.b16 %v2072
    %v2255 = vunpack.c.l.b16 %v2073
    %v2256 = vunpack.c.h.b16 %v2073
    %v2257 = vunpack.c.l.b16 %v2074
    %v2258 = vunpack.c.h.b16 %v2074
    %v2259 = vunpack.c.l.b16 %v2075
    %v2260 = vunpack.c.h.b16 %v2075
    %v2261 = vunpack.c.l.b16 %v2076
    %v2262 = vunpack.c.h.b16 %v2076
    %v2263 = vunpack.c.l.b16 %v2077
    %v2264 = vunpack.c.h.b16 %v2077
    %v2265 = vunpack.c.l.b16 %v2078
    %v2266 = vunpack.c.h.b16 %v2078
    %v2267 = vunpack.c.l.b16 %v2079
    %v2268 = vunpack.c.h.b16 %v2079
    %v2269 = vunpack.c.l.b16 %v2080
    %v2270 = vunpack.c.h.b16 %v2080
    %v2271 = vunpack.c.l.b16 %v2081
    %v2272 = vunpack.c.h.b16 %v2081
    %v2273 = vunpack.c.l.b16 %v2082
    %v2274 = vunpack.c.h.b16 %v2082
    %v2275 = vunpack.c.l.b16 %v2083
    %v2276 = vunpack.c.h.b16 %v2083
    %v2277 = vunpack.c.l.b16 %v2084
    %v2278 = vunpack.c.h.b16 %v2084
    %v2279 = vunpack.c.l.b16 %v2085
    %v2280 = vunpack.c.h.b16 %v2085
    %v2281 = vunpack.c.l.b16 %v2086
    %v2282 = vunpack.c.h.b16 %v2086
    %v2283 = vunpack.c.l.b16 %v2087
    %v2284 = vunpack.c.h.b16 %v2087
    %v2285 = vunpack.c.l.b16 %v2088
    %v2286 = vunpack.c.h.b16 %v2088
    %v2287 = vunpack.c.l.b16 %v2089
    %v2288 = vunpack.c.h.b16 %v2089
    %v2289 = vunpack.c.l.b16 %v2090
    %v2290 = vunpack.c.h.b16 %v2090
    %v2291 = vunpack.c.l.b16 %v2091
    %v2292 = vunpack.c.h.b16 %v2091
    %v2293 = vunpack.c.l.b16 %v2092
    %v2294 = vunpack.c.h.b16 %v2092
    %v2295 = vunpack.c.l.b16 %v2093
    %v2296 = vunpack.c.h.b16 %v2093
    %v2297 = vunpack.c.l.b16 %v2094
    %v2298 = vunpack.c.h.b16 %v2094
    %v2299 = vpack.c.b16 %v2173, %v2171
    %v2300 = vpack.c.b16 %v2174, %v2172
    %v2301 = vpack.c.b16 %v2177, %v2175
    %v2302 = vpack.c.b16 %v2178, %v2176
    %v2303 = vpack.c.b16 %v2181, %v2179
    %v2304 = vpack.c.b16 %v2182, %v2180
    %v2305 = vpack.c.b16 %v2185, %v2183
    %v2306 = vpack.c.b16 %v2186, %v2184
    %v2307 = vpack.c.b16 %v2189, %v2187
    %v2308 = vpack.c.b16 %v2190, %v2188
    %v2309 = vpack.c.b16 %v2193, %v2191
    %v2310 = vpack.c.b16 %v2194, %v2192
    %v2311 = vpack.c.b16 %v2197, %v2195
    %v2312 = vpack.c.b16 %v2198, %v2196
    %v2313 = vpack.c.b16 %v2201, %v2199
    %v2314 = vpack.c.b16 %v2202, %v2200
    %v2315 = vpack.c.b16 %v2205, %v2203
    %v2316 = vpack.c.b16 %v2206, %v2204
    %v2317 = vpack.c.b16 %v2209, %v2207
    %v2318 = vpack.c.b16 %v2210, %v2208
    %v2319 = vpack.c.b16 %v2213, %v2211
    %v2320 = vpack.c.b16 %v2214, %v2212
    %v2321 = vpack.c.b16 %v2217, %v2215
    %v2322 = vpack.c.b16 %v2218, %v2216
    %v2323 = vpack.c.b16 %v2221, %v2219
    %v2324 = vpack.c.b16 %v2222, %v2220
    %v2325 = vpack.c.b16 %v2225, %v2223
    %v2326 = vpack.c.b16 %v2226, %v2224
    %v2327 = vpack.c.b16 %v2229, %v2227
    %v2328 = vpack.c.b16 %v2230, %v2228
    %v2329 = vpack.c.b16 %v2233, %v2231
    %v2330 = vpack.c.b16 %v2234, %v2232
    %v2331 = vpack.c.b16 %v2237, %v2235
    %v2332 = vpack.c.b16 %v2238, %v2236
    %v2333 = vpack.c.b16 %v2241, %v2239
    %v2334 = vpack.c.b16 %v2242, %v2240
    %v2335 = vpack.c.b16 %v2245, %v2243
    %v2336 = vpack.c.b16 %v2246, %v2244
    %v2337 = vpack.c.b16 %v2249, %v2247
    %v2338 = vpack.c.b16 %v2250, %v2248
    %v2339 = vpack.c.b16 %v2253, %v2251
    %v2340 = vpack.c.b16 %v2254, %v2252
    %v2341 = vpack.c.b16 %v2257, %v2255
    %v2342 = vpack.c.b16 %v2258, %v2256
    %v2343 = vpack.c.b16 %v2261, %v2259
    %v2344 = vpack.c.b16 %v2262, %v2260
    %v2345 = vpack.c.b16 %v2265, %v2263
    %v2346 = vpack.c.b16 %v2266, %v2264
    %v2347 = vpack.c.b16 %v2269, %v2267
    %v2348 = vpack.c.b16 %v2270, %v2268
    %v2349 = vpack.c.b16 %v2273, %v2271
    %v2350 = vpack.c.b16 %v2274, %v2272
    %v2351 = vpack.c.b16 %v2277, %v2275
    %v2352 = vpack.c.b16 %v2278, %v2276
    %v2353 = vpack.c.b16 %v2281, %v2279
    %v2354 = vpack.c.b16 %v2282, %v2280
    %v2355 = vpack.c.b16 %v2285, %v2283
    %v2356 = vpack.c.b16 %v2286, %v2284
    %v2357 = vpack.c.b16 %v2289, %v2287
    %v2358 = vpack.c.b16 %v2290, %v2288
    %v2359 = vpack.c.b16 %v2293, %v2291
    %v2360 = vpack.c.b16 %v2294, %v2292
    %v2361 = vpack.c.b16 %v2297, %v2295
    %v2362 = vpack.c.b16 %v2298, %v2296
    %2427 = vmatprep.subr.bf16.mxu0 %v2300
    %2428 = vmatpush1.bf16.msra.mxu0 %v2299
    %2429 = vmatprep.subr.bf16.mxu0 %v2302
    %2430 = vmatpush1.bf16.msra.mxu0 %v2301
    %2431 = vmatprep.subr.bf16.mxu0 %v2304
    %2432 = vmatpush1.bf16.msra.mxu0 %v2303
    %2433 = vmatprep.subr.bf16.mxu0 %v2306
    %2434 = vmatpush1.bf16.msra.mxu0 %v2305
    %2435 = vmatprep.subr.bf16.mxu0 %v2308
    %2436 = vmatpush1.bf16.msra.mxu0 %v2307
    %2437 = vmatprep.subr.bf16.mxu0 %v2310
    %2438 = vmatpush1.bf16.msra.mxu0 %v2309
    %2439 = vmatprep.subr.bf16.mxu0 %v2312
    %2440 = vmatpush1.bf16.msra.mxu0 %v2311
    %2441 = vmatprep.subr.bf16.mxu0 %v2314
    %2442 = vmatpush1.bf16.msra.mxu0 %v2313
    %2443 = vmatprep.subr.bf16.mxu0 %v2316
    %2444 = vmatpush1.bf16.msra.mxu0 %v2315
    %2445 = vmatprep.subr.bf16.mxu0 %v2318
    %2446 = vmatpush1.bf16.msra.mxu0 %v2317
    %2447 = vmatprep.subr.bf16.mxu0 %v2320
    %2448 = vmatpush1.bf16.msra.mxu0 %v2319
    %2449 = vmatprep.subr.bf16.mxu0 %v2322
    %2450 = vmatpush1.bf16.msra.mxu0 %v2321
    %2451 = vmatprep.subr.bf16.mxu0 %v2324
    %2452 = vmatpush1.bf16.msra.mxu0 %v2323
    %2453 = vmatprep.subr.bf16.mxu0 %v2326
    %2454 = vmatpush1.bf16.msra.mxu0 %v2325
    %2455 = vmatprep.subr.bf16.mxu0 %v2328
    %2456 = vmatpush1.bf16.msra.mxu0 %v2327
    %2457 = vmatprep.subr.bf16.mxu0 %v2330
    %2458 = vmatpush1.bf16.msra.mxu0 %v2329
    %2459 = vmatprep.mubr.bf16.mxu0 %v1968
    %2460 = vmatmul.mubr.bf16.gmra.mrb[0].mxu0 %v1967
    %v2461 = vpop.f32.mrb[0].mxu0
    %v2462 = vadd.f32 %v2100, %v2461
    %v2463 = vpop.f32.mrb[0].mxu0
    %v2464 = vadd.f32 %v2104, %v2463
    %v2465 = vpop.f32.mrb[0].mxu0
    %v2466 = vadd.f32 %v2100, %v2465
    %v2467 = vpop.f32.mrb[0].mxu0
    %v2468 = vadd.f32 %v2104, %v2467
    %2469 = vmatprep.mubr.bf16.mxu0 %v1972
    %2470 = vmatmul.mubr.bf16.gmra.mrb[0].mxu0 %v1971
    %v2471 = vpop.f32.mrb[0].mxu0
    %v2472 = vadd.f32 %v2100, %v2471
    %v2473 = vpop.f32.mrb[0].mxu0
    %v2474 = vadd.f32 %v2104, %v2473
    %v2475 = vpop.f32.mrb[0].mxu0
    %v2476 = vadd.f32 %v2100, %v2475
    %v2477 = vpop.f32.mrb[0].mxu0
    %v2478 = vadd.f32 %v2104, %v2477
    %2479 = vmatprep.mubr.bf16.mxu0 %v1976
    %2480 = vmatmul.mubr.bf16.gmra.mrb[0].mxu0 %v1975
    %v2481 = vpop.f32.mrb[0].mxu0
    %v2482 = vadd.f32 %v2100, %v2481
    %v2483 = vpop.f32.mrb[0].mxu0
    %v2484 = vadd.f32 %v2104, %v2483
    %v2485 = vpop.f32.mrb[0].mxu0
    %v2486 = vadd.f32 %v2100, %v2485
    %v2487 = vpop.f32.mrb[0].mxu0
    %v2488 = vadd.f32 %v2104, %v2487
    %2489 = vmatprep.mubr.bf16.mxu0 %v1980
    %2490 = vmatmul.mubr.bf16.gmra.mrb[0].mxu0 %v1979
    %v2491 = vpop.f32.mrb[0].mxu0
    %v2492 = vadd.f32 %v2100, %v2491
    %v2493 = vpop.f32.mrb[0].mxu0
    %v2494 = vadd.f32 %v2104, %v2493
    %v2495 = vpop.f32.mrb[0].mxu0
    %v2496 = vadd.f32 %v2100, %v2495
    %v2497 = vpop.f32.mrb[0].mxu0
    %v2498 = vadd.f32 %v2104, %v2497
    %2499 = vmatprep.mubr.bf16.mxu0 %v1984
    %2500 = vmatmul.mubr.bf16.gmra.mrb[0].mxu0 %v1983
    %v2501 = vpop.f32.mrb[0].mxu0
    %v2502 = vadd.f32 %v2100, %v2501
    %v2503 = vpop.f32.mrb[0].mxu0
    %v2504 = vadd.f32 %v2104, %v2503
    %v2505 = vpop.f32.mrb[0].mxu0
    %v2506 = vadd.f32 %v2100, %v2505
    %v2507 = vpop.f32.mrb[0].mxu0
    %v2508 = vadd.f32 %v2104, %v2507
    %2509 = vmatprep.mubr.bf16.mxu0 %v1988
    %2510 = vmatmul.mubr.bf16.gmra.mrb[0].mxu0 %v1987
    %v2511 = vpop.f32.mrb[0].mxu0
    %v2512 = vadd.f32 %v2100, %v2511
    %v2513 = vpop.f32.mrb[0].mxu0
    %v2514 = vadd.f32 %v2104, %v2513
    %v2515 = vpop.f32.mrb[0].mxu0
    %v2516 = vadd.f32 %v2100, %v2515
    %v2517 = vpop.f32.mrb[0].mxu0
    %v2518 = vadd.f32 %v2104, %v2517
    %2519 = vmatprep.mubr.bf16.mxu0 %v1992
    %2520 = vmatmul.mubr.bf16.gmra.mrb[0].mxu0 %v1991
    %v2521 = vpop.f32.mrb[0].mxu0
    %v2522 = vadd.f32 %v2100, %v2521
    %v2523 = vpop.f32.mrb[0].mxu0
    %v2524 = vadd.f32 %v2104, %v2523
    %v2525 = vpop.f32.mrb[0].mxu0
    %v2526 = vadd.f32 %v2100, %v2525
    %v2527 = vpop.f32.mrb[0].mxu0
    %v2528 = vadd.f32 %v2104, %v2527
    %2529 = vmatprep.mubr.bf16.mxu0 %v1996
    %2530 = vmatmul.mubr.bf16.gmra.mrb[0].mxu0 %v1995
    %v2531 = vpop.f32.mrb[0].mxu0
    %v2532 = vadd.f32 %v2100, %v2531
    %v2533 = vpop.f32.mrb[0].mxu0
    %v2534 = vadd.f32 %v2104, %v2533
    %v2535 = vpop.f32.mrb[0].mxu0
    %v2536 = vadd.f32 %v2100, %v2535
    %v2537 = vpop.f32.mrb[0].mxu0
    %v2538 = vadd.f32 %v2104, %v2537
    %2539 = vmatprep.mubr.bf16.mxu0 %v2000
    %2540 = vmatmul.mubr.bf16.gmra.mrb[0].mxu0 %v1999
    %v2541 = vpop.f32.mrb[0].mxu0
    %v2542 = vadd.f32 %v2100, %v2541
    %v2543 = vpop.f32.mrb[0].mxu0
    %v2544 = vadd.f32 %v2104, %v2543
    %v2545 = vpop.f32.mrb[0].mxu0
    %v2546 = vadd.f32 %v2100, %v2545
    %v2547 = vpop.f32.mrb[0].mxu0
    %v2548 = vadd.f32 %v2104, %v2547
    %2549 = vmatprep.mubr.bf16.mxu0 %v2004
    %2550 = vmatmul.mubr.bf16.gmra.mrb[0].mxu0 %v2003
    %v2551 = vpop.f32.mrb[0].mxu0
    %v2552 = vadd.f32 %v2100, %v2551
    %v2553 = vpop.f32.mrb[0].mxu0
    %v2554 = vadd.f32 %v2104, %v2553
    %v2555 = vpop.f32.mrb[0].mxu0
    %v2556 = vadd.f32 %v2100, %v2555
    %v2557 = vpop.f32.mrb[0].mxu0
    %v2558 = vadd.f32 %v2104, %v2557
    %2559 = vmatprep.mubr.bf16.mxu0 %v2008
    %2560 = vmatmul.mubr.bf16.gmra.mrb[0].mxu0 %v2007
    %v2561 = vpop.f32.mrb[0].mxu0
    %v2562 = vadd.f32 %v2100, %v2561
    %v2563 = vpop.f32.mrb[0].mxu0
    %v2564 = vadd.f32 %v2104, %v2563
    %v2565 = vpop.f32.mrb[0].mxu0
    %v2566 = vadd.f32 %v2100, %v2565
    %v2567 = vpop.f32.mrb[0].mxu0
    %v2568 = vadd.f32 %v2104, %v2567
    %2569 = vmatprep.mubr.bf16.mxu0 %v2012
    %2570 = vmatmul.mubr.bf16.gmra.mrb[0].mxu0 %v2011
    %v2571 = vpop.f32.mrb[0].mxu0
    %v2572 = vadd.f32 %v2100, %v2571
    %v2573 = vpop.f32.mrb[0].mxu0
    %v2574 = vadd.f32 %v2104, %v2573
    %v2575 = vpop.f32.mrb[0].mxu0
    %v2576 = vadd.f32 %v2100, %v2575
    %v2577 = vpop.f32.mrb[0].mxu0
    %v2578 = vadd.f32 %v2104, %v2577
    %2579 = vmatprep.mubr.bf16.mxu0 %v2016
    %2580 = vmatmul.mubr.bf16.gmra.mrb[0].mxu0 %v2015
    %v2581 = vpop.f32.mrb[0].mxu0
    %v2582 = vadd.f32 %v2100, %v2581
    %v2583 = vpop.f32.mrb[0].mxu0
    %v2584 = vadd.f32 %v2104, %v2583
    %v2585 = vpop.f32.mrb[0].mxu0
    %v2586 = vadd.f32 %v2100, %v2585
    %v2587 = vpop.f32.mrb[0].mxu0
    %v2588 = vadd.f32 %v2104, %v2587
    %2589 = vmatprep.mubr.bf16.mxu0 %v2020
    %2590 = vmatmul.mubr.bf16.gmra.mrb[0].mxu0 %v2019
    %v2591 = vpop.f32.mrb[0].mxu0
    %v2592 = vadd.f32 %v2100, %v2591
    %v2593 = vpop.f32.mrb[0].mxu0
    %v2594 = vadd.f32 %v2104, %v2593
    %v2595 = vpop.f32.mrb[0].mxu0
    %v2596 = vadd.f32 %v2100, %v2595
    %v2597 = vpop.f32.mrb[0].mxu0
    %v2598 = vadd.f32 %v2104, %v2597
    %2599 = vmatprep.mubr.bf16.mxu0 %v2024
    %2600 = vmatmul.mubr.bf16.gmra.mrb[0].mxu0 %v2023
    %v2601 = vpop.f32.mrb[0].mxu0
    %v2602 = vadd.f32 %v2100, %v2601
    %v2603 = vpop.f32.mrb[0].mxu0
    %v2604 = vadd.f32 %v2104, %v2603
    %v2605 = vpop.f32.mrb[0].mxu0
    %v2606 = vadd.f32 %v2100, %v2605
    %v2607 = vpop.f32.mrb[0].mxu0
    %v2608 = vadd.f32 %v2104, %v2607
    %2609 = vmatprep.mubr.bf16.mxu0 %v2028
    %2610 = vmatmul.mubr.bf16.gmra.mrb[0].mxu0 %v2027
    %v2611 = vpop.f32.mrb[0].mxu0
    %v2612 = vadd.f32 %v2100, %v2611
    %v2613 = vpop.f32.mrb[0].mxu0
    %v2614 = vadd.f32 %v2104, %v2613
    %v2615 = vpop.f32.mrb[0].mxu0
    %v2616 = vadd.f32 %v2100, %v2615
    %v2617 = vpop.f32.mrb[0].mxu0
    %v2618 = vadd.f32 %v2104, %v2617
    %2619 = vdwg.mxu0
    %2620 = vmatprep.subr.bf16.mxu0 %v2332
    %2621 = vmatpush1.bf16.msra.mxu0 %v2331
    %2622 = vmatprep.subr.bf16.mxu0 %v2334
    %2623 = vmatpush1.bf16.msra.mxu0 %v2333
    %2624 = vmatprep.subr.bf16.mxu0 %v2336
    %2625 = vmatpush1.bf16.msra.mxu0 %v2335
    %2626 = vmatprep.subr.bf16.mxu0 %v2338
    %2627 = vmatpush1.bf16.msra.mxu0 %v2337
    %2628 = vmatprep.subr.bf16.mxu0 %v2340
    %2629 = vmatpush1.bf16.msra.mxu0 %v2339
    %2630 = vmatprep.subr.bf16.mxu0 %v2342
    %2631 = vmatpush1.bf16.msra.mxu0 %v2341
    %2632 = vmatprep.subr.bf16.mxu0 %v2344
    %2633 = vmatpush1.bf16.msra.mxu0 %v2343
    %2634 = vmatprep.subr.bf16.mxu0 %v2346
    %2635 = vmatpush1.bf16.msra.mxu0 %v2345
    %2636 = vmatprep.subr.bf16.mxu0 %v2348
    %2637 = vmatpush1.bf16.msra.mxu0 %v2347
    %2638 = vmatprep.subr.bf16.mxu0 %v2350
    %2639 = vmatpush1.bf16.msra.mxu0 %v2349
    %2640 = vmatprep.subr.bf16.mxu0 %v2352
    %2641 = vmatpush1.bf16.msra.mxu0 %v2351
    %2642 = vmatprep.subr.bf16.mxu0 %v2354
    %2643 = vmatpush1.bf16.msra.mxu0 %v2353
    %2644 = vmatprep.subr.bf16.mxu0 %v2356
    %2645 = vmatpush1.bf16.msra.mxu0 %v2355
    %2646 = vmatprep.subr.bf16.mxu0 %v2358
    %2647 = vmatpush1.bf16.msra.mxu0 %v2357
    %2648 = vmatprep.subr.bf16.mxu0 %v2360
    %2649 = vmatpush1.bf16.msra.mxu0 %v2359
    %2650 = vmatprep.subr.bf16.mxu0 %v2362
    %2651 = vmatpush1.bf16.msra.mxu0 %v2361
    %2652 = vmatprep.mubr.bf16.mxu0 %v1970
    %2653 = vmatmul.mubr.bf16.gmra.mrb[0].mxu0 %v1969
    %v2654 = vpop.f32.mrb[0].mxu0
    %v2655 = vadd.f32 %v2462, %v2654
    %v2656 = vpop.f32.mrb[0].mxu0
    %v2657 = vadd.f32 %v2464, %v2656
    %v2658 = vpop.f32.mrb[0].mxu0
    %v2659 = vadd.f32 %v2466, %v2658
    %v2660 = vpop.f32.mrb[0].mxu0
    %v2661 = vadd.f32 %v2468, %v2660
    %2662 = vmatprep.mubr.bf16.mxu0 %v1974
    %2663 = vmatmul.mubr.bf16.gmra.mrb[0].mxu0 %v1973
    %v2664 = vpop.f32.mrb[0].mxu0
    %v2665 = vadd.f32 %v2472, %v2664
    %v2666 = vpop.f32.mrb[0].mxu0
    %v2667 = vadd.f32 %v2474, %v2666
    %v2668 = vpop.f32.mrb[0].mxu0
    %v2669 = vadd.f32 %v2476, %v2668
    %v2670 = vpop.f32.mrb[0].mxu0
    %v2671 = vadd.f32 %v2478, %v2670
    %2672 = vmatprep.mubr.bf16.mxu0 %v1978
    %2673 = vmatmul.mubr.bf16.gmra.mrb[0].mxu0 %v1977
    %v2674 = vpop.f32.mrb[0].mxu0
    %v2675 = vadd.f32 %v2482, %v2674
    %v2676 = vpop.f32.mrb[0].mxu0
    %v2677 = vadd.f32 %v2484, %v2676
    %v2678 = vpop.f32.mrb[0].mxu0
    %v2679 = vadd.f32 %v2486, %v2678
    %v2680 = vpop.f32.mrb[0].mxu0
    %v2681 = vadd.f32 %v2488, %v2680
    %2682 = vmatprep.mubr.bf16.mxu0 %v1982
    %2683 = vmatmul.mubr.bf16.gmra.mrb[0].mxu0 %v1981
    %v2684 = vpop.f32.mrb[0].mxu0
    %v2685 = vadd.f32 %v2492, %v2684
    %v2686 = vpop.f32.mrb[0].mxu0
    %v2687 = vadd.f32 %v2494, %v2686
    %v2688 = vpop.f32.mrb[0].mxu0
    %v2689 = vadd.f32 %v2496, %v2688
    %v2690 = vpop.f32.mrb[0].mxu0
    %v2691 = vadd.f32 %v2498, %v2690
    %2692 = vmatprep.mubr.bf16.mxu0 %v1986
    %2693 = vmatmul.mubr.bf16.gmra.mrb[0].mxu0 %v1985
    %v2694 = vpop.f32.mrb[0].mxu0
    %v2695 = vadd.f32 %v2502, %v2694
    %v2696 = vpop.f32.mrb[0].mxu0
    %v2697 = vadd.f32 %v2504, %v2696
    %v2698 = vpop.f32.mrb[0].mxu0
    %v2699 = vadd.f32 %v2506, %v2698
    %v2700 = vpop.f32.mrb[0].mxu0
    %v2701 = vadd.f32 %v2508, %v2700
    %2702 = vmatprep.mubr.bf16.mxu0 %v1990
    %2703 = vmatmul.mubr.bf16.gmra.mrb[0].mxu0 %v1989
    %v2704 = vpop.f32.mrb[0].mxu0
    %v2705 = vadd.f32 %v2512, %v2704
    %v2706 = vpop.f32.mrb[0].mxu0
    %v2707 = vadd.f32 %v2514, %v2706
    %v2708 = vpop.f32.mrb[0].mxu0
    %v2709 = vadd.f32 %v2516, %v2708
    %v2710 = vpop.f32.mrb[0].mxu0
    %v2711 = vadd.f32 %v2518, %v2710
    %2712 = vmatprep.mubr.bf16.mxu0 %v1994
    %2713 = vmatmul.mubr.bf16.gmra.mrb[0].mxu0 %v1993
    %v2714 = vpop.f32.mrb[0].mxu0
    %v2715 = vadd.f32 %v2522, %v2714
    %v2716 = vpop.f32.mrb[0].mxu0
    %v2717 = vadd.f32 %v2524, %v2716
    %v2718 = vpop.f32.mrb[0].mxu0
    %v2719 = vadd.f32 %v2526, %v2718
    %v2720 = vpop.f32.mrb[0].mxu0
    %v2721 = vadd.f32 %v2528, %v2720
    %2722 = vmatprep.mubr.bf16.mxu0 %v1998
    %2723 = vmatmul.mubr.bf16.gmra.mrb[0].mxu0 %v1997
    %v2724 = vpop.f32.mrb[0].mxu0
    %v2725 = vadd.f32 %v2532, %v2724
    %v2726 = vpop.f32.mrb[0].mxu0
    %v2727 = vadd.f32 %v2534, %v2726
    %v2728 = vpop.f32.mrb[0].mxu0
    %v2729 = vadd.f32 %v2536, %v2728
    %v2730 = vpop.f32.mrb[0].mxu0
    %v2731 = vadd.f32 %v2538, %v2730
    %2732 = vmatprep.mubr.bf16.mxu0 %v2002
    %2733 = vmatmul.mubr.bf16.gmra.mrb[0].mxu0 %v2001
    %v2734 = vpop.f32.mrb[0].mxu0
    %v2735 = vadd.f32 %v2542, %v2734
    %v2736 = vpop.f32.mrb[0].mxu0
    %v2737 = vadd.f32 %v2544, %v2736
    %v2738 = vpop.f32.mrb[0].mxu0
    %v2739 = vadd.f32 %v2546, %v2738
    %v2740 = vpop.f32.mrb[0].mxu0
    %v2741 = vadd.f32 %v2548, %v2740
    %2742 = vmatprep.mubr.bf16.mxu0 %v2006
    %2743 = vmatmul.mubr.bf16.gmra.mrb[0].mxu0 %v2005
    %v2744 = vpop.f32.mrb[0].mxu0
    %v2745 = vadd.f32 %v2552, %v2744
    %v2746 = vpop.f32.mrb[0].mxu0
    %v2747 = vadd.f32 %v2554, %v2746
    %v2748 = vpop.f32.mrb[0].mxu0
    %v2749 = vadd.f32 %v2556, %v2748
    %v2750 = vpop.f32.mrb[0].mxu0
    %v2751 = vadd.f32 %v2558, %v2750
    %2752 = vmatprep.mubr.bf16.mxu0 %v2010
    %2753 = vmatmul.mubr.bf16.gmra.mrb[0].mxu0 %v2009
    %v2754 = vpop.f32.mrb[0].mxu0
    %v2755 = vadd.f32 %v2562, %v2754
    %v2756 = vpop.f32.mrb[0].mxu0
    %v2757 = vadd.f32 %v2564, %v2756
    %v2758 = vpop.f32.mrb[0].mxu0
    %v2759 = vadd.f32 %v2566, %v2758
    %v2760 = vpop.f32.mrb[0].mxu0
    %v2761 = vadd.f32 %v2568, %v2760
    %2762 = vmatprep.mubr.bf16.mxu0 %v2014
    %2763 = vmatmul.mubr.bf16.gmra.mrb[0].mxu0 %v2013
    %v2764 = vpop.f32.mrb[0].mxu0
    %v2765 = vadd.f32 %v2572, %v2764
    %v2766 = vpop.f32.mrb[0].mxu0
    %v2767 = vadd.f32 %v2574, %v2766
    %v2768 = vpop.f32.mrb[0].mxu0
    %v2769 = vadd.f32 %v2576, %v2768
    %v2770 = vpop.f32.mrb[0].mxu0
    %v2771 = vadd.f32 %v2578, %v2770
    %2772 = vmatprep.mubr.bf16.mxu0 %v2018
    %2773 = vmatmul.mubr.bf16.gmra.mrb[0].mxu0 %v2017
    %v2774 = vpop.f32.mrb[0].mxu0
    %v2775 = vadd.f32 %v2582, %v2774
    %v2776 = vpop.f32.mrb[0].mxu0
    %v2777 = vadd.f32 %v2584, %v2776
    %v2778 = vpop.f32.mrb[0].mxu0
    %v2779 = vadd.f32 %v2586, %v2778
    %v2780 = vpop.f32.mrb[0].mxu0
    %v2781 = vadd.f32 %v2588, %v2780
    %2782 = vmatprep.mubr.bf16.mxu0 %v2022
    %2783 = vmatmul.mubr.bf16.gmra.mrb[0].mxu0 %v2021
    %v2784 = vpop.f32.mrb[0].mxu0
    %v2785 = vadd.f32 %v2592, %v2784
    %v2786 = vpop.f32.mrb[0].mxu0
    %v2787 = vadd.f32 %v2594, %v2786
    %v2788 = vpop.f32.mrb[0].mxu0
    %v2789 = vadd.f32 %v2596, %v2788
    %v2790 = vpop.f32.mrb[0].mxu0
    %v2791 = vadd.f32 %v2598, %v2790
    %2792 = vmatprep.mubr.bf16.mxu0 %v2026
    %2793 = vmatmul.mubr.bf16.gmra.mrb[0].mxu0 %v2025
    %v2794 = vpop.f32.mrb[0].mxu0
    %v2795 = vadd.f32 %v2602, %v2794
    %v2796 = vpop.f32.mrb[0].mxu0
    %v2797 = vadd.f32 %v2604, %v2796
    %v2798 = vpop.f32.mrb[0].mxu0
    %v2799 = vadd.f32 %v2606, %v2798
    %v2800 = vpop.f32.mrb[0].mxu0
    %v2801 = vadd.f32 %v2608, %v2800
    %2802 = vmatprep.mubr.bf16.mxu0 %v2030
    %2803 = vmatmul.mubr.bf16.gmra.mrb[0].mxu0 %v2029
    %v2804 = vpop.f32.mrb[0].mxu0
    %v2805 = vadd.f32 %v2612, %v2804
    %v2806 = vpop.f32.mrb[0].mxu0
    %v2807 = vadd.f32 %v2614, %v2806
    %v2808 = vpop.f32.mrb[0].mxu0
    %v2809 = vadd.f32 %v2616, %v2808
    %v2810 = vpop.f32.mrb[0].mxu0
    %v2811 = vadd.f32 %v2618, %v2810
    %2812 = vdwg.mxu0
    %v2813 = vld [vmem:[%s7] sm:$0x3]
    %v2814 = vld [vmem:[%s8] sm:$0x3]
    %v2815 = vadd.f32 %v2655, %v2657
    %2816 = vadd.xlane.f32.xlu0 %v2815
    %v2817 = vpop.xlane.xlu0 %2816
    %v2818 = vadd.f32 %v2659, %v2661
    %2819 = vadd.xlane.f32.xlu0 %v2818
    %v2820 = vpop.xlane.xlu0 %2819
    %v2821 = vadd.f32 %v2665, %v2667
    %2822 = vadd.xlane.f32.xlu0 %v2821
    %v2823 = vpop.xlane.xlu0 %2822
    %v2824 = vadd.f32 %v2669, %v2671
    %2825 = vadd.xlane.f32.xlu0 %v2824
    %v2826 = vpop.xlane.xlu0 %2825
    %v2827 = vadd.f32 %v2675, %v2677
    %2828 = vadd.xlane.f32.xlu0 %v2827
    %v2829 = vpop.xlane.xlu0 %2828
    %v2830 = vadd.f32 %v2679, %v2681
    %2831 = vadd.xlane.f32.xlu0 %v2830
    %v2832 = vpop.xlane.xlu0 %2831
    %v2833 = vadd.f32 %v2685, %v2687
    %2834 = vadd.xlane.f32.xlu0 %v2833
    %v2835 = vpop.xlane.xlu0 %2834
    %v2836 = vadd.f32 %v2689, %v2691
    %2837 = vadd.xlane.f32.xlu0 %v2836
    %v2838 = vpop.xlane.xlu0 %2837
    %v2839 = vadd.f32 %v2695, %v2697
    %2840 = vadd.xlane.f32.xlu0 %v2839
    %v2841 = vpop.xlane.xlu0 %2840
    %v2842 = vadd.f32 %v2699, %v2701
    %2843 = vadd.xlane.f32.xlu0 %v2842
    %v2844 = vpop.xlane.xlu0 %2843
    %v2845 = vadd.f32 %v2705, %v2707
    %2846 = vadd.xlane.f32.xlu0 %v2845
    %v2847 = vpop.xlane.xlu0 %2846
    %v2848 = vadd.f32 %v2709, %v2711
    %2849 = vadd.xlane.f32.xlu0 %v2848
    %v2850 = vpop.xlane.xlu0 %2849
    %v2851 = vadd.f32 %v2715, %v2717
    %2852 = vadd.xlane.f32.xlu0 %v2851
    %v2853 = vpop.xlane.xlu0 %2852
    %v2854 = vadd.f32 %v2719, %v2721
    %2855 = vadd.xlane.f32.xlu0 %v2854
    %v2856 = vpop.xlane.xlu0 %2855
    %v2857 = vadd.f32 %v2725, %v2727
    %2858 = vadd.xlane.f32.xlu0 %v2857
    %v2859 = vpop.xlane.xlu0 %2858
    %v2860 = vadd.f32 %v2729, %v2731
    %2861 = vadd.xlane.f32.xlu0 %v2860
    %v2862 = vpop.xlane.xlu0 %2861
    %v2863 = vadd.f32 %v2735, %v2737
    %2864 = vadd.xlane.f32.xlu0 %v2863
    %v2865 = vpop.xlane.xlu0 %2864
    %v2866 = vadd.f32 %v2739, %v2741
    %2867 = vadd.xlane.f32.xlu0 %v2866
    %v2868 = vpop.xlane.xlu0 %2867
    %v2869 = vadd.f32 %v2745, %v2747
    %2870 = vadd.xlane.f32.xlu0 %v2869
    %v2871 = vpop.xlane.xlu0 %2870
    %v2872 = vadd.f32 %v2749, %v2751
    %2873 = vadd.xlane.f32.xlu0 %v2872
    %v2874 = vpop.xlane.xlu0 %2873
    %v2875 = vadd.f32 %v2755, %v2757
    %2876 = vadd.xlane.f32.xlu0 %v2875
    %v2877 = vpop.xlane.xlu0 %2876
    %v2878 = vadd.f32 %v2759, %v2761
    %2879 = vadd.xlane.f32.xlu0 %v2878
    %v2880 = vpop.xlane.xlu0 %2879
    %v2881 = vadd.f32 %v2765, %v2767
    %2882 = vadd.xlane.f32.xlu0 %v2881
    %v2883 = vpop.xlane.xlu0 %2882
    %v2884 = vadd.f32 %v2769, %v2771
    %2885 = vadd.xlane.f32.xlu0 %v2884
    %v2886 = vpop.xlane.xlu0 %2885
    %v2887 = vadd.f32 %v2775, %v2777
    %2888 = vadd.xlane.f32.xlu0 %v2887
    %v2889 = vpop.xlane.xlu0 %2888
    %v2890 = vadd.f32 %v2779, %v2781
    %2891 = vadd.xlane.f32.xlu0 %v2890
    %v2892 = vpop.xlane.xlu0 %2891
    %v2893 = vadd.f32 %v2785, %v2787
    %2894 = vadd.xlane.f32.xlu0 %v2893
    %v2895 = vpop.xlane.xlu0 %2894
    %v2896 = vadd.f32 %v2789, %v2791
    %2897 = vadd.xlane.f32.xlu0 %v2896
    %v2898 = vpop.xlane.xlu0 %2897
    %v2899 = vadd.f32 %v2795, %v2797
    %2900 = vadd.xlane.f32.xlu0 %v2899
    %v2901 = vpop.xlane.xlu0 %2900
    %v2902 = vadd.f32 %v2799, %v2801
    %2903 = vadd.xlane.f32.xlu0 %v2902
    %v2904 = vpop.xlane.xlu0 %2903
    %v2905 = vadd.f32 %v2805, %v2807
    %2906 = vadd.xlane.f32.xlu0 %v2905
    %v2907 = vpop.xlane.xlu0 %2906
    %v2908 = vadd.f32 %v2809, %v2811
    %2909 = vadd.xlane.f32.xlu0 %v2908
    %v2910 = vpop.xlane.xlu0 %2909
    %v2911 = vmul.f32 %v2817, 0.00390625
    %v2912 = vmul.f32 %v2820, 0.00390625
    %v2913 = vmul.f32 %v2823, 0.00390625
    %v2914 = vmul.f32 %v2826, 0.00390625
    %v2915 = vmul.f32 %v2829, 0.00390625
    %v2916 = vmul.f32 %v2832, 0.00390625
    %v2917 = vmul.f32 %v2835, 0.00390625
    %v2918 = vmul.f32 %v2838, 0.00390625
    %v2919 = vmul.f32 %v2841, 0.00390625
    %v2920 = vmul.f32 %v2844, 0.00390625
    %v2921 = vmul.f32 %v2847, 0.00390625
    %v2922 = vmul.f32 %v2850, 0.00390625
    %v2923 = vmul.f32 %v2853, 0.00390625
    %v2924 = vmul.f32 %v2856, 0.00390625
    %v2925 = vmul.f32 %v2859, 0.00390625
    %v2926 = vmul.f32 %v2862, 0.00390625
    %v2927 = vmul.f32 %v2865, 0.00390625
    %v2928 = vmul.f32 %v2868, 0.00390625
    %v2929 = vmul.f32 %v2871, 0.00390625
    %v2930 = vmul.f32 %v2874, 0.00390625
    %v2931 = vmul.f32 %v2877, 0.00390625
    %v2932 = vmul.f32 %v2880, 0.00390625
    %v2933 = vmul.f32 %v2883, 0.00390625
    %v2934 = vmul.f32 %v2886, 0.00390625
    %v2935 = vmul.f32 %v2889, 0.00390625
    %v2936 = vmul.f32 %v2892, 0.00390625
    %v2937 = vmul.f32 %v2895, 0.00390625
    %v2938 = vmul.f32 %v2898, 0.00390625
    %v2939 = vmul.f32 %v2901, 0.00390625
    %v2940 = vmul.f32 %v2904, 0.00390625
    %v2941 = vmul.f32 %v2907, 0.00390625
    %v2942 = vmul.f32 %v2910, 0.00390625
    %v2943 = vmul.f32 %v2655, %v2655
    %v2944 = vmul.f32 %v2657, %v2657
    %v2945 = vmul.f32 %v2659, %v2659
    %v2946 = vmul.f32 %v2661, %v2661
    %v2947 = vmul.f32 %v2665, %v2665
    %v2948 = vmul.f32 %v2667, %v2667
    %v2949 = vmul.f32 %v2669, %v2669
    %v2950 = vmul.f32 %v2671, %v2671
    %v2951 = vmul.f32 %v2675, %v2675
    %v2952 = vmul.f32 %v2677, %v2677
    %v2953 = vmul.f32 %v2679, %v2679
    %v2954 = vmul.f32 %v2681, %v2681
    %v2955 = vmul.f32 %v2685, %v2685
    %v2956 = vmul.f32 %v2687, %v2687
    %v2957 = vmul.f32 %v2689, %v2689
    %v2958 = vmul.f32 %v2691, %v2691
    %v2959 = vmul.f32 %v2695, %v2695
    %v2960 = vmul.f32 %v2697, %v2697
    %v2961 = vmul.f32 %v2699, %v2699
    %v2962 = vmul.f32 %v2701, %v2701
    %v2963 = vmul.f32 %v2705, %v2705
    %v2964 = vmul.f32 %v2707, %v2707
    %v2965 = vmul.f32 %v2709, %v2709
    %v2966 = vmul.f32 %v2711, %v2711
    %v2967 = vmul.f32 %v2715, %v2715
    %v2968 = vmul.f32 %v2717, %v2717
    %v2969 = vmul.f32 %v2719, %v2719
    %v2970 = vmul.f32 %v2721, %v2721
    %v2971 = vmul.f32 %v2725, %v2725
    %v2972 = vmul.f32 %v2727, %v2727
    %v2973 = vmul.f32 %v2729, %v2729
    %v2974 = vmul.f32 %v2731, %v2731
    %v2975 = vmul.f32 %v2735, %v2735
    %v2976 = vmul.f32 %v2737, %v2737
    %v2977 = vmul.f32 %v2739, %v2739
    %v2978 = vmul.f32 %v2741, %v2741
    %v2979 = vmul.f32 %v2745, %v2745
    %v2980 = vmul.f32 %v2747, %v2747
    %v2981 = vmul.f32 %v2749, %v2749
    %v2982 = vmul.f32 %v2751, %v2751
    %v2983 = vmul.f32 %v2755, %v2755
    %v2984 = vmul.f32 %v2757, %v2757
    %v2985 = vmul.f32 %v2759, %v2759
    %v2986 = vmul.f32 %v2761, %v2761
    %v2987 = vmul.f32 %v2765, %v2765
    %v2988 = vmul.f32 %v2767, %v2767
    %v2989 = vmul.f32 %v2769, %v2769
    %v2990 = vmul.f32 %v2771, %v2771
    %v2991 = vmul.f32 %v2775, %v2775
    %v2992 = vmul.f32 %v2777, %v2777
    %v2993 = vmul.f32 %v2779, %v2779
    %v2994 = vmul.f32 %v2781, %v2781
    %v2995 = vmul.f32 %v2785, %v2785
    %v2996 = vmul.f32 %v2787, %v2787
    %v2997 = vmul.f32 %v2789, %v2789
    %v2998 = vmul.f32 %v2791, %v2791
    %v2999 = vmul.f32 %v2795, %v2795
    %v3000 = vmul.f32 %v2797, %v2797
    %v3001 = vmul.f32 %v2799, %v2799
    %v3002 = vmul.f32 %v2801, %v2801
    %v3003 = vmul.f32 %v2805, %v2805
    %v3004 = vmul.f32 %v2807, %v2807
    %v3005 = vmul.f32 %v2809, %v2809
    %v3006 = vmul.f32 %v2811, %v2811
    %v3007 = vadd.f32 %v2943, %v2944
    %3008 = vadd.xlane.f32.xlu0 %v3007
    %v3009 = vpop.xlane.xlu0 %3008
    %v3010 = vadd.f32 %v2945, %v2946
    %3011 = vadd.xlane.f32.xlu0 %v3010
    %v3012 = vpop.xlane.xlu0 %3011
    %v3013 = vadd.f32 %v2947, %v2948
    %3014 = vadd.xlane.f32.xlu0 %v3013
    %v3015 = vpop.xlane.xlu0 %3014
    %v3016 = vadd.f32 %v2949, %v2950
    %3017 = vadd.xlane.f32.xlu0 %v3016
    %v3018 = vpop.xlane.xlu0 %3017
    %v3019 = vadd.f32 %v2951, %v2952
    %3020 = vadd.xlane.f32.xlu0 %v3019
    %v3021 = vpop.xlane.xlu0 %3020
    %v3022 = vadd.f32 %v2953, %v2954
    %3023 = vadd.xlane.f32.xlu0 %v3022
    %v3024 = vpop.xlane.xlu0 %3023
    %v3025 = vadd.f32 %v2955, %v2956
    %3026 = vadd.xlane.f32.xlu0 %v3025
    %v3027 = vpop.xlane.xlu0 %3026
    %v3028 = vadd.f32 %v2957, %v2958
    %3029 = vadd.xlane.f32.xlu0 %v3028
    %v3030 = vpop.xlane.xlu0 %3029
    %v3031 = vadd.f32 %v2959, %v2960
    %3032 = vadd.xlane.f32.xlu0 %v3031
    %v3033 = vpop.xlane.xlu0 %3032
    %v3034 = vadd.f32 %v2961, %v2962
    %3035 = vadd.xlane.f32.xlu0 %v3034
    %v3036 = vpop.xlane.xlu0 %3035
    %v3037 = vadd.f32 %v2963, %v2964
    %3038 = vadd.xlane.f32.xlu0 %v3037
    %v3039 = vpop.xlane.xlu0 %3038
    %v3040 = vadd.f32 %v2965, %v2966
    %3041 = vadd.xlane.f32.xlu0 %v3040
    %v3042 = vpop.xlane.xlu0 %3041
    %v3043 = vadd.f32 %v2967, %v2968
    %3044 = vadd.xlane.f32.xlu0 %v3043
    %v3045 = vpop.xlane.xlu0 %3044
    %v3046 = vadd.f32 %v2969, %v2970
    %3047 = vadd.xlane.f32.xlu0 %v3046
    %v3048 = vpop.xlane.xlu0 %3047
    %v3049 = vadd.f32 %v2971, %v2972
    %3050 = vadd.xlane.f32.xlu0 %v3049
    %v3051 = vpop.xlane.xlu0 %3050
    %v3052 = vadd.f32 %v2973, %v2974
    %3053 = vadd.xlane.f32.xlu0 %v3052
    %v3054 = vpop.xlane.xlu0 %3053
    %v3055 = vadd.f32 %v2975, %v2976
    %3056 = vadd.xlane.f32.xlu0 %v3055
    %v3057 = vpop.xlane.xlu0 %3056
    %v3058 = vadd.f32 %v2977, %v2978
    %3059 = vadd.xlane.f32.xlu0 %v3058
    %v3060 = vpop.xlane.xlu0 %3059
    %v3061 = vadd.f32 %v2979, %v2980
    %3062 = vadd.xlane.f32.xlu0 %v3061
    %v3063 = vpop.xlane.xlu0 %3062
    %v3064 = vadd.f32 %v2981, %v2982
    %3065 = vadd.xlane.f32.xlu0 %v3064
    %v3066 = vpop.xlane.xlu0 %3065
    %v3067 = vadd.f32 %v2983, %v2984
    %3068 = vadd.xlane.f32.xlu0 %v3067
    %v3069 = vpop.xlane.xlu0 %3068
    %v3070 = vadd.f32 %v2985, %v2986
    %3071 = vadd.xlane.f32.xlu0 %v3070
    %v3072 = vpop.xlane.xlu0 %3071
    %v3073 = vadd.f32 %v2987, %v2988
    %3074 = vadd.xlane.f32.xlu0 %v3073
    %v3075 = vpop.xlane.xlu0 %3074
    %v3076 = vadd.f32 %v2989, %v2990
    %3077 = vadd.xlane.f32.xlu0 %v3076
    %v3078 = vpop.xlane.xlu0 %3077
    %v3079 = vadd.f32 %v2991, %v2992
    %3080 = vadd.xlane.f32.xlu0 %v3079
    %v3081 = vpop.xlane.xlu0 %3080
    %v3082 = vadd.f32 %v2993, %v2994
    %3083 = vadd.xlane.f32.xlu0 %v3082
    %v3084 = vpop.xlane.xlu0 %3083
    %v3085 = vadd.f32 %v2995, %v2996
    %3086 = vadd.xlane.f32.xlu0 %v3085
    %v3087 = vpop.xlane.xlu0 %3086
    %v3088 = vadd.f32 %v2997, %v2998
    %3089 = vadd.xlane.f32.xlu0 %v3088
    %v3090 = vpop.xlane.xlu0 %3089
    %v3091 = vadd.f32 %v2999, %v3000
    %3092 = vadd.xlane.f32.xlu0 %v3091
    %v3093 = vpop.xlane.xlu0 %3092
    %v3094 = vadd.f32 %v3001, %v3002
    %3095 = vadd.xlane.f32.xlu0 %v3094
    %v3096 = vpop.xlane.xlu0 %3095
    %v3097 = vadd.f32 %v3003, %v3004
    %3098 = vadd.xlane.f32.xlu0 %v3097
    %v3099 = vpop.xlane.xlu0 %3098
    %v3100 = vadd.f32 %v3005, %v3006
    %3101 = vadd.xlane.f32.xlu0 %v3100
    %v3102 = vpop.xlane.xlu0 %3101
    %v3103 = vmul.f32 %v3009, 0.00390625
    %v3104 = vmul.f32 %v3012, 0.00390625
    %v3105 = vmul.f32 %v3015, 0.00390625
    %v3106 = vmul.f32 %v3018, 0.00390625
    %v3107 = vmul.f32 %v3021, 0.00390625
    %v3108 = vmul.f32 %v3024, 0.00390625
    %v3109 = vmul.f32 %v3027, 0.00390625
    %v3110 = vmul.f32 %v3030, 0.00390625
    %v3111 = vmul.f32 %v3033, 0.00390625
    %v3112 = vmul.f32 %v3036, 0.00390625
    %v3113 = vmul.f32 %v3039, 0.00390625
    %v3114 = vmul.f32 %v3042, 0.00390625
    %v3115 = vmul.f32 %v3045, 0.00390625
    %v3116 = vmul.f32 %v3048, 0.00390625
    %v3117 = vmul.f32 %v3051, 0.00390625
    %v3118 = vmul.f32 %v3054, 0.00390625
    %v3119 = vmul.f32 %v3057, 0.00390625
    %v3120 = vmul.f32 %v3060, 0.00390625
    %v3121 = vmul.f32 %v3063, 0.00390625
    %v3122 = vmul.f32 %v3066, 0.00390625
    %v3123 = vmul.f32 %v3069, 0.00390625
    %v3124 = vmul.f32 %v3072, 0.00390625
    %v3125 = vmul.f32 %v3075, 0.00390625
    %v3126 = vmul.f32 %v3078, 0.00390625
    %v3127 = vmul.f32 %v3081, 0.00390625
    %v3128 = vmul.f32 %v3084, 0.00390625
    %v3129 = vmul.f32 %v3087, 0.00390625
    %v3130 = vmul.f32 %v3090, 0.00390625
    %v3131 = vmul.f32 %v3093, 0.00390625
    %v3132 = vmul.f32 %v3096, 0.00390625
    %v3133 = vmul.f32 %v3099, 0.00390625
    %v3134 = vmul.f32 %v3102, 0.00390625
    %v3135 = vmul.f32 %v2911, %v2911
    %v3136 = vmul.f32 %v2912, %v2912
    %v3137 = vmul.f32 %v2913, %v2913
    %v3138 = vmul.f32 %v2914, %v2914
    %v3139 = vmul.f32 %v2915, %v2915
    %v3140 = vmul.f32 %v2916, %v2916
    %v3141 = vmul.f32 %v2917, %v2917
    %v3142 = vmul.f32 %v2918, %v2918
    %v3143 = vmul.f32 %v2919, %v2919
    %v3144 = vmul.f32 %v2920, %v2920
    %v3145 = vmul.f32 %v2921, %v2921
    %v3146 = vmul.f32 %v2922, %v2922
    %v3147 = vmul.f32 %v2923, %v2923
    %v3148 = vmul.f32 %v2924, %v2924
    %v3149 = vmul.f32 %v2925, %v2925
    %v3150 = vmul.f32 %v2926, %v2926
    %v3151 = vmul.f32 %v2927, %v2927
    %v3152 = vmul.f32 %v2928, %v2928
    %v3153 = vmul.f32 %v2929, %v2929
    %v3154 = vmul.f32 %v2930, %v2930
    %v3155 = vmul.f32 %v2931, %v2931
    %v3156 = vmul.f32 %v2932, %v2932
    %v3157 = vmul.f32 %v2933, %v2933
    %v3158 = vmul.f32 %v2934, %v2934
    %v3159 = vmul.f32 %v2935, %v2935
    %v3160 = vmul.f32 %v2936, %v2936
    %v3161 = vmul.f32 %v2937, %v2937
    %v3162 = vmul.f32 %v2938, %v2938
    %v3163 = vmul.f32 %v2939, %v2939
    %v3164 = vmul.f32 %v2940, %v2940
    %v3165 = vmul.f32 %v2941, %v2941
    %v3166 = vmul.f32 %v2942, %v2942
    %v3167 = vsub.f32 %v3103, %v3135
    %v3168 = vsub.f32 %v3104, %v3136
    %v3169 = vsub.f32 %v3105, %v3137
    %v3170 = vsub.f32 %v3106, %v3138
    %v3171 = vsub.f32 %v3107, %v3139
    %v3172 = vsub.f32 %v3108, %v3140
    %v3173 = vsub.f32 %v3109, %v3141
    %v3174 = vsub.f32 %v3110, %v3142
    %v3175 = vsub.f32 %v3111, %v3143
    %v3176 = vsub.f32 %v3112, %v3144
    %v3177 = vsub.f32 %v3113, %v3145
    %v3178 = vsub.f32 %v3114, %v3146
    %v3179 = vsub.f32 %v3115, %v3147
    %v3180 = vsub.f32 %v3116, %v3148
    %v3181 = vsub.f32 %v3117, %v3149
    %v3182 = vsub.f32 %v3118, %v3150
    %v3183 = vsub.f32 %v3119, %v3151
    %v3184 = vsub.f32 %v3120, %v3152
    %v3185 = vsub.f32 %v3121, %v3153
    %v3186 = vsub.f32 %v3122, %v3154
    %v3187 = vsub.f32 %v3123, %v3155
    %v3188 = vsub.f32 %v3124, %v3156
    %v3189 = vsub.f32 %v3125, %v3157
    %v3190 = vsub.f32 %v3126, %v3158
    %v3191 = vsub.f32 %v3127, %v3159
    %v3192 = vsub.f32 %v3128, %v3160
    %v3193 = vsub.f32 %v3129, %v3161
    %v3194 = vsub.f32 %v3130, %v3162
    %v3195 = vsub.f32 %v3131, %v3163
    %v3196 = vsub.f32 %v3132, %v3164
    %v3197 = vsub.f32 %v3133, %v3165
    %v3198 = vsub.f32 %v3134, %v3166
    %v3199 = vsub.f32 %v2655, %v2911
    %v3200 = vsub.f32 %v2657, %v2911
    %v3201 = vsub.f32 %v2659, %v2912
    %v3202 = vsub.f32 %v2661, %v2912
    %v3203 = vsub.f32 %v2665, %v2913
    %v3204 = vsub.f32 %v2667, %v2913
    %v3205 = vsub.f32 %v2669, %v2914
    %v3206 = vsub.f32 %v2671, %v2914
    %v3207 = vsub.f32 %v2675, %v2915
    %v3208 = vsub.f32 %v2677, %v2915
    %v3209 = vsub.f32 %v2679, %v2916
    %v3210 = vsub.f32 %v2681, %v2916
    %v3211 = vsub.f32 %v2685, %v2917
    %v3212 = vsub.f32 %v2687, %v2917
    %v3213 = vsub.f32 %v2689, %v2918
    %v3214 = vsub.f32 %v2691, %v2918
    %v3215 = vsub.f32 %v2695, %v2919
    %v3216 = vsub.f32 %v2697, %v2919
    %v3217 = vsub.f32 %v2699, %v2920
    %v3218 = vsub.f32 %v2701, %v2920
    %v3219 = vsub.f32 %v2705, %v2921
    %v3220 = vsub.f32 %v2707, %v2921
    %v3221 = vsub.f32 %v2709, %v2922
    %v3222 = vsub.f32 %v2711, %v2922
    %v3223 = vsub.f32 %v2715, %v2923
    %v3224 = vsub.f32 %v2717, %v2923
    %v3225 = vsub.f32 %v2719, %v2924
    %v3226 = vsub.f32 %v2721, %v2924
    %v3227 = vsub.f32 %v2725, %v2925
    %v3228 = vsub.f32 %v2727, %v2925
    %v3229 = vsub.f32 %v2729, %v2926
    %v3230 = vsub.f32 %v2731, %v2926
    %v3231 = vsub.f32 %v2735, %v2927
    %v3232 = vsub.f32 %v2737, %v2927
    %v3233 = vsub.f32 %v2739, %v2928
    %v3234 = vsub.f32 %v2741, %v2928
    %v3235 = vsub.f32 %v2745, %v2929
    %v3236 = vsub.f32 %v2747, %v2929
    %v3237 = vsub.f32 %v2749, %v2930
    %v3238 = vsub.f32 %v2751, %v2930
    %v3239 = vsub.f32 %v2755, %v2931
    %v3240 = vsub.f32 %v2757, %v2931
    %v3241 = vsub.f32 %v2759, %v2932
    %v3242 = vsub.f32 %v2761, %v2932
    %v3243 = vsub.f32 %v2765, %v2933
    %v3244 = vsub.f32 %v2767, %v2933
    %v3245 = vsub.f32 %v2769, %v2934
    %v3246 = vsub.f32 %v2771, %v2934
    %v3247 = vsub.f32 %v2775, %v2935
    %v3248 = vsub.f32 %v2777, %v2935
    %v3249 = vsub.f32 %v2779, %v2936
    %v3250 = vsub.f32 %v2781, %v2936
    %v3251 = vsub.f32 %v2785, %v2937
    %v3252 = vsub.f32 %v2787, %v2937
    %v3253 = vsub.f32 %v2789, %v2938
    %v3254 = vsub.f32 %v2791, %v2938
    %v3255 = vsub.f32 %v2795, %v2939
    %v3256 = vsub.f32 %v2797, %v2939
    %v3257 = vsub.f32 %v2799, %v2940
    %v3258 = vsub.f32 %v2801, %v2940
    %v3259 = vsub.f32 %v2805, %v2941
    %v3260 = vsub.f32 %v2807, %v2941
    %v3261 = vsub.f32 %v2809, %v2942
    %v3262 = vsub.f32 %v2811, %v2942
    %v3263 = vadd.f32 %v3167, 1e-05
    %v3264 = vadd.f32 %v3168, 1e-05
    %v3265 = vadd.f32 %v3169, 1e-05
    %v3266 = vadd.f32 %v3170, 1e-05
    %v3267 = vadd.f32 %v3171, 1e-05
    %v3268 = vadd.f32 %v3172, 1e-05
    %v3269 = vadd.f32 %v3173, 1e-05
    %v3270 = vadd.f32 %v3174, 1e-05
    %v3271 = vadd.f32 %v3175, 1e-05
    %v3272 = vadd.f32 %v3176, 1e-05
    %v3273 = vadd.f32 %v3177, 1e-05
    %v3274 = vadd.f32 %v3178, 1e-05
    %v3275 = vadd.f32 %v3179, 1e-05
    %v3276 = vadd.f32 %v3180, 1e-05
    %v3277 = vadd.f32 %v3181, 1e-05
    %v3278 = vadd.f32 %v3182, 1e-05
    %v3279 = vadd.f32 %v3183, 1e-05
    %v3280 = vadd.f32 %v3184, 1e-05
    %v3281 = vadd.f32 %v3185, 1e-05
    %v3282 = vadd.f32 %v3186, 1e-05
    %v3283 = vadd.f32 %v3187, 1e-05
    %v3284 = vadd.f32 %v3188, 1e-05
    %v3285 = vadd.f32 %v3189, 1e-05
    %v3286 = vadd.f32 %v3190, 1e-05
    %v3287 = vadd.f32 %v3191, 1e-05
    %v3288 = vadd.f32 %v3192, 1e-05
    %v3289 = vadd.f32 %v3193, 1e-05
    %v3290 = vadd.f32 %v3194, 1e-05
    %v3291 = vadd.f32 %v3195, 1e-05
    %v3292 = vadd.f32 %v3196, 1e-05
    %v3293 = vadd.f32 %v3197, 1e-05
    %v3294 = vadd.f32 %v3198, 1e-05
    %v3295 = vrsqrt.pop %v3263
    %v3296 = vrsqrt.pop %v3264
    %v3297 = vrsqrt.pop %v3265
    %v3298 = vrsqrt.pop %v3266
    %v3299 = vrsqrt.pop %v3267
    %v3300 = vrsqrt.pop %v3268
    %v3301 = vrsqrt.pop %v3269
    %v3302 = vrsqrt.pop %v3270
    %v3303 = vrsqrt.pop %v3271
    %v3304 = vrsqrt.pop %v3272
    %v3305 = vrsqrt.pop %v3273
    %v3306 = vrsqrt.pop %v3274
    %v3307 = vrsqrt.pop %v3275
    %v3308 = vrsqrt.pop %v3276
    %v3309 = vrsqrt.pop %v3277
    %v3310 = vrsqrt.pop %v3278
    %v3311 = vrsqrt.pop %v3279
    %v3312 = vrsqrt.pop %v3280
    %v3313 = vrsqrt.pop %v3281
    %v3314 = vrsqrt.pop %v3282
    %v3315 = vrsqrt.pop %v3283
    %v3316 = vrsqrt.pop %v3284
    %v3317 = vrsqrt.pop %v3285
    %v3318 = vrsqrt.pop %v3286
    %v3319 = vrsqrt.pop %v3287
    %v3320 = vrsqrt.pop %v3288
    %v3321 = vrsqrt.pop %v3289
    %v3322 = vrsqrt.pop %v3290
    %v3323 = vrsqrt.pop %v3291
    %v3324 = vrsqrt.pop %v3292
    %v3325 = vrsqrt.pop %v3293
    %v3326 = vrsqrt.pop %v3294
    %v3327 = vmul.f32 %v3199, %v3295
    %v3328 = vmul.f32 %v3200, %v3295
    %v3329 = vmul.f32 %v3201, %v3296
    %v3330 = vmul.f32 %v3202, %v3296
    %v3331 = vmul.f32 %v3203, %v3297
    %v3332 = vmul.f32 %v3204, %v3297
    %v3333 = vmul.f32 %v3205, %v3298
    %v3334 = vmul.f32 %v3206, %v3298
    %v3335 = vmul.f32 %v3207, %v3299
    %v3336 = vmul.f32 %v3208, %v3299
    %v3337 = vmul.f32 %v3209, %v3300
    %v3338 = vmul.f32 %v3210, %v3300
    %v3339 = vmul.f32 %v3211, %v3301
    %v3340 = vmul.f32 %v3212, %v3301
    %v3341 = vmul.f32 %v3213, %v3302
    %v3342 = vmul.f32 %v3214, %v3302
    %v3343 = vmul.f32 %v3215, %v3303
    %v3344 = vmul.f32 %v3216, %v3303
    %v3345 = vmul.f32 %v3217, %v3304
    %v3346 = vmul.f32 %v3218, %v3304
    %v3347 = vmul.f32 %v3219, %v3305
    %v3348 = vmul.f32 %v3220, %v3305
    %v3349 = vmul.f32 %v3221, %v3306
    %v3350 = vmul.f32 %v3222, %v3306
    %v3351 = vmul.f32 %v3223, %v3307
    %v3352 = vmul.f32 %v3224, %v3307
    %v3353 = vmul.f32 %v3225, %v3308
    %v3354 = vmul.f32 %v3226, %v3308
    %v3355 = vmul.f32 %v3227, %v3309
    %v3356 = vmul.f32 %v3228, %v3309
    %v3357 = vmul.f32 %v3229, %v3310
    %v3358 = vmul.f32 %v3230, %v3310
    %v3359 = vmul.f32 %v3231, %v3311
    %v3360 = vmul.f32 %v3232, %v3311
    %v3361 = vmul.f32 %v3233, %v3312
    %v3362 = vmul.f32 %v3234, %v3312
    %v3363 = vmul.f32 %v3235, %v3313
    %v3364 = vmul.f32 %v3236, %v3313
    %v3365 = vmul.f32 %v3237, %v3314
    %v3366 = vmul.f32 %v3238, %v3314
    %v3367 = vmul.f32 %v3239, %v3315
    %v3368 = vmul.f32 %v3240, %v3315
    %v3369 = vmul.f32 %v3241, %v3316
    %v3370 = vmul.f32 %v3242, %v3316
    %v3371 = vmul.f32 %v3243, %v3317
    %v3372 = vmul.f32 %v3244, %v3317
    %v3373 = vmul.f32 %v3245, %v3318
    %v3374 = vmul.f32 %v3246, %v3318
    %v3375 = vmul.f32 %v3247, %v3319
    %v3376 = vmul.f32 %v3248, %v3319
    %v3377 = vmul.f32 %v3249, %v3320
    %v3378 = vmul.f32 %v3250, %v3320
    %v3379 = vmul.f32 %v3251, %v3321
    %v3380 = vmul.f32 %v3252, %v3321
    %v3381 = vmul.f32 %v3253, %v3322
    %v3382 = vmul.f32 %v3254, %v3322
    %v3383 = vmul.f32 %v3255, %v3323
    %v3384 = vmul.f32 %v3256, %v3323
    %v3385 = vmul.f32 %v3257, %v3324
    %v3386 = vmul.f32 %v3258, %v3324
    %v3387 = vmul.f32 %v3259, %v3325
    %v3388 = vmul.f32 %v3260, %v3325
    %v3389 = vmul.f32 %v3261, %v3326
    %v3390 = vmul.f32 %v3262, %v3326
    %v3392 = vlaneseq
    %v3393 = vshrl.u32 %v3392, 7
    %v3394 = vsub.s32 0, %v3393
    %v3395 = vrot.slane %v2813, %v3394
    %v3396 = vlaneseq
    %v3397 = vshrl.u32 %v3396, 7
    %v3398 = vsub.s32 1, %v3397
    %v3399 = vrot.slane %v2813, %v3398
    %v3402 = vmul.f32 %v3327, %v3395
    %v3403 = vmul.f32 %v3328, %v3399
    %v3404 = vmul.f32 %v3329, %v3395
    %v3405 = vmul.f32 %v3330, %v3399
    %v3406 = vmul.f32 %v3331, %v3395
    %v3407 = vmul.f32 %v3332, %v3399
    %v3408 = vmul.f32 %v3333, %v3395
    %v3409 = vmul.f32 %v3334, %v3399
    %v3410 = vmul.f32 %v3335, %v3395
    %v3411 = vmul.f32 %v3336, %v3399
    %v3412 = vmul.f32 %v3337, %v3395
    %v3413 = vmul.f32 %v3338, %v3399
    %v3414 = vmul.f32 %v3339, %v3395
    %v3415 = vmul.f32 %v3340, %v3399
    %v3416 = vmul.f32 %v3341, %v3395
    %v3417 = vmul.f32 %v3342, %v3399
    %v3418 = vmul.f32 %v3343, %v3395
    %v3419 = vmul.f32 %v3344, %v3399
    %v3420 = vmul.f32 %v3345, %v3395
    %v3421 = vmul.f32 %v3346, %v3399
    %v3422 = vmul.f32 %v3347, %v3395
    %v3423 = vmul.f32 %v3348, %v3399
    %v3424 = vmul.f32 %v3349, %v3395
    %v3425 = vmul.f32 %v3350, %v3399
    %v3426 = vmul.f32 %v3351, %v3395
    %v3427 = vmul.f32 %v3352, %v3399
    %v3428 = vmul.f32 %v3353, %v3395
    %v3429 = vmul.f32 %v3354, %v3399
    %v3430 = vmul.f32 %v3355, %v3395
    %v3431 = vmul.f32 %v3356, %v3399
    %v3432 = vmul.f32 %v3357, %v3395
    %v3433 = vmul.f32 %v3358, %v3399
    %v3434 = vmul.f32 %v3359, %v3395
    %v3435 = vmul.f32 %v3360, %v3399
    %v3436 = vmul.f32 %v3361, %v3395
    %v3437 = vmul.f32 %v3362, %v3399
    %v3438 = vmul.f32 %v3363, %v3395
    %v3439 = vmul.f32 %v3364, %v3399
    %v3440 = vmul.f32 %v3365, %v3395
    %v3441 = vmul.f32 %v3366, %v3399
    %v3442 = vmul.f32 %v3367, %v3395
    %v3443 = vmul.f32 %v3368, %v3399
    %v3444 = vmul.f32 %v3369, %v3395
    %v3445 = vmul.f32 %v3370, %v3399
    %v3446 = vmul.f32 %v3371, %v3395
    %v3447 = vmul.f32 %v3372, %v3399
    %v3448 = vmul.f32 %v3373, %v3395
    %v3449 = vmul.f32 %v3374, %v3399
    %v3450 = vmul.f32 %v3375, %v3395
    %v3451 = vmul.f32 %v3376, %v3399
    %v3452 = vmul.f32 %v3377, %v3395
    %v3453 = vmul.f32 %v3378, %v3399
    %v3454 = vmul.f32 %v3379, %v3395
    %v3455 = vmul.f32 %v3380, %v3399
    %v3456 = vmul.f32 %v3381, %v3395
    %v3457 = vmul.f32 %v3382, %v3399
    %v3458 = vmul.f32 %v3383, %v3395
    %v3459 = vmul.f32 %v3384, %v3399
    %v3460 = vmul.f32 %v3385, %v3395
    %v3461 = vmul.f32 %v3386, %v3399
    %v3462 = vmul.f32 %v3387, %v3395
    %v3463 = vmul.f32 %v3388, %v3399
    %v3464 = vmul.f32 %v3389, %v3395
    %v3465 = vmul.f32 %v3390, %v3399
    %v3467 = vlaneseq
    %v3468 = vshrl.u32 %v3467, 7
    %v3469 = vsub.s32 0, %v3468
    %v3470 = vrot.slane %v2814, %v3469
    %v3471 = vlaneseq
    %v3472 = vshrl.u32 %v3471, 7
    %v3473 = vsub.s32 1, %v3472
    %v3474 = vrot.slane %v2814, %v3473
    %v3477 = vadd.f32 %v3402, %v3470
    %v3478 = vadd.f32 %v3403, %v3474
    %v3479 = vadd.f32 %v3404, %v3470
    %v3480 = vadd.f32 %v3405, %v3474
    %v3481 = vadd.f32 %v3406, %v3470
    %v3482 = vadd.f32 %v3407, %v3474
    %v3483 = vadd.f32 %v3408, %v3470
    %v3484 = vadd.f32 %v3409, %v3474
    %v3485 = vadd.f32 %v3410, %v3470
    %v3486 = vadd.f32 %v3411, %v3474
    %v3487 = vadd.f32 %v3412, %v3470
    %v3488 = vadd.f32 %v3413, %v3474
    %v3489 = vadd.f32 %v3414, %v3470
    %v3490 = vadd.f32 %v3415, %v3474
    %v3491 = vadd.f32 %v3416, %v3470
    %v3492 = vadd.f32 %v3417, %v3474
    %v3493 = vadd.f32 %v3418, %v3470
    %v3494 = vadd.f32 %v3419, %v3474
    %v3495 = vadd.f32 %v3420, %v3470
    %v3496 = vadd.f32 %v3421, %v3474
    %v3497 = vadd.f32 %v3422, %v3470
    %v3498 = vadd.f32 %v3423, %v3474
    %v3499 = vadd.f32 %v3424, %v3470
    %v3500 = vadd.f32 %v3425, %v3474
    %v3501 = vadd.f32 %v3426, %v3470
    %v3502 = vadd.f32 %v3427, %v3474
    %v3503 = vadd.f32 %v3428, %v3470
    %v3504 = vadd.f32 %v3429, %v3474
    %v3505 = vadd.f32 %v3430, %v3470
    %v3506 = vadd.f32 %v3431, %v3474
    %v3507 = vadd.f32 %v3432, %v3470
    %v3508 = vadd.f32 %v3433, %v3474
    %v3509 = vadd.f32 %v3434, %v3470
    %v3510 = vadd.f32 %v3435, %v3474
    %v3511 = vadd.f32 %v3436, %v3470
    %v3512 = vadd.f32 %v3437, %v3474
    %v3513 = vadd.f32 %v3438, %v3470
    %v3514 = vadd.f32 %v3439, %v3474
    %v3515 = vadd.f32 %v3440, %v3470
    %v3516 = vadd.f32 %v3441, %v3474
    %v3517 = vadd.f32 %v3442, %v3470
    %v3518 = vadd.f32 %v3443, %v3474
    %v3519 = vadd.f32 %v3444, %v3470
    %v3520 = vadd.f32 %v3445, %v3474
    %v3521 = vadd.f32 %v3446, %v3470
    %v3522 = vadd.f32 %v3447, %v3474
    %v3523 = vadd.f32 %v3448, %v3470
    %v3524 = vadd.f32 %v3449, %v3474
    %v3525 = vadd.f32 %v3450, %v3470
    %v3526 = vadd.f32 %v3451, %v3474
    %v3527 = vadd.f32 %v3452, %v3470
    %v3528 = vadd.f32 %v3453, %v3474
    %v3529 = vadd.f32 %v3454, %v3470
    %v3530 = vadd.f32 %v3455, %v3474
    %v3531 = vadd.f32 %v3456, %v3470
    %v3532 = vadd.f32 %v3457, %v3474
    %v3533 = vadd.f32 %v3458, %v3470
    %v3534 = vadd.f32 %v3459, %v3474
    %v3535 = vadd.f32 %v3460, %v3470
    %v3536 = vadd.f32 %v3461, %v3474
    %v3537 = vadd.f32 %v3462, %v3470
    %v3538 = vadd.f32 %v3463, %v3474
    %v3539 = vadd.f32 %v3464, %v3470
    %v3540 = vadd.f32 %v3465, %v3474
    %v3541 = vmax.f32 %v3477, 0.0
    %v3542 = vmax.f32 %v3478, 0.0
    %v3543 = vmax.f32 %v3479, 0.0
    %v3544 = vmax.f32 %v3480, 0.0
    %v3545 = vmax.f32 %v3481, 0.0
    %v3546 = vmax.f32 %v3482, 0.0
    %v3547 = vmax.f32 %v3483, 0.0
    %v3548 = vmax.f32 %v3484, 0.0
    %v3549 = vmax.f32 %v3485, 0.0
    %v3550 = vmax.f32 %v3486, 0.0
    %v3551 = vmax.f32 %v3487, 0.0
    %v3552 = vmax.f32 %v3488, 0.0
    %v3553 = vmax.f32 %v3489, 0.0
    %v3554 = vmax.f32 %v3490, 0.0
    %v3555 = vmax.f32 %v3491, 0.0
    %v3556 = vmax.f32 %v3492, 0.0
    %v3557 = vmax.f32 %v3493, 0.0
    %v3558 = vmax.f32 %v3494, 0.0
    %v3559 = vmax.f32 %v3495, 0.0
    %v3560 = vmax.f32 %v3496, 0.0
    %v3561 = vmax.f32 %v3497, 0.0
    %v3562 = vmax.f32 %v3498, 0.0
    %v3563 = vmax.f32 %v3499, 0.0
    %v3564 = vmax.f32 %v3500, 0.0
    %v3565 = vmax.f32 %v3501, 0.0
    %v3566 = vmax.f32 %v3502, 0.0
    %v3567 = vmax.f32 %v3503, 0.0
    %v3568 = vmax.f32 %v3504, 0.0
    %v3569 = vmax.f32 %v3505, 0.0
    %v3570 = vmax.f32 %v3506, 0.0
    %v3571 = vmax.f32 %v3507, 0.0
    %v3572 = vmax.f32 %v3508, 0.0
    %v3573 = vmax.f32 %v3509, 0.0
    %v3574 = vmax.f32 %v3510, 0.0
    %v3575 = vmax.f32 %v3511, 0.0
    %v3576 = vmax.f32 %v3512, 0.0
    %v3577 = vmax.f32 %v3513, 0.0
    %v3578 = vmax.f32 %v3514, 0.0
    %v3579 = vmax.f32 %v3515, 0.0
    %v3580 = vmax.f32 %v3516, 0.0
    %v3581 = vmax.f32 %v3517, 0.0
    %v3582 = vmax.f32 %v3518, 0.0
    %v3583 = vmax.f32 %v3519, 0.0
    %v3584 = vmax.f32 %v3520, 0.0
    %v3585 = vmax.f32 %v3521, 0.0
    %v3586 = vmax.f32 %v3522, 0.0
    %v3587 = vmax.f32 %v3523, 0.0
    %v3588 = vmax.f32 %v3524, 0.0
    %v3589 = vmax.f32 %v3525, 0.0
    %v3590 = vmax.f32 %v3526, 0.0
    %v3591 = vmax.f32 %v3527, 0.0
    %v3592 = vmax.f32 %v3528, 0.0
    %v3593 = vmax.f32 %v3529, 0.0
    %v3594 = vmax.f32 %v3530, 0.0
    %v3595 = vmax.f32 %v3531, 0.0
    %v3596 = vmax.f32 %v3532, 0.0
    %v3597 = vmax.f32 %v3533, 0.0
    %v3598 = vmax.f32 %v3534, 0.0
    %v3599 = vmax.f32 %v3535, 0.0
    %v3600 = vmax.f32 %v3536, 0.0
    %v3601 = vmax.f32 %v3537, 0.0
    %v3602 = vmax.f32 %v3538, 0.0
    %v3603 = vmax.f32 %v3539, 0.0
    %v3604 = vmax.f32 %v3540, 0.0
    %v3605 = vpack.c.bf16 %v3543, %v3541
    %v3606 = vpack.c.bf16 %v3544, %v3542
    %v3607 = vpack.c.bf16 %v3547, %v3545
    %v3608 = vpack.c.bf16 %v3548, %v3546
    %v3609 = vpack.c.bf16 %v3551, %v3549
    %v3610 = vpack.c.bf16 %v3552, %v3550
    %v3611 = vpack.c.bf16 %v3555, %v3553
    %v3612 = vpack.c.bf16 %v3556, %v3554
    %v3613 = vpack.c.bf16 %v3559, %v3557
    %v3614 = vpack.c.bf16 %v3560, %v3558
    %v3615 = vpack.c.bf16 %v3563, %v3561
    %v3616 = vpack.c.bf16 %v3564, %v3562
    %v3617 = vpack.c.bf16 %v3567, %v3565
    %v3618 = vpack.c.bf16 %v3568, %v3566
    %v3619 = vpack.c.bf16 %v3571, %v3569
    %v3620 = vpack.c.bf16 %v3572, %v3570
    %v3621 = vpack.c.bf16 %v3575, %v3573
    %v3622 = vpack.c.bf16 %v3576, %v3574
    %v3623 = vpack.c.bf16 %v3579, %v3577
    %v3624 = vpack.c.bf16 %v3580, %v3578
    %v3625 = vpack.c.bf16 %v3583, %v3581
    %v3626 = vpack.c.bf16 %v3584, %v3582
    %v3627 = vpack.c.bf16 %v3587, %v3585
    %v3628 = vpack.c.bf16 %v3588, %v3586
    %v3629 = vpack.c.bf16 %v3591, %v3589
    %v3630 = vpack.c.bf16 %v3592, %v3590
    %v3631 = vpack.c.bf16 %v3595, %v3593
    %v3632 = vpack.c.bf16 %v3596, %v3594
    %v3633 = vpack.c.bf16 %v3599, %v3597
    %v3634 = vpack.c.bf16 %v3600, %v3598
    %v3635 = vpack.c.bf16 %v3603, %v3601
    %v3636 = vpack.c.bf16 %v3604, %v3602
    %v3637 = vld [vmem:[%s9] sm:$0xff]
    %v3638 = vld [vmem:[%s9 + $0x8] sm:$0xff]
    %v3639 = vld [vmem:[%s9 + $0x10] sm:$0xff]
    %v3640 = vld [vmem:[%s9 + $0x18] sm:$0xff]
    %v3641 = vld [vmem:[%s9 + $0x20] sm:$0xff]
    %v3642 = vld [vmem:[%s9 + $0x28] sm:$0xff]
    %v3643 = vld [vmem:[%s9 + $0x30] sm:$0xff]
    %v3644 = vld [vmem:[%s9 + $0x38] sm:$0xff]
    %v3645 = vld [vmem:[%s9 + $0x40] sm:$0xff]
    %v3646 = vld [vmem:[%s9 + $0x48] sm:$0xff]
    %v3647 = vld [vmem:[%s9 + $0x50] sm:$0xff]
    %v3648 = vld [vmem:[%s9 + $0x58] sm:$0xff]
    %v3649 = vld [vmem:[%s9 + $0x60] sm:$0xff]
    %v3650 = vld [vmem:[%s9 + $0x68] sm:$0xff]
    %v3651 = vld [vmem:[%s9 + $0x70] sm:$0xff]
    %v3652 = vld [vmem:[%s9 + $0x78] sm:$0xff]
    %v3653 = vld [vmem:[%s9 + $0x80] sm:$0xff]
    %v3654 = vld [vmem:[%s9 + $0x88] sm:$0xff]
    %v3655 = vld [vmem:[%s9 + $0x90] sm:$0xff]
    %v3656 = vld [vmem:[%s9 + $0x98] sm:$0xff]
    %v3657 = vld [vmem:[%s9 + $0xa0] sm:$0xff]
    %v3658 = vld [vmem:[%s9 + $0xa8] sm:$0xff]
    %v3659 = vld [vmem:[%s9 + $0xb0] sm:$0xff]
    %v3660 = vld [vmem:[%s9 + $0xb8] sm:$0xff]
    %v3661 = vld [vmem:[%s9 + $0xc0] sm:$0xff]
    %v3662 = vld [vmem:[%s9 + $0xc8] sm:$0xff]
    %v3663 = vld [vmem:[%s9 + $0xd0] sm:$0xff]
    %v3664 = vld [vmem:[%s9 + $0xd8] sm:$0xff]
    %v3665 = vld [vmem:[%s9 + $0xe0] sm:$0xff]
    %v3666 = vld [vmem:[%s9 + $0xe8] sm:$0xff]
    %v3667 = vld [vmem:[%s9 + $0xf0] sm:$0xff]
    %v3668 = vld [vmem:[%s9 + $0xf8] sm:$0xff]
    %v3669 = vld [vmem:[%s10] sm:$0x3]
    %v3671 = vlaneseq
    %v3672 = vshrl.u32 %v3671, 7
    %v3673 = vsub.s32 0, %v3672
    %v3674 = vrot.slane %v3669, %v3673
    %v3675 = vlaneseq
    %v3676 = vshrl.u32 %v3675, 7
    %v3677 = vsub.s32 1, %v3676
    %v3678 = vrot.slane %v3669, %v3677
    %v3713 = vunpack.c.l.b16 %v3637
    %v3714 = vunpack.c.h.b16 %v3637
    %v3715 = vunpack.c.l.b16 %v3638
    %v3716 = vunpack.c.h.b16 %v3638
    %v3717 = vunpack.c.l.b16 %v3639
    %v3718 = vunpack.c.h.b16 %v3639
    %v3719 = vunpack.c.l.b16 %v3640
    %v3720 = vunpack.c.h.b16 %v3640
    %v3721 = vunpack.c.l.b16 %v3641
    %v3722 = vunpack.c.h.b16 %v3641
    %v3723 = vunpack.c.l.b16 %v3642
    %v3724 = vunpack.c.h.b16 %v3642
    %v3725 = vunpack.c.l.b16 %v3643
    %v3726 = vunpack.c.h.b16 %v3643
    %v3727 = vunpack.c.l.b16 %v3644
    %v3728 = vunpack.c.h.b16 %v3644
    %v3729 = vunpack.c.l.b16 %v3645
    %v3730 = vunpack.c.h.b16 %v3645
    %v3731 = vunpack.c.l.b16 %v3646
    %v3732 = vunpack.c.h.b16 %v3646
    %v3733 = vunpack.c.l.b16 %v3647
    %v3734 = vunpack.c.h.b16 %v3647
    %v3735 = vunpack.c.l.b16 %v3648
    %v3736 = vunpack.c.h.b16 %v3648
    %v3737 = vunpack.c.l.b16 %v3649
    %v3738 = vunpack.c.h.b16 %v3649
    %v3739 = vunpack.c.l.b16 %v3650
    %v3740 = vunpack.c.h.b16 %v3650
    %v3741 = vunpack.c.l.b16 %v3651
    %v3742 = vunpack.c.h.b16 %v3651
    %v3743 = vunpack.c.l.b16 %v3652
    %v3744 = vunpack.c.h.b16 %v3652
    %v3745 = vunpack.c.l.b16 %v3653
    %v3746 = vunpack.c.h.b16 %v3653
    %v3747 = vunpack.c.l.b16 %v3654
    %v3748 = vunpack.c.h.b16 %v3654
    %v3749 = vunpack.c.l.b16 %v3655
    %v3750 = vunpack.c.h.b16 %v3655
    %v3751 = vunpack.c.l.b16 %v3656
    %v3752 = vunpack.c.h.b16 %v3656
    %v3753 = vunpack.c.l.b16 %v3657
    %v3754 = vunpack.c.h.b16 %v3657
    %v3755 = vunpack.c.l.b16 %v3658
    %v3756 = vunpack.c.h.b16 %v3658
    %v3757 = vunpack.c.l.b16 %v3659
    %v3758 = vunpack.c.h.b16 %v3659
    %v3759 = vunpack.c.l.b16 %v3660
    %v3760 = vunpack.c.h.b16 %v3660
    %v3761 = vunpack.c.l.b16 %v3661
    %v3762 = vunpack.c.h.b16 %v3661
    %v3763 = vunpack.c.l.b16 %v3662
    %v3764 = vunpack.c.h.b16 %v3662
    %v3765 = vunpack.c.l.b16 %v3663
    %v3766 = vunpack.c.h.b16 %v3663
    %v3767 = vunpack.c.l.b16 %v3664
    %v3768 = vunpack.c.h.b16 %v3664
    %v3769 = vunpack.c.l.b16 %v3665
    %v3770 = vunpack.c.h.b16 %v3665
    %v3771 = vunpack.c.l.b16 %v3666
    %v3772 = vunpack.c.h.b16 %v3666
    %v3773 = vunpack.c.l.b16 %v3667
    %v3774 = vunpack.c.h.b16 %v3667
    %v3775 = vunpack.c.l.b16 %v3668
    %v3776 = vunpack.c.h.b16 %v3668
    %v3777 = vpack.c.b16 %v3715, %v3713
    %v3778 = vpack.c.b16 %v3716, %v3714
    %v3779 = vpack.c.b16 %v3719, %v3717
    %v3780 = vpack.c.b16 %v3720, %v3718
    %v3781 = vpack.c.b16 %v3723, %v3721
    %v3782 = vpack.c.b16 %v3724, %v3722
    %v3783 = vpack.c.b16 %v3727, %v3725
    %v3784 = vpack.c.b16 %v3728, %v3726
    %v3785 = vpack.c.b16 %v3731, %v3729
    %v3786 = vpack.c.b16 %v3732, %v3730
    %v3787 = vpack.c.b16 %v3735, %v3733
    %v3788 = vpack.c.b16 %v3736, %v3734
    %v3789 = vpack.c.b16 %v3739, %v3737
    %v3790 = vpack.c.b16 %v3740, %v3738
    %v3791 = vpack.c.b16 %v3743, %v3741
    %v3792 = vpack.c.b16 %v3744, %v3742
    %v3793 = vpack.c.b16 %v3747, %v3745
    %v3794 = vpack.c.b16 %v3748, %v3746
    %v3795 = vpack.c.b16 %v3751, %v3749
    %v3796 = vpack.c.b16 %v3752, %v3750
    %v3797 = vpack.c.b16 %v3755, %v3753
    %v3798 = vpack.c.b16 %v3756, %v3754
    %v3799 = vpack.c.b16 %v3759, %v3757
    %v3800 = vpack.c.b16 %v3760, %v3758
    %v3801 = vpack.c.b16 %v3763, %v3761
    %v3802 = vpack.c.b16 %v3764, %v3762
    %v3803 = vpack.c.b16 %v3767, %v3765
    %v3804 = vpack.c.b16 %v3768, %v3766
    %v3805 = vpack.c.b16 %v3771, %v3769
    %v3806 = vpack.c.b16 %v3772, %v3770
    %v3807 = vpack.c.b16 %v3775, %v3773
    %v3808 = vpack.c.b16 %v3776, %v3774
    %3841 = vmatprep.subr.bf16.mxu0 %v3778
    %3842 = vmatpush1.bf16.msra.mxu0 %v3777
    %3843 = vmatprep.subr.bf16.mxu0 %v3780
    %3844 = vmatpush1.bf16.msra.mxu0 %v3779
    %3845 = vmatprep.subr.bf16.mxu0 %v3782
    %3846 = vmatpush1.bf16.msra.mxu0 %v3781
    %3847 = vmatprep.subr.bf16.mxu0 %v3784
    %3848 = vmatpush1.bf16.msra.mxu0 %v3783
    %3849 = vmatprep.subr.bf16.mxu0 %v3786
    %3850 = vmatpush1.bf16.msra.mxu0 %v3785
    %3851 = vmatprep.subr.bf16.mxu0 %v3788
    %3852 = vmatpush1.bf16.msra.mxu0 %v3787
    %3853 = vmatprep.subr.bf16.mxu0 %v3790
    %3854 = vmatpush1.bf16.msra.mxu0 %v3789
    %3855 = vmatprep.subr.bf16.mxu0 %v3792
    %3856 = vmatpush1.bf16.msra.mxu0 %v3791
    %3857 = vmatprep.subr.bf16.mxu0 %v3794
    %3858 = vmatpush1.bf16.msra.mxu0 %v3793
    %3859 = vmatprep.subr.bf16.mxu0 %v3796
    %3860 = vmatpush1.bf16.msra.mxu0 %v3795
    %3861 = vmatprep.subr.bf16.mxu0 %v3798
    %3862 = vmatpush1.bf16.msra.mxu0 %v3797
    %3863 = vmatprep.subr.bf16.mxu0 %v3800
    %3864 = vmatpush1.bf16.msra.mxu0 %v3799
    %3865 = vmatprep.subr.bf16.mxu0 %v3802
    %3866 = vmatpush1.bf16.msra.mxu0 %v3801
    %3867 = vmatprep.subr.bf16.mxu0 %v3804
    %3868 = vmatpush1.bf16.msra.mxu0 %v3803
    %3869 = vmatprep.subr.bf16.mxu0 %v3806
    %3870 = vmatpush1.bf16.msra.mxu0 %v3805
    %3871 = vmatprep.subr.bf16.mxu0 %v3808
    %3872 = vmatpush1.bf16.msra.mxu0 %v3807
    %3873 = vmatprep.mubr.bf16.mxu0 %v3606
    %3874 = vmatmul.mubr.bf16.gmra.mrb[0].mxu0 %v3605
    %v3875 = vpop.f32.mrb[0].mxu0
    %v3876 = vadd.f32 %v3674, %v3875
    %v3877 = vpop.f32.mrb[0].mxu0
    %v3878 = vadd.f32 %v3678, %v3877
    %v3879 = vpop.f32.mrb[0].mxu0
    %v3880 = vadd.f32 %v3674, %v3879
    %v3881 = vpop.f32.mrb[0].mxu0
    %v3882 = vadd.f32 %v3678, %v3881
    %3883 = vmatprep.mubr.bf16.mxu0 %v3608
    %3884 = vmatmul.mubr.bf16.gmra.mrb[0].mxu0 %v3607
    %v3885 = vpop.f32.mrb[0].mxu0
    %v3886 = vadd.f32 %v3674, %v3885
    %v3887 = vpop.f32.mrb[0].mxu0
    %v3888 = vadd.f32 %v3678, %v3887
    %v3889 = vpop.f32.mrb[0].mxu0
    %v3890 = vadd.f32 %v3674, %v3889
    %v3891 = vpop.f32.mrb[0].mxu0
    %v3892 = vadd.f32 %v3678, %v3891
    %3893 = vmatprep.mubr.bf16.mxu0 %v3610
    %3894 = vmatmul.mubr.bf16.gmra.mrb[0].mxu0 %v3609
    %v3895 = vpop.f32.mrb[0].mxu0
    %v3896 = vadd.f32 %v3674, %v3895
    %v3897 = vpop.f32.mrb[0].mxu0
    %v3898 = vadd.f32 %v3678, %v3897
    %v3899 = vpop.f32.mrb[0].mxu0
    %v3900 = vadd.f32 %v3674, %v3899
    %v3901 = vpop.f32.mrb[0].mxu0
    %v3902 = vadd.f32 %v3678, %v3901
    %3903 = vmatprep.mubr.bf16.mxu0 %v3612
    %3904 = vmatmul.mubr.bf16.gmra.mrb[0].mxu0 %v3611
    %v3905 = vpop.f32.mrb[0].mxu0
    %v3906 = vadd.f32 %v3674, %v3905
    %v3907 = vpop.f32.mrb[0].mxu0
    %v3908 = vadd.f32 %v3678, %v3907
    %v3909 = vpop.f32.mrb[0].mxu0
    %v3910 = vadd.f32 %v3674, %v3909
    %v3911 = vpop.f32.mrb[0].mxu0
    %v3912 = vadd.f32 %v3678, %v3911
    %3913 = vmatprep.mubr.bf16.mxu0 %v3614
    %3914 = vmatmul.mubr.bf16.gmra.mrb[0].mxu0 %v3613
    %v3915 = vpop.f32.mrb[0].mxu0
    %v3916 = vadd.f32 %v3674, %v3915
    %v3917 = vpop.f32.mrb[0].mxu0
    %v3918 = vadd.f32 %v3678, %v3917
    %v3919 = vpop.f32.mrb[0].mxu0
    %v3920 = vadd.f32 %v3674, %v3919
    %v3921 = vpop.f32.mrb[0].mxu0
    %v3922 = vadd.f32 %v3678, %v3921
    %3923 = vmatprep.mubr.bf16.mxu0 %v3616
    %3924 = vmatmul.mubr.bf16.gmra.mrb[0].mxu0 %v3615
    %v3925 = vpop.f32.mrb[0].mxu0
    %v3926 = vadd.f32 %v3674, %v3925
    %v3927 = vpop.f32.mrb[0].mxu0
    %v3928 = vadd.f32 %v3678, %v3927
    %v3929 = vpop.f32.mrb[0].mxu0
    %v3930 = vadd.f32 %v3674, %v3929
    %v3931 = vpop.f32.mrb[0].mxu0
    %v3932 = vadd.f32 %v3678, %v3931
    %3933 = vmatprep.mubr.bf16.mxu0 %v3618
    %3934 = vmatmul.mubr.bf16.gmra.mrb[0].mxu0 %v3617
    %v3935 = vpop.f32.mrb[0].mxu0
    %v3936 = vadd.f32 %v3674, %v3935
    %v3937 = vpop.f32.mrb[0].mxu0
    %v3938 = vadd.f32 %v3678, %v3937
    %v3939 = vpop.f32.mrb[0].mxu0
    %v3940 = vadd.f32 %v3674, %v3939
    %v3941 = vpop.f32.mrb[0].mxu0
    %v3942 = vadd.f32 %v3678, %v3941
    %3943 = vmatprep.mubr.bf16.mxu0 %v3620
    %3944 = vmatmul.mubr.bf16.gmra.mrb[0].mxu0 %v3619
    %v3945 = vpop.f32.mrb[0].mxu0
    %v3946 = vadd.f32 %v3674, %v3945
    %v3947 = vpop.f32.mrb[0].mxu0
    %v3948 = vadd.f32 %v3678, %v3947
    %v3949 = vpop.f32.mrb[0].mxu0
    %v3950 = vadd.f32 %v3674, %v3949
    %v3951 = vpop.f32.mrb[0].mxu0
    %v3952 = vadd.f32 %v3678, %v3951
    %3953 = vmatprep.mubr.bf16.mxu0 %v3622
    %3954 = vmatmul.mubr.bf16.gmra.mrb[0].mxu0 %v3621
    %v3955 = vpop.f32.mrb[0].mxu0
    %v3956 = vadd.f32 %v3674, %v3955
    %v3957 = vpop.f32.mrb[0].mxu0
    %v3958 = vadd.f32 %v3678, %v3957
    %v3959 = vpop.f32.mrb[0].mxu0
    %v3960 = vadd.f32 %v3674, %v3959
    %v3961 = vpop.f32.mrb[0].mxu0
    %v3962 = vadd.f32 %v3678, %v3961
    %3963 = vmatprep.mubr.bf16.mxu0 %v3624
    %3964 = vmatmul.mubr.bf16.gmra.mrb[0].mxu0 %v3623
    %v3965 = vpop.f32.mrb[0].mxu0
    %v3966 = vadd.f32 %v3674, %v3965
    %v3967 = vpop.f32.mrb[0].mxu0
    %v3968 = vadd.f32 %v3678, %v3967
    %v3969 = vpop.f32.mrb[0].mxu0
    %v3970 = vadd.f32 %v3674, %v3969
    %v3971 = vpop.f32.mrb[0].mxu0
    %v3972 = vadd.f32 %v3678, %v3971
    %3973 = vmatprep.mubr.bf16.mxu0 %v3626
    %3974 = vmatmul.mubr.bf16.gmra.mrb[0].mxu0 %v3625
    %v3975 = vpop.f32.mrb[0].mxu0
    %v3976 = vadd.f32 %v3674, %v3975
    %v3977 = vpop.f32.mrb[0].mxu0
    %v3978 = vadd.f32 %v3678, %v3977
    %v3979 = vpop.f32.mrb[0].mxu0
    %v3980 = vadd.f32 %v3674, %v3979
    %v3981 = vpop.f32.mrb[0].mxu0
    %v3982 = vadd.f32 %v3678, %v3981
    %3983 = vmatprep.mubr.bf16.mxu0 %v3628
    %3984 = vmatmul.mubr.bf16.gmra.mrb[0].mxu0 %v3627
    %v3985 = vpop.f32.mrb[0].mxu0
    %v3986 = vadd.f32 %v3674, %v3985
    %v3987 = vpop.f32.mrb[0].mxu0
    %v3988 = vadd.f32 %v3678, %v3987
    %v3989 = vpop.f32.mrb[0].mxu0
    %v3990 = vadd.f32 %v3674, %v3989
    %v3991 = vpop.f32.mrb[0].mxu0
    %v3992 = vadd.f32 %v3678, %v3991
    %3993 = vmatprep.mubr.bf16.mxu0 %v3630
    %3994 = vmatmul.mubr.bf16.gmra.mrb[0].mxu0 %v3629
    %v3995 = vpop.f32.mrb[0].mxu0
    %v3996 = vadd.f32 %v3674, %v3995
    %v3997 = vpop.f32.mrb[0].mxu0
    %v3998 = vadd.f32 %v3678, %v3997
    %v3999 = vpop.f32.mrb[0].mxu0
    %v4000 = vadd.f32 %v3674, %v3999
    %v4001 = vpop.f32.mrb[0].mxu0
    %v4002 = vadd.f32 %v3678, %v4001
    %4003 = vmatprep.mubr.bf16.mxu0 %v3632
    %4004 = vmatmul.mubr.bf16.gmra.mrb[0].mxu0 %v3631
    %v4005 = vpop.f32.mrb[0].mxu0
    %v4006 = vadd.f32 %v3674, %v4005
    %v4007 = vpop.f32.mrb[0].mxu0
    %v4008 = vadd.f32 %v3678, %v4007
    %v4009 = vpop.f32.mrb[0].mxu0
    %v4010 = vadd.f32 %v3674, %v4009
    %v4011 = vpop.f32.mrb[0].mxu0
    %v4012 = vadd.f32 %v3678, %v4011
    %4013 = vmatprep.mubr.bf16.mxu0 %v3634
    %4014 = vmatmul.mubr.bf16.gmra.mrb[0].mxu0 %v3633
    %v4015 = vpop.f32.mrb[0].mxu0
    %v4016 = vadd.f32 %v3674, %v4015
    %v4017 = vpop.f32.mrb[0].mxu0
    %v4018 = vadd.f32 %v3678, %v4017
    %v4019 = vpop.f32.mrb[0].mxu0
    %v4020 = vadd.f32 %v3674, %v4019
    %v4021 = vpop.f32.mrb[0].mxu0
    %v4022 = vadd.f32 %v3678, %v4021
    %4023 = vmatprep.mubr.bf16.mxu0 %v3636
    %4024 = vmatmul.mubr.bf16.gmra.mrb[0].mxu0 %v3635
    %v4025 = vpop.f32.mrb[0].mxu0
    %v4026 = vadd.f32 %v3674, %v4025
    %v4027 = vpop.f32.mrb[0].mxu0
    %v4028 = vadd.f32 %v3678, %v4027
    %v4029 = vpop.f32.mrb[0].mxu0
    %v4030 = vadd.f32 %v3674, %v4029
    %v4031 = vpop.f32.mrb[0].mxu0
    %v4032 = vadd.f32 %v3678, %v4031
    %4033 = vdwg.mxu0
    %v4034 = vmax.f32 %v3876, 0.0
    %v4035 = vmax.f32 %v3878, 0.0
    %v4036 = vmax.f32 %v3880, 0.0
    %v4037 = vmax.f32 %v3882, 0.0
    %v4038 = vmax.f32 %v3886, 0.0
    %v4039 = vmax.f32 %v3888, 0.0
    %v4040 = vmax.f32 %v3890, 0.0
    %v4041 = vmax.f32 %v3892, 0.0
    %v4042 = vmax.f32 %v3896, 0.0
    %v4043 = vmax.f32 %v3898, 0.0
    %v4044 = vmax.f32 %v3900, 0.0
    %v4045 = vmax.f32 %v3902, 0.0
    %v4046 = vmax.f32 %v3906, 0.0
    %v4047 = vmax.f32 %v3908, 0.0
    %v4048 = vmax.f32 %v3910, 0.0
    %v4049 = vmax.f32 %v3912, 0.0
    %v4050 = vmax.f32 %v3916, 0.0
    %v4051 = vmax.f32 %v3918, 0.0
    %v4052 = vmax.f32 %v3920, 0.0
    %v4053 = vmax.f32 %v3922, 0.0
    %v4054 = vmax.f32 %v3926, 0.0
    %v4055 = vmax.f32 %v3928, 0.0
    %v4056 = vmax.f32 %v3930, 0.0
    %v4057 = vmax.f32 %v3932, 0.0
    %v4058 = vmax.f32 %v3936, 0.0
    %v4059 = vmax.f32 %v3938, 0.0
    %v4060 = vmax.f32 %v3940, 0.0
    %v4061 = vmax.f32 %v3942, 0.0
    %v4062 = vmax.f32 %v3946, 0.0
    %v4063 = vmax.f32 %v3948, 0.0
    %v4064 = vmax.f32 %v3950, 0.0
    %v4065 = vmax.f32 %v3952, 0.0
    %v4066 = vmax.f32 %v3956, 0.0
    %v4067 = vmax.f32 %v3958, 0.0
    %v4068 = vmax.f32 %v3960, 0.0
    %v4069 = vmax.f32 %v3962, 0.0
    %v4070 = vmax.f32 %v3966, 0.0
    %v4071 = vmax.f32 %v3968, 0.0
    %v4072 = vmax.f32 %v3970, 0.0
    %v4073 = vmax.f32 %v3972, 0.0
    %v4074 = vmax.f32 %v3976, 0.0
    %v4075 = vmax.f32 %v3978, 0.0
    %v4076 = vmax.f32 %v3980, 0.0
    %v4077 = vmax.f32 %v3982, 0.0
    %v4078 = vmax.f32 %v3986, 0.0
    %v4079 = vmax.f32 %v3988, 0.0
    %v4080 = vmax.f32 %v3990, 0.0
    %v4081 = vmax.f32 %v3992, 0.0
    %v4082 = vmax.f32 %v3996, 0.0
    %v4083 = vmax.f32 %v3998, 0.0
    %v4084 = vmax.f32 %v4000, 0.0
    %v4085 = vmax.f32 %v4002, 0.0
    %v4086 = vmax.f32 %v4006, 0.0
    %v4087 = vmax.f32 %v4008, 0.0
    %v4088 = vmax.f32 %v4010, 0.0
    %v4089 = vmax.f32 %v4012, 0.0
    %v4090 = vmax.f32 %v4016, 0.0
    %v4091 = vmax.f32 %v4018, 0.0
    %v4092 = vmax.f32 %v4020, 0.0
    %v4093 = vmax.f32 %v4022, 0.0
    %v4094 = vmax.f32 %v4026, 0.0
    %v4095 = vmax.f32 %v4028, 0.0
    %v4096 = vmax.f32 %v4030, 0.0
    %v4097 = vmax.f32 %v4032, 0.0
    %v4098 = vpack.c.bf16 %v4036, %v4034
    %v4099 = vpack.c.bf16 %v4037, %v4035
    %v4100 = vpack.c.bf16 %v4040, %v4038
    %v4101 = vpack.c.bf16 %v4041, %v4039
    %v4102 = vpack.c.bf16 %v4044, %v4042
    %v4103 = vpack.c.bf16 %v4045, %v4043
    %v4104 = vpack.c.bf16 %v4048, %v4046
    %v4105 = vpack.c.bf16 %v4049, %v4047
    %v4106 = vpack.c.bf16 %v4052, %v4050
    %v4107 = vpack.c.bf16 %v4053, %v4051
    %v4108 = vpack.c.bf16 %v4056, %v4054
    %v4109 = vpack.c.bf16 %v4057, %v4055
    %v4110 = vpack.c.bf16 %v4060, %v4058
    %v4111 = vpack.c.bf16 %v4061, %v4059
    %v4112 = vpack.c.bf16 %v4064, %v4062
    %v4113 = vpack.c.bf16 %v4065, %v4063
    %v4114 = vpack.c.bf16 %v4068, %v4066
    %v4115 = vpack.c.bf16 %v4069, %v4067
    %v4116 = vpack.c.bf16 %v4072, %v4070
    %v4117 = vpack.c.bf16 %v4073, %v4071
    %v4118 = vpack.c.bf16 %v4076, %v4074
    %v4119 = vpack.c.bf16 %v4077, %v4075
    %v4120 = vpack.c.bf16 %v4080, %v4078
    %v4121 = vpack.c.bf16 %v4081, %v4079
    %v4122 = vpack.c.bf16 %v4084, %v4082
    %v4123 = vpack.c.bf16 %v4085, %v4083
    %v4124 = vpack.c.bf16 %v4088, %v4086
    %v4125 = vpack.c.bf16 %v4089, %v4087
    %v4126 = vpack.c.bf16 %v4092, %v4090
    %v4127 = vpack.c.bf16 %v4093, %v4091
    %v4128 = vpack.c.bf16 %v4096, %v4094
    %v4129 = vpack.c.bf16 %v4097, %v4095
    %v4130 = vld [vmem:[#allocation5] sm:$0xff]
    %v4131 = vld [vmem:[#allocation5 + $0x8] sm:$0xff]
    %v4132 = vld [vmem:[#allocation5 + $0x10] sm:$0xf]
    %v4133 = vld [vmem:[#allocation5 + $0x14] sm:$0xff]
    %v4134 = vld [vmem:[#allocation5 + $0x1c] sm:$0xff]
    %v4135 = vld [vmem:[#allocation5 + $0x24] sm:$0xf]
    %v4136 = vld [vmem:[#allocation5 + $0x28] sm:$0xff]
    %v4137 = vld [vmem:[#allocation5 + $0x30] sm:$0xff]
    %v4138 = vld [vmem:[#allocation5 + $0x38] sm:$0xf]
    %v4139 = vld [vmem:[#allocation5 + $0x3c] sm:$0xff]
    %v4140 = vld [vmem:[#allocation5 + $0x44] sm:$0xff]
    %v4141 = vld [vmem:[#allocation5 + $0x4c] sm:$0xf]
    %v4142 = vld [vmem:[#allocation5 + $0x50] sm:$0xff]
    %v4143 = vld [vmem:[#allocation5 + $0x58] sm:$0xff]
    %v4144 = vld [vmem:[#allocation5 + $0x60] sm:$0xf]
    %v4145 = vld [vmem:[#allocation5 + $0x64] sm:$0xff]
    %v4146 = vld [vmem:[#allocation5 + $0x6c] sm:$0xff]
    %v4147 = vld [vmem:[#allocation5 + $0x74] sm:$0xf]
    %v4148 = vld [vmem:[#allocation5 + $0x78] sm:$0xff]
    %v4149 = vld [vmem:[#allocation5 + $0x80] sm:$0xff]
    %v4150 = vld [vmem:[#allocation5 + $0x88] sm:$0xf]
    %v4151 = vld [vmem:[#allocation5 + $0x8c] sm:$0xff]
    %v4152 = vld [vmem:[#allocation5 + $0x94] sm:$0xff]
    %v4153 = vld [vmem:[#allocation5 + $0x9c] sm:$0xf]
    %v4154 = vld [vmem:[#allocation5 + $0xa0] sm:$0xff]
    %v4155 = vld [vmem:[#allocation5 + $0xa8] sm:$0xff]
    %v4156 = vld [vmem:[#allocation5 + $0xb0] sm:$0xf]
    %v4157 = vld [vmem:[#allocation5 + $0xb4] sm:$0xff]
    %v4158 = vld [vmem:[#allocation5 + $0xbc] sm:$0xff]
    %v4159 = vld [vmem:[#allocation5 + $0xc4] sm:$0xf]
    %v4160 = vld [vmem:[#allocation5 + $0xc8] sm:$0xff]
    %v4161 = vld [vmem:[#allocation5 + $0xd0] sm:$0xff]
    %v4162 = vld [vmem:[#allocation5 + $0xd8] sm:$0xf]
    %v4163 = vld [vmem:[#allocation5 + $0xdc] sm:$0xff]
    %v4164 = vld [vmem:[#allocation5 + $0xe4] sm:$0xff]
    %v4165 = vld [vmem:[#allocation5 + $0xec] sm:$0xf]
    %v4166 = vld [vmem:[#allocation5 + $0xf0] sm:$0xff]
    %v4167 = vld [vmem:[#allocation5 + $0xf8] sm:$0xff]
    %v4168 = vld [vmem:[#allocation5 + $0x100] sm:$0xf]
    %v4169 = vld [vmem:[#allocation5 + $0x104] sm:$0xff]
    %v4170 = vld [vmem:[#allocation5 + $0x10c] sm:$0xff]
    %v4171 = vld [vmem:[#allocation5 + $0x114] sm:$0xf]
    %v4172 = vld [vmem:[#allocation5 + $0x118] sm:$0xff]
    %v4173 = vld [vmem:[#allocation5 + $0x120] sm:$0xff]
    %v4174 = vld [vmem:[#allocation5 + $0x128] sm:$0xf]
    %v4175 = vld [vmem:[#allocation5 + $0x12c] sm:$0xff]
    %v4176 = vld [vmem:[#allocation5 + $0x134] sm:$0xff]
    %v4177 = vld [vmem:[#allocation5 + $0x13c] sm:$0xf]
    %v4178 = vld [vmem:[#allocation5 + $0x140] sm:$0xff]
    %v4179 = vld [vmem:[#allocation5 + $0x148] sm:$0xff]
    %v4180 = vld [vmem:[#allocation5 + $0x150] sm:$0xf]
    %v4181 = vld [vmem:[#allocation5 + $0x154] sm:$0xff]
    %v4182 = vld [vmem:[#allocation5 + $0x15c] sm:$0xff]
    %v4183 = vld [vmem:[#allocation5 + $0x164] sm:$0xf]
    %v4184 = vld [vmem:[#allocation5 + $0x168] sm:$0xff]
    %v4185 = vld [vmem:[#allocation5 + $0x170] sm:$0xff]
    %v4186 = vld [vmem:[#allocation5 + $0x178] sm:$0xf]
    %v4187 = vld [vmem:[#allocation5 + $0x17c] sm:$0xff]
    %v4188 = vld [vmem:[#allocation5 + $0x184] sm:$0xff]
    %v4189 = vld [vmem:[#allocation5 + $0x18c] sm:$0xf]
    %v4190 = vld [vmem:[#allocation5 + $0x190] sm:$0xff]
    %v4191 = vld [vmem:[#allocation5 + $0x198] sm:$0xff]
    %v4192 = vld [vmem:[#allocation5 + $0x1a0] sm:$0xf]
    %v4193 = vld [vmem:[#allocation5 + $0x1a4] sm:$0xff]
    %v4194 = vld [vmem:[#allocation5 + $0x1ac] sm:$0xff]
    %v4195 = vld [vmem:[#allocation5 + $0x1b4] sm:$0xf]
    %v4196 = vld [vmem:[#allocation5 + $0x1b8] sm:$0xff]
    %v4197 = vld [vmem:[#allocation5 + $0x1c0] sm:$0xff]
    %v4198 = vld [vmem:[#allocation5 + $0x1c8] sm:$0xf]
    %v4199 = vld [vmem:[#allocation5 + $0x1cc] sm:$0xff]
    %v4200 = vld [vmem:[#allocation5 + $0x1d4] sm:$0xff]
    %v4201 = vld [vmem:[#allocation5 + $0x1dc] sm:$0xf]
    %v4202 = vld [vmem:[#allocation5 + $0x1e0] sm:$0xff]
    %v4203 = vld [vmem:[#allocation5 + $0x1e8] sm:$0xff]
    %v4204 = vld [vmem:[#allocation5 + $0x1f0] sm:$0xf]
    %v4205 = vld [vmem:[#allocation5 + $0x1f4] sm:$0xff]
    %v4206 = vld [vmem:[#allocation5 + $0x1fc] sm:$0xff]
    %v4207 = vld [vmem:[#allocation5 + $0x204] sm:$0xf]
    %v4208 = vld [vmem:[#allocation5 + $0x208] sm:$0xff]
    %v4209 = vld [vmem:[#allocation5 + $0x210] sm:$0xff]
    %v4210 = vld [vmem:[#allocation5 + $0x218] sm:$0xf]
    %v4211 = vld [vmem:[#allocation5 + $0x21c] sm:$0xff]
    %v4212 = vld [vmem:[#allocation5 + $0x224] sm:$0xff]
    %v4213 = vld [vmem:[#allocation5 + $0x22c] sm:$0xf]
    %v4214 = vld [vmem:[#allocation5 + $0x230] sm:$0xff]
    %v4215 = vld [vmem:[#allocation5 + $0x238] sm:$0xff]
    %v4216 = vld [vmem:[#allocation5 + $0x240] sm:$0xf]
    %v4217 = vld [vmem:[#allocation5 + $0x244] sm:$0xff]
    %v4218 = vld [vmem:[#allocation5 + $0x24c] sm:$0xff]
    %v4219 = vld [vmem:[#allocation5 + $0x254] sm:$0xf]
    %v4220 = vld [vmem:[#allocation5 + $0x258] sm:$0xff]
    %v4221 = vld [vmem:[#allocation5 + $0x260] sm:$0xff]
    %v4222 = vld [vmem:[#allocation5 + $0x268] sm:$0xf]
    %v4223 = vld [vmem:[#allocation5 + $0x26c] sm:$0xff]
    %v4224 = vld [vmem:[#allocation5 + $0x274] sm:$0xff]
    %v4225 = vld [vmem:[#allocation5 + $0x27c] sm:$0xf]
    %v4226 = vld [vmem:[%s12] sm:$0x1f]
    %v4228 = vlaneseq
    %v4229 = vshrl.u32 %v4228, 7
    %v4230 = vsub.s32 0, %v4229
    %v4231 = vrot.slane %v4226, %v4230
    %v4232 = vlaneseq
    %v4233 = vshrl.u32 %v4232, 7
    %v4234 = vsub.s32 1, %v4233
    %v4235 = vrot.slane %v4226, %v4234
    %v4236 = vlaneseq
    %v4237 = vshrl.u32 %v4236, 7
    %v4238 = vsub.s32 2, %v4237
    %v4239 = vrot.slane %v4226, %v4238
    %v4240 = vlaneseq
    %v4241 = vshrl.u32 %v4240, 7
    %v4242 = vsub.s32 3, %v4241
    %v4243 = vrot.slane %v4226, %v4242
    %v4244 = vlaneseq
    %v4245 = vshrl.u32 %v4244, 7
    %v4246 = vsub.s32 4, %v4245
    %v4247 = vrot.slane %v4226, %v4246
    %v4349 = vunpack.c.l.b16 %v4130
    %v4350 = vunpack.c.h.b16 %v4130
    %v4351 = vunpack.c.l.b16 %v4131
    %v4352 = vunpack.c.h.b16 %v4131
    %v4353 = vunpack.c.l.b16 %v4132
    %v4354 = vunpack.c.l.b16 %v4133
    %v4355 = vunpack.c.h.b16 %v4133
    %v4356 = vunpack.c.l.b16 %v4134
    %v4357 = vunpack.c.h.b16 %v4134
    %v4358 = vunpack.c.l.b16 %v4135
    %v4359 = vunpack.c.l.b16 %v4136
    %v4360 = vunpack.c.h.b16 %v4136
    %v4361 = vunpack.c.l.b16 %v4137
    %v4362 = vunpack.c.h.b16 %v4137
    %v4363 = vunpack.c.l.b16 %v4138
    %v4364 = vunpack.c.l.b16 %v4139
    %v4365 = vunpack.c.h.b16 %v4139
    %v4366 = vunpack.c.l.b16 %v4140
    %v4367 = vunpack.c.h.b16 %v4140
    %v4368 = vunpack.c.l.b16 %v4141
    %v4369 = vunpack.c.l.b16 %v4142
    %v4370 = vunpack.c.h.b16 %v4142
    %v4371 = vunpack.c.l.b16 %v4143
    %v4372 = vunpack.c.h.b16 %v4143
    %v4373 = vunpack.c.l.b16 %v4144
    %v4374 = vunpack.c.l.b16 %v4145
    %v4375 = vunpack.c.h.b16 %v4145
    %v4376 = vunpack.c.l.b16 %v4146
    %v4377 = vunpack.c.h.b16 %v4146
    %v4378 = vunpack.c.l.b16 %v4147
    %v4379 = vunpack.c.l.b16 %v4148
    %v4380 = vunpack.c.h.b16 %v4148
    %v4381 = vunpack.c.l.b16 %v4149
    %v4382 = vunpack.c.h.b16 %v4149
    %v4383 = vunpack.c.l.b16 %v4150
    %v4384 = vunpack.c.l.b16 %v4151
    %v4385 = vunpack.c.h.b16 %v4151
    %v4386 = vunpack.c.l.b16 %v4152
    %v4387 = vunpack.c.h.b16 %v4152
    %v4388 = vunpack.c.l.b16 %v4153
    %v4389 = vunpack.c.l.b16 %v4154
    %v4390 = vunpack.c.h.b16 %v4154
    %v4391 = vunpack.c.l.b16 %v4155
    %v4392 = vunpack.c.h.b16 %v4155
    %v4393 = vunpack.c.l.b16 %v4156
    %v4394 = vunpack.c.l.b16 %v4157
    %v4395 = vunpack.c.h.b16 %v4157
    %v4396 = vunpack.c.l.b16 %v4158
    %v4397 = vunpack.c.h.b16 %v4158
    %v4398 = vunpack.c.l.b16 %v4159
    %v4399 = vunpack.c.l.b16 %v4160
    %v4400 = vunpack.c.h.b16 %v4160
    %v4401 = vunpack.c.l.b16 %v4161
    %v4402 = vunpack.c.h.b16 %v4161
    %v4403 = vunpack.c.l.b16 %v4162
    %v4404 = vunpack.c.l.b16 %v4163
    %v4405 = vunpack.c.h.b16 %v4163
    %v4406 = vunpack.c.l.b16 %v4164
    %v4407 = vunpack.c.h.b16 %v4164
    %v4408 = vunpack.c.l.b16 %v4165
    %v4409 = vunpack.c.l.b16 %v4166
    %v4410 = vunpack.c.h.b16 %v4166
    %v4411 = vunpack.c.l.b16 %v4167
    %v4412 = vunpack.c.h.b16 %v4167
    %v4413 = vunpack.c.l.b16 %v4168
    %v4414 = vunpack.c.l.b16 %v4169
    %v4415 = vunpack.c.h.b16 %v4169
    %v4416 = vunpack.c.l.b16 %v4170
    %v4417 = vunpack.c.h.b16 %v4170
    %v4418 = vunpack.c.l.b16 %v4171
    %v4419 = vunpack.c.l.b16 %v4172
    %v4420 = vunpack.c.h.b16 %v4172
    %v4421 = vunpack.c.l.b16 %v4173
    %v4422 = vunpack.c.h.b16 %v4173
    %v4423 = vunpack.c.l.b16 %v4174
    %v4424 = vunpack.c.l.b16 %v4175
    %v4425 = vunpack.c.h.b16 %v4175
    %v4426 = vunpack.c.l.b16 %v4176
    %v4427 = vunpack.c.h.b16 %v4176
    %v4428 = vunpack.c.l.b16 %v4177
    %v4429 = vunpack.c.l.b16 %v4178
    %v4430 = vunpack.c.h.b16 %v4178
    %v4431 = vunpack.c.l.b16 %v4179
    %v4432 = vunpack.c.h.b16 %v4179
    %v4433 = vunpack.c.l.b16 %v4180
    %v4434 = vunpack.c.l.b16 %v4181
    %v4435 = vunpack.c.h.b16 %v4181
    %v4436 = vunpack.c.l.b16 %v4182
    %v4437 = vunpack.c.h.b16 %v4182
    %v4438 = vunpack.c.l.b16 %v4183
    %v4439 = vunpack.c.l.b16 %v4184
    %v4440 = vunpack.c.h.b16 %v4184
    %v4441 = vunpack.c.l.b16 %v4185
    %v4442 = vunpack.c.h.b16 %v4185
    %v4443 = vunpack.c.l.b16 %v4186
    %v4444 = vunpack.c.l.b16 %v4187
    %v4445 = vunpack.c.h.b16 %v4187
    %v4446 = vunpack.c.l.b16 %v4188
    %v4447 = vunpack.c.h.b16 %v4188
    %v4448 = vunpack.c.l.b16 %v4189
    %v4449 = vunpack.c.l.b16 %v4190
    %v4450 = vunpack.c.h.b16 %v4190
    %v4451 = vunpack.c.l.b16 %v4191
    %v4452 = vunpack.c.h.b16 %v4191
    %v4453 = vunpack.c.l.b16 %v4192
    %v4454 = vunpack.c.l.b16 %v4193
    %v4455 = vunpack.c.h.b16 %v4193
    %v4456 = vunpack.c.l.b16 %v4194
    %v4457 = vunpack.c.h.b16 %v4194
    %v4458 = vunpack.c.l.b16 %v4195
    %v4459 = vunpack.c.l.b16 %v4196
    %v4460 = vunpack.c.h.b16 %v4196
    %v4461 = vunpack.c.l.b16 %v4197
    %v4462 = vunpack.c.h.b16 %v4197
    %v4463 = vunpack.c.l.b16 %v4198
    %v4464 = vunpack.c.l.b16 %v4199
    %v4465 = vunpack.c.h.b16 %v4199
    %v4466 = vunpack.c.l.b16 %v4200
    %v4467 = vunpack.c.h.b16 %v4200
    %v4468 = vunpack.c.l.b16 %v4201
    %v4469 = vunpack.c.l.b16 %v4202
    %v4470 = vunpack.c.h.b16 %v4202
    %v4471 = vunpack.c.l.b16 %v4203
    %v4472 = vunpack.c.h.b16 %v4203
    %v4473 = vunpack.c.l.b16 %v4204
    %v4474 = vunpack.c.l.b16 %v4205
    %v4475 = vunpack.c.h.b16 %v4205
    %v4476 = vunpack.c.l.b16 %v4206
    %v4477 = vunpack.c.h.b16 %v4206
    %v4478 = vunpack.c.l.b16 %v4207
    %v4479 = vunpack.c.l.b16 %v4208
    %v4480 = vunpack.c.h.b16 %v4208
    %v4481 = vunpack.c.l.b16 %v4209
    %v4482 = vunpack.c.h.b16 %v4209
    %v4483 = vunpack.c.l.b16 %v4210
    %v4484 = vunpack.c.l.b16 %v4211
    %v4485 = vunpack.c.h.b16 %v4211
    %v4486 = vunpack.c.l.b16 %v4212
    %v4487 = vunpack.c.h.b16 %v4212
    %v4488 = vunpack.c.l.b16 %v4213
    %v4489 = vunpack.c.l.b16 %v4214
    %v4490 = vunpack.c.h.b16 %v4214
    %v4491 = vunpack.c.l.b16 %v4215
    %v4492 = vunpack.c.h.b16 %v4215
    %v4493 = vunpack.c.l.b16 %v4216
    %v4494 = vunpack.c.l.b16 %v4217
    %v4495 = vunpack.c.h.b16 %v4217
    %v4496 = vunpack.c.l.b16 %v4218
    %v4497 = vunpack.c.h.b16 %v4218
    %v4498 = vunpack.c.l.b16 %v4219
    %v4499 = vunpack.c.l.b16 %v4220
    %v4500 = vunpack.c.h.b16 %v4220
    %v4501 = vunpack.c.l.b16 %v4221
    %v4502 = vunpack.c.h.b16 %v4221
    %v4503 = vunpack.c.l.b16 %v4222
    %v4504 = vunpack.c.l.b16 %v4223
    %v4505 = vunpack.c.h.b16 %v4223
    %v4506 = vunpack.c.l.b16 %v4224
    %v4507 = vunpack.c.h.b16 %v4224
    %v4508 = vunpack.c.l.b16 %v4225
    %v4509 = vpack.c.b16 %v4354, %v4349
    %v4510 = vpack.c.b16 %v4355, %v4350
    %v4511 = vpack.c.b16 %v4356, %v4351
    %v4512 = vpack.c.b16 %v4357, %v4352
    %v4513 = vpack.c.b16 %v4358, %v4353
    %v4514 = vpack.c.b16 %v4364, %v4359
    %v4515 = vpack.c.b16 %v4365, %v4360
    %v4516 = vpack.c.b16 %v4366, %v4361
    %v4517 = vpack.c.b16 %v4367, %v4362
    %v4518 = vpack.c.b16 %v4368, %v4363
    %v4519 = vpack.c.b16 %v4374, %v4369
    %v4520 = vpack.c.b16 %v4375, %v4370
    %v4521 = vpack.c.b16 %v4376, %v4371
    %v4522 = vpack.c.b16 %v4377, %v4372
    %v4523 = vpack.c.b16 %v4378, %v4373
    %v4524 = vpack.c.b16 %v4384, %v4379
    %v4525 = vpack.c.b16 %v4385, %v4380
    %v4526 = vpack.c.b16 %v4386, %v4381
    %v4527 = vpack.c.b16 %v4387, %v4382
    %v4528 = vpack.c.b16 %v4388, %v4383
    %v4529 = vpack.c.b16 %v4394, %v4389
    %v4530 = vpack.c.b16 %v4395, %v4390
    %v4531 = vpack.c.b16 %v4396, %v4391
    %v4532 = vpack.c.b16 %v4397, %v4392
    %v4533 = vpack.c.b16 %v4398, %v4393
    %v4534 = vpack.c.b16 %v4404, %v4399
    %v4535 = vpack.c.b16 %v4405, %v4400
    %v4536 = vpack.c.b16 %v4406, %v4401
    %v4537 = vpack.c.b16 %v4407, %v4402
    %v4538 = vpack.c.b16 %v4408, %v4403
    %v4539 = vpack.c.b16 %v4414, %v4409
    %v4540 = vpack.c.b16 %v4415, %v4410
    %v4541 = vpack.c.b16 %v4416, %v4411
    %v4542 = vpack.c.b16 %v4417, %v4412
    %v4543 = vpack.c.b16 %v4418, %v4413
    %v4544 = vpack.c.b16 %v4424, %v4419
    %v4545 = vpack.c.b16 %v4425, %v4420
    %v4546 = vpack.c.b16 %v4426, %v4421
    %v4547 = vpack.c.b16 %v4427, %v4422
    %v4548 = vpack.c.b16 %v4428, %v4423
    %v4549 = vpack.c.b16 %v4434, %v4429
    %v4550 = vpack.c.b16 %v4435, %v4430
    %v4551 = vpack.c.b16 %v4436, %v4431
    %v4552 = vpack.c.b16 %v4437, %v4432
    %v4553 = vpack.c.b16 %v4438, %v4433
    %v4554 = vpack.c.b16 %v4444, %v4439
    %v4555 = vpack.c.b16 %v4445, %v4440
    %v4556 = vpack.c.b16 %v4446, %v4441
    %v4557 = vpack.c.b16 %v4447, %v4442
    %v4558 = vpack.c.b16 %v4448, %v4443
    %v4559 = vpack.c.b16 %v4454, %v4449
    %v4560 = vpack.c.b16 %v4455, %v4450
    %v4561 = vpack.c.b16 %v4456, %v4451
    %v4562 = vpack.c.b16 %v4457, %v4452
    %v4563 = vpack.c.b16 %v4458, %v4453
    %v4564 = vpack.c.b16 %v4464, %v4459
    %v4565 = vpack.c.b16 %v4465, %v4460
    %v4566 = vpack.c.b16 %v4466, %v4461
    %v4567 = vpack.c.b16 %v4467, %v4462
    %v4568 = vpack.c.b16 %v4468, %v4463
    %v4569 = vpack.c.b16 %v4474, %v4469
    %v4570 = vpack.c.b16 %v4475, %v4470
    %v4571 = vpack.c.b16 %v4476, %v4471
    %v4572 = vpack.c.b16 %v4477, %v4472
    %v4573 = vpack.c.b16 %v4478, %v4473
    %v4574 = vpack.c.b16 %v4484, %v4479
    %v4575 = vpack.c.b16 %v4485, %v4480
    %v4576 = vpack.c.b16 %v4486, %v4481
    %v4577 = vpack.c.b16 %v4487, %v4482
    %v4578 = vpack.c.b16 %v4488, %v4483
    %v4579 = vpack.c.b16 %v4494, %v4489
    %v4580 = vpack.c.b16 %v4495, %v4490
    %v4581 = vpack.c.b16 %v4496, %v4491
    %v4582 = vpack.c.b16 %v4497, %v4492
    %v4583 = vpack.c.b16 %v4498, %v4493
    %v4584 = vpack.c.b16 %v4504, %v4499
    %v4585 = vpack.c.b16 %v4505, %v4500
    %v4586 = vpack.c.b16 %v4506, %v4501
    %v4587 = vpack.c.b16 %v4507, %v4502
    %v4588 = vpack.c.b16 %v4508, %v4503
    %4669 = vmatprep.subr.bf16.mxu0 %v4510
    %4670 = vmatpush1.bf16.msra.mxu0 %v4509
    %4671 = vmatprep.subr.bf16.mxu0 %v4515
    %4672 = vmatpush1.bf16.msra.mxu0 %v4514
    %4673 = vmatprep.subr.bf16.mxu0 %v4520
    %4674 = vmatpush1.bf16.msra.mxu0 %v4519
    %4675 = vmatprep.subr.bf16.mxu0 %v4525
    %4676 = vmatpush1.bf16.msra.mxu0 %v4524
    %4677 = vmatprep.subr.bf16.mxu0 %v4530
    %4678 = vmatpush1.bf16.msra.mxu0 %v4529
    %4679 = vmatprep.subr.bf16.mxu0 %v4535
    %4680 = vmatpush1.bf16.msra.mxu0 %v4534
    %4681 = vmatprep.subr.bf16.mxu0 %v4540
    %4682 = vmatpush1.bf16.msra.mxu0 %v4539
    %4683 = vmatprep.subr.bf16.mxu0 %v4545
    %4684 = vmatpush1.bf16.msra.mxu0 %v4544
    %4685 = vmatprep.subr.bf16.mxu0 %v4550
    %4686 = vmatpush1.bf16.msra.mxu0 %v4549
    %4687 = vmatprep.subr.bf16.mxu0 %v4555
    %4688 = vmatpush1.bf16.msra.mxu0 %v4554
    %4689 = vmatprep.subr.bf16.mxu0 %v4560
    %4690 = vmatpush1.bf16.msra.mxu0 %v4559
    %4691 = vmatprep.subr.bf16.mxu0 %v4565
    %4692 = vmatpush1.bf16.msra.mxu0 %v4564
    %4693 = vmatprep.subr.bf16.mxu0 %v4570
    %4694 = vmatpush1.bf16.msra.mxu0 %v4569
    %4695 = vmatprep.subr.bf16.mxu0 %v4575
    %4696 = vmatpush1.bf16.msra.mxu0 %v4574
    %4697 = vmatprep.subr.bf16.mxu0 %v4580
    %4698 = vmatpush1.bf16.msra.mxu0 %v4579
    %4699 = vmatprep.subr.bf16.mxu0 %v4585
    %4700 = vmatpush1.bf16.msra.mxu0 %v4584
    %4701 = vmatprep.mubr.bf16.mxu0 %v4099
    %4702 = vmatmul.mubr.bf16.gmra.mrb[0].mxu0 %v4098
    %v4703 = vpop.f32.mrb[0].mxu0
    %v4704 = vadd.f32 %v4231, %v4703
    %v4705 = vpop.f32.mrb[0].mxu0
    %v4706 = vadd.f32 %v4235, %v4705
    %v4707 = vpop.f32.mrb[0].mxu0
    %v4708 = vadd.f32 %v4231, %v4707
    %v4709 = vpop.f32.mrb[0].mxu0
    %v4710 = vadd.f32 %v4235, %v4709
    %4711 = vmatprep.mubr.bf16.mxu0 %v4101
    %4712 = vmatmul.mubr.bf16.gmra.mrb[0].mxu0 %v4100
    %v4713 = vpop.f32.mrb[0].mxu0
    %v4714 = vadd.f32 %v4231, %v4713
    %v4715 = vpop.f32.mrb[0].mxu0
    %v4716 = vadd.f32 %v4235, %v4715
    %v4717 = vpop.f32.mrb[0].mxu0
    %v4718 = vadd.f32 %v4231, %v4717
    %v4719 = vpop.f32.mrb[0].mxu0
    %v4720 = vadd.f32 %v4235, %v4719
    %4721 = vmatprep.mubr.bf16.mxu0 %v4103
    %4722 = vmatmul.mubr.bf16.gmra.mrb[0].mxu0 %v4102
    %v4723 = vpop.f32.mrb[0].mxu0
    %v4724 = vadd.f32 %v4231, %v4723
    %v4725 = vpop.f32.mrb[0].mxu0
    %v4726 = vadd.f32 %v4235, %v4725
    %v4727 = vpop.f32.mrb[0].mxu0
    %v4728 = vadd.f32 %v4231, %v4727
    %v4729 = vpop.f32.mrb[0].mxu0
    %v4730 = vadd.f32 %v4235, %v4729
    %4731 = vmatprep.mubr.bf16.mxu0 %v4105
    %4732 = vmatmul.mubr.bf16.gmra.mrb[0].mxu0 %v4104
    %v4733 = vpop.f32.mrb[0].mxu0
    %v4734 = vadd.f32 %v4231, %v4733
    %v4735 = vpop.f32.mrb[0].mxu0
    %v4736 = vadd.f32 %v4235, %v4735
    %v4737 = vpop.f32.mrb[0].mxu0
    %v4738 = vadd.f32 %v4231, %v4737
    %v4739 = vpop.f32.mrb[0].mxu0
    %v4740 = vadd.f32 %v4235, %v4739
    %4741 = vmatprep.mubr.bf16.mxu0 %v4107
    %4742 = vmatmul.mubr.bf16.gmra.mrb[0].mxu0 %v4106
    %v4743 = vpop.f32.mrb[0].mxu0
    %v4744 = vadd.f32 %v4231, %v4743
    %v4745 = vpop.f32.mrb[0].mxu0
    %v4746 = vadd.f32 %v4235, %v4745
    %v4747 = vpop.f32.mrb[0].mxu0
    %v4748 = vadd.f32 %v4231, %v4747
    %v4749 = vpop.f32.mrb[0].mxu0
    %v4750 = vadd.f32 %v4235, %v4749
    %4751 = vmatprep.mubr.bf16.mxu0 %v4109
    %4752 = vmatmul.mubr.bf16.gmra.mrb[0].mxu0 %v4108
    %v4753 = vpop.f32.mrb[0].mxu0
    %v4754 = vadd.f32 %v4231, %v4753
    %v4755 = vpop.f32.mrb[0].mxu0
    %v4756 = vadd.f32 %v4235, %v4755
    %v4757 = vpop.f32.mrb[0].mxu0
    %v4758 = vadd.f32 %v4231, %v4757
    %v4759 = vpop.f32.mrb[0].mxu0
    %v4760 = vadd.f32 %v4235, %v4759
    %4761 = vmatprep.mubr.bf16.mxu0 %v4111
    %4762 = vmatmul.mubr.bf16.gmra.mrb[0].mxu0 %v4110
    %v4763 = vpop.f32.mrb[0].mxu0
    %v4764 = vadd.f32 %v4231, %v4763
    %v4765 = vpop.f32.mrb[0].mxu0
    %v4766 = vadd.f32 %v4235, %v4765
    %v4767 = vpop.f32.mrb[0].mxu0
    %v4768 = vadd.f32 %v4231, %v4767
    %v4769 = vpop.f32.mrb[0].mxu0
    %v4770 = vadd.f32 %v4235, %v4769
    %4771 = vmatprep.mubr.bf16.mxu0 %v4113
    %4772 = vmatmul.mubr.bf16.gmra.mrb[0].mxu0 %v4112
    %v4773 = vpop.f32.mrb[0].mxu0
    %v4774 = vadd.f32 %v4231, %v4773
    %v4775 = vpop.f32.mrb[0].mxu0
    %v4776 = vadd.f32 %v4235, %v4775
    %v4777 = vpop.f32.mrb[0].mxu0
    %v4778 = vadd.f32 %v4231, %v4777
    %v4779 = vpop.f32.mrb[0].mxu0
    %v4780 = vadd.f32 %v4235, %v4779
    %4781 = vmatprep.mubr.bf16.mxu0 %v4115
    %4782 = vmatmul.mubr.bf16.gmra.mrb[0].mxu0 %v4114
    %v4783 = vpop.f32.mrb[0].mxu0
    %v4784 = vadd.f32 %v4231, %v4783
    %v4785 = vpop.f32.mrb[0].mxu0
    %v4786 = vadd.f32 %v4235, %v4785
    %v4787 = vpop.f32.mrb[0].mxu0
    %v4788 = vadd.f32 %v4231, %v4787
    %v4789 = vpop.f32.mrb[0].mxu0
    %v4790 = vadd.f32 %v4235, %v4789
    %4791 = vmatprep.mubr.bf16.mxu0 %v4117
    %4792 = vmatmul.mubr.bf16.gmra.mrb[0].mxu0 %v4116
    %v4793 = vpop.f32.mrb[0].mxu0
    %v4794 = vadd.f32 %v4231, %v4793
    %v4795 = vpop.f32.mrb[0].mxu0
    %v4796 = vadd.f32 %v4235, %v4795
    %v4797 = vpop.f32.mrb[0].mxu0
    %v4798 = vadd.f32 %v4231, %v4797
    %v4799 = vpop.f32.mrb[0].mxu0
    %v4800 = vadd.f32 %v4235, %v4799
    %4801 = vmatprep.mubr.bf16.mxu0 %v4119
    %4802 = vmatmul.mubr.bf16.gmra.mrb[0].mxu0 %v4118
    %v4803 = vpop.f32.mrb[0].mxu0
    %v4804 = vadd.f32 %v4231, %v4803
    %v4805 = vpop.f32.mrb[0].mxu0
    %v4806 = vadd.f32 %v4235, %v4805
    %v4807 = vpop.f32.mrb[0].mxu0
    %v4808 = vadd.f32 %v4231, %v4807
    %v4809 = vpop.f32.mrb[0].mxu0
    %v4810 = vadd.f32 %v4235, %v4809
    %4811 = vmatprep.mubr.bf16.mxu0 %v4121
    %4812 = vmatmul.mubr.bf16.gmra.mrb[0].mxu0 %v4120
    %v4813 = vpop.f32.mrb[0].mxu0
    %v4814 = vadd.f32 %v4231, %v4813
    %v4815 = vpop.f32.mrb[0].mxu0
    %v4816 = vadd.f32 %v4235, %v4815
    %v4817 = vpop.f32.mrb[0].mxu0
    %v4818 = vadd.f32 %v4231, %v4817
    %v4819 = vpop.f32.mrb[0].mxu0
    %v4820 = vadd.f32 %v4235, %v4819
    %4821 = vmatprep.mubr.bf16.mxu0 %v4123
    %4822 = vmatmul.mubr.bf16.gmra.mrb[0].mxu0 %v4122
    %v4823 = vpop.f32.mrb[0].mxu0
    %v4824 = vadd.f32 %v4231, %v4823
    %v4825 = vpop.f32.mrb[0].mxu0
    %v4826 = vadd.f32 %v4235, %v4825
    %v4827 = vpop.f32.mrb[0].mxu0
    %v4828 = vadd.f32 %v4231, %v4827
    %v4829 = vpop.f32.mrb[0].mxu0
    %v4830 = vadd.f32 %v4235, %v4829
    %4831 = vmatprep.mubr.bf16.mxu0 %v4125
    %4832 = vmatmul.mubr.bf16.gmra.mrb[0].mxu0 %v4124
    %v4833 = vpop.f32.mrb[0].mxu0
    %v4834 = vadd.f32 %v4231, %v4833
    %v4835 = vpop.f32.mrb[0].mxu0
    %v4836 = vadd.f32 %v4235, %v4835
    %v4837 = vpop.f32.mrb[0].mxu0
    %v4838 = vadd.f32 %v4231, %v4837
    %v4839 = vpop.f32.mrb[0].mxu0
    %v4840 = vadd.f32 %v4235, %v4839
    %4841 = vmatprep.mubr.bf16.mxu0 %v4127
    %4842 = vmatmul.mubr.bf16.gmra.mrb[0].mxu0 %v4126
    %v4843 = vpop.f32.mrb[0].mxu0
    %v4844 = vadd.f32 %v4231, %v4843
    %v4845 = vpop.f32.mrb[0].mxu0
    %v4846 = vadd.f32 %v4235, %v4845
    %v4847 = vpop.f32.mrb[0].mxu0
    %v4848 = vadd.f32 %v4231, %v4847
    %v4849 = vpop.f32.mrb[0].mxu0
    %v4850 = vadd.f32 %v4235, %v4849
    %4851 = vmatprep.mubr.bf16.mxu0 %v4129
    %4852 = vmatmul.mubr.bf16.gmra.mrb[0].mxu0 %v4128
    %v4853 = vpop.f32.mrb[0].mxu0
    %v4854 = vadd.f32 %v4231, %v4853
    %v4855 = vpop.f32.mrb[0].mxu0
    %v4856 = vadd.f32 %v4235, %v4855
    %v4857 = vpop.f32.mrb[0].mxu0
    %v4858 = vadd.f32 %v4231, %v4857
    %v4859 = vpop.f32.mrb[0].mxu0
    %v4860 = vadd.f32 %v4235, %v4859
    %4861 = vdwg.mxu0
    %4862 = vmatprep.subr.bf16.mxu0 %v4512
    %4863 = vmatpush1.bf16.msra.mxu0 %v4511
    %4864 = vmatprep.subr.bf16.mxu0 %v4517
    %4865 = vmatpush1.bf16.msra.mxu0 %v4516
    %4866 = vmatprep.subr.bf16.mxu0 %v4522
    %4867 = vmatpush1.bf16.msra.mxu0 %v4521
    %4868 = vmatprep.subr.bf16.mxu0 %v4527
    %4869 = vmatpush1.bf16.msra.mxu0 %v4526
    %4870 = vmatprep.subr.bf16.mxu0 %v4532
    %4871 = vmatpush1.bf16.msra.mxu0 %v4531
    %4872 = vmatprep.subr.bf16.mxu0 %v4537
    %4873 = vmatpush1.bf16.msra.mxu0 %v4536
    %4874 = vmatprep.subr.bf16.mxu0 %v4542
    %4875 = vmatpush1.bf16.msra.mxu0 %v4541
    %4876 = vmatprep.subr.bf16.mxu0 %v4547
    %4877 = vmatpush1.bf16.msra.mxu0 %v4546
    %4878 = vmatprep.subr.bf16.mxu0 %v4552
    %4879 = vmatpush1.bf16.msra.mxu0 %v4551
    %4880 = vmatprep.subr.bf16.mxu0 %v4557
    %4881 = vmatpush1.bf16.msra.mxu0 %v4556
    %4882 = vmatprep.subr.bf16.mxu0 %v4562
    %4883 = vmatpush1.bf16.msra.mxu0 %v4561
    %4884 = vmatprep.subr.bf16.mxu0 %v4567
    %4885 = vmatpush1.bf16.msra.mxu0 %v4566
    %4886 = vmatprep.subr.bf16.mxu0 %v4572
    %4887 = vmatpush1.bf16.msra.mxu0 %v4571
    %4888 = vmatprep.subr.bf16.mxu0 %v4577
    %4889 = vmatpush1.bf16.msra.mxu0 %v4576
    %4890 = vmatprep.subr.bf16.mxu0 %v4582
    %4891 = vmatpush1.bf16.msra.mxu0 %v4581
    %4892 = vmatprep.subr.bf16.mxu0 %v4587
    %4893 = vmatpush1.bf16.msra.mxu0 %v4586
    %4894 = vmatprep.mubr.bf16.mxu0 %v4099
    %4895 = vmatmul.mubr.bf16.gmra.mrb[0].mxu0 %v4098
    %v4896 = vpop.f32.mrb[0].mxu0
    %v4897 = vadd.f32 %v4239, %v4896
    %v4898 = vpop.f32.mrb[0].mxu0
    %v4899 = vadd.f32 %v4243, %v4898
    %v4900 = vpop.f32.mrb[0].mxu0
    %v4901 = vadd.f32 %v4239, %v4900
    %v4902 = vpop.f32.mrb[0].mxu0
    %v4903 = vadd.f32 %v4243, %v4902
    %4904 = vmatprep.mubr.bf16.mxu0 %v4101
    %4905 = vmatmul.mubr.bf16.gmra.mrb[0].mxu0 %v4100
    %v4906 = vpop.f32.mrb[0].mxu0
    %v4907 = vadd.f32 %v4239, %v4906
    %v4908 = vpop.f32.mrb[0].mxu0
    %v4909 = vadd.f32 %v4243, %v4908
    %v4910 = vpop.f32.mrb[0].mxu0
    %v4911 = vadd.f32 %v4239, %v4910
    %v4912 = vpop.f32.mrb[0].mxu0
    %v4913 = vadd.f32 %v4243, %v4912
    %4914 = vmatprep.mubr.bf16.mxu0 %v4103
    %4915 = vmatmul.mubr.bf16.gmra.mrb[0].mxu0 %v4102
    %v4916 = vpop.f32.mrb[0].mxu0
    %v4917 = vadd.f32 %v4239, %v4916
    %v4918 = vpop.f32.mrb[0].mxu0
    %v4919 = vadd.f32 %v4243, %v4918
    %v4920 = vpop.f32.mrb[0].mxu0
    %v4921 = vadd.f32 %v4239, %v4920
    %v4922 = vpop.f32.mrb[0].mxu0
    %v4923 = vadd.f32 %v4243, %v4922
    %4924 = vmatprep.mubr.bf16.mxu0 %v4105
    %4925 = vmatmul.mubr.bf16.gmra.mrb[0].mxu0 %v4104
    %v4926 = vpop.f32.mrb[0].mxu0
    %v4927 = vadd.f32 %v4239, %v4926
    %v4928 = vpop.f32.mrb[0].mxu0
    %v4929 = vadd.f32 %v4243, %v4928
    %v4930 = vpop.f32.mrb[0].mxu0
    %v4931 = vadd.f32 %v4239, %v4930
    %v4932 = vpop.f32.mrb[0].mxu0
    %v4933 = vadd.f32 %v4243, %v4932
    %4934 = vmatprep.mubr.bf16.mxu0 %v4107
    %4935 = vmatmul.mubr.bf16.gmra.mrb[0].mxu0 %v4106
    %v4936 = vpop.f32.mrb[0].mxu0
    %v4937 = vadd.f32 %v4239, %v4936
    %v4938 = vpop.f32.mrb[0].mxu0
    %v4939 = vadd.f32 %v4243, %v4938
    %v4940 = vpop.f32.mrb[0].mxu0
    %v4941 = vadd.f32 %v4239, %v4940
    %v4942 = vpop.f32.mrb[0].mxu0
    %v4943 = vadd.f32 %v4243, %v4942
    %4944 = vmatprep.mubr.bf16.mxu0 %v4109
    %4945 = vmatmul.mubr.bf16.gmra.mrb[0].mxu0 %v4108
    %v4946 = vpop.f32.mrb[0].mxu0
    %v4947 = vadd.f32 %v4239, %v4946
    %v4948 = vpop.f32.mrb[0].mxu0
    %v4949 = vadd.f32 %v4243, %v4948
    %v4950 = vpop.f32.mrb[0].mxu0
    %v4951 = vadd.f32 %v4239, %v4950
    %v4952 = vpop.f32.mrb[0].mxu0
    %v4953 = vadd.f32 %v4243, %v4952
    %4954 = vmatprep.mubr.bf16.mxu0 %v4111
    %4955 = vmatmul.mubr.bf16.gmra.mrb[0].mxu0 %v4110
    %v4956 = vpop.f32.mrb[0].mxu0
    %v4957 = vadd.f32 %v4239, %v4956
    %v4958 = vpop.f32.mrb[0].mxu0
    %v4959 = vadd.f32 %v4243, %v4958
    %v4960 = vpop.f32.mrb[0].mxu0
    %v4961 = vadd.f32 %v4239, %v4960
    %v4962 = vpop.f32.mrb[0].mxu0
    %v4963 = vadd.f32 %v4243, %v4962
    %4964 = vmatprep.mubr.bf16.mxu0 %v4113
    %4965 = vmatmul.mubr.bf16.gmra.mrb[0].mxu0 %v4112
    %v4966 = vpop.f32.mrb[0].mxu0
    %v4967 = vadd.f32 %v4239, %v4966
    %v4968 = vpop.f32.mrb[0].mxu0
    %v4969 = vadd.f32 %v4243, %v4968
    %v4970 = vpop.f32.mrb[0].mxu0
    %v4971 = vadd.f32 %v4239, %v4970
    %v4972 = vpop.f32.mrb[0].mxu0
    %v4973 = vadd.f32 %v4243, %v4972
    %4974 = vmatprep.mubr.bf16.mxu0 %v4115
    %4975 = vmatmul.mubr.bf16.gmra.mrb[0].mxu0 %v4114
    %v4976 = vpop.f32.mrb[0].mxu0
    %v4977 = vadd.f32 %v4239, %v4976
    %v4978 = vpop.f32.mrb[0].mxu0
    %v4979 = vadd.f32 %v4243, %v4978
    %v4980 = vpop.f32.mrb[0].mxu0
    %v4981 = vadd.f32 %v4239, %v4980
    %v4982 = vpop.f32.mrb[0].mxu0
    %v4983 = vadd.f32 %v4243, %v4982
    %4984 = vmatprep.mubr.bf16.mxu0 %v4117
    %4985 = vmatmul.mubr.bf16.gmra.mrb[0].mxu0 %v4116
    %v4986 = vpop.f32.mrb[0].mxu0
    %v4987 = vadd.f32 %v4239, %v4986
    %v4988 = vpop.f32.mrb[0].mxu0
    %v4989 = vadd.f32 %v4243, %v4988
    %v4990 = vpop.f32.mrb[0].mxu0
    %v4991 = vadd.f32 %v4239, %v4990
    %v4992 = vpop.f32.mrb[0].mxu0
    %v4993 = vadd.f32 %v4243, %v4992
    %4994 = vmatprep.mubr.bf16.mxu0 %v4119
    %4995 = vmatmul.mubr.bf16.gmra.mrb[0].mxu0 %v4118
    %v4996 = vpop.f32.mrb[0].mxu0
    %v4997 = vadd.f32 %v4239, %v4996
    %v4998 = vpop.f32.mrb[0].mxu0
    %v4999 = vadd.f32 %v4243, %v4998
    %v5000 = vpop.f32.mrb[0].mxu0
    %v5001 = vadd.f32 %v4239, %v5000
    %v5002 = vpop.f32.mrb[0].mxu0
    %v5003 = vadd.f32 %v4243, %v5002
    %5004 = vmatprep.mubr.bf16.mxu0 %v4121
    %5005 = vmatmul.mubr.bf16.gmra.mrb[0].mxu0 %v4120
    %v5006 = vpop.f32.mrb[0].mxu0
    %v5007 = vadd.f32 %v4239, %v5006
    %v5008 = vpop.f32.mrb[0].mxu0
    %v5009 = vadd.f32 %v4243, %v5008
    %v5010 = vpop.f32.mrb[0].mxu0
    %v5011 = vadd.f32 %v4239, %v5010
    %v5012 = vpop.f32.mrb[0].mxu0
    %v5013 = vadd.f32 %v4243, %v5012
    %5014 = vmatprep.mubr.bf16.mxu0 %v4123
    %5015 = vmatmul.mubr.bf16.gmra.mrb[0].mxu0 %v4122
    %v5016 = vpop.f32.mrb[0].mxu0
    %v5017 = vadd.f32 %v4239, %v5016
    %v5018 = vpop.f32.mrb[0].mxu0
    %v5019 = vadd.f32 %v4243, %v5018
    %v5020 = vpop.f32.mrb[0].mxu0
    %v5021 = vadd.f32 %v4239, %v5020
    %v5022 = vpop.f32.mrb[0].mxu0
    %v5023 = vadd.f32 %v4243, %v5022
    %5024 = vmatprep.mubr.bf16.mxu0 %v4125
    %5025 = vmatmul.mubr.bf16.gmra.mrb[0].mxu0 %v4124
    %v5026 = vpop.f32.mrb[0].mxu0
    %v5027 = vadd.f32 %v4239, %v5026
    %v5028 = vpop.f32.mrb[0].mxu0
    %v5029 = vadd.f32 %v4243, %v5028
    %v5030 = vpop.f32.mrb[0].mxu0
    %v5031 = vadd.f32 %v4239, %v5030
    %v5032 = vpop.f32.mrb[0].mxu0
    %v5033 = vadd.f32 %v4243, %v5032
    %5034 = vmatprep.mubr.bf16.mxu0 %v4127
    %5035 = vmatmul.mubr.bf16.gmra.mrb[0].mxu0 %v4126
    %v5036 = vpop.f32.mrb[0].mxu0
    %v5037 = vadd.f32 %v4239, %v5036
    %v5038 = vpop.f32.mrb[0].mxu0
    %v5039 = vadd.f32 %v4243, %v5038
    %v5040 = vpop.f32.mrb[0].mxu0
    %v5041 = vadd.f32 %v4239, %v5040
    %v5042 = vpop.f32.mrb[0].mxu0
    %v5043 = vadd.f32 %v4243, %v5042
    %5044 = vmatprep.mubr.bf16.mxu0 %v4129
    %5045 = vmatmul.mubr.bf16.gmra.mrb[0].mxu0 %v4128
    %v5046 = vpop.f32.mrb[0].mxu0
    %v5047 = vadd.f32 %v4239, %v5046
    %v5048 = vpop.f32.mrb[0].mxu0
    %v5049 = vadd.f32 %v4243, %v5048
    %v5050 = vpop.f32.mrb[0].mxu0
    %v5051 = vadd.f32 %v4239, %v5050
    %v5052 = vpop.f32.mrb[0].mxu0
    %v5053 = vadd.f32 %v4243, %v5052
    %5054 = vdwg.mxu0
    %5055 = vmatprep.subr.bf16.mxu0 0
    %5056 = vmatpush1.bf16.msra.mxu0 %v4513
    %5057 = vmatprep.subr.bf16.mxu0 0
    %5058 = vmatpush1.bf16.msra.mxu0 %v4518
    %5059 = vmatprep.subr.bf16.mxu0 0
    %5060 = vmatpush1.bf16.msra.mxu0 %v4523
    %5061 = vmatprep.subr.bf16.mxu0 0
    %5062 = vmatpush1.bf16.msra.mxu0 %v4528
    %5063 = vmatprep.subr.bf16.mxu0 0
    %5064 = vmatpush1.bf16.msra.mxu0 %v4533
    %5065 = vmatprep.subr.bf16.mxu0 0
    %5066 = vmatpush1.bf16.msra.mxu0 %v4538
    %5067 = vmatprep.subr.bf16.mxu0 0
    %5068 = vmatpush1.bf16.msra.mxu0 %v4543
    %5069 = vmatprep.subr.bf16.mxu0 0
    %5070 = vmatpush1.bf16.msra.mxu0 %v4548
    %5071 = vmatprep.subr.bf16.mxu0 0
    %5072 = vmatpush1.bf16.msra.mxu0 %v4553
    %5073 = vmatprep.subr.bf16.mxu0 0
    %5074 = vmatpush1.bf16.msra.mxu0 %v4558
    %5075 = vmatprep.subr.bf16.mxu0 0
    %5076 = vmatpush1.bf16.msra.mxu0 %v4563
    %5077 = vmatprep.subr.bf16.mxu0 0
    %5078 = vmatpush1.bf16.msra.mxu0 %v4568
    %5079 = vmatprep.subr.bf16.mxu0 0
    %5080 = vmatpush1.bf16.msra.mxu0 %v4573
    %5081 = vmatprep.subr.bf16.mxu0 0
    %5082 = vmatpush1.bf16.msra.mxu0 %v4578
    %5083 = vmatprep.subr.bf16.mxu0 0
    %5084 = vmatpush1.bf16.msra.mxu0 %v4583
    %5085 = vmatprep.subr.bf16.mxu0 0
    %5086 = vmatpush1.bf16.msra.mxu0 %v4588
    %5087 = vmatprep.mubr.bf16.mxu0 %v4099
    %5088 = vmatmul.mubr.bf16.gmra.mrb[0].mxu0 %v4098
    %v5089 = vpop.f32.mrb[0].mxu0
    %v5090 = vadd.f32 %v4247, %v5089
    %v5091 = vpop.f32.mrb[0].mxu0
    %v5092 = vpop.f32.mrb[0].mxu0
    %v5093 = vadd.f32 %v4247, %v5092
    %v5094 = vpop.f32.mrb[0].mxu0
    %5095 = vmatprep.mubr.bf16.mxu0 %v4101
    %5096 = vmatmul.mubr.bf16.gmra.mrb[0].mxu0 %v4100
    %v5097 = vpop.f32.mrb[0].mxu0
    %v5098 = vadd.f32 %v4247, %v5097
    %v5099 = vpop.f32.mrb[0].mxu0
    %v5100 = vpop.f32.mrb[0].mxu0
    %v5101 = vadd.f32 %v4247, %v5100
    %v5102 = vpop.f32.mrb[0].mxu0
    %5103 = vmatprep.mubr.bf16.mxu0 %v4103
    %5104 = vmatmul.mubr.bf16.gmra.mrb[0].mxu0 %v4102
    %v5105 = vpop.f32.mrb[0].mxu0
    %v5106 = vadd.f32 %v4247, %v5105
    %v5107 = vpop.f32.mrb[0].mxu0
    %v5108 = vpop.f32.mrb[0].mxu0
    %v5109 = vadd.f32 %v4247, %v5108
    %v5110 = vpop.f32.mrb[0].mxu0
    %5111 = vmatprep.mubr.bf16.mxu0 %v4105
    %5112 = vmatmul.mubr.bf16.gmra.mrb[0].mxu0 %v4104
    %v5113 = vpop.f32.mrb[0].mxu0
    %v5114 = vadd.f32 %v4247, %v5113
    %v5115 = vpop.f32.mrb[0].mxu0
    %v5116 = vpop.f32.mrb[0].mxu0
    %v5117 = vadd.f32 %v4247, %v5116
    %v5118 = vpop.f32.mrb[0].mxu0
    %5119 = vmatprep.mubr.bf16.mxu0 %v4107
    %5120 = vmatmul.mubr.bf16.gmra.mrb[0].mxu0 %v4106
    %v5121 = vpop.f32.mrb[0].mxu0
    %v5122 = vadd.f32 %v4247, %v5121
    %v5123 = vpop.f32.mrb[0].mxu0
    %v5124 = vpop.f32.mrb[0].mxu0
    %v5125 = vadd.f32 %v4247, %v5124
    %v5126 = vpop.f32.mrb[0].mxu0
    %5127 = vmatprep.mubr.bf16.mxu0 %v4109
    %5128 = vmatmul.mubr.bf16.gmra.mrb[0].mxu0 %v4108
    %v5129 = vpop.f32.mrb[0].mxu0
    %v5130 = vadd.f32 %v4247, %v5129
    %v5131 = vpop.f32.mrb[0].mxu0
    %v5132 = vpop.f32.mrb[0].mxu0
    %v5133 = vadd.f32 %v4247, %v5132
    %v5134 = vpop.f32.mrb[0].mxu0
    %5135 = vmatprep.mubr.bf16.mxu0 %v4111
    %5136 = vmatmul.mubr.bf16.gmra.mrb[0].mxu0 %v4110
    %v5137 = vpop.f32.mrb[0].mxu0
    %v5138 = vadd.f32 %v4247, %v5137
    %v5139 = vpop.f32.mrb[0].mxu0
    %v5140 = vpop.f32.mrb[0].mxu0
    %v5141 = vadd.f32 %v4247, %v5140
    %v5142 = vpop.f32.mrb[0].mxu0
    %5143 = vmatprep.mubr.bf16.mxu0 %v4113
    %5144 = vmatmul.mubr.bf16.gmra.mrb[0].mxu0 %v4112
    %v5145 = vpop.f32.mrb[0].mxu0
    %v5146 = vadd.f32 %v4247, %v5145
    %v5147 = vpop.f32.mrb[0].mxu0
    %v5148 = vpop.f32.mrb[0].mxu0
    %v5149 = vadd.f32 %v4247, %v5148
    %v5150 = vpop.f32.mrb[0].mxu0
    %5151 = vmatprep.mubr.bf16.mxu0 %v4115
    %5152 = vmatmul.mubr.bf16.gmra.mrb[0].mxu0 %v4114
    %v5153 = vpop.f32.mrb[0].mxu0
    %v5154 = vadd.f32 %v4247, %v5153
    %v5155 = vpop.f32.mrb[0].mxu0
    %v5156 = vpop.f32.mrb[0].mxu0
    %v5157 = vadd.f32 %v4247, %v5156
    %v5158 = vpop.f32.mrb[0].mxu0
    %5159 = vmatprep.mubr.bf16.mxu0 %v4117
    %5160 = vmatmul.mubr.bf16.gmra.mrb[0].mxu0 %v4116
    %v5161 = vpop.f32.mrb[0].mxu0
    %v5162 = vadd.f32 %v4247, %v5161
    %v5163 = vpop.f32.mrb[0].mxu0
    %v5164 = vpop.f32.mrb[0].mxu0
    %v5165 = vadd.f32 %v4247, %v5164
    %v5166 = vpop.f32.mrb[0].mxu0
    %5167 = vmatprep.mubr.bf16.mxu0 %v4119
    %5168 = vmatmul.mubr.bf16.gmra.mrb[0].mxu0 %v4118
    %v5169 = vpop.f32.mrb[0].mxu0
    %v5170 = vadd.f32 %v4247, %v5169
    %v5171 = vpop.f32.mrb[0].mxu0
    %v5172 = vpop.f32.mrb[0].mxu0
    %v5173 = vadd.f32 %v4247, %v5172
    %v5174 = vpop.f32.mrb[0].mxu0
    %5175 = vmatprep.mubr.bf16.mxu0 %v4121
    %5176 = vmatmul.mubr.bf16.gmra.mrb[0].mxu0 %v4120
    %v5177 = vpop.f32.mrb[0].mxu0
    %v5178 = vadd.f32 %v4247, %v5177
    %v5179 = vpop.f32.mrb[0].mxu0
    %v5180 = vpop.f32.mrb[0].mxu0
    %v5181 = vadd.f32 %v4247, %v5180
    %v5182 = vpop.f32.mrb[0].mxu0
    %5183 = vmatprep.mubr.bf16.mxu0 %v4123
    %5184 = vmatmul.mubr.bf16.gmra.mrb[0].mxu0 %v4122
    %v5185 = vpop.f32.mrb[0].mxu0
    %v5186 = vadd.f32 %v4247, %v5185
    %v5187 = vpop.f32.mrb[0].mxu0
    %v5188 = vpop.f32.mrb[0].mxu0
    %v5189 = vadd.f32 %v4247, %v5188
    %v5190 = vpop.f32.mrb[0].mxu0
    %5191 = vmatprep.mubr.bf16.mxu0 %v4125
    %5192 = vmatmul.mubr.bf16.gmra.mrb[0].mxu0 %v4124
    %v5193 = vpop.f32.mrb[0].mxu0
    %v5194 = vadd.f32 %v4247, %v5193
    %v5195 = vpop.f32.mrb[0].mxu0
    %v5196 = vpop.f32.mrb[0].mxu0
    %v5197 = vadd.f32 %v4247, %v5196
    %v5198 = vpop.f32.mrb[0].mxu0
    %5199 = vmatprep.mubr.bf16.mxu0 %v4127
    %5200 = vmatmul.mubr.bf16.gmra.mrb[0].mxu0 %v4126
    %v5201 = vpop.f32.mrb[0].mxu0
    %v5202 = vadd.f32 %v4247, %v5201
    %v5203 = vpop.f32.mrb[0].mxu0
    %v5204 = vpop.f32.mrb[0].mxu0
    %v5205 = vadd.f32 %v4247, %v5204
    %v5206 = vpop.f32.mrb[0].mxu0
    %5207 = vmatprep.mubr.bf16.mxu0 %v4129
    %5208 = vmatmul.mubr.bf16.gmra.mrb[0].mxu0 %v4128
    %v5209 = vpop.f32.mrb[0].mxu0
    %v5210 = vadd.f32 %v4247, %v5209
    %v5211 = vpop.f32.mrb[0].mxu0
    %v5212 = vpop.f32.mrb[0].mxu0
    %v5213 = vadd.f32 %v4247, %v5212
    %v5214 = vpop.f32.mrb[0].mxu0
    %5215 = vdwg.mxu0
    %v5216 = vadd.f32 %v4704, %v4706
    %v5217 = vadd.f32 %v4708, %v4710
    %v5218 = vadd.f32 %v4714, %v4716
    %v5219 = vadd.f32 %v4718, %v4720
    %v5220 = vadd.f32 %v4724, %v4726
    %v5221 = vadd.f32 %v4728, %v4730
    %v5222 = vadd.f32 %v4734, %v4736
    %v5223 = vadd.f32 %v4738, %v4740
    %v5224 = vadd.f32 %v4744, %v4746
    %v5225 = vadd.f32 %v4748, %v4750
    %v5226 = vadd.f32 %v4754, %v4756
    %v5227 = vadd.f32 %v4758, %v4760
    %v5228 = vadd.f32 %v4764, %v4766
    %v5229 = vadd.f32 %v4768, %v4770
    %v5230 = vadd.f32 %v4774, %v4776
    %v5231 = vadd.f32 %v4778, %v4780
    %v5232 = vadd.f32 %v4784, %v4786
    %v5233 = vadd.f32 %v4788, %v4790
    %v5234 = vadd.f32 %v4794, %v4796
    %v5235 = vadd.f32 %v4798, %v4800
    %v5236 = vadd.f32 %v4804, %v4806
    %v5237 = vadd.f32 %v4808, %v4810
    %v5238 = vadd.f32 %v4814, %v4816
    %v5239 = vadd.f32 %v4818, %v4820
    %v5240 = vadd.f32 %v4824, %v4826
    %v5241 = vadd.f32 %v4828, %v4830
    %v5242 = vadd.f32 %v4834, %v4836
    %v5243 = vadd.f32 %v4838, %v4840
    %v5244 = vadd.f32 %v4844, %v4846
    %v5245 = vadd.f32 %v4848, %v4850
    %v5246 = vadd.f32 %v4854, %v4856
    %v5247 = vadd.f32 %v4858, %v4860
    %v5248 = vadd.f32 %v5216, %v4897
    %v5249 = vadd.f32 %v5217, %v4901
    %v5250 = vadd.f32 %v5218, %v4907
    %v5251 = vadd.f32 %v5219, %v4911
    %v5252 = vadd.f32 %v5220, %v4917
    %v5253 = vadd.f32 %v5221, %v4921
    %v5254 = vadd.f32 %v5222, %v4927
    %v5255 = vadd.f32 %v5223, %v4931
    %v5256 = vadd.f32 %v5224, %v4937
    %v5257 = vadd.f32 %v5225, %v4941
    %v5258 = vadd.f32 %v5226, %v4947
    %v5259 = vadd.f32 %v5227, %v4951
    %v5260 = vadd.f32 %v5228, %v4957
    %v5261 = vadd.f32 %v5229, %v4961
    %v5262 = vadd.f32 %v5230, %v4967
    %v5263 = vadd.f32 %v5231, %v4971
    %v5264 = vadd.f32 %v5232, %v4977
    %v5265 = vadd.f32 %v5233, %v4981
    %v5266 = vadd.f32 %v5234, %v4987
    %v5267 = vadd.f32 %v5235, %v4991
    %v5268 = vadd.f32 %v5236, %v4997
    %v5269 = vadd.f32 %v5237, %v5001
    %v5270 = vadd.f32 %v5238, %v5007
    %v5271 = vadd.f32 %v5239, %v5011
    %v5272 = vadd.f32 %v5240, %v5017
    %v5273 = vadd.f32 %v5241, %v5021
    %v5274 = vadd.f32 %v5242, %v5027
    %v5275 = vadd.f32 %v5243, %v5031
    %v5276 = vadd.f32 %v5244, %v5037
    %v5277 = vadd.f32 %v5245, %v5041
    %v5278 = vadd.f32 %v5246, %v5047
    %v5279 = vadd.f32 %v5247, %v5051
    %v5280 = vadd.f32 %v5248, %v4899
    %v5281 = vadd.f32 %v5249, %v4903
    %v5282 = vadd.f32 %v5250, %v4909
    %v5283 = vadd.f32 %v5251, %v4913
    %v5284 = vadd.f32 %v5252, %v4919
    %v5285 = vadd.f32 %v5253, %v4923
    %v5286 = vadd.f32 %v5254, %v4929
    %v5287 = vadd.f32 %v5255, %v4933
    %v5288 = vadd.f32 %v5256, %v4939
    %v5289 = vadd.f32 %v5257, %v4943
    %v5290 = vadd.f32 %v5258, %v4949
    %v5291 = vadd.f32 %v5259, %v4953
    %v5292 = vadd.f32 %v5260, %v4959
    %v5293 = vadd.f32 %v5261, %v4963
    %v5294 = vadd.f32 %v5262, %v4969
    %v5295 = vadd.f32 %v5263, %v4973
    %v5296 = vadd.f32 %v5264, %v4979
    %v5297 = vadd.f32 %v5265, %v4983
    %v5298 = vadd.f32 %v5266, %v4989
    %v5299 = vadd.f32 %v5267, %v4993
    %v5300 = vadd.f32 %v5268, %v4999
    %v5301 = vadd.f32 %v5269, %v5003
    %v5302 = vadd.f32 %v5270, %v5009
    %v5303 = vadd.f32 %v5271, %v5013
    %v5304 = vadd.f32 %v5272, %v5019
    %v5305 = vadd.f32 %v5273, %v5023
    %v5306 = vadd.f32 %v5274, %v5029
    %v5307 = vadd.f32 %v5275, %v5033
    %v5308 = vadd.f32 %v5276, %v5039
    %v5309 = vadd.f32 %v5277, %v5043
    %v5310 = vadd.f32 %v5278, %v5049
    %v5311 = vadd.f32 %v5279, %v5053
    %v5312 = vmul.f32 %v5280, 0.25
    %v5313 = vmul.f32 %v5281, 0.25
    %v5314 = vmul.f32 %v5282, 0.25
    %v5315 = vmul.f32 %v5283, 0.25
    %v5316 = vmul.f32 %v5284, 0.25
    %v5317 = vmul.f32 %v5285, 0.25
    %v5318 = vmul.f32 %v5286, 0.25
    %v5319 = vmul.f32 %v5287, 0.25
    %v5320 = vmul.f32 %v5288, 0.25
    %v5321 = vmul.f32 %v5289, 0.25
    %v5322 = vmul.f32 %v5290, 0.25
    %v5323 = vmul.f32 %v5291, 0.25
    %v5324 = vmul.f32 %v5292, 0.25
    %v5325 = vmul.f32 %v5293, 0.25
    %v5326 = vmul.f32 %v5294, 0.25
    %v5327 = vmul.f32 %v5295, 0.25
    %v5328 = vmul.f32 %v5296, 0.25
    %v5329 = vmul.f32 %v5297, 0.25
    %v5330 = vmul.f32 %v5298, 0.25
    %v5331 = vmul.f32 %v5299, 0.25
    %v5332 = vmul.f32 %v5300, 0.25
    %v5333 = vmul.f32 %v5301, 0.25
    %v5334 = vmul.f32 %v5302, 0.25
    %v5335 = vmul.f32 %v5303, 0.25
    %v5336 = vmul.f32 %v5304, 0.25
    %v5337 = vmul.f32 %v5305, 0.25
    %v5338 = vmul.f32 %v5306, 0.25
    %v5339 = vmul.f32 %v5307, 0.25
    %v5340 = vmul.f32 %v5308, 0.25
    %v5341 = vmul.f32 %v5309, 0.25
    %v5342 = vmul.f32 %v5310, 0.25
    %v5343 = vmul.f32 %v5311, 0.25
    %v5344 = vsub.f32 %v5090, %v5312
    %v5345 = vsub.f32 %v5093, %v5313
    %v5346 = vsub.f32 %v5098, %v5314
    %v5347 = vsub.f32 %v5101, %v5315
    %v5348 = vsub.f32 %v5106, %v5316
    %v5349 = vsub.f32 %v5109, %v5317
    %v5350 = vsub.f32 %v5114, %v5318
    %v5351 = vsub.f32 %v5117, %v5319
    %v5352 = vsub.f32 %v5122, %v5320
    %v5353 = vsub.f32 %v5125, %v5321
    %v5354 = vsub.f32 %v5130, %v5322
    %v5355 = vsub.f32 %v5133, %v5323
    %v5356 = vsub.f32 %v5138, %v5324
    %v5357 = vsub.f32 %v5141, %v5325
    %v5358 = vsub.f32 %v5146, %v5326
    %v5359 = vsub.f32 %v5149, %v5327
    %v5360 = vsub.f32 %v5154, %v5328
    %v5361 = vsub.f32 %v5157, %v5329
    %v5362 = vsub.f32 %v5162, %v5330
    %v5363 = vsub.f32 %v5165, %v5331
    %v5364 = vsub.f32 %v5170, %v5332
    %v5365 = vsub.f32 %v5173, %v5333
    %v5366 = vsub.f32 %v5178, %v5334
    %v5367 = vsub.f32 %v5181, %v5335
    %v5368 = vsub.f32 %v5186, %v5336
    %v5369 = vsub.f32 %v5189, %v5337
    %v5370 = vsub.f32 %v5194, %v5338
    %v5371 = vsub.f32 %v5197, %v5339
    %v5372 = vsub.f32 %v5202, %v5340
    %v5373 = vsub.f32 %v5205, %v5341
    %v5374 = vsub.f32 %v5210, %v5342
    %v5375 = vsub.f32 %v5213, %v5343
    %v5376 = vadd.f32 %v4704, %v5344
    %v5377 = vadd.f32 %v4706, %v5344
    %v5378 = vadd.f32 %v4897, %v5344
    %v5379 = vadd.f32 %v4899, %v5344
    %v5380 = vadd.f32 %v4708, %v5345
    %v5381 = vadd.f32 %v4710, %v5345
    %v5382 = vadd.f32 %v4901, %v5345
    %v5383 = vadd.f32 %v4903, %v5345
    %v5384 = vadd.f32 %v4714, %v5346
    %v5385 = vadd.f32 %v4716, %v5346
    %v5386 = vadd.f32 %v4907, %v5346
    %v5387 = vadd.f32 %v4909, %v5346
    %v5388 = vadd.f32 %v4718, %v5347
    %v5389 = vadd.f32 %v4720, %v5347
    %v5390 = vadd.f32 %v4911, %v5347
    %v5391 = vadd.f32 %v4913, %v5347
    %v5392 = vadd.f32 %v4724, %v5348
    %v5393 = vadd.f32 %v4726, %v5348
    %v5394 = vadd.f32 %v4917, %v5348
    %v5395 = vadd.f32 %v4919, %v5348
    %v5396 = vadd.f32 %v4728, %v5349
    %v5397 = vadd.f32 %v4730, %v5349
    %v5398 = vadd.f32 %v4921, %v5349
    %v5399 = vadd.f32 %v4923, %v5349
    %v5400 = vadd.f32 %v4734, %v5350
    %v5401 = vadd.f32 %v4736, %v5350
    %v5402 = vadd.f32 %v4927, %v5350
    %v5403 = vadd.f32 %v4929, %v5350
    %v5404 = vadd.f32 %v4738, %v5351
    %v5405 = vadd.f32 %v4740, %v5351
    %v5406 = vadd.f32 %v4931, %v5351
    %v5407 = vadd.f32 %v4933, %v5351
    %v5408 = vadd.f32 %v4744, %v5352
    %v5409 = vadd.f32 %v4746, %v5352
    %v5410 = vadd.f32 %v4937, %v5352
    %v5411 = vadd.f32 %v4939, %v5352
    %v5412 = vadd.f32 %v4748, %v5353
    %v5413 = vadd.f32 %v4750, %v5353
    %v5414 = vadd.f32 %v4941, %v5353
    %v5415 = vadd.f32 %v4943, %v5353
    %v5416 = vadd.f32 %v4754, %v5354
    %v5417 = vadd.f32 %v4756, %v5354
    %v5418 = vadd.f32 %v4947, %v5354
    %v5419 = vadd.f32 %v4949, %v5354
    %v5420 = vadd.f32 %v4758, %v5355
    %v5421 = vadd.f32 %v4760, %v5355
    %v5422 = vadd.f32 %v4951, %v5355
    %v5423 = vadd.f32 %v4953, %v5355
    %v5424 = vadd.f32 %v4764, %v5356
    %v5425 = vadd.f32 %v4766, %v5356
    %v5426 = vadd.f32 %v4957, %v5356
    %v5427 = vadd.f32 %v4959, %v5356
    %v5428 = vadd.f32 %v4768, %v5357
    %v5429 = vadd.f32 %v4770, %v5357
    %v5430 = vadd.f32 %v4961, %v5357
    %v5431 = vadd.f32 %v4963, %v5357
    %v5432 = vadd.f32 %v4774, %v5358
    %v5433 = vadd.f32 %v4776, %v5358
    %v5434 = vadd.f32 %v4967, %v5358
    %v5435 = vadd.f32 %v4969, %v5358
    %v5436 = vadd.f32 %v4778, %v5359
    %v5437 = vadd.f32 %v4780, %v5359
    %v5438 = vadd.f32 %v4971, %v5359
    %v5439 = vadd.f32 %v4973, %v5359
    %v5440 = vadd.f32 %v4784, %v5360
    %v5441 = vadd.f32 %v4786, %v5360
    %v5442 = vadd.f32 %v4977, %v5360
    %v5443 = vadd.f32 %v4979, %v5360
    %v5444 = vadd.f32 %v4788, %v5361
    %v5445 = vadd.f32 %v4790, %v5361
    %v5446 = vadd.f32 %v4981, %v5361
    %v5447 = vadd.f32 %v4983, %v5361
    %v5448 = vadd.f32 %v4794, %v5362
    %v5449 = vadd.f32 %v4796, %v5362
    %v5450 = vadd.f32 %v4987, %v5362
    %v5451 = vadd.f32 %v4989, %v5362
    %v5452 = vadd.f32 %v4798, %v5363
    %v5453 = vadd.f32 %v4800, %v5363
    %v5454 = vadd.f32 %v4991, %v5363
    %v5455 = vadd.f32 %v4993, %v5363
    %v5456 = vadd.f32 %v4804, %v5364
    %v5457 = vadd.f32 %v4806, %v5364
    %v5458 = vadd.f32 %v4997, %v5364
    %v5459 = vadd.f32 %v4999, %v5364
    %v5460 = vadd.f32 %v4808, %v5365
    %v5461 = vadd.f32 %v4810, %v5365
    %v5462 = vadd.f32 %v5001, %v5365
    %v5463 = vadd.f32 %v5003, %v5365
    %v5464 = vadd.f32 %v4814, %v5366
    %v5465 = vadd.f32 %v4816, %v5366
    %v5466 = vadd.f32 %v5007, %v5366
    %v5467 = vadd.f32 %v5009, %v5366
    %v5468 = vadd.f32 %v4818, %v5367
    %v5469 = vadd.f32 %v4820, %v5367
    %v5470 = vadd.f32 %v5011, %v5367
    %v5471 = vadd.f32 %v5013, %v5367
    %v5472 = vadd.f32 %v4824, %v5368
    %v5473 = vadd.f32 %v4826, %v5368
    %v5474 = vadd.f32 %v5017, %v5368
    %v5475 = vadd.f32 %v5019, %v5368
    %v5476 = vadd.f32 %v4828, %v5369
    %v5477 = vadd.f32 %v4830, %v5369
    %v5478 = vadd.f32 %v5021, %v5369
    %v5479 = vadd.f32 %v5023, %v5369
    %v5480 = vadd.f32 %v4834, %v5370
    %v5481 = vadd.f32 %v4836, %v5370
    %v5482 = vadd.f32 %v5027, %v5370
    %v5483 = vadd.f32 %v5029, %v5370
    %v5484 = vadd.f32 %v4838, %v5371
    %v5485 = vadd.f32 %v4840, %v5371
    %v5486 = vadd.f32 %v5031, %v5371
    %v5487 = vadd.f32 %v5033, %v5371
    %v5488 = vadd.f32 %v4844, %v5372
    %v5489 = vadd.f32 %v4846, %v5372
    %v5490 = vadd.f32 %v5037, %v5372
    %v5491 = vadd.f32 %v5039, %v5372
    %v5492 = vadd.f32 %v4848, %v5373
    %v5493 = vadd.f32 %v4850, %v5373
    %v5494 = vadd.f32 %v5041, %v5373
    %v5495 = vadd.f32 %v5043, %v5373
    %v5496 = vadd.f32 %v4854, %v5374
    %v5497 = vadd.f32 %v4856, %v5374
    %v5498 = vadd.f32 %v5047, %v5374
    %v5499 = vadd.f32 %v5049, %v5374
    %v5500 = vadd.f32 %v4858, %v5375
    %v5501 = vadd.f32 %v4860, %v5375
    %v5502 = vadd.f32 %v5051, %v5375
    %v5503 = vadd.f32 %v5053, %v5375
    %v5504 = vmax.f32 %v5376, %v5377
    %v5505 = vmax.f32 %v5504, %v5378
    %v5506 = vmax.f32 %v5505, %v5379
    %5507 = vmax.xlane.f32.xlu0 %v5506
    %v5508 = vpop.xlane.xlu0 %5507
    %v5509 = vmax.f32 %v5380, %v5381
    %v5510 = vmax.f32 %v5509, %v5382
    %v5511 = vmax.f32 %v5510, %v5383
    %5512 = vmax.xlane.f32.xlu0 %v5511
    %v5513 = vpop.xlane.xlu0 %5512
    %v5514 = vmax.f32 %v5384, %v5385
    %v5515 = vmax.f32 %v5514, %v5386
    %v5516 = vmax.f32 %v5515, %v5387
    %5517 = vmax.xlane.f32.xlu0 %v5516
    %v5518 = vpop.xlane.xlu0 %5517
    %v5519 = vmax.f32 %v5388, %v5389
    %v5520 = vmax.f32 %v5519, %v5390
    %v5521 = vmax.f32 %v5520, %v5391
    %5522 = vmax.xlane.f32.xlu0 %v5521
    %v5523 = vpop.xlane.xlu0 %5522
    %v5524 = vmax.f32 %v5392, %v5393
    %v5525 = vmax.f32 %v5524, %v5394
    %v5526 = vmax.f32 %v5525, %v5395
    %5527 = vmax.xlane.f32.xlu0 %v5526
    %v5528 = vpop.xlane.xlu0 %5527
    %v5529 = vmax.f32 %v5396, %v5397
    %v5530 = vmax.f32 %v5529, %v5398
    %v5531 = vmax.f32 %v5530, %v5399
    %5532 = vmax.xlane.f32.xlu0 %v5531
    %v5533 = vpop.xlane.xlu0 %5532
    %v5534 = vmax.f32 %v5400, %v5401
    %v5535 = vmax.f32 %v5534, %v5402
    %v5536 = vmax.f32 %v5535, %v5403
    %5537 = vmax.xlane.f32.xlu0 %v5536
    %v5538 = vpop.xlane.xlu0 %5537
    %v5539 = vmax.f32 %v5404, %v5405
    %v5540 = vmax.f32 %v5539, %v5406
    %v5541 = vmax.f32 %v5540, %v5407
    %5542 = vmax.xlane.f32.xlu0 %v5541
    %v5543 = vpop.xlane.xlu0 %5542
    %v5544 = vmax.f32 %v5408, %v5409
    %v5545 = vmax.f32 %v5544, %v5410
    %v5546 = vmax.f32 %v5545, %v5411
    %5547 = vmax.xlane.f32.xlu0 %v5546
    %v5548 = vpop.xlane.xlu0 %5547
    %v5549 = vmax.f32 %v5412, %v5413
    %v5550 = vmax.f32 %v5549, %v5414
    %v5551 = vmax.f32 %v5550, %v5415
    %5552 = vmax.xlane.f32.xlu0 %v5551
    %v5553 = vpop.xlane.xlu0 %5552
    %v5554 = vmax.f32 %v5416, %v5417
    %v5555 = vmax.f32 %v5554, %v5418
    %v5556 = vmax.f32 %v5555, %v5419
    %5557 = vmax.xlane.f32.xlu0 %v5556
    %v5558 = vpop.xlane.xlu0 %5557
    %v5559 = vmax.f32 %v5420, %v5421
    %v5560 = vmax.f32 %v5559, %v5422
    %v5561 = vmax.f32 %v5560, %v5423
    %5562 = vmax.xlane.f32.xlu0 %v5561
    %v5563 = vpop.xlane.xlu0 %5562
    %v5564 = vmax.f32 %v5424, %v5425
    %v5565 = vmax.f32 %v5564, %v5426
    %v5566 = vmax.f32 %v5565, %v5427
    %5567 = vmax.xlane.f32.xlu0 %v5566
    %v5568 = vpop.xlane.xlu0 %5567
    %v5569 = vmax.f32 %v5428, %v5429
    %v5570 = vmax.f32 %v5569, %v5430
    %v5571 = vmax.f32 %v5570, %v5431
    %5572 = vmax.xlane.f32.xlu0 %v5571
    %v5573 = vpop.xlane.xlu0 %5572
    %v5574 = vmax.f32 %v5432, %v5433
    %v5575 = vmax.f32 %v5574, %v5434
    %v5576 = vmax.f32 %v5575, %v5435
    %5577 = vmax.xlane.f32.xlu0 %v5576
    %v5578 = vpop.xlane.xlu0 %5577
    %v5579 = vmax.f32 %v5436, %v5437
    %v5580 = vmax.f32 %v5579, %v5438
    %v5581 = vmax.f32 %v5580, %v5439
    %5582 = vmax.xlane.f32.xlu0 %v5581
    %v5583 = vpop.xlane.xlu0 %5582
    %v5584 = vmax.f32 %v5440, %v5441
    %v5585 = vmax.f32 %v5584, %v5442
    %v5586 = vmax.f32 %v5585, %v5443
    %5587 = vmax.xlane.f32.xlu0 %v5586
    %v5588 = vpop.xlane.xlu0 %5587
    %v5589 = vmax.f32 %v5444, %v5445
    %v5590 = vmax.f32 %v5589, %v5446
    %v5591 = vmax.f32 %v5590, %v5447
    %5592 = vmax.xlane.f32.xlu0 %v5591
    %v5593 = vpop.xlane.xlu0 %5592
    %v5594 = vmax.f32 %v5448, %v5449
    %v5595 = vmax.f32 %v5594, %v5450
    %v5596 = vmax.f32 %v5595, %v5451
    %5597 = vmax.xlane.f32.xlu0 %v5596
    %v5598 = vpop.xlane.xlu0 %5597
    %v5599 = vmax.f32 %v5452, %v5453
    %v5600 = vmax.f32 %v5599, %v5454
    %v5601 = vmax.f32 %v5600, %v5455
    %5602 = vmax.xlane.f32.xlu0 %v5601
    %v5603 = vpop.xlane.xlu0 %5602
    %v5604 = vmax.f32 %v5456, %v5457
    %v5605 = vmax.f32 %v5604, %v5458
    %v5606 = vmax.f32 %v5605, %v5459
    %5607 = vmax.xlane.f32.xlu0 %v5606
    %v5608 = vpop.xlane.xlu0 %5607
    %v5609 = vmax.f32 %v5460, %v5461
    %v5610 = vmax.f32 %v5609, %v5462
    %v5611 = vmax.f32 %v5610, %v5463
    %5612 = vmax.xlane.f32.xlu0 %v5611
    %v5613 = vpop.xlane.xlu0 %5612
    %v5614 = vmax.f32 %v5464, %v5465
    %v5615 = vmax.f32 %v5614, %v5466
    %v5616 = vmax.f32 %v5615, %v5467
    %5617 = vmax.xlane.f32.xlu0 %v5616
    %v5618 = vpop.xlane.xlu0 %5617
    %v5619 = vmax.f32 %v5468, %v5469
    %v5620 = vmax.f32 %v5619, %v5470
    %v5621 = vmax.f32 %v5620, %v5471
    %5622 = vmax.xlane.f32.xlu0 %v5621
    %v5623 = vpop.xlane.xlu0 %5622
    %v5624 = vmax.f32 %v5472, %v5473
    %v5625 = vmax.f32 %v5624, %v5474
    %v5626 = vmax.f32 %v5625, %v5475
    %5627 = vmax.xlane.f32.xlu0 %v5626
    %v5628 = vpop.xlane.xlu0 %5627
    %v5629 = vmax.f32 %v5476, %v5477
    %v5630 = vmax.f32 %v5629, %v5478
    %v5631 = vmax.f32 %v5630, %v5479
    %5632 = vmax.xlane.f32.xlu0 %v5631
    %v5633 = vpop.xlane.xlu0 %5632
    %v5634 = vmax.f32 %v5480, %v5481
    %v5635 = vmax.f32 %v5634, %v5482
    %v5636 = vmax.f32 %v5635, %v5483
    %5637 = vmax.xlane.f32.xlu0 %v5636
    %v5638 = vpop.xlane.xlu0 %5637
    %v5639 = vmax.f32 %v5484, %v5485
    %v5640 = vmax.f32 %v5639, %v5486
    %v5641 = vmax.f32 %v5640, %v5487
    %5642 = vmax.xlane.f32.xlu0 %v5641
    %v5643 = vpop.xlane.xlu0 %5642
    %v5644 = vmax.f32 %v5488, %v5489
    %v5645 = vmax.f32 %v5644, %v5490
    %v5646 = vmax.f32 %v5645, %v5491
    %5647 = vmax.xlane.f32.xlu0 %v5646
    %v5648 = vpop.xlane.xlu0 %5647
    %v5649 = vmax.f32 %v5492, %v5493
    %v5650 = vmax.f32 %v5649, %v5494
    %v5651 = vmax.f32 %v5650, %v5495
    %5652 = vmax.xlane.f32.xlu0 %v5651
    %v5653 = vpop.xlane.xlu0 %5652
    %v5654 = vmax.f32 %v5496, %v5497
    %v5655 = vmax.f32 %v5654, %v5498
    %v5656 = vmax.f32 %v5655, %v5499
    %5657 = vmax.xlane.f32.xlu0 %v5656
    %v5658 = vpop.xlane.xlu0 %5657
    %v5659 = vmax.f32 %v5500, %v5501
    %v5660 = vmax.f32 %v5659, %v5502
    %v5661 = vmax.f32 %v5660, %v5503
    %5662 = vmax.xlane.f32.xlu0 %v5661
    %v5663 = vpop.xlane.xlu0 %5662
    %v5664 = vsub.f32 %v5376, %v5508
    %v5665 = vsub.f32 %v5377, %v5508
    %v5666 = vsub.f32 %v5378, %v5508
    %v5667 = vsub.f32 %v5379, %v5508
    %v5668 = vsub.f32 %v5380, %v5513
    %v5669 = vsub.f32 %v5381, %v5513
    %v5670 = vsub.f32 %v5382, %v5513
    %v5671 = vsub.f32 %v5383, %v5513
    %v5672 = vsub.f32 %v5384, %v5518
    %v5673 = vsub.f32 %v5385, %v5518
    %v5674 = vsub.f32 %v5386, %v5518
    %v5675 = vsub.f32 %v5387, %v5518
    %v5676 = vsub.f32 %v5388, %v5523
    %v5677 = vsub.f32 %v5389, %v5523
    %v5678 = vsub.f32 %v5390, %v5523
    %v5679 = vsub.f32 %v5391, %v5523
    %v5680 = vsub.f32 %v5392, %v5528
    %v5681 = vsub.f32 %v5393, %v5528
    %v5682 = vsub.f32 %v5394, %v5528
    %v5683 = vsub.f32 %v5395, %v5528
    %v5684 = vsub.f32 %v5396, %v5533
    %v5685 = vsub.f32 %v5397, %v5533
    %v5686 = vsub.f32 %v5398, %v5533
    %v5687 = vsub.f32 %v5399, %v5533
    %v5688 = vsub.f32 %v5400, %v5538
    %v5689 = vsub.f32 %v5401, %v5538
    %v5690 = vsub.f32 %v5402, %v5538
    %v5691 = vsub.f32 %v5403, %v5538
    %v5692 = vsub.f32 %v5404, %v5543
    %v5693 = vsub.f32 %v5405, %v5543
    %v5694 = vsub.f32 %v5406, %v5543
    %v5695 = vsub.f32 %v5407, %v5543
    %v5696 = vsub.f32 %v5408, %v5548
    %v5697 = vsub.f32 %v5409, %v5548
    %v5698 = vsub.f32 %v5410, %v5548
    %v5699 = vsub.f32 %v5411, %v5548
    %v5700 = vsub.f32 %v5412, %v5553
    %v5701 = vsub.f32 %v5413, %v5553
    %v5702 = vsub.f32 %v5414, %v5553
    %v5703 = vsub.f32 %v5415, %v5553
    %v5704 = vsub.f32 %v5416, %v5558
    %v5705 = vsub.f32 %v5417, %v5558
    %v5706 = vsub.f32 %v5418, %v5558
    %v5707 = vsub.f32 %v5419, %v5558
    %v5708 = vsub.f32 %v5420, %v5563
    %v5709 = vsub.f32 %v5421, %v5563
    %v5710 = vsub.f32 %v5422, %v5563
    %v5711 = vsub.f32 %v5423, %v5563
    %v5712 = vsub.f32 %v5424, %v5568
    %v5713 = vsub.f32 %v5425, %v5568
    %v5714 = vsub.f32 %v5426, %v5568
    %v5715 = vsub.f32 %v5427, %v5568
    %v5716 = vsub.f32 %v5428, %v5573
    %v5717 = vsub.f32 %v5429, %v5573
    %v5718 = vsub.f32 %v5430, %v5573
    %v5719 = vsub.f32 %v5431, %v5573
    %v5720 = vsub.f32 %v5432, %v5578
    %v5721 = vsub.f32 %v5433, %v5578
    %v5722 = vsub.f32 %v5434, %v5578
    %v5723 = vsub.f32 %v5435, %v5578
    %v5724 = vsub.f32 %v5436, %v5583
    %v5725 = vsub.f32 %v5437, %v5583
    %v5726 = vsub.f32 %v5438, %v5583
    %v5727 = vsub.f32 %v5439, %v5583
    %v5728 = vsub.f32 %v5440, %v5588
    %v5729 = vsub.f32 %v5441, %v5588
    %v5730 = vsub.f32 %v5442, %v5588
    %v5731 = vsub.f32 %v5443, %v5588
    %v5732 = vsub.f32 %v5444, %v5593
    %v5733 = vsub.f32 %v5445, %v5593
    %v5734 = vsub.f32 %v5446, %v5593
    %v5735 = vsub.f32 %v5447, %v5593
    %v5736 = vsub.f32 %v5448, %v5598
    %v5737 = vsub.f32 %v5449, %v5598
    %v5738 = vsub.f32 %v5450, %v5598
    %v5739 = vsub.f32 %v5451, %v5598
    %v5740 = vsub.f32 %v5452, %v5603
    %v5741 = vsub.f32 %v5453, %v5603
    %v5742 = vsub.f32 %v5454, %v5603
    %v5743 = vsub.f32 %v5455, %v5603
    %v5744 = vsub.f32 %v5456, %v5608
    %v5745 = vsub.f32 %v5457, %v5608
    %v5746 = vsub.f32 %v5458, %v5608
    %v5747 = vsub.f32 %v5459, %v5608
    %v5748 = vsub.f32 %v5460, %v5613
    %v5749 = vsub.f32 %v5461, %v5613
    %v5750 = vsub.f32 %v5462, %v5613
    %v5751 = vsub.f32 %v5463, %v5613
    %v5752 = vsub.f32 %v5464, %v5618
    %v5753 = vsub.f32 %v5465, %v5618
    %v5754 = vsub.f32 %v5466, %v5618
    %v5755 = vsub.f32 %v5467, %v5618
    %v5756 = vsub.f32 %v5468, %v5623
    %v5757 = vsub.f32 %v5469, %v5623
    %v5758 = vsub.f32 %v5470, %v5623
    %v5759 = vsub.f32 %v5471, %v5623
    %v5760 = vsub.f32 %v5472, %v5628
    %v5761 = vsub.f32 %v5473, %v5628
    %v5762 = vsub.f32 %v5474, %v5628
    %v5763 = vsub.f32 %v5475, %v5628
    %v5764 = vsub.f32 %v5476, %v5633
    %v5765 = vsub.f32 %v5477, %v5633
    %v5766 = vsub.f32 %v5478, %v5633
    %v5767 = vsub.f32 %v5479, %v5633
    %v5768 = vsub.f32 %v5480, %v5638
    %v5769 = vsub.f32 %v5481, %v5638
    %v5770 = vsub.f32 %v5482, %v5638
    %v5771 = vsub.f32 %v5483, %v5638
    %v5772 = vsub.f32 %v5484, %v5643
    %v5773 = vsub.f32 %v5485, %v5643
    %v5774 = vsub.f32 %v5486, %v5643
    %v5775 = vsub.f32 %v5487, %v5643
    %v5776 = vsub.f32 %v5488, %v5648
    %v5777 = vsub.f32 %v5489, %v5648
    %v5778 = vsub.f32 %v5490, %v5648
    %v5779 = vsub.f32 %v5491, %v5648
    %v5780 = vsub.f32 %v5492, %v5653
    %v5781 = vsub.f32 %v5493, %v5653
    %v5782 = vsub.f32 %v5494, %v5653
    %v5783 = vsub.f32 %v5495, %v5653
    %v5784 = vsub.f32 %v5496, %v5658
    %v5785 = vsub.f32 %v5497, %v5658
    %v5786 = vsub.f32 %v5498, %v5658
    %v5787 = vsub.f32 %v5499, %v5658
    %v5788 = vsub.f32 %v5500, %v5663
    %v5789 = vsub.f32 %v5501, %v5663
    %v5790 = vsub.f32 %v5502, %v5663
    %v5791 = vsub.f32 %v5503, %v5663
    %v5792 = vmul.f32 %v5664, 1.442695
    %v5793 = vpow.pop %v5792
    %v5794 = vmul.f32 %v5665, 1.442695
    %v5795 = vpow.pop %v5794
    %v5796 = vmul.f32 %v5666, 1.442695
    %v5797 = vpow.pop %v5796
    %v5798 = vmul.f32 %v5667, 1.442695
    %v5799 = vpow.pop %v5798
    %v5800 = vmul.f32 %v5668, 1.442695
    %v5801 = vpow.pop %v5800
    %v5802 = vmul.f32 %v5669, 1.442695
    %v5803 = vpow.pop %v5802
    %v5804 = vmul.f32 %v5670, 1.442695
    %v5805 = vpow.pop %v5804
    %v5806 = vmul.f32 %v5671, 1.442695
    %v5807 = vpow.pop %v5806
    %v5808 = vmul.f32 %v5672, 1.442695
    %v5809 = vpow.pop %v5808
    %v5810 = vmul.f32 %v5673, 1.442695
    %v5811 = vpow.pop %v5810
    %v5812 = vmul.f32 %v5674, 1.442695
    %v5813 = vpow.pop %v5812
    %v5814 = vmul.f32 %v5675, 1.442695
    %v5815 = vpow.pop %v5814
    %v5816 = vmul.f32 %v5676, 1.442695
    %v5817 = vpow.pop %v5816
    %v5818 = vmul.f32 %v5677, 1.442695
    %v5819 = vpow.pop %v5818
    %v5820 = vmul.f32 %v5678, 1.442695
    %v5821 = vpow.pop %v5820
    %v5822 = vmul.f32 %v5679, 1.442695
    %v5823 = vpow.pop %v5822
    %v5824 = vmul.f32 %v5680, 1.442695
    %v5825 = vpow.pop %v5824
    %v5826 = vmul.f32 %v5681, 1.442695
    %v5827 = vpow.pop %v5826
    %v5828 = vmul.f32 %v5682, 1.442695
    %v5829 = vpow.pop %v5828
    %v5830 = vmul.f32 %v5683, 1.442695
    %v5831 = vpow.pop %v5830
    %v5832 = vmul.f32 %v5684, 1.442695
    %v5833 = vpow.pop %v5832
    %v5834 = vmul.f32 %v5685, 1.442695
    %v5835 = vpow.pop %v5834
    %v5836 = vmul.f32 %v5686, 1.442695
    %v5837 = vpow.pop %v5836
    %v5838 = vmul.f32 %v5687, 1.442695
    %v5839 = vpow.pop %v5838
    %v5840 = vmul.f32 %v5688, 1.442695
    %v5841 = vpow.pop %v5840
    %v5842 = vmul.f32 %v5689, 1.442695
    %v5843 = vpow.pop %v5842
    %v5844 = vmul.f32 %v5690, 1.442695
    %v5845 = vpow.pop %v5844
    %v5846 = vmul.f32 %v5691, 1.442695
    %v5847 = vpow.pop %v5846
    %v5848 = vmul.f32 %v5692, 1.442695
    %v5849 = vpow.pop %v5848
    %v5850 = vmul.f32 %v5693, 1.442695
    %v5851 = vpow.pop %v5850
    %v5852 = vmul.f32 %v5694, 1.442695
    %v5853 = vpow.pop %v5852
    %v5854 = vmul.f32 %v5695, 1.442695
    %v5855 = vpow.pop %v5854
    %v5856 = vmul.f32 %v5696, 1.442695
    %v5857 = vpow.pop %v5856
    %v5858 = vmul.f32 %v5697, 1.442695
    %v5859 = vpow.pop %v5858
    %v5860 = vmul.f32 %v5698, 1.442695
    %v5861 = vpow.pop %v5860
    %v5862 = vmul.f32 %v5699, 1.442695
    %v5863 = vpow.pop %v5862
    %v5864 = vmul.f32 %v5700, 1.442695
    %v5865 = vpow.pop %v5864
    %v5866 = vmul.f32 %v5701, 1.442695
    %v5867 = vpow.pop %v5866
    %v5868 = vmul.f32 %v5702, 1.442695
    %v5869 = vpow.pop %v5868
    %v5870 = vmul.f32 %v5703, 1.442695
    %v5871 = vpow.pop %v5870
    %v5872 = vmul.f32 %v5704, 1.442695
    %v5873 = vpow.pop %v5872
    %v5874 = vmul.f32 %v5705, 1.442695
    %v5875 = vpow.pop %v5874
    %v5876 = vmul.f32 %v5706, 1.442695
    %v5877 = vpow.pop %v5876
    %v5878 = vmul.f32 %v5707, 1.442695
    %v5879 = vpow.pop %v5878
    %v5880 = vmul.f32 %v5708, 1.442695
    %v5881 = vpow.pop %v5880
    %v5882 = vmul.f32 %v5709, 1.442695
    %v5883 = vpow.pop %v5882
    %v5884 = vmul.f32 %v5710, 1.442695
    %v5885 = vpow.pop %v5884
    %v5886 = vmul.f32 %v5711, 1.442695
    %v5887 = vpow.pop %v5886
    %v5888 = vmul.f32 %v5712, 1.442695
    %v5889 = vpow.pop %v5888
    %v5890 = vmul.f32 %v5713, 1.442695
    %v5891 = vpow.pop %v5890
    %v5892 = vmul.f32 %v5714, 1.442695
    %v5893 = vpow.pop %v5892
    %v5894 = vmul.f32 %v5715, 1.442695
    %v5895 = vpow.pop %v5894
    %v5896 = vmul.f32 %v5716, 1.442695
    %v5897 = vpow.pop %v5896
    %v5898 = vmul.f32 %v5717, 1.442695
    %v5899 = vpow.pop %v5898
    %v5900 = vmul.f32 %v5718, 1.442695
    %v5901 = vpow.pop %v5900
    %v5902 = vmul.f32 %v5719, 1.442695
    %v5903 = vpow.pop %v5902
    %v5904 = vmul.f32 %v5720, 1.442695
    %v5905 = vpow.pop %v5904
    %v5906 = vmul.f32 %v5721, 1.442695
    %v5907 = vpow.pop %v5906
    %v5908 = vmul.f32 %v5722, 1.442695
    %v5909 = vpow.pop %v5908
    %v5910 = vmul.f32 %v5723, 1.442695
    %v5911 = vpow.pop %v5910
    %v5912 = vmul.f32 %v5724, 1.442695
    %v5913 = vpow.pop %v5912
    %v5914 = vmul.f32 %v5725, 1.442695
    %v5915 = vpow.pop %v5914
    %v5916 = vmul.f32 %v5726, 1.442695
    %v5917 = vpow.pop %v5916
    %v5918 = vmul.f32 %v5727, 1.442695
    %v5919 = vpow.pop %v5918
    %v5920 = vmul.f32 %v5728, 1.442695
    %v5921 = vpow.pop %v5920
    %v5922 = vmul.f32 %v5729, 1.442695
    %v5923 = vpow.pop %v5922
    %v5924 = vmul.f32 %v5730, 1.442695
    %v5925 = vpow.pop %v5924
    %v5926 = vmul.f32 %v5731, 1.442695
    %v5927 = vpow.pop %v5926
    %v5928 = vmul.f32 %v5732, 1.442695
    %v5929 = vpow.pop %v5928
    %v5930 = vmul.f32 %v5733, 1.442695
    %v5931 = vpow.pop %v5930
    %v5932 = vmul.f32 %v5734, 1.442695
    %v5933 = vpow.pop %v5932
    %v5934 = vmul.f32 %v5735, 1.442695
    %v5935 = vpow.pop %v5934
    %v5936 = vmul.f32 %v5736, 1.442695
    %v5937 = vpow.pop %v5936
    %v5938 = vmul.f32 %v5737, 1.442695
    %v5939 = vpow.pop %v5938
    %v5940 = vmul.f32 %v5738, 1.442695
    %v5941 = vpow.pop %v5940
    %v5942 = vmul.f32 %v5739, 1.442695
    %v5943 = vpow.pop %v5942
    %v5944 = vmul.f32 %v5740, 1.442695
    %v5945 = vpow.pop %v5944
    %v5946 = vmul.f32 %v5741, 1.442695
    %v5947 = vpow.pop %v5946
    %v5948 = vmul.f32 %v5742, 1.442695
    %v5949 = vpow.pop %v5948
    %v5950 = vmul.f32 %v5743, 1.442695
    %v5951 = vpow.pop %v5950
    %v5952 = vmul.f32 %v5744, 1.442695
    %v5953 = vpow.pop %v5952
    %v5954 = vmul.f32 %v5745, 1.442695
    %v5955 = vpow.pop %v5954
    %v5956 = vmul.f32 %v5746, 1.442695
    %v5957 = vpow.pop %v5956
    %v5958 = vmul.f32 %v5747, 1.442695
    %v5959 = vpow.pop %v5958
    %v5960 = vmul.f32 %v5748, 1.442695
    %v5961 = vpow.pop %v5960
    %v5962 = vmul.f32 %v5749, 1.442695
    %v5963 = vpow.pop %v5962
    %v5964 = vmul.f32 %v5750, 1.442695
    %v5965 = vpow.pop %v5964
    %v5966 = vmul.f32 %v5751, 1.442695
    %v5967 = vpow.pop %v5966
    %v5968 = vmul.f32 %v5752, 1.442695
    %v5969 = vpow.pop %v5968
    %v5970 = vmul.f32 %v5753, 1.442695
    %v5971 = vpow.pop %v5970
    %v5972 = vmul.f32 %v5754, 1.442695
    %v5973 = vpow.pop %v5972
    %v5974 = vmul.f32 %v5755, 1.442695
    %v5975 = vpow.pop %v5974
    %v5976 = vmul.f32 %v5756, 1.442695
    %v5977 = vpow.pop %v5976
    %v5978 = vmul.f32 %v5757, 1.442695
    %v5979 = vpow.pop %v5978
    %v5980 = vmul.f32 %v5758, 1.442695
    %v5981 = vpow.pop %v5980
    %v5982 = vmul.f32 %v5759, 1.442695
    %v5983 = vpow.pop %v5982
    %v5984 = vmul.f32 %v5760, 1.442695
    %v5985 = vpow.pop %v5984
    %v5986 = vmul.f32 %v5761, 1.442695
    %v5987 = vpow.pop %v5986
    %v5988 = vmul.f32 %v5762, 1.442695
    %v5989 = vpow.pop %v5988
    %v5990 = vmul.f32 %v5763, 1.442695
    %v5991 = vpow.pop %v5990
    %v5992 = vmul.f32 %v5764, 1.442695
    %v5993 = vpow.pop %v5992
    %v5994 = vmul.f32 %v5765, 1.442695
    %v5995 = vpow.pop %v5994
    %v5996 = vmul.f32 %v5766, 1.442695
    %v5997 = vpow.pop %v5996
    %v5998 = vmul.f32 %v5767, 1.442695
    %v5999 = vpow.pop %v5998
    %v6000 = vmul.f32 %v5768, 1.442695
    %v6001 = vpow.pop %v6000
    %v6002 = vmul.f32 %v5769, 1.442695
    %v6003 = vpow.pop %v6002
    %v6004 = vmul.f32 %v5770, 1.442695
    %v6005 = vpow.pop %v6004
    %v6006 = vmul.f32 %v5771, 1.442695
    %v6007 = vpow.pop %v6006
    %v6008 = vmul.f32 %v5772, 1.442695
    %v6009 = vpow.pop %v6008
    %v6010 = vmul.f32 %v5773, 1.442695
    %v6011 = vpow.pop %v6010
    %v6012 = vmul.f32 %v5774, 1.442695
    %v6013 = vpow.pop %v6012
    %v6014 = vmul.f32 %v5775, 1.442695
    %v6015 = vpow.pop %v6014
    %v6016 = vmul.f32 %v5776, 1.442695
    %v6017 = vpow.pop %v6016
    %v6018 = vmul.f32 %v5777, 1.442695
    %v6019 = vpow.pop %v6018
    %v6020 = vmul.f32 %v5778, 1.442695
    %v6021 = vpow.pop %v6020
    %v6022 = vmul.f32 %v5779, 1.442695
    %v6023 = vpow.pop %v6022
    %v6024 = vmul.f32 %v5780, 1.442695
    %v6025 = vpow.pop %v6024
    %v6026 = vmul.f32 %v5781, 1.442695
    %v6027 = vpow.pop %v6026
    %v6028 = vmul.f32 %v5782, 1.442695
    %v6029 = vpow.pop %v6028
    %v6030 = vmul.f32 %v5783, 1.442695
    %v6031 = vpow.pop %v6030
    %v6032 = vmul.f32 %v5784, 1.442695
    %v6033 = vpow.pop %v6032
    %v6034 = vmul.f32 %v5785, 1.442695
    %v6035 = vpow.pop %v6034
    %v6036 = vmul.f32 %v5786, 1.442695
    %v6037 = vpow.pop %v6036
    %v6038 = vmul.f32 %v5787, 1.442695
    %v6039 = vpow.pop %v6038
    %v6040 = vmul.f32 %v5788, 1.442695
    %v6041 = vpow.pop %v6040
    %v6042 = vmul.f32 %v5789, 1.442695
    %v6043 = vpow.pop %v6042
    %v6044 = vmul.f32 %v5790, 1.442695
    %v6045 = vpow.pop %v6044
    %v6046 = vmul.f32 %v5791, 1.442695
    %v6047 = vpow.pop %v6046
    %v6048 = vld [vmem:[#allocation7] sm:$0xff]
    %v6049 = vld [vmem:[#allocation7 + $0x8] sm:$0xff]
    %v6050 = vld [vmem:[#allocation7 + $0x10] sm:$0xff]
    %v6051 = vld [vmem:[#allocation7 + $0x18] sm:$0xff]
    %v6052 = vld [vmem:[#allocation7 + $0x20] sm:$0xff]
    %v6053 = vld [vmem:[#allocation7 + $0x28] sm:$0xff]
    %v6054 = vld [vmem:[#allocation7 + $0x30] sm:$0xff]
    %v6055 = vld [vmem:[#allocation7 + $0x38] sm:$0xff]
    %v6056 = vld [vmem:[#allocation7 + $0x40] sm:$0xff]
    %v6057 = vld [vmem:[#allocation7 + $0x48] sm:$0xff]
    %v6058 = vld [vmem:[#allocation7 + $0x50] sm:$0xff]
    %v6059 = vld [vmem:[#allocation7 + $0x58] sm:$0xff]
    %v6060 = vld [vmem:[#allocation7 + $0x60] sm:$0xff]
    %v6061 = vld [vmem:[#allocation7 + $0x68] sm:$0xff]
    %v6062 = vld [vmem:[#allocation7 + $0x70] sm:$0xff]
    %v6063 = vld [vmem:[#allocation7 + $0x78] sm:$0xff]
    %v6064 = vld [vmem:[#allocation7 + $0x80] sm:$0xff]
    %v6065 = vld [vmem:[#allocation7 + $0x88] sm:$0xff]
    %v6066 = vld [vmem:[#allocation7 + $0x90] sm:$0xff]
    %v6067 = vld [vmem:[#allocation7 + $0x98] sm:$0xff]
    %v6068 = vld [vmem:[#allocation7 + $0xa0] sm:$0xff]
    %v6069 = vld [vmem:[#allocation7 + $0xa8] sm:$0xff]
    %v6070 = vld [vmem:[#allocation7 + $0xb0] sm:$0xff]
    %v6071 = vld [vmem:[#allocation7 + $0xb8] sm:$0xff]
    %v6072 = vld [vmem:[#allocation7 + $0xc0] sm:$0xff]
    %v6073 = vld [vmem:[#allocation7 + $0xc8] sm:$0xff]
    %v6074 = vld [vmem:[#allocation7 + $0xd0] sm:$0xff]
    %v6075 = vld [vmem:[#allocation7 + $0xd8] sm:$0xff]
    %v6076 = vld [vmem:[#allocation7 + $0xe0] sm:$0xff]
    %v6077 = vld [vmem:[#allocation7 + $0xe8] sm:$0xff]
    %v6078 = vld [vmem:[#allocation7 + $0xf0] sm:$0xff]
    %v6079 = vld [vmem:[#allocation7 + $0xf8] sm:$0xff]
    %v6080 = vld [vmem:[#allocation7 + $0x100] sm:$0xff]
    %v6081 = vld [vmem:[#allocation7 + $0x108] sm:$0xff]
    %v6082 = vld [vmem:[#allocation7 + $0x110] sm:$0xff]
    %v6083 = vld [vmem:[#allocation7 + $0x118] sm:$0xff]
    %v6084 = vld [vmem:[#allocation7 + $0x120] sm:$0xff]
    %v6085 = vld [vmem:[#allocation7 + $0x128] sm:$0xff]
    %v6086 = vld [vmem:[#allocation7 + $0x130] sm:$0xff]
    %v6087 = vld [vmem:[#allocation7 + $0x138] sm:$0xff]
    %v6088 = vld [vmem:[#allocation7 + $0x140] sm:$0xff]
    %v6089 = vld [vmem:[#allocation7 + $0x148] sm:$0xff]
    %v6090 = vld [vmem:[#allocation7 + $0x150] sm:$0xff]
    %v6091 = vld [vmem:[#allocation7 + $0x158] sm:$0xff]
    %v6092 = vld [vmem:[#allocation7 + $0x160] sm:$0xff]
    %v6093 = vld [vmem:[#allocation7 + $0x168] sm:$0xff]
    %v6094 = vld [vmem:[#allocation7 + $0x170] sm:$0xff]
    %v6095 = vld [vmem:[#allocation7 + $0x178] sm:$0xff]
    %v6096 = vld [vmem:[#allocation7 + $0x180] sm:$0xff]
    %v6097 = vld [vmem:[#allocation7 + $0x188] sm:$0xff]
    %v6098 = vld [vmem:[#allocation7 + $0x190] sm:$0xff]
    %v6099 = vld [vmem:[#allocation7 + $0x198] sm:$0xff]
    %v6100 = vld [vmem:[#allocation7 + $0x1a0] sm:$0xff]
    %v6101 = vld [vmem:[#allocation7 + $0x1a8] sm:$0xff]
    %v6102 = vld [vmem:[#allocation7 + $0x1b0] sm:$0xff]
    %v6103 = vld [vmem:[#allocation7 + $0x1b8] sm:$0xff]
    %v6104 = vld [vmem:[#allocation7 + $0x1c0] sm:$0xff]
    %v6105 = vld [vmem:[#allocation7 + $0x1c8] sm:$0xff]
    %v6106 = vld [vmem:[#allocation7 + $0x1d0] sm:$0xff]
    %v6107 = vld [vmem:[#allocation7 + $0x1d8] sm:$0xff]
    %v6108 = vld [vmem:[#allocation7 + $0x1e0] sm:$0xff]
    %v6109 = vld [vmem:[#allocation7 + $0x1e8] sm:$0xff]
    %v6110 = vld [vmem:[#allocation7 + $0x1f0] sm:$0xff]
    %v6111 = vld [vmem:[#allocation7 + $0x1f8] sm:$0xff]
    %v6112 = vld [vmem:[#allocation7 + $0x200] sm:$0xff]
    %v6113 = vld [vmem:[#allocation7 + $0x208] sm:$0xff]
    %v6114 = vld [vmem:[#allocation7 + $0x210] sm:$0xff]
    %v6115 = vld [vmem:[#allocation7 + $0x218] sm:$0xff]
    %v6116 = vld [vmem:[#allocation7 + $0x220] sm:$0xff]
    %v6117 = vld [vmem:[#allocation7 + $0x228] sm:$0xff]
    %v6118 = vld [vmem:[#allocation7 + $0x230] sm:$0xff]
    %v6119 = vld [vmem:[#allocation7 + $0x238] sm:$0xff]
    %v6120 = vld [vmem:[#allocation7 + $0x240] sm:$0xff]
    %v6121 = vld [vmem:[#allocation7 + $0x248] sm:$0xff]
    %v6122 = vld [vmem:[#allocation7 + $0x250] sm:$0xff]
    %v6123 = vld [vmem:[#allocation7 + $0x258] sm:$0xff]
    %v6124 = vld [vmem:[#allocation7 + $0x260] sm:$0xff]
    %v6125 = vld [vmem:[#allocation7 + $0x268] sm:$0xff]
    %v6126 = vld [vmem:[#allocation7 + $0x270] sm:$0xff]
    %v6127 = vld [vmem:[#allocation7 + $0x278] sm:$0xff]
    %v6128 = vld [vmem:[#allocation7 + $0x280] sm:$0xff]
    %v6129 = vld [vmem:[#allocation7 + $0x288] sm:$0xff]
    %v6130 = vld [vmem:[#allocation7 + $0x290] sm:$0xff]
    %v6131 = vld [vmem:[#allocation7 + $0x298] sm:$0xff]
    %v6132 = vld [vmem:[#allocation7 + $0x2a0] sm:$0xff]
    %v6133 = vld [vmem:[#allocation7 + $0x2a8] sm:$0xff]
    %v6134 = vld [vmem:[#allocation7 + $0x2b0] sm:$0xff]
    %v6135 = vld [vmem:[#allocation7 + $0x2b8] sm:$0xff]
    %v6136 = vld [vmem:[#allocation7 + $0x2c0] sm:$0xff]
    %v6137 = vld [vmem:[#allocation7 + $0x2c8] sm:$0xff]
    %v6138 = vld [vmem:[#allocation7 + $0x2d0] sm:$0xff]
    %v6139 = vld [vmem:[#allocation7 + $0x2d8] sm:$0xff]
    %v6140 = vld [vmem:[#allocation7 + $0x2e0] sm:$0xff]
    %v6141 = vld [vmem:[#allocation7 + $0x2e8] sm:$0xff]
    %v6142 = vld [vmem:[#allocation7 + $0x2f0] sm:$0xff]
    %v6143 = vld [vmem:[#allocation7 + $0x2f8] sm:$0xff]
    %v6144 = vld [vmem:[#allocation7 + $0x300] sm:$0xff]
    %v6145 = vld [vmem:[#allocation7 + $0x308] sm:$0xff]
    %v6146 = vld [vmem:[#allocation7 + $0x310] sm:$0xff]
    %v6147 = vld [vmem:[#allocation7 + $0x318] sm:$0xff]
    %v6148 = vld [vmem:[#allocation7 + $0x320] sm:$0xff]
    %v6149 = vld [vmem:[#allocation7 + $0x328] sm:$0xff]
    %v6150 = vld [vmem:[#allocation7 + $0x330] sm:$0xff]
    %v6151 = vld [vmem:[#allocation7 + $0x338] sm:$0xff]
    %v6152 = vld [vmem:[#allocation7 + $0x340] sm:$0xff]
    %v6153 = vld [vmem:[#allocation7 + $0x348] sm:$0xff]
    %v6154 = vld [vmem:[#allocation7 + $0x350] sm:$0xff]
    %v6155 = vld [vmem:[#allocation7 + $0x358] sm:$0xff]
    %v6156 = vld [vmem:[#allocation7 + $0x360] sm:$0xff]
    %v6157 = vld [vmem:[#allocation7 + $0x368] sm:$0xff]
    %v6158 = vld [vmem:[#allocation7 + $0x370] sm:$0xff]
    %v6159 = vld [vmem:[#allocation7 + $0x378] sm:$0xff]
    %v6160 = vld [vmem:[#allocation7 + $0x380] sm:$0xff]
    %v6161 = vld [vmem:[#allocation7 + $0x388] sm:$0xff]
    %v6162 = vld [vmem:[#allocation7 + $0x390] sm:$0xff]
    %v6163 = vld [vmem:[#allocation7 + $0x398] sm:$0xff]
    %v6164 = vld [vmem:[#allocation7 + $0x3a0] sm:$0xff]
    %v6165 = vld [vmem:[#allocation7 + $0x3a8] sm:$0xff]
    %v6166 = vld [vmem:[#allocation7 + $0x3b0] sm:$0xff]
    %v6167 = vld [vmem:[#allocation7 + $0x3b8] sm:$0xff]
    %v6168 = vld [vmem:[#allocation7 + $0x3c0] sm:$0xff]
    %v6169 = vld [vmem:[#allocation7 + $0x3c8] sm:$0xff]
    %v6170 = vld [vmem:[#allocation7 + $0x3d0] sm:$0xff]
    %v6171 = vld [vmem:[#allocation7 + $0x3d8] sm:$0xff]
    %v6172 = vld [vmem:[#allocation7 + $0x3e0] sm:$0xff]
    %v6173 = vld [vmem:[#allocation7 + $0x3e8] sm:$0xff]
    %v6174 = vld [vmem:[#allocation7 + $0x3f0] sm:$0xff]
    %v6175 = vld [vmem:[#allocation7 + $0x3f8] sm:$0xff]
    %6176 = vmatprep.subr.mxu0 %v6049
    %6177 = vmatpush1.msra.mxu0 %v6048
    %6178 = vmatprep.subr.mxu0 %v6051
    %6179 = vmatpush1.msra.mxu0 %v6050
    %6180 = vmatprep.subr.mxu0 %v6053
    %6181 = vmatpush1.msra.mxu0 %v6052
    %6182 = vmatprep.subr.mxu0 %v6055
    %6183 = vmatpush1.msra.mxu0 %v6054
    %6184 = vmatprep.subr.mxu0 %v6057
    %6185 = vmatpush1.msra.mxu0 %v6056
    %6186 = vmatprep.subr.mxu0 %v6059
    %6187 = vmatpush1.msra.mxu0 %v6058
    %6188 = vmatprep.subr.mxu0 %v6061
    %6189 = vmatpush1.msra.mxu0 %v6060
    %6190 = vmatprep.subr.mxu0 %v6063
    %6191 = vmatpush1.msra.mxu0 %v6062
    %6192 = vmatprep.subr.mxu0 %v6065
    %6193 = vmatpush1.msra.mxu0 %v6064
    %6194 = vmatprep.subr.mxu0 %v6067
    %6195 = vmatpush1.msra.mxu0 %v6066
    %6196 = vmatprep.subr.mxu0 %v6069
    %6197 = vmatpush1.msra.mxu0 %v6068
    %6198 = vmatprep.subr.mxu0 %v6071
    %6199 = vmatpush1.msra.mxu0 %v6070
    %6200 = vmatprep.subr.mxu0 %v6073
    %6201 = vmatpush1.msra.mxu0 %v6072
    %6202 = vmatprep.subr.mxu0 %v6075
    %6203 = vmatpush1.msra.mxu0 %v6074
    %6204 = vmatprep.subr.mxu0 %v6077
    %6205 = vmatpush1.msra.mxu0 %v6076
    %6206 = vmatprep.subr.mxu0 %v6079
    %6207 = vmatpush1.msra.mxu0 %v6078
    %6208 = vmatprep.subr.mxu0 %v6081
    %6209 = vmatpush1.msra.mxu0 %v6080
    %6210 = vmatprep.subr.mxu0 %v6083
    %6211 = vmatpush1.msra.mxu0 %v6082
    %6212 = vmatprep.subr.mxu0 %v6085
    %6213 = vmatpush1.msra.mxu0 %v6084
    %6214 = vmatprep.subr.mxu0 %v6087
    %6215 = vmatpush1.msra.mxu0 %v6086
    %6216 = vmatprep.subr.mxu0 %v6089
    %6217 = vmatpush1.msra.mxu0 %v6088
    %6218 = vmatprep.subr.mxu0 %v6091
    %6219 = vmatpush1.msra.mxu0 %v6090
    %6220 = vmatprep.subr.mxu0 %v6093
    %6221 = vmatpush1.msra.mxu0 %v6092
    %6222 = vmatprep.subr.mxu0 %v6095
    %6223 = vmatpush1.msra.mxu0 %v6094
    %6224 = vmatprep.subr.mxu0 %v6097
    %6225 = vmatpush1.msra.mxu0 %v6096
    %6226 = vmatprep.subr.mxu0 %v6099
    %6227 = vmatpush1.msra.mxu0 %v6098
    %6228 = vmatprep.subr.mxu0 %v6101
    %6229 = vmatpush1.msra.mxu0 %v6100
    %6230 = vmatprep.subr.mxu0 %v6103
    %6231 = vmatpush1.msra.mxu0 %v6102
    %6232 = vmatprep.subr.mxu0 %v6105
    %6233 = vmatpush1.msra.mxu0 %v6104
    %6234 = vmatprep.subr.mxu0 %v6107
    %6235 = vmatpush1.msra.mxu0 %v6106
    %6236 = vmatprep.subr.mxu0 %v6109
    %6237 = vmatpush1.msra.mxu0 %v6108
    %6238 = vmatprep.subr.mxu0 %v6111
    %6239 = vmatpush1.msra.mxu0 %v6110
    %6240 = vmatprep.mubr.f32.mxu0 %v5795
    %6241 = vmatmul.mubr.f32.gmra.mrb[0].mxu0 %v5793
    %v6242 = vpop.f32.mrb[0].mxu0
    %v6243 = vadd.f32 0.0, %v6242
    %v6244 = vpop.f32.mrb[0].mxu0
    %v6245 = vadd.f32 0.0, %v6244
    %6246 = vmatprep.mubr.f32.mxu0 %v5803
    %6247 = vmatmul.mubr.f32.gmra.mrb[0].mxu0 %v5801
    %v6248 = vpop.f32.mrb[0].mxu0
    %v6249 = vadd.f32 0.0, %v6248
    %v6250 = vpop.f32.mrb[0].mxu0
    %v6251 = vadd.f32 0.0, %v6250
    %6252 = vmatprep.mubr.f32.mxu0 %v5811
    %6253 = vmatmul.mubr.f32.gmra.mrb[0].mxu0 %v5809
    %v6254 = vpop.f32.mrb[0].mxu0
    %v6255 = vadd.f32 0.0, %v6254
    %v6256 = vpop.f32.mrb[0].mxu0
    %v6257 = vadd.f32 0.0, %v6256
    %6258 = vmatprep.mubr.f32.mxu0 %v5819
    %6259 = vmatmul.mubr.f32.gmra.mrb[0].mxu0 %v5817
    %v6260 = vpop.f32.mrb[0].mxu0
    %v6261 = vadd.f32 0.0, %v6260
    %v6262 = vpop.f32.mrb[0].mxu0
    %v6263 = vadd.f32 0.0, %v6262
    %6264 = vmatprep.mubr.f32.mxu0 %v5827
    %6265 = vmatmul.mubr.f32.gmra.mrb[0].mxu0 %v5825
    %v6266 = vpop.f32.mrb[0].mxu0
    %v6267 = vadd.f32 0.0, %v6266
    %v6268 = vpop.f32.mrb[0].mxu0
    %v6269 = vadd.f32 0.0, %v6268
    %6270 = vmatprep.mubr.f32.mxu0 %v5835
    %6271 = vmatmul.mubr.f32.gmra.mrb[0].mxu0 %v5833
    %v6272 = vpop.f32.mrb[0].mxu0
    %v6273 = vadd.f32 0.0, %v6272
    %v6274 = vpop.f32.mrb[0].mxu0
    %v6275 = vadd.f32 0.0, %v6274
    %6276 = vmatprep.mubr.f32.mxu0 %v5843
    %6277 = vmatmul.mubr.f32.gmra.mrb[0].mxu0 %v5841
    %v6278 = vpop.f32.mrb[0].mxu0
    %v6279 = vadd.f32 0.0, %v6278
    %v6280 = vpop.f32.mrb[0].mxu0
    %v6281 = vadd.f32 0.0, %v6280
    %6282 = vmatprep.mubr.f32.mxu0 %v5851
    %6283 = vmatmul.mubr.f32.gmra.mrb[0].mxu0 %v5849
    %v6284 = vpop.f32.mrb[0].mxu0
    %v6285 = vadd.f32 0.0, %v6284
    %v6286 = vpop.f32.mrb[0].mxu0
    %v6287 = vadd.f32 0.0, %v6286
    %6288 = vmatprep.mubr.f32.mxu0 %v5859
    %6289 = vmatmul.mubr.f32.gmra.mrb[0].mxu0 %v5857
    %v6290 = vpop.f32.mrb[0].mxu0
    %v6291 = vadd.f32 0.0, %v6290
    %v6292 = vpop.f32.mrb[0].mxu0
    %v6293 = vadd.f32 0.0, %v6292
    %6294 = vmatprep.mubr.f32.mxu0 %v5867
    %6295 = vmatmul.mubr.f32.gmra.mrb[0].mxu0 %v5865
    %v6296 = vpop.f32.mrb[0].mxu0
    %v6297 = vadd.f32 0.0, %v6296
    %v6298 = vpop.f32.mrb[0].mxu0
    %v6299 = vadd.f32 0.0, %v6298
    %6300 = vmatprep.mubr.f32.mxu0 %v5875
    %6301 = vmatmul.mubr.f32.gmra.mrb[0].mxu0 %v5873
    %v6302 = vpop.f32.mrb[0].mxu0
    %v6303 = vadd.f32 0.0, %v6302
    %v6304 = vpop.f32.mrb[0].mxu0
    %v6305 = vadd.f32 0.0, %v6304
    %6306 = vmatprep.mubr.f32.mxu0 %v5883
    %6307 = vmatmul.mubr.f32.gmra.mrb[0].mxu0 %v5881
    %v6308 = vpop.f32.mrb[0].mxu0
    %v6309 = vadd.f32 0.0, %v6308
    %v6310 = vpop.f32.mrb[0].mxu0
    %v6311 = vadd.f32 0.0, %v6310
    %6312 = vmatprep.mubr.f32.mxu0 %v5891
    %6313 = vmatmul.mubr.f32.gmra.mrb[0].mxu0 %v5889
    %v6314 = vpop.f32.mrb[0].mxu0
    %v6315 = vadd.f32 0.0, %v6314
    %v6316 = vpop.f32.mrb[0].mxu0
    %v6317 = vadd.f32 0.0, %v6316
    %6318 = vmatprep.mubr.f32.mxu0 %v5899
    %6319 = vmatmul.mubr.f32.gmra.mrb[0].mxu0 %v5897
    %v6320 = vpop.f32.mrb[0].mxu0
    %v6321 = vadd.f32 0.0, %v6320
    %v6322 = vpop.f32.mrb[0].mxu0
    %v6323 = vadd.f32 0.0, %v6322
    %6324 = vmatprep.mubr.f32.mxu0 %v5907
    %6325 = vmatmul.mubr.f32.gmra.mrb[0].mxu0 %v5905
    %v6326 = vpop.f32.mrb[0].mxu0
    %v6327 = vadd.f32 0.0, %v6326
    %v6328 = vpop.f32.mrb[0].mxu0
    %v6329 = vadd.f32 0.0, %v6328
    %6330 = vmatprep.mubr.f32.mxu0 %v5915
    %6331 = vmatmul.mubr.f32.gmra.mrb[0].mxu0 %v5913
    %v6332 = vpop.f32.mrb[0].mxu0
    %v6333 = vadd.f32 0.0, %v6332
    %v6334 = vpop.f32.mrb[0].mxu0
    %v6335 = vadd.f32 0.0, %v6334
    %6336 = vmatprep.mubr.f32.mxu0 %v5923
    %6337 = vmatmul.mubr.f32.gmra.mrb[0].mxu0 %v5921
    %v6338 = vpop.f32.mrb[0].mxu0
    %v6339 = vadd.f32 0.0, %v6338
    %v6340 = vpop.f32.mrb[0].mxu0
    %v6341 = vadd.f32 0.0, %v6340
    %6342 = vmatprep.mubr.f32.mxu0 %v5931
    %6343 = vmatmul.mubr.f32.gmra.mrb[0].mxu0 %v5929
    %v6344 = vpop.f32.mrb[0].mxu0
    %v6345 = vadd.f32 0.0, %v6344
    %v6346 = vpop.f32.mrb[0].mxu0
    %v6347 = vadd.f32 0.0, %v6346
    %6348 = vmatprep.mubr.f32.mxu0 %v5939
    %6349 = vmatmul.mubr.f32.gmra.mrb[0].mxu0 %v5937
    %v6350 = vpop.f32.mrb[0].mxu0
    %v6351 = vadd.f32 0.0, %v6350
    %v6352 = vpop.f32.mrb[0].mxu0
    %v6353 = vadd.f32 0.0, %v6352
    %6354 = vmatprep.mubr.f32.mxu0 %v5947
    %6355 = vmatmul.mubr.f32.gmra.mrb[0].mxu0 %v5945
    %v6356 = vpop.f32.mrb[0].mxu0
    %v6357 = vadd.f32 0.0, %v6356
    %v6358 = vpop.f32.mrb[0].mxu0
    %v6359 = vadd.f32 0.0, %v6358
    %6360 = vmatprep.mubr.f32.mxu0 %v5955
    %6361 = vmatmul.mubr.f32.gmra.mrb[0].mxu0 %v5953
    %v6362 = vpop.f32.mrb[0].mxu0
    %v6363 = vadd.f32 0.0, %v6362
    %v6364 = vpop.f32.mrb[0].mxu0
    %v6365 = vadd.f32 0.0, %v6364
    %6366 = vmatprep.mubr.f32.mxu0 %v5963
    %6367 = vmatmul.mubr.f32.gmra.mrb[0].mxu0 %v5961
    %v6368 = vpop.f32.mrb[0].mxu0
    %v6369 = vadd.f32 0.0, %v6368
    %v6370 = vpop.f32.mrb[0].mxu0
    %v6371 = vadd.f32 0.0, %v6370
    %6372 = vmatprep.mubr.f32.mxu0 %v5971
    %6373 = vmatmul.mubr.f32.gmra.mrb[0].mxu0 %v5969
    %v6374 = vpop.f32.mrb[0].mxu0
    %v6375 = vadd.f32 0.0, %v6374
    %v6376 = vpop.f32.mrb[0].mxu0
    %v6377 = vadd.f32 0.0, %v6376
    %6378 = vmatprep.mubr.f32.mxu0 %v5979
    %6379 = vmatmul.mubr.f32.gmra.mrb[0].mxu0 %v5977
    %v6380 = vpop.f32.mrb[0].mxu0
    %v6381 = vadd.f32 0.0, %v6380
    %v6382 = vpop.f32.mrb[0].mxu0
    %v6383 = vadd.f32 0.0, %v6382
    %6384 = vmatprep.mubr.f32.mxu0 %v5987
    %6385 = vmatmul.mubr.f32.gmra.mrb[0].mxu0 %v5985
    %v6386 = vpop.f32.mrb[0].mxu0
    %v6387 = vadd.f32 0.0, %v6386
    %v6388 = vpop.f32.mrb[0].mxu0
    %v6389 = vadd.f32 0.0, %v6388
    %6390 = vmatprep.mubr.f32.mxu0 %v5995
    %6391 = vmatmul.mubr.f32.gmra.mrb[0].mxu0 %v5993
    %v6392 = vpop.f32.mrb[0].mxu0
    %v6393 = vadd.f32 0.0, %v6392
    %v6394 = vpop.f32.mrb[0].mxu0
    %v6395 = vadd.f32 0.0, %v6394
    %6396 = vmatprep.mubr.f32.mxu0 %v6003
    %6397 = vmatmul.mubr.f32.gmra.mrb[0].mxu0 %v6001
    %v6398 = vpop.f32.mrb[0].mxu0
    %v6399 = vadd.f32 0.0, %v6398
    %v6400 = vpop.f32.mrb[0].mxu0
    %v6401 = vadd.f32 0.0, %v6400
    %6402 = vmatprep.mubr.f32.mxu0 %v6011
    %6403 = vmatmul.mubr.f32.gmra.mrb[0].mxu0 %v6009
    %v6404 = vpop.f32.mrb[0].mxu0
    %v6405 = vadd.f32 0.0, %v6404
    %v6406 = vpop.f32.mrb[0].mxu0
    %v6407 = vadd.f32 0.0, %v6406
    %6408 = vmatprep.mubr.f32.mxu0 %v6019
    %6409 = vmatmul.mubr.f32.gmra.mrb[0].mxu0 %v6017
    %v6410 = vpop.f32.mrb[0].mxu0
    %v6411 = vadd.f32 0.0, %v6410
    %v6412 = vpop.f32.mrb[0].mxu0
    %v6413 = vadd.f32 0.0, %v6412
    %6414 = vmatprep.mubr.f32.mxu0 %v6027
    %6415 = vmatmul.mubr.f32.gmra.mrb[0].mxu0 %v6025
    %v6416 = vpop.f32.mrb[0].mxu0
    %v6417 = vadd.f32 0.0, %v6416
    %v6418 = vpop.f32.mrb[0].mxu0
    %v6419 = vadd.f32 0.0, %v6418
    %6420 = vmatprep.mubr.f32.mxu0 %v6035
    %6421 = vmatmul.mubr.f32.gmra.mrb[0].mxu0 %v6033
    %v6422 = vpop.f32.mrb[0].mxu0
    %v6423 = vadd.f32 0.0, %v6422
    %v6424 = vpop.f32.mrb[0].mxu0
    %v6425 = vadd.f32 0.0, %v6424
    %6426 = vmatprep.mubr.f32.mxu0 %v6043
    %6427 = vmatmul.mubr.f32.gmra.mrb[0].mxu0 %v6041
    %v6428 = vpop.f32.mrb[0].mxu0
    %v6429 = vadd.f32 0.0, %v6428
    %v6430 = vpop.f32.mrb[0].mxu0
    %v6431 = vadd.f32 0.0, %v6430
    %6432 = vdwg.mxu0
    %6433 = vmatprep.subr.mxu0 %v6113
    %6434 = vmatpush1.msra.mxu0 %v6112
    %6435 = vmatprep.subr.mxu0 %v6115
    %6436 = vmatpush1.msra.mxu0 %v6114
    %6437 = vmatprep.subr.mxu0 %v6117
    %6438 = vmatpush1.msra.mxu0 %v6116
    %6439 = vmatprep.subr.mxu0 %v6119
    %6440 = vmatpush1.msra.mxu0 %v6118
    %6441 = vmatprep.subr.mxu0 %v6121
    %6442 = vmatpush1.msra.mxu0 %v6120
    %6443 = vmatprep.subr.mxu0 %v6123
    %6444 = vmatpush1.msra.mxu0 %v6122
    %6445 = vmatprep.subr.mxu0 %v6125
    %6446 = vmatpush1.msra.mxu0 %v6124
    %6447 = vmatprep.subr.mxu0 %v6127
    %6448 = vmatpush1.msra.mxu0 %v6126
    %6449 = vmatprep.subr.mxu0 %v6129
    %6450 = vmatpush1.msra.mxu0 %v6128
    %6451 = vmatprep.subr.mxu0 %v6131
    %6452 = vmatpush1.msra.mxu0 %v6130
    %6453 = vmatprep.subr.mxu0 %v6133
    %6454 = vmatpush1.msra.mxu0 %v6132
    %6455 = vmatprep.subr.mxu0 %v6135
    %6456 = vmatpush1.msra.mxu0 %v6134
    %6457 = vmatprep.subr.mxu0 %v6137
    %6458 = vmatpush1.msra.mxu0 %v6136
    %6459 = vmatprep.subr.mxu0 %v6139
    %6460 = vmatpush1.msra.mxu0 %v6138
    %6461 = vmatprep.subr.mxu0 %v6141
    %6462 = vmatpush1.msra.mxu0 %v6140
    %6463 = vmatprep.subr.mxu0 %v6143
    %6464 = vmatpush1.msra.mxu0 %v6142
    %6465 = vmatprep.subr.mxu0 %v6145
    %6466 = vmatpush1.msra.mxu0 %v6144
    %6467 = vmatprep.subr.mxu0 %v6147
    %6468 = vmatpush1.msra.mxu0 %v6146
    %6469 = vmatprep.subr.mxu0 %v6149
    %6470 = vmatpush1.msra.mxu0 %v6148
    %6471 = vmatprep.subr.mxu0 %v6151
    %6472 = vmatpush1.msra.mxu0 %v6150
    %6473 = vmatprep.subr.mxu0 %v6153
    %6474 = vmatpush1.msra.mxu0 %v6152
    %6475 = vmatprep.subr.mxu0 %v6155
    %6476 = vmatpush1.msra.mxu0 %v6154
    %6477 = vmatprep.subr.mxu0 %v6157
    %6478 = vmatpush1.msra.mxu0 %v6156
    %6479 = vmatprep.subr.mxu0 %v6159
    %6480 = vmatpush1.msra.mxu0 %v6158
    %6481 = vmatprep.subr.mxu0 %v6161
    %6482 = vmatpush1.msra.mxu0 %v6160
    %6483 = vmatprep.subr.mxu0 %v6163
    %6484 = vmatpush1.msra.mxu0 %v6162
    %6485 = vmatprep.subr.mxu0 %v6165
    %6486 = vmatpush1.msra.mxu0 %v6164
    %6487 = vmatprep.subr.mxu0 %v6167
    %6488 = vmatpush1.msra.mxu0 %v6166
    %6489 = vmatprep.subr.mxu0 %v6169
    %6490 = vmatpush1.msra.mxu0 %v6168
    %6491 = vmatprep.subr.mxu0 %v6171
    %6492 = vmatpush1.msra.mxu0 %v6170
    %6493 = vmatprep.subr.mxu0 %v6173
    %6494 = vmatpush1.msra.mxu0 %v6172
    %6495 = vmatprep.subr.mxu0 %v6175
    %6496 = vmatpush1.msra.mxu0 %v6174
    %6497 = vmatprep.mubr.f32.mxu0 %v5799
    %6498 = vmatmul.mubr.f32.gmra.mrb[0].mxu0 %v5797
    %v6499 = vpop.f32.mrb[0].mxu0
    %v6500 = vadd.f32 %v6243, %v6499
    %v6501 = vpop.f32.mrb[0].mxu0
    %v6502 = vadd.f32 %v6245, %v6501
    %6503 = vmatprep.mubr.f32.mxu0 %v5807
    %6504 = vmatmul.mubr.f32.gmra.mrb[0].mxu0 %v5805
    %v6505 = vpop.f32.mrb[0].mxu0
    %v6506 = vadd.f32 %v6249, %v6505
    %v6507 = vpop.f32.mrb[0].mxu0
    %v6508 = vadd.f32 %v6251, %v6507
    %6509 = vmatprep.mubr.f32.mxu0 %v5815
    %6510 = vmatmul.mubr.f32.gmra.mrb[0].mxu0 %v5813
    %v6511 = vpop.f32.mrb[0].mxu0
    %v6512 = vadd.f32 %v6255, %v6511
    %v6513 = vpop.f32.mrb[0].mxu0
    %v6514 = vadd.f32 %v6257, %v6513
    %6515 = vmatprep.mubr.f32.mxu0 %v5823
    %6516 = vmatmul.mubr.f32.gmra.mrb[0].mxu0 %v5821
    %v6517 = vpop.f32.mrb[0].mxu0
    %v6518 = vadd.f32 %v6261, %v6517
    %v6519 = vpop.f32.mrb[0].mxu0
    %v6520 = vadd.f32 %v6263, %v6519
    %6521 = vmatprep.mubr.f32.mxu0 %v5831
    %6522 = vmatmul.mubr.f32.gmra.mrb[0].mxu0 %v5829
    %v6523 = vpop.f32.mrb[0].mxu0
    %v6524 = vadd.f32 %v6267, %v6523
    %v6525 = vpop.f32.mrb[0].mxu0
    %v6526 = vadd.f32 %v6269, %v6525
    %6527 = vmatprep.mubr.f32.mxu0 %v5839
    %6528 = vmatmul.mubr.f32.gmra.mrb[0].mxu0 %v5837
    %v6529 = vpop.f32.mrb[0].mxu0
    %v6530 = vadd.f32 %v6273, %v6529
    %v6531 = vpop.f32.mrb[0].mxu0
    %v6532 = vadd.f32 %v6275, %v6531
    %6533 = vmatprep.mubr.f32.mxu0 %v5847
    %6534 = vmatmul.mubr.f32.gmra.mrb[0].mxu0 %v5845
    %v6535 = vpop.f32.mrb[0].mxu0
    %v6536 = vadd.f32 %v6279, %v6535
    %v6537 = vpop.f32.mrb[0].mxu0
    %v6538 = vadd.f32 %v6281, %v6537
    %6539 = vmatprep.mubr.f32.mxu0 %v5855
    %6540 = vmatmul.mubr.f32.gmra.mrb[0].mxu0 %v5853
    %v6541 = vpop.f32.mrb[0].mxu0
    %v6542 = vadd.f32 %v6285, %v6541
    %v6543 = vpop.f32.mrb[0].mxu0
    %v6544 = vadd.f32 %v6287, %v6543
    %6545 = vmatprep.mubr.f32.mxu0 %v5863
    %6546 = vmatmul.mubr.f32.gmra.mrb[0].mxu0 %v5861
    %v6547 = vpop.f32.mrb[0].mxu0
    %v6548 = vadd.f32 %v6291, %v6547
    %v6549 = vpop.f32.mrb[0].mxu0
    %v6550 = vadd.f32 %v6293, %v6549
    %6551 = vmatprep.mubr.f32.mxu0 %v5871
    %6552 = vmatmul.mubr.f32.gmra.mrb[0].mxu0 %v5869
    %v6553 = vpop.f32.mrb[0].mxu0
    %v6554 = vadd.f32 %v6297, %v6553
    %v6555 = vpop.f32.mrb[0].mxu0
    %v6556 = vadd.f32 %v6299, %v6555
    %6557 = vmatprep.mubr.f32.mxu0 %v5879
    %6558 = vmatmul.mubr.f32.gmra.mrb[0].mxu0 %v5877
    %v6559 = vpop.f32.mrb[0].mxu0
    %v6560 = vadd.f32 %v6303, %v6559
    %v6561 = vpop.f32.mrb[0].mxu0
    %v6562 = vadd.f32 %v6305, %v6561
    %6563 = vmatprep.mubr.f32.mxu0 %v5887
    %6564 = vmatmul.mubr.f32.gmra.mrb[0].mxu0 %v5885
    %v6565 = vpop.f32.mrb[0].mxu0
    %v6566 = vadd.f32 %v6309, %v6565
    %v6567 = vpop.f32.mrb[0].mxu0
    %v6568 = vadd.f32 %v6311, %v6567
    %6569 = vmatprep.mubr.f32.mxu0 %v5895
    %6570 = vmatmul.mubr.f32.gmra.mrb[0].mxu0 %v5893
    %v6571 = vpop.f32.mrb[0].mxu0
    %v6572 = vadd.f32 %v6315, %v6571
    %v6573 = vpop.f32.mrb[0].mxu0
    %v6574 = vadd.f32 %v6317, %v6573
    %6575 = vmatprep.mubr.f32.mxu0 %v5903
    %6576 = vmatmul.mubr.f32.gmra.mrb[0].mxu0 %v5901
    %v6577 = vpop.f32.mrb[0].mxu0
    %v6578 = vadd.f32 %v6321, %v6577
    %v6579 = vpop.f32.mrb[0].mxu0
    %v6580 = vadd.f32 %v6323, %v6579
    %6581 = vmatprep.mubr.f32.mxu0 %v5911
    %6582 = vmatmul.mubr.f32.gmra.mrb[0].mxu0 %v5909
    %v6583 = vpop.f32.mrb[0].mxu0
    %v6584 = vadd.f32 %v6327, %v6583
    %v6585 = vpop.f32.mrb[0].mxu0
    %v6586 = vadd.f32 %v6329, %v6585
    %6587 = vmatprep.mubr.f32.mxu0 %v5919
    %6588 = vmatmul.mubr.f32.gmra.mrb[0].mxu0 %v5917
    %v6589 = vpop.f32.mrb[0].mxu0
    %v6590 = vadd.f32 %v6333, %v6589
    %v6591 = vpop.f32.mrb[0].mxu0
    %v6592 = vadd.f32 %v6335, %v6591
    %6593 = vmatprep.mubr.f32.mxu0 %v5927
    %6594 = vmatmul.mubr.f32.gmra.mrb[0].mxu0 %v5925
    %v6595 = vpop.f32.mrb[0].mxu0
    %v6596 = vadd.f32 %v6339, %v6595
    %v6597 = vpop.f32.mrb[0].mxu0
    %v6598 = vadd.f32 %v6341, %v6597
    %6599 = vmatprep.mubr.f32.mxu0 %v5935
    %6600 = vmatmul.mubr.f32.gmra.mrb[0].mxu0 %v5933
    %v6601 = vpop.f32.mrb[0].mxu0
    %v6602 = vadd.f32 %v6345, %v6601
    %v6603 = vpop.f32.mrb[0].mxu0
    %v6604 = vadd.f32 %v6347, %v6603
    %6605 = vmatprep.mubr.f32.mxu0 %v5943
    %6606 = vmatmul.mubr.f32.gmra.mrb[0].mxu0 %v5941
    %v6607 = vpop.f32.mrb[0].mxu0
    %v6608 = vadd.f32 %v6351, %v6607
    %v6609 = vpop.f32.mrb[0].mxu0
    %v6610 = vadd.f32 %v6353, %v6609
    %6611 = vmatprep.mubr.f32.mxu0 %v5951
    %6612 = vmatmul.mubr.f32.gmra.mrb[0].mxu0 %v5949
    %v6613 = vpop.f32.mrb[0].mxu0
    %v6614 = vadd.f32 %v6357, %v6613
    %v6615 = vpop.f32.mrb[0].mxu0
    %v6616 = vadd.f32 %v6359, %v6615
    %6617 = vmatprep.mubr.f32.mxu0 %v5959
    %6618 = vmatmul.mubr.f32.gmra.mrb[0].mxu0 %v5957
    %v6619 = vpop.f32.mrb[0].mxu0
    %v6620 = vadd.f32 %v6363, %v6619
    %v6621 = vpop.f32.mrb[0].mxu0
    %v6622 = vadd.f32 %v6365, %v6621
    %6623 = vmatprep.mubr.f32.mxu0 %v5967
    %6624 = vmatmul.mubr.f32.gmra.mrb[0].mxu0 %v5965
    %v6625 = vpop.f32.mrb[0].mxu0
    %v6626 = vadd.f32 %v6369, %v6625
    %v6627 = vpop.f32.mrb[0].mxu0
    %v6628 = vadd.f32 %v6371, %v6627
    %6629 = vmatprep.mubr.f32.mxu0 %v5975
    %6630 = vmatmul.mubr.f32.gmra.mrb[0].mxu0 %v5973
    %v6631 = vpop.f32.mrb[0].mxu0
    %v6632 = vadd.f32 %v6375, %v6631
    %v6633 = vpop.f32.mrb[0].mxu0
    %v6634 = vadd.f32 %v6377, %v6633
    %6635 = vmatprep.mubr.f32.mxu0 %v5983
    %6636 = vmatmul.mubr.f32.gmra.mrb[0].mxu0 %v5981
    %v6637 = vpop.f32.mrb[0].mxu0
    %v6638 = vadd.f32 %v6381, %v6637
    %v6639 = vpop.f32.mrb[0].mxu0
    %v6640 = vadd.f32 %v6383, %v6639
    %6641 = vmatprep.mubr.f32.mxu0 %v5991
    %6642 = vmatmul.mubr.f32.gmra.mrb[0].mxu0 %v5989
    %v6643 = vpop.f32.mrb[0].mxu0
    %v6644 = vadd.f32 %v6387, %v6643
    %v6645 = vpop.f32.mrb[0].mxu0
    %v6646 = vadd.f32 %v6389, %v6645
    %6647 = vmatprep.mubr.f32.mxu0 %v5999
    %6648 = vmatmul.mubr.f32.gmra.mrb[0].mxu0 %v5997
    %v6649 = vpop.f32.mrb[0].mxu0
    %v6650 = vadd.f32 %v6393, %v6649
    %v6651 = vpop.f32.mrb[0].mxu0
    %v6652 = vadd.f32 %v6395, %v6651
    %6653 = vmatprep.mubr.f32.mxu0 %v6007
    %6654 = vmatmul.mubr.f32.gmra.mrb[0].mxu0 %v6005
    %v6655 = vpop.f32.mrb[0].mxu0
    %v6656 = vadd.f32 %v6399, %v6655
    %v6657 = vpop.f32.mrb[0].mxu0
    %v6658 = vadd.f32 %v6401, %v6657
    %6659 = vmatprep.mubr.f32.mxu0 %v6015
    %6660 = vmatmul.mubr.f32.gmra.mrb[0].mxu0 %v6013
    %v6661 = vpop.f32.mrb[0].mxu0
    %v6662 = vadd.f32 %v6405, %v6661
    %v6663 = vpop.f32.mrb[0].mxu0
    %v6664 = vadd.f32 %v6407, %v6663
    %6665 = vmatprep.mubr.f32.mxu0 %v6023
    %6666 = vmatmul.mubr.f32.gmra.mrb[0].mxu0 %v6021
    %v6667 = vpop.f32.mrb[0].mxu0
    %v6668 = vadd.f32 %v6411, %v6667
    %v6669 = vpop.f32.mrb[0].mxu0
    %v6670 = vadd.f32 %v6413, %v6669
    %6671 = vmatprep.mubr.f32.mxu0 %v6031
    %6672 = vmatmul.mubr.f32.gmra.mrb[0].mxu0 %v6029
    %v6673 = vpop.f32.mrb[0].mxu0
    %v6674 = vadd.f32 %v6417, %v6673
    %v6675 = vpop.f32.mrb[0].mxu0
    %v6676 = vadd.f32 %v6419, %v6675
    %6677 = vmatprep.mubr.f32.mxu0 %v6039
    %6678 = vmatmul.mubr.f32.gmra.mrb[0].mxu0 %v6037
    %v6679 = vpop.f32.mrb[0].mxu0
    %v6680 = vadd.f32 %v6423, %v6679
    %v6681 = vpop.f32.mrb[0].mxu0
    %v6682 = vadd.f32 %v6425, %v6681
    %6683 = vmatprep.mubr.f32.mxu0 %v6047
    %6684 = vmatmul.mubr.f32.gmra.mrb[0].mxu0 %v6045
    %v6685 = vpop.f32.mrb[0].mxu0
    %v6686 = vadd.f32 %v6429, %v6685
    %v6687 = vpop.f32.mrb[0].mxu0
    %v6688 = vadd.f32 %v6431, %v6687
    %6689 = vdwg.mxu0
    %v6690 = vmax.f32 %v6502, 1e-30
    %v6691 = vmax.f32 %v6508, 1e-30
    %v6692 = vmax.f32 %v6514, 1e-30
    %v6693 = vmax.f32 %v6520, 1e-30
    %v6694 = vmax.f32 %v6526, 1e-30
    %v6695 = vmax.f32 %v6532, 1e-30
    %v6696 = vmax.f32 %v6538, 1e-30
    %v6697 = vmax.f32 %v6544, 1e-30
    %v6698 = vmax.f32 %v6550, 1e-30
    %v6699 = vmax.f32 %v6556, 1e-30
    %v6700 = vmax.f32 %v6562, 1e-30
    %v6701 = vmax.f32 %v6568, 1e-30
    %v6702 = vmax.f32 %v6574, 1e-30
    %v6703 = vmax.f32 %v6580, 1e-30
    %v6704 = vmax.f32 %v6586, 1e-30
    %v6705 = vmax.f32 %v6592, 1e-30
    %v6706 = vmax.f32 %v6598, 1e-30
    %v6707 = vmax.f32 %v6604, 1e-30
    %v6708 = vmax.f32 %v6610, 1e-30
    %v6709 = vmax.f32 %v6616, 1e-30
    %v6710 = vmax.f32 %v6622, 1e-30
    %v6711 = vmax.f32 %v6628, 1e-30
    %v6712 = vmax.f32 %v6634, 1e-30
    %v6713 = vmax.f32 %v6640, 1e-30
    %v6714 = vmax.f32 %v6646, 1e-30
    %v6715 = vmax.f32 %v6652, 1e-30
    %v6716 = vmax.f32 %v6658, 1e-30
    %v6717 = vmax.f32 %v6664, 1e-30
    %v6718 = vmax.f32 %v6670, 1e-30
    %v6719 = vmax.f32 %v6676, 1e-30
    %v6720 = vmax.f32 %v6682, 1e-30
    %v6721 = vmax.f32 %v6688, 1e-30
    %v6722 = vrcp.pop %v6690
    %v6723 = vrcp.pop %v6691
    %v6724 = vrcp.pop %v6692
    %v6725 = vrcp.pop %v6693
    %v6726 = vrcp.pop %v6694
    %v6727 = vrcp.pop %v6695
    %v6728 = vrcp.pop %v6696
    %v6729 = vrcp.pop %v6697
    %v6730 = vrcp.pop %v6698
    %v6731 = vrcp.pop %v6699
    %v6732 = vrcp.pop %v6700
    %v6733 = vrcp.pop %v6701
    %v6734 = vrcp.pop %v6702
    %v6735 = vrcp.pop %v6703
    %v6736 = vrcp.pop %v6704
    %v6737 = vrcp.pop %v6705
    %v6738 = vrcp.pop %v6706
    %v6739 = vrcp.pop %v6707
    %v6740 = vrcp.pop %v6708
    %v6741 = vrcp.pop %v6709
    %v6742 = vrcp.pop %v6710
    %v6743 = vrcp.pop %v6711
    %v6744 = vrcp.pop %v6712
    %v6745 = vrcp.pop %v6713
    %v6746 = vrcp.pop %v6714
    %v6747 = vrcp.pop %v6715
    %v6748 = vrcp.pop %v6716
    %v6749 = vrcp.pop %v6717
    %v6750 = vrcp.pop %v6718
    %v6751 = vrcp.pop %v6719
    %v6752 = vrcp.pop %v6720
    %v6753 = vrcp.pop %v6721
    %v6754 = vmul.f32 %v6500, %v6722
    %v6755 = vmul.f32 %v6506, %v6723
    %v6756 = vmul.f32 %v6512, %v6724
    %v6757 = vmul.f32 %v6518, %v6725
    %v6758 = vmul.f32 %v6524, %v6726
    %v6759 = vmul.f32 %v6530, %v6727
    %v6760 = vmul.f32 %v6536, %v6728
    %v6761 = vmul.f32 %v6542, %v6729
    %v6762 = vmul.f32 %v6548, %v6730
    %v6763 = vmul.f32 %v6554, %v6731
    %v6764 = vmul.f32 %v6560, %v6732
    %v6765 = vmul.f32 %v6566, %v6733
    %v6766 = vmul.f32 %v6572, %v6734
    %v6767 = vmul.f32 %v6578, %v6735
    %v6768 = vmul.f32 %v6584, %v6736
    %v6769 = vmul.f32 %v6590, %v6737
    %v6770 = vmul.f32 %v6596, %v6738
    %v6771 = vmul.f32 %v6602, %v6739
    %v6772 = vmul.f32 %v6608, %v6740
    %v6773 = vmul.f32 %v6614, %v6741
    %v6774 = vmul.f32 %v6620, %v6742
    %v6775 = vmul.f32 %v6626, %v6743
    %v6776 = vmul.f32 %v6632, %v6744
    %v6777 = vmul.f32 %v6638, %v6745
    %v6778 = vmul.f32 %v6644, %v6746
    %v6779 = vmul.f32 %v6650, %v6747
    %v6780 = vmul.f32 %v6656, %v6748
    %v6781 = vmul.f32 %v6662, %v6749
    %v6782 = vmul.f32 %v6668, %v6750
    %v6783 = vmul.f32 %v6674, %v6751
    %v6784 = vmul.f32 %v6680, %v6752
    %v6785 = vmul.f32 %v6686, %v6753
    %6786 = vst [vmem:[#allocation8] sm:$0xff] %v6754
    %6787 = vst [vmem:[#allocation8 + $0x8] sm:$0xff] %v6755
    %6788 = vst [vmem:[#allocation8 + $0x10] sm:$0xff] %v6756
    %6789 = vst [vmem:[#allocation8 + $0x18] sm:$0xff] %v6757
    %6790 = vst [vmem:[#allocation8 + $0x20] sm:$0xff] %v6758
    %6791 = vst [vmem:[#allocation8 + $0x28] sm:$0xff] %v6759
    %6792 = vst [vmem:[#allocation8 + $0x30] sm:$0xff] %v6760
    %6793 = vst [vmem:[#allocation8 + $0x38] sm:$0xff] %v6761
    %6794 = vst [vmem:[#allocation8 + $0x40] sm:$0xff] %v6762
    %6795 = vst [vmem:[#allocation8 + $0x48] sm:$0xff] %v6763
    %6796 = vst [vmem:[#allocation8 + $0x50] sm:$0xff] %v6764
    %6797 = vst [vmem:[#allocation8 + $0x58] sm:$0xff] %v6765
    %6798 = vst [vmem:[#allocation8 + $0x60] sm:$0xff] %v6766
    %6799 = vst [vmem:[#allocation8 + $0x68] sm:$0xff] %v6767
    %6800 = vst [vmem:[#allocation8 + $0x70] sm:$0xff] %v6768
    %6801 = vst [vmem:[#allocation8 + $0x78] sm:$0xff] %v6769
    %6802 = vst [vmem:[#allocation8 + $0x80] sm:$0xff] %v6770
    %6803 = vst [vmem:[#allocation8 + $0x88] sm:$0xff] %v6771
    %6804 = vst [vmem:[#allocation8 + $0x90] sm:$0xff] %v6772
    %6805 = vst [vmem:[#allocation8 + $0x98] sm:$0xff] %v6773
    %6806 = vst [vmem:[#allocation8 + $0xa0] sm:$0xff] %v6774
    %6807 = vst [vmem:[#allocation8 + $0xa8] sm:$0xff] %v6775
    %6808 = vst [vmem:[#allocation8 + $0xb0] sm:$0xff] %v6776
    %6809 = vst [vmem:[#allocation8 + $0xb8] sm:$0xff] %v6777
    %6810 = vst [vmem:[#allocation8 + $0xc0] sm:$0xff] %v6778
    %6811 = vst [vmem:[#allocation8 + $0xc8] sm:$0xff] %v6779
    %6812 = vst [vmem:[#allocation8 + $0xd0] sm:$0xff] %v6780
    %6813 = vst [vmem:[#allocation8 + $0xd8] sm:$0xff] %v6781
    %6814 = vst [vmem:[#allocation8 + $0xe0] sm:$0xff] %v6782
    %6815 = vst [vmem:[#allocation8 + $0xe8] sm:$0xff] %v6783
    %6816 = vst [vmem:[#allocation8 + $0xf0] sm:$0xff] %v6784
    %6817 = vst [vmem:[#allocation8 + $0xf8] sm:$0xff] %v6785
    // Predicated region
    $region70: #{tpu_custom_call.1} parent=1 // pred_check
      _
    $region71: #{tpu_custom_call.1} parent=1 // pred_check_branch
      %6819 = sbr.rel (0) target = $region73
    $region72: #{tpu_custom_call.1} parent=1 // pred_region
      %s6821 = ssub.s32 4096, 4096
      %6822 = vsyncadd [#allocation4], %s6821
      %s6823 = sshll.u32 [#allocation8], 4
      %s6824 = int_to_ptr.vmem [resolvable:$true] %s6823
      %6829 = dma.vmem_to_hbm [thread:$0]  %s6824, 4096, %s14, [#allocation4], 128, 128, 8
    $region73: #{tpu_custom_call.1} parent=1 // pred_fallthru
      _
    // Predicated region
    $region74: #{tpu_custom_call.1} parent=1 // pred_check
      _
    $region75: #{tpu_custom_call.1} parent=1 // pred_check_branch
      %6831 = sbr.rel (0) target = $region77
    $region76: #{tpu_custom_call.1} parent=1 // pred_region
      %6832 = dma.done [#allocation4], 4096
    $region77: #{tpu_custom_call.1} parent=1 // pred_fallthru
      _
    %6833 = vsyncpa [#allocation3], 1
    %6834 = vsyncpa [#allocation6], 1
    %6835 = vsyncpa [#allocation4], 1

</llo_original>
